<compile_context>
chip_gen: v7x
topology: tpu7x:2x2x1
jax: 0.10.0
libtpu: 0.0.40
codegen_flags: <defaults>
</compile_context>

<pallas_src>
import jax
import jax.numpy as jnp
from jax.experimental import pallas as pl
from jax.experimental.pallas import tpu as pltpu


# ---------------------------------------------------------------------------
# helpers
# ---------------------------------------------------------------------------
def _round_up(x, m):
    return ((x + m - 1) // m) * m


def _pick_tile_p(n_rows, n_cols, tile_p):
    """Row-tile size: large (amortize per-step overhead), sublane-aligned, at least two
    grid programs when possible (megacore), and capped so one x tile stays under ~2 MiB
    of VMEM (safe with double buffering on v5e's 16 MiB default scoped VMEM)."""
    vmem_cap = max(8, (((2 << 20) // max(4 * n_cols, 1)) // 8) * 8)
    half = _round_up(max((n_rows + 1) // 2, 1), 8)
    t = min(tile_p, half, vmem_cap)
    return max(8, (t // 8) * 8)


def im2col_3x3(x_nhwc):
    """3x3 / stride-1 / pad-1 patches, pixels-major: (N,H,W,C) -> (N*H*W, 9*C)."""
    n, h, w, c = x_nhwc.shape
    xp = jnp.pad(x_nhwc, ((0, 0), (1, 1), (1, 1), (0, 0)))
    taps = [xp[:, dy:dy + h, dx:dx + w, :] for dy in range(3) for dx in range(3)]
    cols = jnp.stack(taps, axis=3)                    # (N,H,W,9,C), tap = dy*3+dx
    return cols.reshape(n * h * w, 9 * c)


# ---------------------------------------------------------------------------
# Pallas kernel 1: tiled  y = act(x @ W + b)   (BN already folded into W, b)
# ---------------------------------------------------------------------------
def _make_mm_kernel(act):
    def kernel(x_ref, w_ref, b_ref, o_ref):
        h = jnp.dot(x_ref[...], w_ref[...], preferred_element_type=jnp.float32)
        h = h + b_ref[...]
        if act == "relu":
            h = jnp.maximum(h, 0.0)
        o_ref[...] = h.astype(o_ref.dtype)
    return kernel


def pallas_matmul(x, w, b, *, act="none", tile_p=2048):
    p, k = x.shape
    c_out = w.shape[1]
    t = _pick_tile_p(p, k, tile_p)
    pp = _round_up(p, t)
    if pp != p:
        x = jnp.pad(x, ((0, pp - p), (0, 0)))         # zero rows: harmless, sliced off
    y = pl.pallas_call(
        _make_mm_kernel(act),
        out_shape=jax.ShapeDtypeStruct((pp, c_out), x.dtype),
        grid_spec=pltpu.PrefetchScalarGridSpec(
            num_scalar_prefetch=0,
            grid=(pp // t,),
            in_specs=[
                pl.BlockSpec((t, k), lambda i: (i, 0)),
                pl.BlockSpec((k, c_out), lambda i: (0, 0)),
                pl.BlockSpec((1, c_out), lambda i: (0, 0)),
            ],
            out_specs=pl.BlockSpec((t, c_out), lambda i: (i, 0)),
        ),
        compiler_params=pltpu.CompilerParams(dimension_semantics=("parallel",)),
    )(x, w, b)
    return y[:p]


# ---------------------------------------------------------------------------
# Pallas kernel 2: fused branch block
#   relu(block-diag conv3x3) -> cumulative chunk sums (matmul with 0/1 matrix) -> + branch0
# ---------------------------------------------------------------------------
def _branch_block_kernel(cols_ref, w_ref, b_ref, t_ref, b0_ref, o_ref):
    h = jnp.dot(cols_ref[...], w_ref[...], preferred_element_type=jnp.float32) + b_ref[...]
    h = jnp.maximum(h, 0.0)                            # four branch convs + BN + ReLU
    csum = jnp.dot(h, t_ref[...], preferred_element_type=jnp.float32)   # cat([b1,b2,b3,b4])
    o_ref[...] = (csum + b0_ref[...]).astype(o_ref.dtype)               # + branch0 residual


def pallas_branch_block(cols, w_bd, b_bd, tmat, b0_flat, *, tile_p=2048):
    p, k = cols.shape
    depth = w_bd.shape[1]
    t = _pick_tile_p(p, k, tile_p)
    pp = _round_up(p, t)
    if pp != p:
        cols = jnp.pad(cols, ((0, pp - p), (0, 0)))
        b0_flat = jnp.pad(b0_flat, ((0, pp - p), (0, 0)))
    y = pl.pallas_call(
        _branch_block_kernel,
        out_shape=jax.ShapeDtypeStruct((pp, depth), cols.dtype),
        grid_spec=pltpu.PrefetchScalarGridSpec(
            num_scalar_prefetch=0,
            grid=(pp // t,),
            in_specs=[
                pl.BlockSpec((t, k), lambda i: (i, 0)),
                pl.BlockSpec((k, depth), lambda i: (0, 0)),
                pl.BlockSpec((1, depth), lambda i: (0, 0)),
                pl.BlockSpec((depth, depth), lambda i: (0, 0)),
                pl.BlockSpec((t, depth), lambda i: (i, 0)),
            ],
            out_specs=pl.BlockSpec((t, depth), lambda i: (i, 0)),
        ),
        compiler_params=pltpu.CompilerParams(dimension_semantics=("parallel",)),
    )(cols, w_bd, b_bd, tmat, b0_flat)
    return y[:p]


# ---------------------------------------------------------------------------
# Pallas kernel 3: fused head conv3x3+BN+ReLU + PAM (QKV + softmax + residual)
# ---------------------------------------------------------------------------
def _head_pam_kernel(cols_ref, wh_ref, bh_ref, wq_ref, bq_ref, wk_ref, bk_ref,
                     wv_ref, bv_ref, g_ref, o_ref):
    feat = jnp.dot(cols_ref[...], wh_ref[...], preferred_element_type=jnp.float32) + bh_ref[...]
    feat = jnp.maximum(feat, 0.0)                                       # head conv+BN+ReLU
    q = jnp.dot(feat, wq_ref[...], preferred_element_type=jnp.float32) + bq_ref[...]
    k = jnp.dot(feat, wk_ref[...], preferred_element_type=jnp.float32) + bk_ref[...]
    v = jnp.dot(feat, wv_ref[...], preferred_element_type=jnp.float32) + bv_ref[...]
    e = jnp.einsum("qc,kc->qk", q, k, preferred_element_type=jnp.float32)
    e = e - jnp.max(e, axis=-1, keepdims=True)
    pe = jnp.exp(e)
    att = pe / jnp.sum(pe, axis=-1, keepdims=True)
    out = jnp.dot(att, v, preferred_element_type=jnp.float32)
    o_ref[...] = (g_ref[...] * out + feat).astype(o_ref.dtype)


def pallas_head_pam(cols, n_batch, hw, w_head, b_head, wq, bq, wk, bk, wv, bv, gamma):
    kdim = cols.shape[1]
    c = w_head.shape[1]
    assert hw % 8 == 0, "H*W must be sublane aligned for the PAM block"
    return pl.pallas_call(
        _head_pam_kernel,
        out_shape=jax.ShapeDtypeStruct((n_batch * hw, c), cols.dtype),
        grid_spec=pltpu.PrefetchScalarGridSpec(
            num_scalar_prefetch=0,
            grid=(n_batch,),
            in_specs=[
                pl.BlockSpec((hw, kdim), lambda b: (b, 0)),
                pl.BlockSpec((kdim, c), lambda b: (0, 0)),
                pl.BlockSpec((1, c), lambda b: (0, 0)),
                pl.BlockSpec((c, c), lambda b: (0, 0)),
                pl.BlockSpec((1, c), lambda b: (0, 0)),
                pl.BlockSpec((c, c), lambda b: (0, 0)),
                pl.BlockSpec((1, c), lambda b: (0, 0)),
                pl.BlockSpec((c, c), lambda b: (0, 0)),
                pl.BlockSpec((1, c), lambda b: (0, 0)),
                pl.BlockSpec((1, 1), lambda b: (0, 0)),
            ],
            out_specs=pl.BlockSpec((hw, c), lambda b: (b, 0)),
        ),
        compiler_params=pltpu.CompilerParams(dimension_semantics=("parallel",)),
    )(cols, w_head, b_head, wq, bq, wk, bk, wv, bv, gamma)


# ---------------------------------------------------------------------------
# Pallas kernel 4: fused out-block  conv3x3+BN+PReLU -> conv1x1  (lane-padded)
# ---------------------------------------------------------------------------
def _out_block_kernel(x_ref, w1_ref, b1_ref, a_ref, w2_ref, b2_ref, o_ref):
    h = jnp.dot(x_ref[...], w1_ref[...], preferred_element_type=jnp.float32) + b1_ref[...]
    h = jnp.where(h > 0.0, h, h * a_ref[...])          # PReLU (single shared slope)
    # TODO(synk): Dropout2d(p=0.1) is the identity in eval mode; train-mode channel
    # dropout is not implemented here.
    y = jnp.dot(h, w2_ref[...], preferred_element_type=jnp.float32) + b2_ref[...]
    o_ref[...] = y.astype(o_ref.dtype)


def pallas_out_block(x, w1, b1, a, w2, b2, *, tile_p=2048):
    p, k = x.shape
    c_mid = w1.shape[1]
    c_out = w2.shape[1]
    t = _pick_tile_p(p, k, tile_p)
    pp = _round_up(p, t)
    if pp != p:
        x = jnp.pad(x, ((0, pp - p), (0, 0)))
    y = pl.pallas_call(
        _out_block_kernel,
        out_shape=jax.ShapeDtypeStruct((pp, c_out), x.dtype),
        grid_spec=pltpu.PrefetchScalarGridSpec(
            num_scalar_prefetch=0,
            grid=(pp // t,),
            in_specs=[
                pl.BlockSpec((t, k), lambda i: (i, 0)),
                pl.BlockSpec((k, c_mid), lambda i: (0, 0)),
                pl.BlockSpec((1, c_mid), lambda i: (0, 0)),
                pl.BlockSpec((1, 1), lambda i: (0, 0)),
                pl.BlockSpec((c_mid, c_out), lambda i: (0, 0)),
                pl.BlockSpec((1, c_out), lambda i: (0, 0)),
            ],
            out_specs=pl.BlockSpec((t, c_out), lambda i: (i, 0)),
        ),
        compiler_params=pltpu.CompilerParams(dimension_semantics=("parallel",)),
    )(x, w1, b1, a, w2, b2)
    return y[:p]


# ---------------------------------------------------------------------------
# Full APM forward (Pallas path)
# ---------------------------------------------------------------------------
def apm_forward_pallas(x_nchw, pp):
    n, c_in, h, w = x_nchw.shape
    depth = pp["w_b0"].shape[1]
    p = n * h * w

    x = jnp.transpose(x_nchw, (0, 2, 3, 1))            # NHWC
    x_flat = x.reshape(p, c_in)

    # branch_main: global avg-pool -> Conv1x1+BN+ReLU; bilinear upsample of a 1x1 map
    # (align_corners=True) is a spatial broadcast.  Tiny (NxC) -> plain XLA glue.
    pooled = jnp.mean(x, axis=(1, 2))                  # (N, C_in)
    bm = jnp.maximum(pooled @ pp["w_bm"] + pp["b_bm"], 0.0)            # (N, depth)
    bm_map = jnp.broadcast_to(bm[:, None, None, :], (n, h, w, depth))

    # branch0: 1x1 conv + BN + ReLU  (Pallas)
    b0_flat = pallas_matmul(x_flat, pp["w_b0"], pp["b_b0"], act="relu")        # (P, depth)

    # branches 1..4: four 32->32 3x3 convs as one block-diagonal 3x3 conv, cumulative
    # chunk sums and +branch0 residual all fused in one Pallas kernel.
    cols_b0 = im2col_3x3(b0_flat.reshape(n, h, w, depth))                      # (P, 9*depth)
    merged = pallas_branch_block(cols_b0, pp["w_bd"], pp["b_bd"],
                                 pp["tmat"], b0_flat)                          # (P, depth)

    # head 3x3 conv (2*depth -> 128) + BN + ReLU fused with PAM
    # (QKV + softmax attention + gamma-residual), one grid step per batch element.
    head_in = jnp.concatenate([bm_map, merged.reshape(n, h, w, depth)], axis=-1)
    cols_head = im2col_3x3(head_in)                                            # (P, 9*2*depth)
    pam = pallas_head_pam(cols_head, n, h * w, pp["w_head"], pp["b_head"],
                          pp["wq"], pp["bq"], pp["wk"], pp["bk"],
                          pp["wv"], pp["bv"], pp["gamma"])                     # (P, 128)

    # out block: conv3x3(128->64)+BN+PReLU (+Dropout=id) -> conv1x1(64->1), fused; the
    # intermediate/output are 128-lane padded, the real output is column 0.
    cols_out = im2col_3x3(pam.reshape(n, h, w, pam.shape[1]))
    y_pad = pallas_out_block(cols_out, pp["w_o1"], pp["b_o1"], pp["a_prelu"],
                             pp["w_o2"], pp["b_o2"])                           # (P, 128)
    y = y_pad[:, :1]
    return jnp.transpose(y.reshape(n, h, w, 1), (0, 3, 1, 2))


# ---------------------------------------------------------------------------
# Pure-JAX reference (XLA convs, unfolded BN) for correctness checking
# ---------------------------------------------------------------------------
def _bn_ref(z, bn, eps=1e-5):
    g, b, m, v = bn
    return (z - m) * (g / jnp.sqrt(v + eps)) + b


def _conv3x3_ref(x_nhwc, w_hwio):
    return jax.lax.conv_general_dilated(
        x_nhwc, w_hwio, window_strides=(1, 1), padding="SAME",
        dimension_numbers=("NHWC", "HWIO", "NHWC"))


def apm_forward_reference(x_nchw, rp):
    n, c_in, h, w = x_nchw.shape
    depth = rp["w_b0"].shape[1]
    inter = depth // 4
    x = jnp.transpose(x_nchw, (0, 2, 3, 1))

    pooled = jnp.mean(x, axis=(1, 2), keepdims=True)
    bm = jnp.einsum("nhwc,cd->nhwd", pooled, rp["w_bm"]) + rp["cb_bm"]
    bm = jnp.maximum(_bn_ref(bm, rp["bn_bm"]), 0.0)
    bm = jnp.broadcast_to(bm, (n, h, w, depth))        # bilinear upsample of a 1x1 map

    b0 = jnp.einsum("nhwc,cd->nhwd", x, rp["w_b0"])
    b0 = jnp.maximum(_bn_ref(b0, rp["bn_b0"]), 0.0)

    convs = []
    for i in range(4):
        ci = _conv3x3_ref(b0[..., i * inter:(i + 1) * inter], rp["w_br"][i])
        convs.append(jnp.maximum(_bn_ref(ci, rp["bn_br"][i]), 0.0))
    b1 = convs[0]
    b2 = b1 + convs[1]
    b3 = b2 + convs[2]
    b4 = b3 + convs[3]
    out = jnp.concatenate([b1, b2, b3, b4], axis=-1) + b0
    out = jnp.concatenate([bm, out], axis=-1)

    hd = jnp.maximum(_bn_ref(_conv3x3_ref(out, rp["w_head"]), rp["bn_head"]), 0.0)

    feat = hd.reshape(n, h * w, -1)
    q = feat @ rp["wq"] + rp["bq"]
    k = feat @ rp["wk"] + rp["bk"]
    v = feat @ rp["wv"] + rp["bv"]
    att = jax.nn.softmax(jnp.einsum("nic,njc->nij", q, k), axis=-1)
    pam = rp["gamma_pam"] * jnp.einsum("nij,njc->nic", att, v) + feat
    pam = pam.reshape(n, h, w, -1)

    o = _conv3x3_ref(pam, rp["w_o1"]) + rp["cb_o1"]
    o = _bn_ref(o, rp["bn_o1"])
    o = jnp.where(o > 0, o, rp["prelu_a"] * o)         # PReLU; Dropout2d = identity (eval)
    y = jnp.einsum("nhwc,cd->nhwd", o, rp["w_o2"]) + rp["cb_o2"]
    return jnp.transpose(y, (0, 3, 1, 2))


# ---------------------------------------------------------------------------
# Synthetic parameters + host-side folding (BN folds, block-diag, lane padding)
# ---------------------------------------------------------------------------
def make_raw_params(key, in_ch, depth):
    inter = depth // 4
    keys = iter(jax.random.split(key, 64))
    nk = lambda: next(keys)

    def nrm(shape, std):
        return std * jax.random.normal(nk(), shape, jnp.float32)

    def bn(c):
        return (1.0 + 0.2 * jax.random.normal(nk(), (c,), jnp.float32),     # gamma
                0.2 * jax.random.normal(nk(), (c,), jnp.float32),           # beta
                0.3 * jax.random.normal(nk(), (c,), jnp.float32),           # running mean
                0.5 + jnp.abs(jax.random.normal(nk(), (c,), jnp.float32)))  # running var

    def ws(fan_in):
        return 0.5 / float(fan_in) ** 0.5

    return {
        "w_bm": nrm((in_ch, depth), ws(in_ch)),        # branch_main Conv1x1 (conv bias)
        "cb_bm": nrm((depth,), 0.1),
        "bn_bm": bn(depth),
        "w_b0": nrm((in_ch, depth), ws(in_ch)),        # branch0 (no conv bias)
        "bn_b0": bn(depth),
        "w_br": [nrm((3, 3, inter, inter), ws(9 * inter)) for _ in range(4)],
        "bn_br": [bn(inter) for _ in range(4)],
        "w_head": nrm((3, 3, 2 * depth, 128), ws(9 * 2 * depth)),
        "bn_head": bn(128),
        "wq": nrm((128, 32), ws(128)), "bq": nrm((32,), 0.1),
        "wk": nrm((128, 32), ws(128)), "bk": nrm((32,), 0.1),
        "wv": nrm((128, 128), ws(128)), "bv": nrm((128,), 0.1),
        "gamma_pam": 0.5,
        "w_o1": nrm((3, 3, 128, 64), ws(9 * 128)),
        "cb_o1": nrm((64,), 0.1),
        "bn_o1": bn(64),
        "prelu_a": 0.25,
        "w_o2": nrm((64, 1), ws(64)),
        "cb_o2": nrm((1,), 0.1),
    }


def prepare_pallas_params(rp, eps=1e-5):
    depth = rp["w_b0"].shape[1]
    inter = depth // 4

    def fold(w_mat, conv_bias, bn):   # eval-mode BN folded into (W, b)
        g, b, m, v = bn
        s = g / jnp.sqrt(v + eps)
        cb = conv_bias if conv_bias is not None else 0.0
        return w_mat * s[None, :], (cb * s + (b - m * s))[None, :]

    pp = {}
    pp["w_bm"], pp["b_bm"] = fold(rp["w_bm"], rp["cb_bm"], rp["bn_bm"])
    pp["w_b0"], pp["b_b0"] = fold(rp["w_b0"], None, rp["bn_b0"])

    # The four 32->32 branch convs as one block-diagonal (9*depth, depth) matmul.
    w_bd = jnp.zeros((3, 3, depth, depth), jnp.float32)
    for i in range(4):
        w_bd = w_bd.at[:, :, i * inter:(i + 1) * inter,
                       i * inter:(i + 1) * inter].set(rp["w_br"][i])
    bn_bd = tuple(jnp.concatenate([rp["bn_br"][i][j] for i in range(4)]) for j in range(4))
    pp["w_bd"], pp["b_bd"] = fold(w_bd.reshape(9 * depth, depth), None, bn_bd)

    # Constant matrix turning the four relu'd chunks into their cumulative sums
    # (cat([b1, b1+b2, b1+b2+b3, b1+b2+b3+b4])): block upper-triangular of identities.
    pp["tmat"] = jnp.kron(jnp.triu(jnp.ones((4, 4), jnp.float32)),
                          jnp.eye(inter, dtype=jnp.float32))

    pp["w_head"], pp["b_head"] = fold(rp["w_head"].reshape(9 * 2 * depth, 128),
                                      None, rp["bn_head"])

    # PAM: zero-pad Q/K projections to 128 lanes (exact: padded dims are zero on both sides).
    c = 128
    pp["wq"] = jnp.zeros((c, c), jnp.float32).at[:, :32].set(rp["wq"])
    pp["bq"] = jnp.zeros((1, c), jnp.float32).at[0, :32].set(rp["bq"])
    pp["wk"] = jnp.zeros((c, c), jnp.float32).at[:, :32].set(rp["wk"])
    pp["bk"] = jnp.zeros((1, c), jnp.float32).at[0, :32].set(rp["bk"])
    pp["wv"] = rp["wv"]
    pp["bv"] = rp["bv"][None, :]
    pp["gamma"] = jnp.full((1, 1), rp["gamma_pam"], jnp.float32)

    # out block: fold BN into conv1; pad 64-wide intermediate and 1-wide output to 128 lanes
    # (exact: PReLU(0)=0 and zero rows/cols contribute nothing).
    w_o1, b_o1 = fold(rp["w_o1"].reshape(9 * 128, 64), rp["cb_o1"], rp["bn_o1"])
    pp["w_o1"] = jnp.zeros((9 * 128, 128), jnp.float32).at[:, :64].set(w_o1)
    pp["b_o1"] = jnp.zeros((1, 128), jnp.float32).at[:, :64].set(b_o1)
    pp["a_prelu"] = jnp.full((1, 1), rp["prelu_a"], jnp.float32)
    pp["w_o2"] = jnp.zeros((128, 128), jnp.float32).at[:64, :1].set(rp["w_o2"])
    pp["b_o2"] = jnp.zeros((1, 128), jnp.float32).at[0, :1].set(rp["cb_o2"])
    return pp


if __name__ == "__main__":
    key = jax.random.PRNGKey(0)
    N, in_ch, H, W = 2, 32, 16, 16
    depth = 128

    kx, kp = jax.random.split(key)
    x = jax.random.normal(kx, (N, in_ch, H, W), jnp.float32)

    rp = make_raw_params(kp, in_ch, depth)
    pp = prepare_pallas_params(rp)

    fwd = jax.jit(apm_forward_pallas)
    out = jax.block_until_ready(fwd(x, pp))
    assert out.shape == (N, 1, H, W), out.shape

    ref = apm_forward_reference(x, rp)
    max_err = float(jnp.max(jnp.abs(out - ref)))
    assert jnp.allclose(out, ref, atol=2e-2, rtol=2e-2), max_err

    print("KERNEL_OK")
</pallas_src>

<mosaic_0001>
module attributes {stable_mosaic.version = 11 : i64} {
  func.func @kernel(%arg0: i32, %arg1: memref<256x32xf32, #tpu.memory_space<vmem>>, %arg2: memref<32x128xf32, #tpu.memory_space<vmem>>, %arg3: memref<1x128xf32, #tpu.memory_space<vmem>>, %arg4: memref<256x128xf32, #tpu.memory_space<vmem>>) attributes {dimension_semantics = [#tpu.dimension_semantics<parallel>], iteration_bounds = array<i64: 2>, scalar_prefetch = 0 : i64, scratch_operands = 0 : i64, tpu.core_type = #tpu.core_type<tc>, window_params = [{transform_indices = @transform_0, window_bounds = array<i64: 256, 32>}, {pipeline_mode = #tpu.pipeline_mode<synchronous>, transform_indices = @transform_1, window_bounds = array<i64: 32, 128>}, {pipeline_mode = #tpu.pipeline_mode<synchronous>, transform_indices = @transform_2, window_bounds = array<i64: 1, 128>}, {transform_indices = @transform_3, window_bounds = array<i64: 256, 128>}]} {
    %c0 = arith.constant 0 : index
    %c0_0 = arith.constant 0 : index
    %0 = vector.load %arg1[%c0, %c0_0] : memref<256x32xf32, #tpu.memory_space<vmem>>, vector<256x32xf32>
    %c0_1 = arith.constant 0 : index
    %c0_2 = arith.constant 0 : index
    %1 = vector.load %arg2[%c0_1, %c0_2] : memref<32x128xf32, #tpu.memory_space<vmem>>, vector<32x128xf32>
    %cst = arith.constant dense<0.000000e+00> : vector<256x128xf32>
    %2 = tpu.matmul %0, %1, %cst {dimension_numbers = #tpu.dot_dimension_numbers<[1], [0], [0], [1], [0, 0, 1, 1], [], []>} : vector<256x32xf32>, vector<32x128xf32>, vector<256x128xf32> -> vector<256x128xf32>
    %c0_3 = arith.constant 0 : index
    %c0_4 = arith.constant 0 : index
    %3 = vector.load %arg3[%c0_3, %c0_4] : memref<1x128xf32, #tpu.memory_space<vmem>>, vector<1x128xf32>
    %4 = vector.broadcast %3 : vector<1x128xf32> to vector<256x128xf32>
    %5 = arith.addf %2, %4 : vector<256x128xf32>
    %cst_5 = arith.constant 0.000000e+00 : f32
    %6 = vector.broadcast %cst_5 : f32 to vector<256x128xf32>
    %7 = arith.maximumf %5, %6 : vector<256x128xf32>
    %c0_6 = arith.constant 0 : index
    %c0_7 = arith.constant 0 : index
    %8 = vector.load %arg4[%c0_6, %c0_7] : memref<256x128xf32, #tpu.memory_space<vmem>>, vector<256x128xf32>
    tpu.vector_store %arg4[%c0_6, %c0_7], %7 {strides = array<i32>} : memref<256x128xf32, #tpu.memory_space<vmem>>, vector<256x128xf32>,
    return
  }
  func.func @transform_0(%arg0: i32) -> (i32, i32) {
    %c0_i32 = arith.constant 0 : i32
    %c0_i32_0 = arith.constant 0 : i32
    return %arg0, %c0_i32 : i32, i32
  }
  func.func @transform_1(%arg0: i32) -> (i32, i32) {
    %c0_i32 = arith.constant 0 : i32
    %c0_i32_0 = arith.constant 0 : i32
    %c0_i32_1 = arith.constant 0 : i32
    return %c0_i32, %c0_i32_0 : i32, i32
  }
  func.func @transform_2(%arg0: i32) -> (i32, i32) {
    %c0_i32 = arith.constant 0 : i32
    %c0_i32_0 = arith.constant 0 : i32
    %c0_i32_1 = arith.constant 0 : i32
    return %c0_i32, %c0_i32_0 : i32, i32
  }
  func.func @transform_3(%arg0: i32) -> (i32, i32) {
    %c0_i32 = arith.constant 0 : i32
    %c0_i32_0 = arith.constant 0 : i32
    return %arg0, %c0_i32 : i32, i32
  }
}

module attributes {stable_mosaic.version = 11 : i64} {
  func.func @_branch_block_kernel(%arg0: i32, %arg1: memref<256x1152xf32, #tpu.memory_space<vmem>>, %arg2: memref<1152x128xf32, #tpu.memory_space<vmem>>, %arg3: memref<1x128xf32, #tpu.memory_space<vmem>>, %arg4: memref<128x128xf32, #tpu.memory_space<vmem>>, %arg5: memref<256x128xf32, #tpu.memory_space<vmem>>, %arg6: memref<256x128xf32, #tpu.memory_space<vmem>>) attributes {dimension_semantics = [#tpu.dimension_semantics<parallel>], iteration_bounds = array<i64: 2>, scalar_prefetch = 0 : i64, scratch_operands = 0 : i64, tpu.core_type = #tpu.core_type<tc>, window_params = [{transform_indices = @transform_0, window_bounds = array<i64: 256, 1152>}, {pipeline_mode = #tpu.pipeline_mode<synchronous>, transform_indices = @transform_1, window_bounds = array<i64: 1152, 128>}, {pipeline_mode = #tpu.pipeline_mode<synchronous>, transform_indices = @transform_2, window_bounds = array<i64: 1, 128>}, {pipeline_mode = #tpu.pipeline_mode<synchronous>, transform_indices = @transform_3, window_bounds = array<i64: 128, 128>}, {transform_indices = @transform_4, window_bounds = array<i64: 256, 128>}, {transform_indices = @transform_5, window_bounds = array<i64: 256, 128>}]} {
    %c0 = arith.constant 0 : index
    %c0_0 = arith.constant 0 : index
    %0 = vector.load %arg1[%c0, %c0_0] : memref<256x1152xf32, #tpu.memory_space<vmem>>, vector<256x1152xf32>
    %c0_1 = arith.constant 0 : index
    %c0_2 = arith.constant 0 : index
    %1 = vector.load %arg2[%c0_1, %c0_2] : memref<1152x128xf32, #tpu.memory_space<vmem>>, vector<1152x128xf32>
    %cst = arith.constant dense<0.000000e+00> : vector<256x128xf32>
    %2 = tpu.matmul %0, %1, %cst {dimension_numbers = #tpu.dot_dimension_numbers<[1], [0], [0], [1], [0, 0, 1, 1], [], []>} : vector<256x1152xf32>, vector<1152x128xf32>, vector<256x128xf32> -> vector<256x128xf32>
    %c0_3 = arith.constant 0 : index
    %c0_4 = arith.constant 0 : index
    %3 = vector.load %arg3[%c0_3, %c0_4] : memref<1x128xf32, #tpu.memory_space<vmem>>, vector<1x128xf32>
    %4 = vector.broadcast %3 : vector<1x128xf32> to vector<256x128xf32>
    %5 = arith.addf %2, %4 : vector<256x128xf32>
    %cst_5 = arith.constant 0.000000e+00 : f32
    %6 = vector.broadcast %cst_5 : f32 to vector<256x128xf32>
    %7 = arith.maximumf %5, %6 : vector<256x128xf32>
    %c0_6 = arith.constant 0 : index
    %c0_7 = arith.constant 0 : index
    %8 = vector.load %arg4[%c0_6, %c0_7] : memref<128x128xf32, #tpu.memory_space<vmem>>, vector<128x128xf32>
    %cst_8 = arith.constant dense<0.000000e+00> : vector<256x128xf32>
    %9 = tpu.matmul %7, %8, %cst_8 {dimension_numbers = #tpu.dot_dimension_numbers<[1], [0], [0], [1], [0, 0, 1, 1], [], []>} : vector<256x128xf32>, vector<128x128xf32>, vector<256x128xf32> -> vector<256x128xf32>
    %c0_9 = arith.constant 0 : index
    %c0_10 = arith.constant 0 : index
    %10 = vector.load %arg5[%c0_9, %c0_10] : memref<256x128xf32, #tpu.memory_space<vmem>>, vector<256x128xf32>
    %11 = arith.addf %9, %10 : vector<256x128xf32>
    %c0_11 = arith.constant 0 : index
    %c0_12 = arith.constant 0 : index
    %12 = vector.load %arg6[%c0_11, %c0_12] : memref<256x128xf32, #tpu.memory_space<vmem>>, vector<256x128xf32>
    tpu.vector_store %arg6[%c0_11, %c0_12], %11 {strides = array<i32>} : memref<256x128xf32, #tpu.memory_space<vmem>>, vector<256x128xf32>,
    return
  }
  func.func @transform_0(%arg0: i32) -> (i32, i32) {
    %c0_i32 = arith.constant 0 : i32
    %c0_i32_0 = arith.constant 0 : i32
    return %arg0, %c0_i32 : i32, i32
  }
  func.func @transform_1(%arg0: i32) -> (i32, i32) {
    %c0_i32 = arith.constant 0 : i32
    %c0_i32_0 = arith.constant 0 : i32
    %c0_i32_1 = arith.constant 0 : i32
    return %c0_i32, %c0_i32_0 : i32, i32
  }
  func.func @transform_2(%arg0: i32) -> (i32, i32) {
    %c0_i32 = arith.constant 0 : i32
    %c0_i32_0 = arith.constant 0 : i32
    %c0_i32_1 = arith.constant 0 : i32
    return %c0_i32, %c0_i32_0 : i32, i32
  }
  func.func @transform_3(%arg0: i32) -> (i32, i32) {
    %c0_i32 = arith.constant 0 : i32
    %c0_i32_0 = arith.constant 0 : i32
    %c0_i32_1 = arith.constant 0 : i32
    return %c0_i32, %c0_i32_0 : i32, i32
  }
  func.func @transform_4(%arg0: i32) -> (i32, i32) {
    %c0_i32 = arith.constant 0 : i32
    %c0_i32_0 = arith.constant 0 : i32
    return %arg0, %c0_i32 : i32, i32
  }
  func.func @transform_5(%arg0: i32) -> (i32, i32) {
    %c0_i32 = arith.constant 0 : i32
    %c0_i32_0 = arith.constant 0 : i32
    return %arg0, %c0_i32 : i32, i32
  }
}

module attributes {stable_mosaic.version = 11 : i64} {
  func.func @_head_pam_kernel(%arg0: i32, %arg1: memref<256x2304xf32, #tpu.memory_space<vmem>>, %arg2: memref<2304x128xf32, #tpu.memory_space<vmem>>, %arg3: memref<1x128xf32, #tpu.memory_space<vmem>>, %arg4: memref<128x128xf32, #tpu.memory_space<vmem>>, %arg5: memref<1x128xf32, #tpu.memory_space<vmem>>, %arg6: memref<128x128xf32, #tpu.memory_space<vmem>>, %arg7: memref<1x128xf32, #tpu.memory_space<vmem>>, %arg8: memref<128x128xf32, #tpu.memory_space<vmem>>, %arg9: memref<1x128xf32, #tpu.memory_space<vmem>>, %arg10: memref<1x1xf32, #tpu.memory_space<vmem>>, %arg11: memref<256x128xf32, #tpu.memory_space<vmem>>) attributes {dimension_semantics = [#tpu.dimension_semantics<parallel>], iteration_bounds = array<i64: 2>, scalar_prefetch = 0 : i64, scratch_operands = 0 : i64, tpu.core_type = #tpu.core_type<tc>, window_params = [{transform_indices = @transform_0, window_bounds = array<i64: 256, 2304>}, {pipeline_mode = #tpu.pipeline_mode<synchronous>, transform_indices = @transform_1, window_bounds = array<i64: 2304, 128>}, {pipeline_mode = #tpu.pipeline_mode<synchronous>, transform_indices = @transform_2, window_bounds = array<i64: 1, 128>}, {pipeline_mode = #tpu.pipeline_mode<synchronous>, transform_indices = @transform_3, window_bounds = array<i64: 128, 128>}, {pipeline_mode = #tpu.pipeline_mode<synchronous>, transform_indices = @transform_4, window_bounds = array<i64: 1, 128>}, {pipeline_mode = #tpu.pipeline_mode<synchronous>, transform_indices = @transform_5, window_bounds = array<i64: 128, 128>}, {pipeline_mode = #tpu.pipeline_mode<synchronous>, transform_indices = @transform_6, window_bounds = array<i64: 1, 128>}, {pipeline_mode = #tpu.pipeline_mode<synchronous>, transform_indices = @transform_7, window_bounds = array<i64: 128, 128>}, {pipeline_mode = #tpu.pipeline_mode<synchronous>, transform_indices = @transform_8, window_bounds = array<i64: 1, 128>}, {pipeline_mode = #tpu.pipeline_mode<synchronous>, transform_indices = @transform_9, window_bounds = array<i64: 1, 1>}, {transform_indices = @transform_10, window_bounds = array<i64: 256, 128>}]} {
    %c0 = arith.constant 0 : index
    %c0_0 = arith.constant 0 : index
    %0 = vector.load %arg1[%c0, %c0_0] : memref<256x2304xf32, #tpu.memory_space<vmem>>, vector<256x2304xf32>
    %c0_1 = arith.constant 0 : index
    %c0_2 = arith.constant 0 : index
    %1 = vector.load %arg2[%c0_1, %c0_2] : memref<2304x128xf32, #tpu.memory_space<vmem>>, vector<2304x128xf32>
    %cst = arith.constant dense<0.000000e+00> : vector<256x128xf32>
    %2 = tpu.matmul %0, %1, %cst {dimension_numbers = #tpu.dot_dimension_numbers<[1], [0], [0], [1], [0, 0, 1, 1], [], []>} : vector<256x2304xf32>, vector<2304x128xf32>, vector<256x128xf32> -> vector<256x128xf32>
    %c0_3 = arith.constant 0 : index
    %c0_4 = arith.constant 0 : index
    %3 = vector.load %arg3[%c0_3, %c0_4] : memref<1x128xf32, #tpu.memory_space<vmem>>, vector<1x128xf32>
    %4 = vector.broadcast %3 : vector<1x128xf32> to vector<256x128xf32>
    %5 = arith.addf %2, %4 : vector<256x128xf32>
    %cst_5 = arith.constant 0.000000e+00 : f32
    %6 = vector.broadcast %cst_5 : f32 to vector<256x128xf32>
    %7 = arith.maximumf %5, %6 : vector<256x128xf32>
    %c0_6 = arith.constant 0 : index
    %c0_7 = arith.constant 0 : index
    %8 = vector.load %arg4[%c0_6, %c0_7] : memref<128x128xf32, #tpu.memory_space<vmem>>, vector<128x128xf32>
    %cst_8 = arith.constant dense<0.000000e+00> : vector<256x128xf32>
    %9 = tpu.matmul %7, %8, %cst_8 {dimension_numbers = #tpu.dot_dimension_numbers<[1], [0], [0], [1], [0, 0, 1, 1], [], []>} : vector<256x128xf32>, vector<128x128xf32>, vector<256x128xf32> -> vector<256x128xf32>
    %c0_9 = arith.constant 0 : index
    %c0_10 = arith.constant 0 : index
    %10 = vector.load %arg5[%c0_9, %c0_10] : memref<1x128xf32, #tpu.memory_space<vmem>>, vector<1x128xf32>
    %11 = vector.broadcast %10 : vector<1x128xf32> to vector<256x128xf32>
    %12 = arith.addf %9, %11 : vector<256x128xf32>
    %c0_11 = arith.constant 0 : index
    %c0_12 = arith.constant 0 : index
    %13 = vector.load %arg6[%c0_11, %c0_12] : memref<128x128xf32, #tpu.memory_space<vmem>>, vector<128x128xf32>
    %cst_13 = arith.constant dense<0.000000e+00> : vector<256x128xf32>
    %14 = tpu.matmul %7, %13, %cst_13 {dimension_numbers = #tpu.dot_dimension_numbers<[1], [0], [0], [1], [0, 0, 1, 1], [], []>} : vector<256x128xf32>, vector<128x128xf32>, vector<256x128xf32> -> vector<256x128xf32>
    %c0_14 = arith.constant 0 : index
    %c0_15 = arith.constant 0 : index
    %15 = vector.load %arg7[%c0_14, %c0_15] : memref<1x128xf32, #tpu.memory_space<vmem>>, vector<1x128xf32>
    %16 = vector.broadcast %15 : vector<1x128xf32> to vector<256x128xf32>
    %17 = arith.addf %14, %16 : vector<256x128xf32>
    %c0_16 = arith.constant 0 : index
    %c0_17 = arith.constant 0 : index
    %18 = vector.load %arg8[%c0_16, %c0_17] : memref<128x128xf32, #tpu.memory_space<vmem>>, vector<128x128xf32>
    %cst_18 = arith.constant dense<0.000000e+00> : vector<256x128xf32>
    %19 = tpu.matmul %7, %18, %cst_18 {dimension_numbers = #tpu.dot_dimension_numbers<[1], [0], [0], [1], [0, 0, 1, 1], [], []>} : vector<256x128xf32>, vector<128x128xf32>, vector<256x128xf32> -> vector<256x128xf32>
    %c0_19 = arith.constant 0 : index
    %c0_20 = arith.constant 0 : index
    %20 = vector.load %arg9[%c0_19, %c0_20] : memref<1x128xf32, #tpu.memory_space<vmem>>, vector<1x128xf32>
    %21 = vector.broadcast %20 : vector<1x128xf32> to vector<256x128xf32>
    %22 = arith.addf %19, %21 : vector<256x128xf32>
    "tpu.trace_start"() <{level = 10 : i32, message = "qc,kc->qk"}> : () -> ()
    %cst_21 = arith.constant dense<0.000000e+00> : vector<256x256xf32>
    %23 = tpu.matmul %12, %17, %cst_21 {dimension_numbers = #tpu.dot_dimension_numbers<[1], [1], [0], [0], [0, 0, 1, 0], [], []>} : vector<256x128xf32>, vector<256x128xf32>, vector<256x256xf32> -> vector<256x256xf32>
    "tpu.trace_stop"() : () -> ()
    %cst_22 = arith.constant dense<0xFF800000> : vector<256xf32>
    %24 = vector.multi_reduction <maximumf>, %23, %cst_22 [1] : vector<256x256xf32> to vector<256xf32>
    %25 = vector.shape_cast %24 : vector<256xf32> to vector<256x1xf32>
    %26 = vector.broadcast %25 : vector<256x1xf32> to vector<256x256xf32>
    %27 = arith.subf %23, %26 : vector<256x256xf32>
    %28 = math.exp %27 : vector<256x256xf32>
    %cst_23 = arith.constant dense<0.000000e+00> : vector<256xf32>
    %29 = vector.multi_reduction <add>, %28, %cst_23 [1] : vector<256x256xf32> to vector<256xf32>
    %30 = vector.shape_cast %29 : vector<256xf32> to vector<256x1xf32>
    %31 = vector.broadcast %30 : vector<256x1xf32> to vector<256x256xf32>
    %32 = arith.divf %28, %31 : vector<256x256xf32>
    %cst_24 = arith.constant dense<0.000000e+00> : vector<256x128xf32>
    %33 = tpu.matmul %32, %22, %cst_24 {dimension_numbers = #tpu.dot_dimension_numbers<[1], [0], [0], [1], [0, 0, 1, 1], [], []>} : vector<256x256xf32>, vector<256x128xf32>, vector<256x128xf32> -> vector<256x128xf32>
    %c0_25 = arith.constant 0 : index
    %c0_26 = arith.constant 0 : index
    %34 = vector.load %arg10[%c0_25, %c0_26] : memref<1x1xf32, #tpu.memory_space<vmem>>, vector<1x1xf32>
    %35 = vector.broadcast %34 : vector<1x1xf32> to vector<256x128xf32>
    %36 = arith.mulf %35, %33 : vector<256x128xf32>
    %37 = arith.addf %36, %7 : vector<256x128xf32>
    %c0_27 = arith.constant 0 : index
    %c0_28 = arith.constant 0 : index
    %38 = vector.load %arg11[%c0_27, %c0_28] : memref<256x128xf32, #tpu.memory_space<vmem>>, vector<256x128xf32>
    tpu.vector_store %arg11[%c0_27, %c0_28], %37 {strides = array<i32>} : memref<256x128xf32, #tpu.memory_space<vmem>>, vector<256x128xf32>,
    return
  }
  func.func @transform_0(%arg0: i32) -> (i32, i32) {
    %c0_i32 = arith.constant 0 : i32
    %c0_i32_0 = arith.constant 0 : i32
    return %arg0, %c0_i32 : i32, i32
  }
  func.func @transform_1(%arg0: i32) -> (i32, i32) {
    %c0_i32 = arith.constant 0 : i32
    %c0_i32_0 = arith.constant 0 : i32
    %c0_i32_1 = arith.constant 0 : i32
    return %c0_i32, %c0_i32_0 : i32, i32
  }
  func.func @transform_2(%arg0: i32) -> (i32, i32) {
    %c0_i32 = arith.constant 0 : i32
    %c0_i32_0 = arith.constant 0 : i32
    %c0_i32_1 = arith.constant 0 : i32
    return %c0_i32, %c0_i32_0 : i32, i32
  }
  func.func @transform_3(%arg0: i32) -> (i32, i32) {
    %c0_i32 = arith.constant 0 : i32
    %c0_i32_0 = arith.constant 0 : i32
    %c0_i32_1 = arith.constant 0 : i32
    return %c0_i32, %c0_i32_0 : i32, i32
  }
  func.func @transform_4(%arg0: i32) -> (i32, i32) {
    %c0_i32 = arith.constant 0 : i32
    %c0_i32_0 = arith.constant 0 : i32
    %c0_i32_1 = arith.constant 0 : i32
    return %c0_i32, %c0_i32_0 : i32, i32
  }
  func.func @transform_5(%arg0: i32) -> (i32, i32) {
    %c0_i32 = arith.constant 0 : i32
    %c0_i32_0 = arith.constant 0 : i32
    %c0_i32_1 = arith.constant 0 : i32
    return %c0_i32, %c0_i32_0 : i32, i32
  }
  func.func @transform_6(%arg0: i32) -> (i32, i32) {
    %c0_i32 = arith.constant 0 : i32
    %c0_i32_0 = arith.constant 0 : i32
    %c0_i32_1 = arith.constant 0 : i32
    return %c0_i32, %c0_i32_0 : i32, i32
  }
  func.func @transform_7(%arg0: i32) -> (i32, i32) {
    %c0_i32 = arith.constant 0 : i32
    %c0_i32_0 = arith.constant 0 : i32
    %c0_i32_1 = arith.constant 0 : i32
    return %c0_i32, %c0_i32_0 : i32, i32
  }
  func.func @transform_8(%arg0: i32) -> (i32, i32) {
    %c0_i32 = arith.constant 0 : i32
    %c0_i32_0 = arith.constant 0 : i32
    %c0_i32_1 = arith.constant 0 : i32
    return %c0_i32, %c0_i32_0 : i32, i32
  }
  func.func @transform_9(%arg0: i32) -> (i32, i32) {
    %c0_i32 = arith.constant 0 : i32
    %c0_i32_0 = arith.constant 0 : i32
    %c0_i32_1 = arith.constant 0 : i32
    return %c0_i32, %c0_i32_0 : i32, i32
  }
  func.func @transform_10(%arg0: i32) -> (i32, i32) {
    %c0_i32 = arith.constant 0 : i32
    %c0_i32_0 = arith.constant 0 : i32
    return %arg0, %c0_i32 : i32, i32
  }
}

module attributes {stable_mosaic.version = 11 : i64} {
  func.func @_out_block_kernel(%arg0: i32, %arg1: memref<256x1152xf32, #tpu.memory_space<vmem>>, %arg2: memref<1152x128xf32, #tpu.memory_space<vmem>>, %arg3: memref<1x128xf32, #tpu.memory_space<vmem>>, %arg4: memref<1x1xf32, #tpu.memory_space<vmem>>, %arg5: memref<128x128xf32, #tpu.memory_space<vmem>>, %arg6: memref<1x128xf32, #tpu.memory_space<vmem>>, %arg7: memref<256x128xf32, #tpu.memory_space<vmem>>) attributes {dimension_semantics = [#tpu.dimension_semantics<parallel>], iteration_bounds = array<i64: 2>, scalar_prefetch = 0 : i64, scratch_operands = 0 : i64, tpu.core_type = #tpu.core_type<tc>, window_params = [{transform_indices = @transform_0, window_bounds = array<i64: 256, 1152>}, {pipeline_mode = #tpu.pipeline_mode<synchronous>, transform_indices = @transform_1, window_bounds = array<i64: 1152, 128>}, {pipeline_mode = #tpu.pipeline_mode<synchronous>, transform_indices = @transform_2, window_bounds = array<i64: 1, 128>}, {pipeline_mode = #tpu.pipeline_mode<synchronous>, transform_indices = @transform_3, window_bounds = array<i64: 1, 1>}, {pipeline_mode = #tpu.pipeline_mode<synchronous>, transform_indices = @transform_4, window_bounds = array<i64: 128, 128>}, {pipeline_mode = #tpu.pipeline_mode<synchronous>, transform_indices = @transform_5, window_bounds = array<i64: 1, 128>}, {transform_indices = @transform_6, window_bounds = array<i64: 256, 128>}]} {
    %c0 = arith.constant 0 : index
    %c0_0 = arith.constant 0 : index
    %0 = vector.load %arg1[%c0, %c0_0] : memref<256x1152xf32, #tpu.memory_space<vmem>>, vector<256x1152xf32>
    %c0_1 = arith.constant 0 : index
    %c0_2 = arith.constant 0 : index
    %1 = vector.load %arg2[%c0_1, %c0_2] : memref<1152x128xf32, #tpu.memory_space<vmem>>, vector<1152x128xf32>
    %cst = arith.constant dense<0.000000e+00> : vector<256x128xf32>
    %2 = tpu.matmul %0, %1, %cst {dimension_numbers = #tpu.dot_dimension_numbers<[1], [0], [0], [1], [0, 0, 1, 1], [], []>} : vector<256x1152xf32>, vector<1152x128xf32>, vector<256x128xf32> -> vector<256x128xf32>
    %c0_3 = arith.constant 0 : index
    %c0_4 = arith.constant 0 : index
    %3 = vector.load %arg3[%c0_3, %c0_4] : memref<1x128xf32, #tpu.memory_space<vmem>>, vector<1x128xf32>
    %4 = vector.broadcast %3 : vector<1x128xf32> to vector<256x128xf32>
    %5 = arith.addf %2, %4 : vector<256x128xf32>
    %cst_5 = arith.constant 0.000000e+00 : f32
    %6 = vector.broadcast %cst_5 : f32 to vector<256x128xf32>
    %7 = arith.cmpf ogt, %5, %6 : vector<256x128xf32>
    %c0_6 = arith.constant 0 : index
    %c0_7 = arith.constant 0 : index
    %8 = vector.load %arg4[%c0_6, %c0_7] : memref<1x1xf32, #tpu.memory_space<vmem>>, vector<1x1xf32>
    %9 = vector.broadcast %8 : vector<1x1xf32> to vector<256x128xf32>
    %10 = arith.mulf %5, %9 : vector<256x128xf32>
    %11 = arith.select %7, %5, %10 : vector<256x128xi1>, vector<256x128xf32>
    %c0_8 = arith.constant 0 : index
    %c0_9 = arith.constant 0 : index
    %12 = vector.load %arg5[%c0_8, %c0_9] : memref<128x128xf32, #tpu.memory_space<vmem>>, vector<128x128xf32>
    %cst_10 = arith.constant dense<0.000000e+00> : vector<256x128xf32>
    %13 = tpu.matmul %11, %12, %cst_10 {dimension_numbers = #tpu.dot_dimension_numbers<[1], [0], [0], [1], [0, 0, 1, 1], [], []>} : vector<256x128xf32>, vector<128x128xf32>, vector<256x128xf32> -> vector<256x128xf32>
    %c0_11 = arith.constant 0 : index
    %c0_12 = arith.constant 0 : index
    %14 = vector.load %arg6[%c0_11, %c0_12] : memref<1x128xf32, #tpu.memory_space<vmem>>, vector<1x128xf32>
    %15 = vector.broadcast %14 : vector<1x128xf32> to vector<256x128xf32>
    %16 = arith.addf %13, %15 : vector<256x128xf32>
    %c0_13 = arith.constant 0 : index
    %c0_14 = arith.constant 0 : index
    %17 = vector.load %arg7[%c0_13, %c0_14] : memref<256x128xf32, #tpu.memory_space<vmem>>, vector<256x128xf32>
    tpu.vector_store %arg7[%c0_13, %c0_14], %16 {strides = array<i32>} : memref<256x128xf32, #tpu.memory_space<vmem>>, vector<256x128xf32>,
    return
  }
  func.func @transform_0(%arg0: i32) -> (i32, i32) {
    %c0_i32 = arith.constant 0 : i32
    %c0_i32_0 = arith.constant 0 : i32
    return %arg0, %c0_i32 : i32, i32
  }
  func.func @transform_1(%arg0: i32) -> (i32, i32) {
    %c0_i32 = arith.constant 0 : i32
    %c0_i32_0 = arith.constant 0 : i32
    %c0_i32_1 = arith.constant 0 : i32
    return %c0_i32, %c0_i32_0 : i32, i32
  }
  func.func @transform_2(%arg0: i32) -> (i32, i32) {
    %c0_i32 = arith.constant 0 : i32
    %c0_i32_0 = arith.constant 0 : i32
    %c0_i32_1 = arith.constant 0 : i32
    return %c0_i32, %c0_i32_0 : i32, i32
  }
  func.func @transform_3(%arg0: i32) -> (i32, i32) {
    %c0_i32 = arith.constant 0 : i32
    %c0_i32_0 = arith.constant 0 : i32
    %c0_i32_1 = arith.constant 0 : i32
    return %c0_i32, %c0_i32_0 : i32, i32
  }
  func.func @transform_4(%arg0: i32) -> (i32, i32) {
    %c0_i32 = arith.constant 0 : i32
    %c0_i32_0 = arith.constant 0 : i32
    %c0_i32_1 = arith.constant 0 : i32
    return %c0_i32, %c0_i32_0 : i32, i32
  }
  func.func @transform_5(%arg0: i32) -> (i32, i32) {
    %c0_i32 = arith.constant 0 : i32
    %c0_i32_0 = arith.constant 0 : i32
    %c0_i32_1 = arith.constant 0 : i32
    return %c0_i32, %c0_i32_0 : i32, i32
  }
  func.func @transform_6(%arg0: i32) -> (i32, i32) {
    %c0_i32 = arith.constant 0 : i32
    %c0_i32_0 = arith.constant 0 : i32
    return %arg0, %c0_i32 : i32, i32
  }
}

</mosaic_0001>

<llo_original>
// kernel: apm_forward_pallas.4
$region0: #{apm_forward_pallas.4}
  #allocation0 [shape = 'u32[]', space=smem, size = 0x4, offset = 0x4, fixed_abs, tag = 'smem constant byte address 0x4 - core index']
  #allocation1 [shape = 'u32[144,128]{1,0:T(1,128)}', space=vmem, size = 0x12000, scoped, tag = 'internal scratch']
  %s0 = inlined_call_operand.hbm [shape: f32[512,32], index: 0, kind: input, shape index: {}]
  %s1 = inlined_call_operand.hbm [shape: f32[32,128], index: 1, kind: input, shape index: {}]
  %s2 = inlined_call_operand.hbm [shape: f32[1,128], index: 2, kind: input, shape index: {}]
  %s3 = inlined_call_operand.vmem [shape: f32[512,128], index: 3, kind: output, shape index: {}]
  %s4 = sld [smem:[#allocation0]]
  $region57: #{apm_forward_pallas.4} parent=0
    _
  %s6 = ssub.s32 1, %s4
  %s7 = scalar_select 0, %s6, %s4
  $region1: #{apm_forward_pallas.4} parent=0
    #allocation2 [shape = 'u8[262144]{0}', space=vmem, size = 0x40000, scoped, tag = 'input window, operand 0']
    #allocation3 [shape = 's32[2]{0}', space=sflag, size = 0x8, scoped, tag = 'scoped memory for apm_forward_pallas.4']
    #allocation4 [shape = 'u8[16384]{0}', space=vmem, size = 0x4000, scoped, tag = 'input window, operand 1, single buffered']
    #allocation5 [shape = 's32[1]{0}', space=sflag, size = 0x4, scoped, tag = 'scoped memory for apm_forward_pallas.4']
    #allocation6 [shape = 'u8[512]{0}', space=vmem, size = 0x400, scoped, tag = 'input window, operand 2, single buffered']
    %8 = vsyncpa [#allocation3], 0
    %s9 = scalar_lea.sflag [#allocation3], 1
    %10 = vsyncpa %s9, 0
    %11 = vsyncpa [#allocation5], 0
    loop: start=0, step=1, limit=4
    $region2: #{apm_forward_pallas.4} parent=1 // loop_pre_header
      _
    $region3: #{apm_forward_pallas.4} parent=1 // loop_header
      %s13 = sphi 0, %s17
      %p14 = scmp.ge.s32.totalorder %s13, 4
      %s23 = sphi 0, %s25
      %s26 = sphi 0, %s23
      %s27 = sphi 0, %s26
      %s43 = sphi 0, %s27
      %s47 = sphi 0, %s47
      %s49 = sphi 0, %s47
      %s50 = sphi 0, %s49
      %s64 = sphi 0, %s50
      %s68 = sphi 0, %s68
      %s70 = sphi 0, %s68
      %s71 = sphi 0, %s70
      %s85 = sphi 0, %s71
      %s91 = sphi 0, %s93
      %s94 = sphi 0, %s91
      %s95 = sphi 0, %s94
      %s111 = sphi 0, %s95
    $region4: #{apm_forward_pallas.4} parent=1 // loop_header_branch
      %16 = sbr.rel (%p14) target = $region8
    $region5: #{apm_forward_pallas.4} parent=1 // loop_body
      %s18 = ssub.s32 %s13, 1
      %s19 = ssub.s32 %s13, 2
      %s20 = sadd.s32 %s13, 1
      %s21 = ssub.s32 %s13, %s20
      %p22 = scmp.eq.s32.totalorder %s21, 0
      %s24 = sadd.s32 %s23, 1
      %s25 = scalar_select %p22, %s23, %s24
      %p28 = pneg %p22
      %p29 = scmp.eq.s32.totalorder %s13, 1
      %p30 = por %p28, %p29
      %p31 = scmp.ne.s32.totalorder %s23, %s26
      %p32 = scmp.eq.s32.totalorder %s13, 0
      %p33 = por %p31, %p32
      %p34 = scmp.ne.s32.totalorder %s23, %s26
      %p35 = scmp.eq.s32.totalorder %s18, 1
      %p36 = por %p34, %p35
      %p37 = scmp.ne.s32.totalorder %s26, %s27
      %p38 = scmp.eq.s32.totalorder %s18, 0
      %p39 = por %p37, %p38
      %p40 = scmp.ne.s32.totalorder %s26, %s27
      %p41 = scmp.eq.s32.totalorder %s19, 1
      %p42 = por %p40, %p41
      %p44 = scmp.ne.s32.totalorder %s27, %s43
      %p45 = scmp.eq.s32.totalorder %s19, 0
      %p46 = por %p44, %p45
      %s48 = sadd.s32 %s47, 1
      %p51 = scmp.eq.s32.totalorder %s13, 1
      %p52 = scmp.ne.s32.totalorder %s47, %s49
      %p53 = scmp.eq.s32.totalorder %s13, 0
      %p54 = por %p52, %p53
      %p55 = scmp.ne.s32.totalorder %s47, %s49
      %p56 = scmp.eq.s32.totalorder %s18, 1
      %p57 = por %p55, %p56
      %p58 = scmp.ne.s32.totalorder %s49, %s50
      %p59 = scmp.eq.s32.totalorder %s18, 0
      %p60 = por %p58, %p59
      %p61 = scmp.ne.s32.totalorder %s49, %s50
      %p62 = scmp.eq.s32.totalorder %s19, 1
      %p63 = por %p61, %p62
      %p65 = scmp.ne.s32.totalorder %s50, %s64
      %p66 = scmp.eq.s32.totalorder %s19, 0
      %p67 = por %p65, %p66
      %s69 = sadd.s32 %s68, 1
      %p72 = scmp.eq.s32.totalorder %s13, 1
      %p73 = scmp.ne.s32.totalorder %s68, %s70
      %p74 = scmp.eq.s32.totalorder %s13, 0
      %p75 = por %p73, %p74
      %p76 = scmp.ne.s32.totalorder %s68, %s70
      %p77 = scmp.eq.s32.totalorder %s18, 1
      %p78 = por %p76, %p77
      %p79 = scmp.ne.s32.totalorder %s70, %s71
      %p80 = scmp.eq.s32.totalorder %s18, 0
      %p81 = por %p79, %p80
      %p82 = scmp.ne.s32.totalorder %s70, %s71
      %p83 = scmp.eq.s32.totalorder %s19, 1
      %p84 = por %p82, %p83
      %p86 = scmp.ne.s32.totalorder %s71, %s85
      %p87 = scmp.eq.s32.totalorder %s19, 0
      %p88 = por %p86, %p87
      %s89 = ssub.s32 %s13, %s20
      %p90 = scmp.eq.s32.totalorder %s89, 0
      %s92 = sadd.s32 %s91, 1
      %s93 = scalar_select %p90, %s91, %s92
      %p96 = pneg %p90
      %p97 = scmp.eq.s32.totalorder %s13, 1
      %p98 = por %p96, %p97
      %p99 = scmp.ne.s32.totalorder %s91, %s94
      %p100 = scmp.eq.s32.totalorder %s13, 0
      %p101 = por %p99, %p100
      %p102 = scmp.ne.s32.totalorder %s91, %s94
      %p103 = scmp.eq.s32.totalorder %s18, 1
      %p104 = por %p102, %p103
      %p105 = scmp.ne.s32.totalorder %s94, %s95
      %p106 = scmp.eq.s32.totalorder %s18, 0
      %p107 = por %p105, %p106
      %p108 = scmp.ne.s32.totalorder %s94, %s95
      %p109 = scmp.eq.s32.totalorder %s19, 1
      %p110 = por %p108, %p109
      %p112 = scmp.ne.s32.totalorder %s95, %s111
      %p113 = scmp.eq.s32.totalorder %s19, 0
      %p114 = por %p112, %p113
      %p115 = scmp.le.s32.totalorder 1, %s13
      %p116 = scmp.lt.s32.totalorder %s13, 3
      %p117 = pnand %p115, %p116
      %p118 = pneg %p117
      // Predicated region
      $region9: #{apm_forward_pallas.4} parent=5 // pred_check
        _
      $region10: #{apm_forward_pallas.4} parent=5 // pred_check_branch
        %120 = sbr.rel (%p117) target = $region12
      $region11: #{apm_forward_pallas.4} parent=5 // pred_region
        %s121 = ssub.s32 %s13, 1
        // Predicated region
        $region13: #{apm_forward_pallas.4} parent=11 // pred_check
          %p122 = pneg %p60
        $region14: #{apm_forward_pallas.4} parent=11 // pred_check_branch
          %124 = sbr.rel (%p122) target = $region16
        $region15: #{apm_forward_pallas.4} parent=11 // pred_region
          %s126 = ssub.s32 512, 512
          %127 = vsyncadd [#allocation5], %s126
          %s128 = sshll.u32 [#allocation4], 4
          %s129 = int_to_ptr.vmem [resolvable:$true] %s128
          %134 = dma.hbm_to_vmem [thread:$0]  %s1, 512, %s129, [#allocation5], 128, 128, 8
        $region16: #{apm_forward_pallas.4} parent=11 // pred_fallthru
          _
        // Predicated region
        $region17: #{apm_forward_pallas.4} parent=11 // pred_check
          %p135 = pneg %p81
        $region18: #{apm_forward_pallas.4} parent=11 // pred_check_branch
          %137 = sbr.rel (%p135) target = $region20
        $region19: #{apm_forward_pallas.4} parent=11 // pred_region
          %s139 = ssub.s32 16, 16
          %140 = vsyncadd [#allocation5], %s139
          %s142 = sshll.u32 [#allocation6], 4
          %s143 = int_to_ptr.vmem [resolvable:$true] %s142
          %145 = dma.hbm_to_vmem [thread:$0]  %s2, 16, %s143, [#allocation5]
        $region20: #{apm_forward_pallas.4} parent=11 // pred_fallthru
          _
      $region12: #{apm_forward_pallas.4} parent=5 // pred_fallthru
        _
      %p146 = scmp.lt.s32.totalorder %s13, 2
      // Predicated region
      $region21: #{apm_forward_pallas.4} parent=5 // pred_check
        %p147 = pneg %p146
      $region22: #{apm_forward_pallas.4} parent=5 // pred_check_branch
        %149 = sbr.rel (%p147) target = $region24
      $region23: #{apm_forward_pallas.4} parent=5 // pred_region
        // Predicated region
        $region25: #{apm_forward_pallas.4} parent=23 // pred_check
          %p150 = pneg %p33
        $region26: #{apm_forward_pallas.4} parent=23 // pred_check_branch
          %152 = sbr.rel (%p150) target = $region28
        $region27: #{apm_forward_pallas.4} parent=23 // pred_region
          %s153 = sand.u32 %s23, 1
          %s154 = scalar_lea.sflag [#allocation3], %s153
          %s155 = sand.u32 %s23, 1
          %s156 = smul.addr %s155, 256
          %s157 = scalar_lea.vmem [#allocation2], %s156
          %s158 = smul.u32 32, %s13
          %s160 = ssub.s32 4096, 4096
          %161 = vsyncadd %s154, %s160
          %s162 = smul.addr %s158, 128
          %s163 = scalar_lea.hbm %s0, %s162
          %s164 = sshll.u32 %s157, 4
          %s165 = int_to_ptr.vmem [resolvable:$true] %s164
          %170 = dma.hbm_to_vmem [thread:$0]  %s163, 4096, %s165, %s154, 128, 128, 8
        $region28: #{apm_forward_pallas.4} parent=23 // pred_fallthru
          _
      $region24: #{apm_forward_pallas.4} parent=5 // pred_fallthru
        _
      %p171 = scmp.le.s32.totalorder 1, %s13
      %p172 = scmp.lt.s32.totalorder %s13, 3
      %p173 = pnand %p171, %p172
      %p174 = pneg %p173
      // Predicated region
      $region29: #{apm_forward_pallas.4} parent=5 // pred_check
        _
      $region30: #{apm_forward_pallas.4} parent=5 // pred_check_branch
        %176 = sbr.rel (%p173) target = $region32
      $region31: #{apm_forward_pallas.4} parent=5 // pred_region
        %s177 = ssub.s32 %s13, 1
        %s178 = sand.u32 %s26, 1
        %s179 = scalar_lea.sflag [#allocation3], %s178
        %s180 = sand.u32 %s26, 1
        %s181 = smul.addr %s180, 256
        %s182 = scalar_lea.vmem [#allocation2], %s181
        // Predicated region
        $region33: #{apm_forward_pallas.4} parent=31 // pred_check
          %p183 = pneg %p39
        $region34: #{apm_forward_pallas.4} parent=31 // pred_check_branch
          %185 = sbr.rel (%p183) target = $region36
        $region35: #{apm_forward_pallas.4} parent=31 // pred_region
          %186 = dma.done %s179, 4096
        $region36: #{apm_forward_pallas.4} parent=31 // pred_fallthru
          _
        // Predicated region
        $region37: #{apm_forward_pallas.4} parent=31 // pred_check
          %p187 = pneg %p60
        $region38: #{apm_forward_pallas.4} parent=31 // pred_check_branch
          %189 = sbr.rel (%p187) target = $region40
        $region39: #{apm_forward_pallas.4} parent=31 // pred_region
          %190 = dma.done [#allocation5], 512
        $region40: #{apm_forward_pallas.4} parent=31 // pred_fallthru
          _
        // Predicated region
        $region41: #{apm_forward_pallas.4} parent=31 // pred_check
          %p191 = pneg %p81
        $region42: #{apm_forward_pallas.4} parent=31 // pred_check_branch
          %193 = sbr.rel (%p191) target = $region44
        $region43: #{apm_forward_pallas.4} parent=31 // pred_region
          %194 = dma.done [#allocation5], 16
        $region44: #{apm_forward_pallas.4} parent=31 // pred_fallthru
          _
        %s195 = sand.u32 %s26, 1
        %s196 = scalar_lea.sflag [#allocation3], %s195
        %s197 = sand.u32 %s26, 1
        %s198 = smul.addr %s197, 256
        %s199 = scalar_lea.vmem [#allocation2], %s198
        %p200 = pneg %p39
        %p201 = pneg %p36
        %p202 = pneg %p60
        %p203 = pneg %p57
        %p204 = pneg %p81
        %p205 = pneg %p78
        %p206 = pneg %p107
        %p207 = pneg %p104
        %s208 = smul.u32 32, %s18
        %p209 = scmp.lt.s32.totalorder %s208, 63
        %s210 = scalar_select %p209, %s208, 63
        %s211 = smul.addr %s210, 8
        %s212 = scalar_lea.vmem %s3, %s211
        %s213 = smul.u32 32, %s18
        %s214 = smul.u32 32, %s18
        %p215 = scmp.lt.s32.totalorder %s214, 63
        %s216 = scalar_select %p215, %s214, 63
        %s217 = smul.addr %s216, 8
        %s218 = scalar_lea.vmem %s3, %s217
        %s219 = smul.u32 32, %s18
        %v220 = vld [vmem:[%s182] sm:$0xff]
        %v221 = vld [vmem:[%s182 + $0x8] sm:$0xff]
        %v222 = vld [vmem:[%s182 + $0x10] sm:$0xff]
        %v223 = vld [vmem:[%s182 + $0x18] sm:$0xff]
        %v224 = vld [vmem:[%s182 + $0x20] sm:$0xff]
        %v225 = vld [vmem:[%s182 + $0x28] sm:$0xff]
        %v226 = vld [vmem:[%s182 + $0x30] sm:$0xff]
        %v227 = vld [vmem:[%s182 + $0x38] sm:$0xff]
        %v228 = vld [vmem:[%s182 + $0x40] sm:$0xff]
        %v229 = vld [vmem:[%s182 + $0x48] sm:$0xff]
        %v230 = vld [vmem:[%s182 + $0x50] sm:$0xff]
        %v231 = vld [vmem:[%s182 + $0x58] sm:$0xff]
        %v232 = vld [vmem:[%s182 + $0x60] sm:$0xff]
        %v233 = vld [vmem:[%s182 + $0x68] sm:$0xff]
        %v234 = vld [vmem:[%s182 + $0x70] sm:$0xff]
        %v235 = vld [vmem:[%s182 + $0x78] sm:$0xff]
        %v236 = vld [vmem:[%s182 + $0x80] sm:$0xff]
        %v237 = vld [vmem:[%s182 + $0x88] sm:$0xff]
        %v238 = vld [vmem:[%s182 + $0x90] sm:$0xff]
        %v239 = vld [vmem:[%s182 + $0x98] sm:$0xff]
        %v240 = vld [vmem:[%s182 + $0xa0] sm:$0xff]
        %v241 = vld [vmem:[%s182 + $0xa8] sm:$0xff]
        %v242 = vld [vmem:[%s182 + $0xb0] sm:$0xff]
        %v243 = vld [vmem:[%s182 + $0xb8] sm:$0xff]
        %v244 = vld [vmem:[%s182 + $0xc0] sm:$0xff]
        %v245 = vld [vmem:[%s182 + $0xc8] sm:$0xff]
        %v246 = vld [vmem:[%s182 + $0xd0] sm:$0xff]
        %v247 = vld [vmem:[%s182 + $0xd8] sm:$0xff]
        %v248 = vld [vmem:[%s182 + $0xe0] sm:$0xff]
        %v249 = vld [vmem:[%s182 + $0xe8] sm:$0xff]
        %v250 = vld [vmem:[%s182 + $0xf0] sm:$0xff]
        %v251 = vld [vmem:[%s182 + $0xf8] sm:$0xff]
        %v252 = vld [vmem:[#allocation4] sm:$0xff]
        %v253 = vld [vmem:[#allocation4 + $0x8] sm:$0xff]
        %v254 = vld [vmem:[#allocation4 + $0x10] sm:$0xff]
        %v255 = vld [vmem:[#allocation4 + $0x18] sm:$0xff]
        %v256 = vld [vmem:[#allocation6] sm:$0x1]
        %v258 = vlaneseq
        %v259 = vshrl.u32 %v258, 7
        %v260 = vsub.s32 0, %v259
        %v261 = vrot.slane %v256, %v260
        %vm263 = vcmask 261120
        %v265 = vsel %vm263, %v220, 0
        %v268 = vsel %vm263, %v221, 0
        %v271 = vsel %vm263, %v222, 0
        %v274 = vsel %vm263, %v223, 0
        %v277 = vsel %vm263, %v224, 0
        %v280 = vsel %vm263, %v225, 0
        %v283 = vsel %vm263, %v226, 0
        %v286 = vsel %vm263, %v227, 0
        %v289 = vsel %vm263, %v228, 0
        %v292 = vsel %vm263, %v229, 0
        %v295 = vsel %vm263, %v230, 0
        %v298 = vsel %vm263, %v231, 0
        %v301 = vsel %vm263, %v232, 0
        %v304 = vsel %vm263, %v233, 0
        %v307 = vsel %vm263, %v234, 0
        %v310 = vsel %vm263, %v235, 0
        %v313 = vsel %vm263, %v236, 0
        %v316 = vsel %vm263, %v237, 0
        %v319 = vsel %vm263, %v238, 0
        %v322 = vsel %vm263, %v239, 0
        %v325 = vsel %vm263, %v240, 0
        %v328 = vsel %vm263, %v241, 0
        %v331 = vsel %vm263, %v242, 0
        %v334 = vsel %vm263, %v243, 0
        %v337 = vsel %vm263, %v244, 0
        %v340 = vsel %vm263, %v245, 0
        %v343 = vsel %vm263, %v246, 0
        %v346 = vsel %vm263, %v247, 0
        %v349 = vsel %vm263, %v248, 0
        %v352 = vsel %vm263, %v249, 0
        %v355 = vsel %vm263, %v250, 0
        %v358 = vsel %vm263, %v251, 0
        %360 = vmatprep.subr.mxu0 0.0
        %361 = vmatpush1.msra.mxu0 %v252
        %362 = vmatprep.subr.mxu0 0.0
        %363 = vmatpush1.msra.mxu0 %v253
        %364 = vmatprep.subr.mxu0 0.0
        %365 = vmatpush1.msra.mxu0 %v254
        %366 = vmatprep.subr.mxu0 0.0
        %367 = vmatpush1.msra.mxu0 %v255
        %368 = vmatprep.subr.mxu0 0.0
        %369 = vmatpush1.msra.mxu0 0.0
        %370 = vmatprep.subr.mxu0 0.0
        %371 = vmatpush1.msra.mxu0 0.0
        %372 = vmatprep.subr.mxu0 0.0
        %373 = vmatpush1.msra.mxu0 0.0
        %374 = vmatprep.subr.mxu0 0.0
        %375 = vmatpush1.msra.mxu0 0.0
        %376 = vmatprep.subr.mxu0 0.0
        %377 = vmatpush1.msra.mxu0 0.0
        %378 = vmatprep.subr.mxu0 0.0
        %379 = vmatpush1.msra.mxu0 0.0
        %380 = vmatprep.subr.mxu0 0.0
        %381 = vmatpush1.msra.mxu0 0.0
        %382 = vmatprep.subr.mxu0 0.0
        %383 = vmatpush1.msra.mxu0 0.0
        %384 = vmatprep.subr.mxu0 0.0
        %385 = vmatpush1.msra.mxu0 0.0
        %386 = vmatprep.subr.mxu0 0.0
        %387 = vmatpush1.msra.mxu0 0.0
        %388 = vmatprep.subr.mxu0 0.0
        %389 = vmatpush1.msra.mxu0 0.0
        %390 = vmatprep.subr.mxu0 0.0
        %391 = vmatpush1.msra.mxu0 0.0
        %392 = vmatprep.subr.mxu0 0.0
        %393 = vmatpush1.msra.mxu0 0.0
        %394 = vmatprep.subr.mxu0 0.0
        %395 = vmatpush1.msra.mxu0 0.0
        %396 = vmatprep.subr.mxu0 0.0
        %397 = vmatpush1.msra.mxu0 0.0
        %398 = vmatprep.subr.mxu0 0.0
        %399 = vmatpush1.msra.mxu0 0.0
        %400 = vmatprep.subr.mxu0 0.0
        %401 = vmatpush1.msra.mxu0 0.0
        %402 = vmatprep.subr.mxu0 0.0
        %403 = vmatpush1.msra.mxu0 0.0
        %404 = vmatprep.subr.mxu0 0.0
        %405 = vmatpush1.msra.mxu0 0.0
        %406 = vmatprep.subr.mxu0 0.0
        %407 = vmatpush1.msra.mxu0 0.0
        %408 = vmatprep.subr.mxu0 0.0
        %409 = vmatpush1.msra.mxu0 0.0
        %410 = vmatprep.subr.mxu0 0.0
        %411 = vmatpush1.msra.mxu0 0.0
        %412 = vmatprep.subr.mxu0 0.0
        %413 = vmatpush1.msra.mxu0 0.0
        %414 = vmatprep.subr.mxu0 0.0
        %415 = vmatpush1.msra.mxu0 0.0
        %416 = vmatprep.subr.mxu0 0.0
        %417 = vmatpush1.msra.mxu0 0.0
        %418 = vmatprep.subr.mxu0 0.0
        %419 = vmatpush1.msra.mxu0 0.0
        %420 = vmatprep.subr.mxu0 0.0
        %421 = vmatpush1.msra.mxu0 0.0
        %422 = vmatprep.subr.mxu0 0.0
        %423 = vmatpush1.msra.mxu0 0.0
        %424 = vmatprep.mubr.f32.mxu0 0.0
        %425 = vmatmul.mubr.f32.gmra.mrb[0].mxu0 %v265
        %v426 = vpop.f32.mrb[0].mxu0
        %v427 = vadd.f32 %v261, %v426
        %v428 = vpop.f32.mrb[0].mxu0
        %429 = vmatprep.mubr.f32.mxu0 0.0
        %430 = vmatmul.mubr.f32.gmra.mrb[0].mxu0 %v268
        %v431 = vpop.f32.mrb[0].mxu0
        %v432 = vadd.f32 %v261, %v431
        %v433 = vpop.f32.mrb[0].mxu0
        %434 = vmatprep.mubr.f32.mxu0 0.0
        %435 = vmatmul.mubr.f32.gmra.mrb[0].mxu0 %v271
        %v436 = vpop.f32.mrb[0].mxu0
        %v437 = vadd.f32 %v261, %v436
        %v438 = vpop.f32.mrb[0].mxu0
        %439 = vmatprep.mubr.f32.mxu0 0.0
        %440 = vmatmul.mubr.f32.gmra.mrb[0].mxu0 %v274
        %v441 = vpop.f32.mrb[0].mxu0
        %v442 = vadd.f32 %v261, %v441
        %v443 = vpop.f32.mrb[0].mxu0
        %444 = vmatprep.mubr.f32.mxu0 0.0
        %445 = vmatmul.mubr.f32.gmra.mrb[0].mxu0 %v277
        %v446 = vpop.f32.mrb[0].mxu0
        %v447 = vadd.f32 %v261, %v446
        %v448 = vpop.f32.mrb[0].mxu0
        %449 = vmatprep.mubr.f32.mxu0 0.0
        %450 = vmatmul.mubr.f32.gmra.mrb[0].mxu0 %v280
        %v451 = vpop.f32.mrb[0].mxu0
        %v452 = vadd.f32 %v261, %v451
        %v453 = vpop.f32.mrb[0].mxu0
        %454 = vmatprep.mubr.f32.mxu0 0.0
        %455 = vmatmul.mubr.f32.gmra.mrb[0].mxu0 %v283
        %v456 = vpop.f32.mrb[0].mxu0
        %v457 = vadd.f32 %v261, %v456
        %v458 = vpop.f32.mrb[0].mxu0
        %459 = vmatprep.mubr.f32.mxu0 0.0
        %460 = vmatmul.mubr.f32.gmra.mrb[0].mxu0 %v286
        %v461 = vpop.f32.mrb[0].mxu0
        %v462 = vadd.f32 %v261, %v461
        %v463 = vpop.f32.mrb[0].mxu0
        %464 = vmatprep.mubr.f32.mxu0 0.0
        %465 = vmatmul.mubr.f32.gmra.mrb[0].mxu0 %v289
        %v466 = vpop.f32.mrb[0].mxu0
        %v467 = vadd.f32 %v261, %v466
        %v468 = vpop.f32.mrb[0].mxu0
        %469 = vmatprep.mubr.f32.mxu0 0.0
        %470 = vmatmul.mubr.f32.gmra.mrb[0].mxu0 %v292
        %v471 = vpop.f32.mrb[0].mxu0
        %v472 = vadd.f32 %v261, %v471
        %v473 = vpop.f32.mrb[0].mxu0
        %474 = vmatprep.mubr.f32.mxu0 0.0
        %475 = vmatmul.mubr.f32.gmra.mrb[0].mxu0 %v295
        %v476 = vpop.f32.mrb[0].mxu0
        %v477 = vadd.f32 %v261, %v476
        %v478 = vpop.f32.mrb[0].mxu0
        %479 = vmatprep.mubr.f32.mxu0 0.0
        %480 = vmatmul.mubr.f32.gmra.mrb[0].mxu0 %v298
        %v481 = vpop.f32.mrb[0].mxu0
        %v482 = vadd.f32 %v261, %v481
        %v483 = vpop.f32.mrb[0].mxu0
        %484 = vmatprep.mubr.f32.mxu0 0.0
        %485 = vmatmul.mubr.f32.gmra.mrb[0].mxu0 %v301
        %v486 = vpop.f32.mrb[0].mxu0
        %v487 = vadd.f32 %v261, %v486
        %v488 = vpop.f32.mrb[0].mxu0
        %489 = vmatprep.mubr.f32.mxu0 0.0
        %490 = vmatmul.mubr.f32.gmra.mrb[0].mxu0 %v304
        %v491 = vpop.f32.mrb[0].mxu0
        %v492 = vadd.f32 %v261, %v491
        %v493 = vpop.f32.mrb[0].mxu0
        %494 = vmatprep.mubr.f32.mxu0 0.0
        %495 = vmatmul.mubr.f32.gmra.mrb[0].mxu0 %v307
        %v496 = vpop.f32.mrb[0].mxu0
        %v497 = vadd.f32 %v261, %v496
        %v498 = vpop.f32.mrb[0].mxu0
        %499 = vmatprep.mubr.f32.mxu0 0.0
        %500 = vmatmul.mubr.f32.gmra.mrb[0].mxu0 %v310
        %v501 = vpop.f32.mrb[0].mxu0
        %v502 = vadd.f32 %v261, %v501
        %v503 = vpop.f32.mrb[0].mxu0
        %504 = vmatprep.mubr.f32.mxu0 0.0
        %505 = vmatmul.mubr.f32.gmra.mrb[0].mxu0 %v313
        %v506 = vpop.f32.mrb[0].mxu0
        %v507 = vadd.f32 %v261, %v506
        %v508 = vpop.f32.mrb[0].mxu0
        %509 = vmatprep.mubr.f32.mxu0 0.0
        %510 = vmatmul.mubr.f32.gmra.mrb[0].mxu0 %v316
        %v511 = vpop.f32.mrb[0].mxu0
        %v512 = vadd.f32 %v261, %v511
        %v513 = vpop.f32.mrb[0].mxu0
        %514 = vmatprep.mubr.f32.mxu0 0.0
        %515 = vmatmul.mubr.f32.gmra.mrb[0].mxu0 %v319
        %v516 = vpop.f32.mrb[0].mxu0
        %v517 = vadd.f32 %v261, %v516
        %v518 = vpop.f32.mrb[0].mxu0
        %519 = vmatprep.mubr.f32.mxu0 0.0
        %520 = vmatmul.mubr.f32.gmra.mrb[0].mxu0 %v322
        %v521 = vpop.f32.mrb[0].mxu0
        %v522 = vadd.f32 %v261, %v521
        %v523 = vpop.f32.mrb[0].mxu0
        %524 = vmatprep.mubr.f32.mxu0 0.0
        %525 = vmatmul.mubr.f32.gmra.mrb[0].mxu0 %v325
        %v526 = vpop.f32.mrb[0].mxu0
        %v527 = vadd.f32 %v261, %v526
        %v528 = vpop.f32.mrb[0].mxu0
        %529 = vmatprep.mubr.f32.mxu0 0.0
        %530 = vmatmul.mubr.f32.gmra.mrb[0].mxu0 %v328
        %v531 = vpop.f32.mrb[0].mxu0
        %v532 = vadd.f32 %v261, %v531
        %v533 = vpop.f32.mrb[0].mxu0
        %534 = vmatprep.mubr.f32.mxu0 0.0
        %535 = vmatmul.mubr.f32.gmra.mrb[0].mxu0 %v331
        %v536 = vpop.f32.mrb[0].mxu0
        %v537 = vadd.f32 %v261, %v536
        %v538 = vpop.f32.mrb[0].mxu0
        %539 = vmatprep.mubr.f32.mxu0 0.0
        %540 = vmatmul.mubr.f32.gmra.mrb[0].mxu0 %v334
        %v541 = vpop.f32.mrb[0].mxu0
        %v542 = vadd.f32 %v261, %v541
        %v543 = vpop.f32.mrb[0].mxu0
        %544 = vmatprep.mubr.f32.mxu0 0.0
        %545 = vmatmul.mubr.f32.gmra.mrb[0].mxu0 %v337
        %v546 = vpop.f32.mrb[0].mxu0
        %v547 = vadd.f32 %v261, %v546
        %v548 = vpop.f32.mrb[0].mxu0
        %549 = vmatprep.mubr.f32.mxu0 0.0
        %550 = vmatmul.mubr.f32.gmra.mrb[0].mxu0 %v340
        %v551 = vpop.f32.mrb[0].mxu0
        %v552 = vadd.f32 %v261, %v551
        %v553 = vpop.f32.mrb[0].mxu0
        %554 = vmatprep.mubr.f32.mxu0 0.0
        %555 = vmatmul.mubr.f32.gmra.mrb[0].mxu0 %v343
        %v556 = vpop.f32.mrb[0].mxu0
        %v557 = vadd.f32 %v261, %v556
        %v558 = vpop.f32.mrb[0].mxu0
        %559 = vmatprep.mubr.f32.mxu0 0.0
        %560 = vmatmul.mubr.f32.gmra.mrb[0].mxu0 %v346
        %v561 = vpop.f32.mrb[0].mxu0
        %v562 = vadd.f32 %v261, %v561
        %v563 = vpop.f32.mrb[0].mxu0
        %564 = vmatprep.mubr.f32.mxu0 0.0
        %565 = vmatmul.mubr.f32.gmra.mrb[0].mxu0 %v349
        %v566 = vpop.f32.mrb[0].mxu0
        %v567 = vadd.f32 %v261, %v566
        %v568 = vpop.f32.mrb[0].mxu0
        %569 = vmatprep.mubr.f32.mxu0 0.0
        %570 = vmatmul.mubr.f32.gmra.mrb[0].mxu0 %v352
        %v571 = vpop.f32.mrb[0].mxu0
        %v572 = vadd.f32 %v261, %v571
        %v573 = vpop.f32.mrb[0].mxu0
        %574 = vmatprep.mubr.f32.mxu0 0.0
        %575 = vmatmul.mubr.f32.gmra.mrb[0].mxu0 %v355
        %v576 = vpop.f32.mrb[0].mxu0
        %v577 = vadd.f32 %v261, %v576
        %v578 = vpop.f32.mrb[0].mxu0
        %579 = vmatprep.mubr.f32.mxu0 0.0
        %580 = vmatmul.mubr.f32.gmra.mrb[0].mxu0 %v358
        %v581 = vpop.f32.mrb[0].mxu0
        %v582 = vadd.f32 %v261, %v581
        %v583 = vpop.f32.mrb[0].mxu0
        %584 = vdwg.mxu0
        %v585 = vmax.f32 %v427, 0.0
        %v586 = vmax.f32 %v432, 0.0
        %v587 = vmax.f32 %v437, 0.0
        %v588 = vmax.f32 %v442, 0.0
        %v589 = vmax.f32 %v447, 0.0
        %v590 = vmax.f32 %v452, 0.0
        %v591 = vmax.f32 %v457, 0.0
        %v592 = vmax.f32 %v462, 0.0
        %v593 = vmax.f32 %v467, 0.0
        %v594 = vmax.f32 %v472, 0.0
        %v595 = vmax.f32 %v477, 0.0
        %v596 = vmax.f32 %v482, 0.0
        %v597 = vmax.f32 %v487, 0.0
        %v598 = vmax.f32 %v492, 0.0
        %v599 = vmax.f32 %v497, 0.0
        %v600 = vmax.f32 %v502, 0.0
        %v601 = vmax.f32 %v507, 0.0
        %v602 = vmax.f32 %v512, 0.0
        %v603 = vmax.f32 %v517, 0.0
        %v604 = vmax.f32 %v522, 0.0
        %v605 = vmax.f32 %v527, 0.0
        %v606 = vmax.f32 %v532, 0.0
        %v607 = vmax.f32 %v537, 0.0
        %v608 = vmax.f32 %v542, 0.0
        %v609 = vmax.f32 %v547, 0.0
        %v610 = vmax.f32 %v552, 0.0
        %v611 = vmax.f32 %v557, 0.0
        %v612 = vmax.f32 %v562, 0.0
        %v613 = vmax.f32 %v567, 0.0
        %v614 = vmax.f32 %v572, 0.0
        %v615 = vmax.f32 %v577, 0.0
        %v616 = vmax.f32 %v582, 0.0
        %617 = vst [vmem:[%s218] sm:$0xff] %v585
        %618 = vst [vmem:[%s218 + $0x8] sm:$0xff] %v586
        %619 = vst [vmem:[%s218 + $0x10] sm:$0xff] %v587
        %620 = vst [vmem:[%s218 + $0x18] sm:$0xff] %v588
        %621 = vst [vmem:[%s218 + $0x20] sm:$0xff] %v589
        %622 = vst [vmem:[%s218 + $0x28] sm:$0xff] %v590
        %623 = vst [vmem:[%s218 + $0x30] sm:$0xff] %v591
        %624 = vst [vmem:[%s218 + $0x38] sm:$0xff] %v592
        %625 = vst [vmem:[%s218 + $0x40] sm:$0xff] %v593
        %626 = vst [vmem:[%s218 + $0x48] sm:$0xff] %v594
        %627 = vst [vmem:[%s218 + $0x50] sm:$0xff] %v595
        %628 = vst [vmem:[%s218 + $0x58] sm:$0xff] %v596
        %629 = vst [vmem:[%s218 + $0x60] sm:$0xff] %v597
        %630 = vst [vmem:[%s218 + $0x68] sm:$0xff] %v598
        %631 = vst [vmem:[%s218 + $0x70] sm:$0xff] %v599
        %632 = vst [vmem:[%s218 + $0x78] sm:$0xff] %v600
        %633 = vst [vmem:[%s218 + $0x80] sm:$0xff] %v601
        %634 = vst [vmem:[%s218 + $0x88] sm:$0xff] %v602
        %635 = vst [vmem:[%s218 + $0x90] sm:$0xff] %v603
        %636 = vst [vmem:[%s218 + $0x98] sm:$0xff] %v604
        %637 = vst [vmem:[%s218 + $0xa0] sm:$0xff] %v605
        %638 = vst [vmem:[%s218 + $0xa8] sm:$0xff] %v606
        %639 = vst [vmem:[%s218 + $0xb0] sm:$0xff] %v607
        %640 = vst [vmem:[%s218 + $0xb8] sm:$0xff] %v608
        %641 = vst [vmem:[%s218 + $0xc0] sm:$0xff] %v609
        %642 = vst [vmem:[%s218 + $0xc8] sm:$0xff] %v610
        %643 = vst [vmem:[%s218 + $0xd0] sm:$0xff] %v611
        %644 = vst [vmem:[%s218 + $0xd8] sm:$0xff] %v612
        %645 = vst [vmem:[%s218 + $0xe0] sm:$0xff] %v613
        %646 = vst [vmem:[%s218 + $0xe8] sm:$0xff] %v614
        %647 = vst [vmem:[%s218 + $0xf0] sm:$0xff] %v615
        %648 = vst [vmem:[%s218 + $0xf8] sm:$0xff] %v616
        %s649 = smul.u32 32, %s18
        %p650 = scmp.lt.s32.totalorder %s649, 63
        %s651 = scalar_select %p650, %s649, 63
        %s652 = smul.addr %s651, 8
        %s653 = scalar_lea.vmem %s3, %s652
        // Predicated region
        $region45: #{apm_forward_pallas.4} parent=31 // pred_check
          %p654 = pneg %p104
        $region46: #{apm_forward_pallas.4} parent=31 // pred_check_branch
          %656 = sbr.rel (%p654) target = $region48
        $region47: #{apm_forward_pallas.4} parent=31 // pred_region
          %s657 = smul.u32 32, %s18
        $region48: #{apm_forward_pallas.4} parent=31 // pred_fallthru
          _
      $region32: #{apm_forward_pallas.4} parent=5 // pred_fallthru
        _
      %p658 = scmp.le.s32.totalorder 2, %s13
      // Predicated region
      $region49: #{apm_forward_pallas.4} parent=5 // pred_check
        %p659 = pneg %p658
      $region50: #{apm_forward_pallas.4} parent=5 // pred_check_branch
        %661 = sbr.rel (%p659) target = $region52
      $region51: #{apm_forward_pallas.4} parent=5 // pred_region
        %s662 = ssub.s32 %s13, 2
        // Predicated region
        $region53: #{apm_forward_pallas.4} parent=51 // pred_check
          %p663 = pneg %p110
        $region54: #{apm_forward_pallas.4} parent=51 // pred_check_branch
          %665 = sbr.rel (%p663) target = $region56
        $region55: #{apm_forward_pallas.4} parent=51 // pred_region
          %s666 = smul.u32 32, %s19
          %p667 = scmp.lt.s32.totalorder %s666, 63
          %s668 = scalar_select %p667, %s666, 63
          %s669 = smul.addr %s668, 8
          %s670 = scalar_lea.vmem %s3, %s669
        $region56: #{apm_forward_pallas.4} parent=51 // pred_fallthru
          _
      $region52: #{apm_forward_pallas.4} parent=5 // pred_fallthru
        _
    $region6: #{apm_forward_pallas.4} parent=1 // loop_footer
      %s17 = sadd.s32 1, %s13
    $region7: #{apm_forward_pallas.4} parent=1 // loop_footer_branch
      %12 = sbr.rel target = $region3
    $region8: #{apm_forward_pallas.4} parent=1 // loop_exit
      _
    %671 = vsyncpa [#allocation3], 1
    %s672 = scalar_lea.sflag [#allocation3], 1
    %673 = vsyncpa %s672, 1
    %674 = vsyncpa [#allocation5], 1

// kernel: apm_forward_pallas.5
$region0: #{apm_forward_pallas.5}
  #allocation0 [shape = 'u32[]', space=smem, size = 0x4, offset = 0x4, fixed_abs, tag = 'smem constant byte address 0x4 - core index']
  #allocation1 [shape = 'u32[144,128]{1,0:T(1,128)}', space=vmem, size = 0x12000, scoped, tag = 'internal scratch']
  %s0 = inlined_call_operand.vmem [shape: f32[512,1152], index: 0, kind: input, shape index: {}]
  %s1 = inlined_call_operand.vmem [shape: f32[1152,128], index: 1, kind: input, shape index: {}]
  %s2 = inlined_call_operand.vmem [shape: f32[1,128], index: 2, kind: input, shape index: {}]
  %s3 = inlined_call_operand.vmem [shape: f32[128,128], index: 3, kind: input, shape index: {}]
  %s4 = inlined_call_operand.vmem [shape: f32[512,128], index: 4, kind: input, shape index: {}]
  %s5 = inlined_call_operand.vmem [shape: f32[512,128], index: 5, kind: output, shape index: {}]
  %s6 = sld [smem:[#allocation0]]
  $region53: #{apm_forward_pallas.5} parent=0
    _
  %s8 = ssub.s32 1, %s6
  %s9 = scalar_select 0, %s8, %s6
  loop: start=0, step=1, limit=4
  $region2: #{apm_forward_pallas.5} parent=0 // loop_pre_header
    _
  $region3: #{apm_forward_pallas.5} parent=0 // loop_header
    %s11 = sphi 0, %s15
    %p12 = scmp.ge.s32.totalorder %s11, 4
    %s21 = sphi 0, %s23
    %s24 = sphi 0, %s21
    %s25 = sphi 0, %s24
    %s41 = sphi 0, %s25
    %s45 = sphi 0, %s45
    %s47 = sphi 0, %s45
    %s48 = sphi 0, %s47
    %s62 = sphi 0, %s48
    %s66 = sphi 0, %s66
    %s68 = sphi 0, %s66
    %s69 = sphi 0, %s68
    %s83 = sphi 0, %s69
    %s87 = sphi 0, %s87
    %s89 = sphi 0, %s87
    %s90 = sphi 0, %s89
    %s104 = sphi 0, %s90
    %s110 = sphi 0, %s112
    %s113 = sphi 0, %s110
    %s114 = sphi 0, %s113
    %s130 = sphi 0, %s114
    %s136 = sphi 0, %s138
    %s139 = sphi 0, %s136
    %s140 = sphi 0, %s139
    %s156 = sphi 0, %s140
  $region4: #{apm_forward_pallas.5} parent=0 // loop_header_branch
    %14 = sbr.rel (%p12) target = $region8
  $region5: #{apm_forward_pallas.5} parent=0 // loop_body
    %s16 = ssub.s32 %s11, 1
    %s17 = ssub.s32 %s11, 2
    %s18 = sadd.s32 %s11, 1
    %s19 = ssub.s32 %s11, %s18
    %p20 = scmp.eq.s32.totalorder %s19, 0
    %s22 = sadd.s32 %s21, 1
    %s23 = scalar_select %p20, %s21, %s22
    %p26 = pneg %p20
    %p27 = scmp.eq.s32.totalorder %s11, 1
    %p28 = por %p26, %p27
    %p29 = scmp.ne.s32.totalorder %s21, %s24
    %p30 = scmp.eq.s32.totalorder %s11, 0
    %p31 = por %p29, %p30
    %p32 = scmp.ne.s32.totalorder %s21, %s24
    %p33 = scmp.eq.s32.totalorder %s16, 1
    %p34 = por %p32, %p33
    %p35 = scmp.ne.s32.totalorder %s24, %s25
    %p36 = scmp.eq.s32.totalorder %s16, 0
    %p37 = por %p35, %p36
    %p38 = scmp.ne.s32.totalorder %s24, %s25
    %p39 = scmp.eq.s32.totalorder %s17, 1
    %p40 = por %p38, %p39
    %p42 = scmp.ne.s32.totalorder %s25, %s41
    %p43 = scmp.eq.s32.totalorder %s17, 0
    %p44 = por %p42, %p43
    %s46 = sadd.s32 %s45, 1
    %p49 = scmp.eq.s32.totalorder %s11, 1
    %p50 = scmp.ne.s32.totalorder %s45, %s47
    %p51 = scmp.eq.s32.totalorder %s11, 0
    %p52 = por %p50, %p51
    %p53 = scmp.ne.s32.totalorder %s45, %s47
    %p54 = scmp.eq.s32.totalorder %s16, 1
    %p55 = por %p53, %p54
    %p56 = scmp.ne.s32.totalorder %s47, %s48
    %p57 = scmp.eq.s32.totalorder %s16, 0
    %p58 = por %p56, %p57
    %p59 = scmp.ne.s32.totalorder %s47, %s48
    %p60 = scmp.eq.s32.totalorder %s17, 1
    %p61 = por %p59, %p60
    %p63 = scmp.ne.s32.totalorder %s48, %s62
    %p64 = scmp.eq.s32.totalorder %s17, 0
    %p65 = por %p63, %p64
    %s67 = sadd.s32 %s66, 1
    %p70 = scmp.eq.s32.totalorder %s11, 1
    %p71 = scmp.ne.s32.totalorder %s66, %s68
    %p72 = scmp.eq.s32.totalorder %s11, 0
    %p73 = por %p71, %p72
    %p74 = scmp.ne.s32.totalorder %s66, %s68
    %p75 = scmp.eq.s32.totalorder %s16, 1
    %p76 = por %p74, %p75
    %p77 = scmp.ne.s32.totalorder %s68, %s69
    %p78 = scmp.eq.s32.totalorder %s16, 0
    %p79 = por %p77, %p78
    %p80 = scmp.ne.s32.totalorder %s68, %s69
    %p81 = scmp.eq.s32.totalorder %s17, 1
    %p82 = por %p80, %p81
    %p84 = scmp.ne.s32.totalorder %s69, %s83
    %p85 = scmp.eq.s32.totalorder %s17, 0
    %p86 = por %p84, %p85
    %s88 = sadd.s32 %s87, 1
    %p91 = scmp.eq.s32.totalorder %s11, 1
    %p92 = scmp.ne.s32.totalorder %s87, %s89
    %p93 = scmp.eq.s32.totalorder %s11, 0
    %p94 = por %p92, %p93
    %p95 = scmp.ne.s32.totalorder %s87, %s89
    %p96 = scmp.eq.s32.totalorder %s16, 1
    %p97 = por %p95, %p96
    %p98 = scmp.ne.s32.totalorder %s89, %s90
    %p99 = scmp.eq.s32.totalorder %s16, 0
    %p100 = por %p98, %p99
    %p101 = scmp.ne.s32.totalorder %s89, %s90
    %p102 = scmp.eq.s32.totalorder %s17, 1
    %p103 = por %p101, %p102
    %p105 = scmp.ne.s32.totalorder %s90, %s104
    %p106 = scmp.eq.s32.totalorder %s17, 0
    %p107 = por %p105, %p106
    %s108 = ssub.s32 %s11, %s18
    %p109 = scmp.eq.s32.totalorder %s108, 0
    %s111 = sadd.s32 %s110, 1
    %s112 = scalar_select %p109, %s110, %s111
    %p115 = pneg %p109
    %p116 = scmp.eq.s32.totalorder %s11, 1
    %p117 = por %p115, %p116
    %p118 = scmp.ne.s32.totalorder %s110, %s113
    %p119 = scmp.eq.s32.totalorder %s11, 0
    %p120 = por %p118, %p119
    %p121 = scmp.ne.s32.totalorder %s110, %s113
    %p122 = scmp.eq.s32.totalorder %s16, 1
    %p123 = por %p121, %p122
    %p124 = scmp.ne.s32.totalorder %s113, %s114
    %p125 = scmp.eq.s32.totalorder %s16, 0
    %p126 = por %p124, %p125
    %p127 = scmp.ne.s32.totalorder %s113, %s114
    %p128 = scmp.eq.s32.totalorder %s17, 1
    %p129 = por %p127, %p128
    %p131 = scmp.ne.s32.totalorder %s114, %s130
    %p132 = scmp.eq.s32.totalorder %s17, 0
    %p133 = por %p131, %p132
    %s134 = ssub.s32 %s11, %s18
    %p135 = scmp.eq.s32.totalorder %s134, 0
    %s137 = sadd.s32 %s136, 1
    %s138 = scalar_select %p135, %s136, %s137
    %p141 = pneg %p135
    %p142 = scmp.eq.s32.totalorder %s11, 1
    %p143 = por %p141, %p142
    %p144 = scmp.ne.s32.totalorder %s136, %s139
    %p145 = scmp.eq.s32.totalorder %s11, 0
    %p146 = por %p144, %p145
    %p147 = scmp.ne.s32.totalorder %s136, %s139
    %p148 = scmp.eq.s32.totalorder %s16, 1
    %p149 = por %p147, %p148
    %p150 = scmp.ne.s32.totalorder %s139, %s140
    %p151 = scmp.eq.s32.totalorder %s16, 0
    %p152 = por %p150, %p151
    %p153 = scmp.ne.s32.totalorder %s139, %s140
    %p154 = scmp.eq.s32.totalorder %s17, 1
    %p155 = por %p153, %p154
    %p157 = scmp.ne.s32.totalorder %s140, %s156
    %p158 = scmp.eq.s32.totalorder %s17, 0
    %p159 = por %p157, %p158
    %p160 = scmp.le.s32.totalorder 1, %s11
    %p161 = scmp.lt.s32.totalorder %s11, 3
    %p162 = pnand %p160, %p161
    %p163 = pneg %p162
    // Predicated region
    $region9: #{apm_forward_pallas.5} parent=5 // pred_check
      _
    $region10: #{apm_forward_pallas.5} parent=5 // pred_check_branch
      %165 = sbr.rel (%p162) target = $region12
    $region11: #{apm_forward_pallas.5} parent=5 // pred_region
      %s166 = ssub.s32 %s11, 1
      // Predicated region
      $region13: #{apm_forward_pallas.5} parent=11 // pred_check
        %p167 = pneg %p58
      $region14: #{apm_forward_pallas.5} parent=11 // pred_check_branch
        %169 = sbr.rel (%p167) target = $region16
      $region15: #{apm_forward_pallas.5} parent=11 // pred_region
        _
      $region16: #{apm_forward_pallas.5} parent=11 // pred_fallthru
        _
      // Predicated region
      $region17: #{apm_forward_pallas.5} parent=11 // pred_check
        %p170 = pneg %p79
      $region18: #{apm_forward_pallas.5} parent=11 // pred_check_branch
        %172 = sbr.rel (%p170) target = $region20
      $region19: #{apm_forward_pallas.5} parent=11 // pred_region
        _
      $region20: #{apm_forward_pallas.5} parent=11 // pred_fallthru
        _
      // Predicated region
      $region21: #{apm_forward_pallas.5} parent=11 // pred_check
        %p173 = pneg %p100
      $region22: #{apm_forward_pallas.5} parent=11 // pred_check_branch
        %175 = sbr.rel (%p173) target = $region24
      $region23: #{apm_forward_pallas.5} parent=11 // pred_region
        _
      $region24: #{apm_forward_pallas.5} parent=11 // pred_fallthru
        _
    $region12: #{apm_forward_pallas.5} parent=5 // pred_fallthru
      _
    %p176 = scmp.lt.s32.totalorder %s11, 2
    // Predicated region
    $region25: #{apm_forward_pallas.5} parent=5 // pred_check
      %p177 = pneg %p176
    $region26: #{apm_forward_pallas.5} parent=5 // pred_check_branch
      %179 = sbr.rel (%p177) target = $region28
    $region27: #{apm_forward_pallas.5} parent=5 // pred_region
      // Predicated region
      $region29: #{apm_forward_pallas.5} parent=27 // pred_check
        %p180 = pneg %p31
      $region30: #{apm_forward_pallas.5} parent=27 // pred_check_branch
        %182 = sbr.rel (%p180) target = $region32
      $region31: #{apm_forward_pallas.5} parent=27 // pred_region
        %s183 = smul.u32 32, %s11
        %p184 = scmp.lt.s32.totalorder %s183, 63
        %s185 = scalar_select %p184, %s183, 63
        %s186 = smul.addr %s185, 9
        %s187 = smul.addr %s186, 8
        %s188 = scalar_lea.vmem %s0, %s187
        %s189 = smul.u32 32, %s11
      $region32: #{apm_forward_pallas.5} parent=27 // pred_fallthru
        _
      // Predicated region
      $region33: #{apm_forward_pallas.5} parent=27 // pred_check
        %p190 = pneg %p120
      $region34: #{apm_forward_pallas.5} parent=27 // pred_check_branch
        %192 = sbr.rel (%p190) target = $region36
      $region35: #{apm_forward_pallas.5} parent=27 // pred_region
        %s193 = smul.u32 32, %s11
        %p194 = scmp.lt.s32.totalorder %s193, 63
        %s195 = scalar_select %p194, %s193, 63
        %s196 = smul.addr %s195, 8
        %s197 = scalar_lea.vmem %s4, %s196
        %s198 = smul.u32 32, %s11
      $region36: #{apm_forward_pallas.5} parent=27 // pred_fallthru
        _
    $region28: #{apm_forward_pallas.5} parent=5 // pred_fallthru
      _
    %p199 = scmp.le.s32.totalorder 1, %s11
    %p200 = scmp.lt.s32.totalorder %s11, 3
    %p201 = pnand %p199, %p200
    %p202 = pneg %p201
    // Predicated region
    $region37: #{apm_forward_pallas.5} parent=5 // pred_check
      _
    $region38: #{apm_forward_pallas.5} parent=5 // pred_check_branch
      %204 = sbr.rel (%p201) target = $region40
    $region39: #{apm_forward_pallas.5} parent=5 // pred_region
      %s205 = ssub.s32 %s11, 1
      %s206 = smul.u32 32, %s16
      %p207 = scmp.lt.s32.totalorder %s206, 63
      %s208 = scalar_select %p207, %s206, 63
      %s209 = smul.addr %s208, 9
      %s210 = smul.addr %s209, 8
      %s211 = scalar_lea.vmem %s0, %s210
      %p212 = pneg %p37
      %p213 = pneg %p34
      %p214 = pneg %p58
      %p215 = pneg %p55
      %p216 = pneg %p79
      %p217 = pneg %p76
      %p218 = pneg %p100
      %p219 = pneg %p97
      %s220 = smul.u32 32, %s16
      %p221 = scmp.lt.s32.totalorder %s220, 63
      %s222 = scalar_select %p221, %s220, 63
      %s223 = smul.addr %s222, 8
      %s224 = scalar_lea.vmem %s4, %s223
      %p225 = pneg %p126
      %p226 = pneg %p123
      %p227 = pneg %p152
      %p228 = pneg %p149
      %s229 = smul.u32 32, %s16
      %p230 = scmp.lt.s32.totalorder %s229, 63
      %s231 = scalar_select %p230, %s229, 63
      %s232 = smul.addr %s231, 8
      %s233 = scalar_lea.vmem %s5, %s232
      %s234 = smul.u32 32, %s16
      %p235 = scmp.lt.s32.totalorder %s234, 63
      %s236 = scalar_select %p235, %s234, 63
      %s237 = smul.addr %s236, 9
      %s238 = smul.addr %s237, 8
      %s239 = scalar_lea.vmem %s0, %s238
      %s240 = smul.u32 32, %s16
      %s241 = smul.u32 32, %s16
      %p242 = scmp.lt.s32.totalorder %s241, 63
      %s243 = scalar_select %p242, %s241, 63
      %s244 = smul.addr %s243, 8
      %s245 = scalar_lea.vmem %s4, %s244
      %s246 = smul.u32 32, %s16
      %s247 = smul.u32 32, %s16
      %p248 = scmp.lt.s32.totalorder %s247, 63
      %s249 = scalar_select %p248, %s247, 63
      %s250 = smul.addr %s249, 8
      %s251 = scalar_lea.vmem %s5, %s250
      %s252 = smul.u32 32, %s16
      %v253 = vld [vmem:[%s239] sm:$0xff]
      %v254 = vld [vmem:[%s239 + $0x8] sm:$0xff]
      %v255 = vld [vmem:[%s239 + $0x10] sm:$0xff]
      %v256 = vld [vmem:[%s239 + $0x18] sm:$0xff]
      %v257 = vld [vmem:[%s239 + $0x20] sm:$0xff]
      %v258 = vld [vmem:[%s239 + $0x28] sm:$0xff]
      %v259 = vld [vmem:[%s239 + $0x30] sm:$0xff]
      %v260 = vld [vmem:[%s239 + $0x38] sm:$0xff]
      %v261 = vld [vmem:[%s239 + $0x40] sm:$0xff]
      %v262 = vld [vmem:[%s239 + $0x48] sm:$0xff]
      %v263 = vld [vmem:[%s239 + $0x50] sm:$0xff]
      %v264 = vld [vmem:[%s239 + $0x58] sm:$0xff]
      %v265 = vld [vmem:[%s239 + $0x60] sm:$0xff]
      %v266 = vld [vmem:[%s239 + $0x68] sm:$0xff]
      %v267 = vld [vmem:[%s239 + $0x70] sm:$0xff]
      %v268 = vld [vmem:[%s239 + $0x78] sm:$0xff]
      %v269 = vld [vmem:[%s239 + $0x80] sm:$0xff]
      %v270 = vld [vmem:[%s239 + $0x88] sm:$0xff]
      %v271 = vld [vmem:[%s239 + $0x90] sm:$0xff]
      %v272 = vld [vmem:[%s239 + $0x98] sm:$0xff]
      %v273 = vld [vmem:[%s239 + $0xa0] sm:$0xff]
      %v274 = vld [vmem:[%s239 + $0xa8] sm:$0xff]
      %v275 = vld [vmem:[%s239 + $0xb0] sm:$0xff]
      %v276 = vld [vmem:[%s239 + $0xb8] sm:$0xff]
      %v277 = vld [vmem:[%s239 + $0xc0] sm:$0xff]
      %v278 = vld [vmem:[%s239 + $0xc8] sm:$0xff]
      %v279 = vld [vmem:[%s239 + $0xd0] sm:$0xff]
      %v280 = vld [vmem:[%s239 + $0xd8] sm:$0xff]
      %v281 = vld [vmem:[%s239 + $0xe0] sm:$0xff]
      %v282 = vld [vmem:[%s239 + $0xe8] sm:$0xff]
      %v283 = vld [vmem:[%s239 + $0xf0] sm:$0xff]
      %v284 = vld [vmem:[%s239 + $0xf8] sm:$0xff]
      %v285 = vld [vmem:[%s239 + $0x100] sm:$0xff]
      %v286 = vld [vmem:[%s239 + $0x108] sm:$0xff]
      %v287 = vld [vmem:[%s239 + $0x110] sm:$0xff]
      %v288 = vld [vmem:[%s239 + $0x118] sm:$0xff]
      %v289 = vld [vmem:[%s239 + $0x120] sm:$0xff]
      %v290 = vld [vmem:[%s239 + $0x128] sm:$0xff]
      %v291 = vld [vmem:[%s239 + $0x130] sm:$0xff]
      %v292 = vld [vmem:[%s239 + $0x138] sm:$0xff]
      %v293 = vld [vmem:[%s239 + $0x140] sm:$0xff]
      %v294 = vld [vmem:[%s239 + $0x148] sm:$0xff]
      %v295 = vld [vmem:[%s239 + $0x150] sm:$0xff]
      %v296 = vld [vmem:[%s239 + $0x158] sm:$0xff]
      %v297 = vld [vmem:[%s239 + $0x160] sm:$0xff]
      %v298 = vld [vmem:[%s239 + $0x168] sm:$0xff]
      %v299 = vld [vmem:[%s239 + $0x170] sm:$0xff]
      %v300 = vld [vmem:[%s239 + $0x178] sm:$0xff]
      %v301 = vld [vmem:[%s239 + $0x180] sm:$0xff]
      %v302 = vld [vmem:[%s239 + $0x188] sm:$0xff]
      %v303 = vld [vmem:[%s239 + $0x190] sm:$0xff]
      %v304 = vld [vmem:[%s239 + $0x198] sm:$0xff]
      %v305 = vld [vmem:[%s239 + $0x1a0] sm:$0xff]
      %v306 = vld [vmem:[%s239 + $0x1a8] sm:$0xff]
      %v307 = vld [vmem:[%s239 + $0x1b0] sm:$0xff]
      %v308 = vld [vmem:[%s239 + $0x1b8] sm:$0xff]
      %v309 = vld [vmem:[%s239 + $0x1c0] sm:$0xff]
      %v310 = vld [vmem:[%s239 + $0x1c8] sm:$0xff]
      %v311 = vld [vmem:[%s239 + $0x1d0] sm:$0xff]
      %v312 = vld [vmem:[%s239 + $0x1d8] sm:$0xff]
      %v313 = vld [vmem:[%s239 + $0x1e0] sm:$0xff]
      %v314 = vld [vmem:[%s239 + $0x1e8] sm:$0xff]
      %v315 = vld [vmem:[%s239 + $0x1f0] sm:$0xff]
      %v316 = vld [vmem:[%s239 + $0x1f8] sm:$0xff]
      %v317 = vld [vmem:[%s239 + $0x200] sm:$0xff]
      %v318 = vld [vmem:[%s239 + $0x208] sm:$0xff]
      %v319 = vld [vmem:[%s239 + $0x210] sm:$0xff]
      %v320 = vld [vmem:[%s239 + $0x218] sm:$0xff]
      %v321 = vld [vmem:[%s239 + $0x220] sm:$0xff]
      %v322 = vld [vmem:[%s239 + $0x228] sm:$0xff]
      %v323 = vld [vmem:[%s239 + $0x230] sm:$0xff]
      %v324 = vld [vmem:[%s239 + $0x238] sm:$0xff]
      %v325 = vld [vmem:[%s239 + $0x240] sm:$0xff]
      %v326 = vld [vmem:[%s239 + $0x248] sm:$0xff]
      %v327 = vld [vmem:[%s239 + $0x250] sm:$0xff]
      %v328 = vld [vmem:[%s239 + $0x258] sm:$0xff]
      %v329 = vld [vmem:[%s239 + $0x260] sm:$0xff]
      %v330 = vld [vmem:[%s239 + $0x268] sm:$0xff]
      %v331 = vld [vmem:[%s239 + $0x270] sm:$0xff]
      %v332 = vld [vmem:[%s239 + $0x278] sm:$0xff]
      %v333 = vld [vmem:[%s239 + $0x280] sm:$0xff]
      %v334 = vld [vmem:[%s239 + $0x288] sm:$0xff]
      %v335 = vld [vmem:[%s239 + $0x290] sm:$0xff]
      %v336 = vld [vmem:[%s239 + $0x298] sm:$0xff]
      %v337 = vld [vmem:[%s239 + $0x2a0] sm:$0xff]
      %v338 = vld [vmem:[%s239 + $0x2a8] sm:$0xff]
      %v339 = vld [vmem:[%s239 + $0x2b0] sm:$0xff]
      %v340 = vld [vmem:[%s239 + $0x2b8] sm:$0xff]
      %v341 = vld [vmem:[%s239 + $0x2c0] sm:$0xff]
      %v342 = vld [vmem:[%s239 + $0x2c8] sm:$0xff]
      %v343 = vld [vmem:[%s239 + $0x2d0] sm:$0xff]
      %v344 = vld [vmem:[%s239 + $0x2d8] sm:$0xff]
      %v345 = vld [vmem:[%s239 + $0x2e0] sm:$0xff]
      %v346 = vld [vmem:[%s239 + $0x2e8] sm:$0xff]
      %v347 = vld [vmem:[%s239 + $0x2f0] sm:$0xff]
      %v348 = vld [vmem:[%s239 + $0x2f8] sm:$0xff]
      %v349 = vld [vmem:[%s239 + $0x300] sm:$0xff]
      %v350 = vld [vmem:[%s239 + $0x308] sm:$0xff]
      %v351 = vld [vmem:[%s239 + $0x310] sm:$0xff]
      %v352 = vld [vmem:[%s239 + $0x318] sm:$0xff]
      %v353 = vld [vmem:[%s239 + $0x320] sm:$0xff]
      %v354 = vld [vmem:[%s239 + $0x328] sm:$0xff]
      %v355 = vld [vmem:[%s239 + $0x330] sm:$0xff]
      %v356 = vld [vmem:[%s239 + $0x338] sm:$0xff]
      %v357 = vld [vmem:[%s239 + $0x340] sm:$0xff]
      %v358 = vld [vmem:[%s239 + $0x348] sm:$0xff]
      %v359 = vld [vmem:[%s239 + $0x350] sm:$0xff]
      %v360 = vld [vmem:[%s239 + $0x358] sm:$0xff]
      %v361 = vld [vmem:[%s239 + $0x360] sm:$0xff]
      %v362 = vld [vmem:[%s239 + $0x368] sm:$0xff]
      %v363 = vld [vmem:[%s239 + $0x370] sm:$0xff]
      %v364 = vld [vmem:[%s239 + $0x378] sm:$0xff]
      %v365 = vld [vmem:[%s239 + $0x380] sm:$0xff]
      %v366 = vld [vmem:[%s239 + $0x388] sm:$0xff]
      %v367 = vld [vmem:[%s239 + $0x390] sm:$0xff]
      %v368 = vld [vmem:[%s239 + $0x398] sm:$0xff]
      %v369 = vld [vmem:[%s239 + $0x3a0] sm:$0xff]
      %v370 = vld [vmem:[%s239 + $0x3a8] sm:$0xff]
      %v371 = vld [vmem:[%s239 + $0x3b0] sm:$0xff]
      %v372 = vld [vmem:[%s239 + $0x3b8] sm:$0xff]
      %v373 = vld [vmem:[%s239 + $0x3c0] sm:$0xff]
      %v374 = vld [vmem:[%s239 + $0x3c8] sm:$0xff]
      %v375 = vld [vmem:[%s239 + $0x3d0] sm:$0xff]
      %v376 = vld [vmem:[%s239 + $0x3d8] sm:$0xff]
      %v377 = vld [vmem:[%s239 + $0x3e0] sm:$0xff]
      %v378 = vld [vmem:[%s239 + $0x3e8] sm:$0xff]
      %v379 = vld [vmem:[%s239 + $0x3f0] sm:$0xff]
      %v380 = vld [vmem:[%s239 + $0x3f8] sm:$0xff]
      %v381 = vld [vmem:[%s239 + $0x400] sm:$0xff]
      %v382 = vld [vmem:[%s239 + $0x408] sm:$0xff]
      %v383 = vld [vmem:[%s239 + $0x410] sm:$0xff]
      %v384 = vld [vmem:[%s239 + $0x418] sm:$0xff]
      %v385 = vld [vmem:[%s239 + $0x420] sm:$0xff]
      %v386 = vld [vmem:[%s239 + $0x428] sm:$0xff]
      %v387 = vld [vmem:[%s239 + $0x430] sm:$0xff]
      %v388 = vld [vmem:[%s239 + $0x438] sm:$0xff]
      %v389 = vld [vmem:[%s239 + $0x440] sm:$0xff]
      %v390 = vld [vmem:[%s239 + $0x448] sm:$0xff]
      %v391 = vld [vmem:[%s239 + $0x450] sm:$0xff]
      %v392 = vld [vmem:[%s239 + $0x458] sm:$0xff]
      %v393 = vld [vmem:[%s239 + $0x460] sm:$0xff]
      %v394 = vld [vmem:[%s239 + $0x468] sm:$0xff]
      %v395 = vld [vmem:[%s239 + $0x470] sm:$0xff]
      %v396 = vld [vmem:[%s239 + $0x478] sm:$0xff]
      %v397 = vld [vmem:[%s239 + $0x480] sm:$0xff]
      %v398 = vld [vmem:[%s239 + $0x488] sm:$0xff]
      %v399 = vld [vmem:[%s239 + $0x490] sm:$0xff]
      %v400 = vld [vmem:[%s239 + $0x498] sm:$0xff]
      %v401 = vld [vmem:[%s239 + $0x4a0] sm:$0xff]
      %v402 = vld [vmem:[%s239 + $0x4a8] sm:$0xff]
      %v403 = vld [vmem:[%s239 + $0x4b0] sm:$0xff]
      %v404 = vld [vmem:[%s239 + $0x4b8] sm:$0xff]
      %v405 = vld [vmem:[%s239 + $0x4c0] sm:$0xff]
      %v406 = vld [vmem:[%s239 + $0x4c8] sm:$0xff]
      %v407 = vld [vmem:[%s239 + $0x4d0] sm:$0xff]
      %v408 = vld [vmem:[%s239 + $0x4d8] sm:$0xff]
      %v409 = vld [vmem:[%s239 + $0x4e0] sm:$0xff]
      %v410 = vld [vmem:[%s239 + $0x4e8] sm:$0xff]
      %v411 = vld [vmem:[%s239 + $0x4f0] sm:$0xff]
      %v412 = vld [vmem:[%s239 + $0x4f8] sm:$0xff]
      %v413 = vld [vmem:[%s239 + $0x500] sm:$0xff]
      %v414 = vld [vmem:[%s239 + $0x508] sm:$0xff]
      %v415 = vld [vmem:[%s239 + $0x510] sm:$0xff]
      %v416 = vld [vmem:[%s239 + $0x518] sm:$0xff]
      %v417 = vld [vmem:[%s239 + $0x520] sm:$0xff]
      %v418 = vld [vmem:[%s239 + $0x528] sm:$0xff]
      %v419 = vld [vmem:[%s239 + $0x530] sm:$0xff]
      %v420 = vld [vmem:[%s239 + $0x538] sm:$0xff]
      %v421 = vld [vmem:[%s239 + $0x540] sm:$0xff]
      %v422 = vld [vmem:[%s239 + $0x548] sm:$0xff]
      %v423 = vld [vmem:[%s239 + $0x550] sm:$0xff]
      %v424 = vld [vmem:[%s239 + $0x558] sm:$0xff]
      %v425 = vld [vmem:[%s239 + $0x560] sm:$0xff]
      %v426 = vld [vmem:[%s239 + $0x568] sm:$0xff]
      %v427 = vld [vmem:[%s239 + $0x570] sm:$0xff]
      %v428 = vld [vmem:[%s239 + $0x578] sm:$0xff]
      %v429 = vld [vmem:[%s239 + $0x580] sm:$0xff]
      %v430 = vld [vmem:[%s239 + $0x588] sm:$0xff]
      %v431 = vld [vmem:[%s239 + $0x590] sm:$0xff]
      %v432 = vld [vmem:[%s239 + $0x598] sm:$0xff]
      %v433 = vld [vmem:[%s239 + $0x5a0] sm:$0xff]
      %v434 = vld [vmem:[%s239 + $0x5a8] sm:$0xff]
      %v435 = vld [vmem:[%s239 + $0x5b0] sm:$0xff]
      %v436 = vld [vmem:[%s239 + $0x5b8] sm:$0xff]
      %v437 = vld [vmem:[%s239 + $0x5c0] sm:$0xff]
      %v438 = vld [vmem:[%s239 + $0x5c8] sm:$0xff]
      %v439 = vld [vmem:[%s239 + $0x5d0] sm:$0xff]
      %v440 = vld [vmem:[%s239 + $0x5d8] sm:$0xff]
      %v441 = vld [vmem:[%s239 + $0x5e0] sm:$0xff]
      %v442 = vld [vmem:[%s239 + $0x5e8] sm:$0xff]
      %v443 = vld [vmem:[%s239 + $0x5f0] sm:$0xff]
      %v444 = vld [vmem:[%s239 + $0x5f8] sm:$0xff]
      %v445 = vld [vmem:[%s239 + $0x600] sm:$0xff]
      %v446 = vld [vmem:[%s239 + $0x608] sm:$0xff]
      %v447 = vld [vmem:[%s239 + $0x610] sm:$0xff]
      %v448 = vld [vmem:[%s239 + $0x618] sm:$0xff]
      %v449 = vld [vmem:[%s239 + $0x620] sm:$0xff]
      %v450 = vld [vmem:[%s239 + $0x628] sm:$0xff]
      %v451 = vld [vmem:[%s239 + $0x630] sm:$0xff]
      %v452 = vld [vmem:[%s239 + $0x638] sm:$0xff]
      %v453 = vld [vmem:[%s239 + $0x640] sm:$0xff]
      %v454 = vld [vmem:[%s239 + $0x648] sm:$0xff]
      %v455 = vld [vmem:[%s239 + $0x650] sm:$0xff]
      %v456 = vld [vmem:[%s239 + $0x658] sm:$0xff]
      %v457 = vld [vmem:[%s239 + $0x660] sm:$0xff]
      %v458 = vld [vmem:[%s239 + $0x668] sm:$0xff]
      %v459 = vld [vmem:[%s239 + $0x670] sm:$0xff]
      %v460 = vld [vmem:[%s239 + $0x678] sm:$0xff]
      %v461 = vld [vmem:[%s239 + $0x680] sm:$0xff]
      %v462 = vld [vmem:[%s239 + $0x688] sm:$0xff]
      %v463 = vld [vmem:[%s239 + $0x690] sm:$0xff]
      %v464 = vld [vmem:[%s239 + $0x698] sm:$0xff]
      %v465 = vld [vmem:[%s239 + $0x6a0] sm:$0xff]
      %v466 = vld [vmem:[%s239 + $0x6a8] sm:$0xff]
      %v467 = vld [vmem:[%s239 + $0x6b0] sm:$0xff]
      %v468 = vld [vmem:[%s239 + $0x6b8] sm:$0xff]
      %v469 = vld [vmem:[%s239 + $0x6c0] sm:$0xff]
      %v470 = vld [vmem:[%s239 + $0x6c8] sm:$0xff]
      %v471 = vld [vmem:[%s239 + $0x6d0] sm:$0xff]
      %v472 = vld [vmem:[%s239 + $0x6d8] sm:$0xff]
      %v473 = vld [vmem:[%s239 + $0x6e0] sm:$0xff]
      %v474 = vld [vmem:[%s239 + $0x6e8] sm:$0xff]
      %v475 = vld [vmem:[%s239 + $0x6f0] sm:$0xff]
      %v476 = vld [vmem:[%s239 + $0x6f8] sm:$0xff]
      %v477 = vld [vmem:[%s239 + $0x700] sm:$0xff]
      %v478 = vld [vmem:[%s239 + $0x708] sm:$0xff]
      %v479 = vld [vmem:[%s239 + $0x710] sm:$0xff]
      %v480 = vld [vmem:[%s239 + $0x718] sm:$0xff]
      %v481 = vld [vmem:[%s239 + $0x720] sm:$0xff]
      %v482 = vld [vmem:[%s239 + $0x728] sm:$0xff]
      %v483 = vld [vmem:[%s239 + $0x730] sm:$0xff]
      %v484 = vld [vmem:[%s239 + $0x738] sm:$0xff]
      %v485 = vld [vmem:[%s239 + $0x740] sm:$0xff]
      %v486 = vld [vmem:[%s239 + $0x748] sm:$0xff]
      %v487 = vld [vmem:[%s239 + $0x750] sm:$0xff]
      %v488 = vld [vmem:[%s239 + $0x758] sm:$0xff]
      %v489 = vld [vmem:[%s239 + $0x760] sm:$0xff]
      %v490 = vld [vmem:[%s239 + $0x768] sm:$0xff]
      %v491 = vld [vmem:[%s239 + $0x770] sm:$0xff]
      %v492 = vld [vmem:[%s239 + $0x778] sm:$0xff]
      %v493 = vld [vmem:[%s239 + $0x780] sm:$0xff]
      %v494 = vld [vmem:[%s239 + $0x788] sm:$0xff]
      %v495 = vld [vmem:[%s239 + $0x790] sm:$0xff]
      %v496 = vld [vmem:[%s239 + $0x798] sm:$0xff]
      %v497 = vld [vmem:[%s239 + $0x7a0] sm:$0xff]
      %v498 = vld [vmem:[%s239 + $0x7a8] sm:$0xff]
      %v499 = vld [vmem:[%s239 + $0x7b0] sm:$0xff]
      %v500 = vld [vmem:[%s239 + $0x7b8] sm:$0xff]
      %v501 = vld [vmem:[%s239 + $0x7c0] sm:$0xff]
      %v502 = vld [vmem:[%s239 + $0x7c8] sm:$0xff]
      %v503 = vld [vmem:[%s239 + $0x7d0] sm:$0xff]
      %v504 = vld [vmem:[%s239 + $0x7d8] sm:$0xff]
      %v505 = vld [vmem:[%s239 + $0x7e0] sm:$0xff]
      %v506 = vld [vmem:[%s239 + $0x7e8] sm:$0xff]
      %v507 = vld [vmem:[%s239 + $0x7f0] sm:$0xff]
      %v508 = vld [vmem:[%s239 + $0x7f8] sm:$0xff]
      %v509 = vld [vmem:[%s239 + $0x800] sm:$0xff]
      %v510 = vld [vmem:[%s239 + $0x808] sm:$0xff]
      %v511 = vld [vmem:[%s239 + $0x810] sm:$0xff]
      %v512 = vld [vmem:[%s239 + $0x818] sm:$0xff]
      %v513 = vld [vmem:[%s239 + $0x820] sm:$0xff]
      %v514 = vld [vmem:[%s239 + $0x828] sm:$0xff]
      %v515 = vld [vmem:[%s239 + $0x830] sm:$0xff]
      %v516 = vld [vmem:[%s239 + $0x838] sm:$0xff]
      %v517 = vld [vmem:[%s239 + $0x840] sm:$0xff]
      %v518 = vld [vmem:[%s239 + $0x848] sm:$0xff]
      %v519 = vld [vmem:[%s239 + $0x850] sm:$0xff]
      %v520 = vld [vmem:[%s239 + $0x858] sm:$0xff]
      %v521 = vld [vmem:[%s239 + $0x860] sm:$0xff]
      %v522 = vld [vmem:[%s239 + $0x868] sm:$0xff]
      %v523 = vld [vmem:[%s239 + $0x870] sm:$0xff]
      %v524 = vld [vmem:[%s239 + $0x878] sm:$0xff]
      %v525 = vld [vmem:[%s239 + $0x880] sm:$0xff]
      %v526 = vld [vmem:[%s239 + $0x888] sm:$0xff]
      %v527 = vld [vmem:[%s239 + $0x890] sm:$0xff]
      %v528 = vld [vmem:[%s239 + $0x898] sm:$0xff]
      %v529 = vld [vmem:[%s239 + $0x8a0] sm:$0xff]
      %v530 = vld [vmem:[%s239 + $0x8a8] sm:$0xff]
      %v531 = vld [vmem:[%s239 + $0x8b0] sm:$0xff]
      %v532 = vld [vmem:[%s239 + $0x8b8] sm:$0xff]
      %v533 = vld [vmem:[%s239 + $0x8c0] sm:$0xff]
      %v534 = vld [vmem:[%s239 + $0x8c8] sm:$0xff]
      %v535 = vld [vmem:[%s239 + $0x8d0] sm:$0xff]
      %v536 = vld [vmem:[%s239 + $0x8d8] sm:$0xff]
      %v537 = vld [vmem:[%s239 + $0x8e0] sm:$0xff]
      %v538 = vld [vmem:[%s239 + $0x8e8] sm:$0xff]
      %v539 = vld [vmem:[%s239 + $0x8f0] sm:$0xff]
      %v540 = vld [vmem:[%s239 + $0x8f8] sm:$0xff]
      %v541 = vld [vmem:[%s1] sm:$0xff]
      %v542 = vld [vmem:[%s1 + $0x8] sm:$0xff]
      %v543 = vld [vmem:[%s1 + $0x10] sm:$0xff]
      %v544 = vld [vmem:[%s1 + $0x18] sm:$0xff]
      %v545 = vld [vmem:[%s1 + $0x20] sm:$0xff]
      %v546 = vld [vmem:[%s1 + $0x28] sm:$0xff]
      %v547 = vld [vmem:[%s1 + $0x30] sm:$0xff]
      %v548 = vld [vmem:[%s1 + $0x38] sm:$0xff]
      %v549 = vld [vmem:[%s1 + $0x40] sm:$0xff]
      %v550 = vld [vmem:[%s1 + $0x48] sm:$0xff]
      %v551 = vld [vmem:[%s1 + $0x50] sm:$0xff]
      %v552 = vld [vmem:[%s1 + $0x58] sm:$0xff]
      %v553 = vld [vmem:[%s1 + $0x60] sm:$0xff]
      %v554 = vld [vmem:[%s1 + $0x68] sm:$0xff]
      %v555 = vld [vmem:[%s1 + $0x70] sm:$0xff]
      %v556 = vld [vmem:[%s1 + $0x78] sm:$0xff]
      %v557 = vld [vmem:[%s1 + $0x80] sm:$0xff]
      %v558 = vld [vmem:[%s1 + $0x88] sm:$0xff]
      %v559 = vld [vmem:[%s1 + $0x90] sm:$0xff]
      %v560 = vld [vmem:[%s1 + $0x98] sm:$0xff]
      %v561 = vld [vmem:[%s1 + $0xa0] sm:$0xff]
      %v562 = vld [vmem:[%s1 + $0xa8] sm:$0xff]
      %v563 = vld [vmem:[%s1 + $0xb0] sm:$0xff]
      %v564 = vld [vmem:[%s1 + $0xb8] sm:$0xff]
      %v565 = vld [vmem:[%s1 + $0xc0] sm:$0xff]
      %v566 = vld [vmem:[%s1 + $0xc8] sm:$0xff]
      %v567 = vld [vmem:[%s1 + $0xd0] sm:$0xff]
      %v568 = vld [vmem:[%s1 + $0xd8] sm:$0xff]
      %v569 = vld [vmem:[%s1 + $0xe0] sm:$0xff]
      %v570 = vld [vmem:[%s1 + $0xe8] sm:$0xff]
      %v571 = vld [vmem:[%s1 + $0xf0] sm:$0xff]
      %v572 = vld [vmem:[%s1 + $0xf8] sm:$0xff]
      %v573 = vld [vmem:[%s1 + $0x100] sm:$0xff]
      %v574 = vld [vmem:[%s1 + $0x108] sm:$0xff]
      %v575 = vld [vmem:[%s1 + $0x110] sm:$0xff]
      %v576 = vld [vmem:[%s1 + $0x118] sm:$0xff]
      %v577 = vld [vmem:[%s1 + $0x120] sm:$0xff]
      %v578 = vld [vmem:[%s1 + $0x128] sm:$0xff]
      %v579 = vld [vmem:[%s1 + $0x130] sm:$0xff]
      %v580 = vld [vmem:[%s1 + $0x138] sm:$0xff]
      %v581 = vld [vmem:[%s1 + $0x140] sm:$0xff]
      %v582 = vld [vmem:[%s1 + $0x148] sm:$0xff]
      %v583 = vld [vmem:[%s1 + $0x150] sm:$0xff]
      %v584 = vld [vmem:[%s1 + $0x158] sm:$0xff]
      %v585 = vld [vmem:[%s1 + $0x160] sm:$0xff]
      %v586 = vld [vmem:[%s1 + $0x168] sm:$0xff]
      %v587 = vld [vmem:[%s1 + $0x170] sm:$0xff]
      %v588 = vld [vmem:[%s1 + $0x178] sm:$0xff]
      %v589 = vld [vmem:[%s1 + $0x180] sm:$0xff]
      %v590 = vld [vmem:[%s1 + $0x188] sm:$0xff]
      %v591 = vld [vmem:[%s1 + $0x190] sm:$0xff]
      %v592 = vld [vmem:[%s1 + $0x198] sm:$0xff]
      %v593 = vld [vmem:[%s1 + $0x1a0] sm:$0xff]
      %v594 = vld [vmem:[%s1 + $0x1a8] sm:$0xff]
      %v595 = vld [vmem:[%s1 + $0x1b0] sm:$0xff]
      %v596 = vld [vmem:[%s1 + $0x1b8] sm:$0xff]
      %v597 = vld [vmem:[%s1 + $0x1c0] sm:$0xff]
      %v598 = vld [vmem:[%s1 + $0x1c8] sm:$0xff]
      %v599 = vld [vmem:[%s1 + $0x1d0] sm:$0xff]
      %v600 = vld [vmem:[%s1 + $0x1d8] sm:$0xff]
      %v601 = vld [vmem:[%s1 + $0x1e0] sm:$0xff]
      %v602 = vld [vmem:[%s1 + $0x1e8] sm:$0xff]
      %v603 = vld [vmem:[%s1 + $0x1f0] sm:$0xff]
      %v604 = vld [vmem:[%s1 + $0x1f8] sm:$0xff]
      %v605 = vld [vmem:[%s1 + $0x200] sm:$0xff]
      %v606 = vld [vmem:[%s1 + $0x208] sm:$0xff]
      %v607 = vld [vmem:[%s1 + $0x210] sm:$0xff]
      %v608 = vld [vmem:[%s1 + $0x218] sm:$0xff]
      %v609 = vld [vmem:[%s1 + $0x220] sm:$0xff]
      %v610 = vld [vmem:[%s1 + $0x228] sm:$0xff]
      %v611 = vld [vmem:[%s1 + $0x230] sm:$0xff]
      %v612 = vld [vmem:[%s1 + $0x238] sm:$0xff]
      %v613 = vld [vmem:[%s1 + $0x240] sm:$0xff]
      %v614 = vld [vmem:[%s1 + $0x248] sm:$0xff]
      %v615 = vld [vmem:[%s1 + $0x250] sm:$0xff]
      %v616 = vld [vmem:[%s1 + $0x258] sm:$0xff]
      %v617 = vld [vmem:[%s1 + $0x260] sm:$0xff]
      %v618 = vld [vmem:[%s1 + $0x268] sm:$0xff]
      %v619 = vld [vmem:[%s1 + $0x270] sm:$0xff]
      %v620 = vld [vmem:[%s1 + $0x278] sm:$0xff]
      %v621 = vld [vmem:[%s1 + $0x280] sm:$0xff]
      %v622 = vld [vmem:[%s1 + $0x288] sm:$0xff]
      %v623 = vld [vmem:[%s1 + $0x290] sm:$0xff]
      %v624 = vld [vmem:[%s1 + $0x298] sm:$0xff]
      %v625 = vld [vmem:[%s1 + $0x2a0] sm:$0xff]
      %v626 = vld [vmem:[%s1 + $0x2a8] sm:$0xff]
      %v627 = vld [vmem:[%s1 + $0x2b0] sm:$0xff]
      %v628 = vld [vmem:[%s1 + $0x2b8] sm:$0xff]
      %v629 = vld [vmem:[%s1 + $0x2c0] sm:$0xff]
      %v630 = vld [vmem:[%s1 + $0x2c8] sm:$0xff]
      %v631 = vld [vmem:[%s1 + $0x2d0] sm:$0xff]
      %v632 = vld [vmem:[%s1 + $0x2d8] sm:$0xff]
      %v633 = vld [vmem:[%s1 + $0x2e0] sm:$0xff]
      %v634 = vld [vmem:[%s1 + $0x2e8] sm:$0xff]
      %v635 = vld [vmem:[%s1 + $0x2f0] sm:$0xff]
      %v636 = vld [vmem:[%s1 + $0x2f8] sm:$0xff]
      %v637 = vld [vmem:[%s1 + $0x300] sm:$0xff]
      %v638 = vld [vmem:[%s1 + $0x308] sm:$0xff]
      %v639 = vld [vmem:[%s1 + $0x310] sm:$0xff]
      %v640 = vld [vmem:[%s1 + $0x318] sm:$0xff]
      %v641 = vld [vmem:[%s1 + $0x320] sm:$0xff]
      %v642 = vld [vmem:[%s1 + $0x328] sm:$0xff]
      %v643 = vld [vmem:[%s1 + $0x330] sm:$0xff]
      %v644 = vld [vmem:[%s1 + $0x338] sm:$0xff]
      %v645 = vld [vmem:[%s1 + $0x340] sm:$0xff]
      %v646 = vld [vmem:[%s1 + $0x348] sm:$0xff]
      %v647 = vld [vmem:[%s1 + $0x350] sm:$0xff]
      %v648 = vld [vmem:[%s1 + $0x358] sm:$0xff]
      %v649 = vld [vmem:[%s1 + $0x360] sm:$0xff]
      %v650 = vld [vmem:[%s1 + $0x368] sm:$0xff]
      %v651 = vld [vmem:[%s1 + $0x370] sm:$0xff]
      %v652 = vld [vmem:[%s1 + $0x378] sm:$0xff]
      %v653 = vld [vmem:[%s1 + $0x380] sm:$0xff]
      %v654 = vld [vmem:[%s1 + $0x388] sm:$0xff]
      %v655 = vld [vmem:[%s1 + $0x390] sm:$0xff]
      %v656 = vld [vmem:[%s1 + $0x398] sm:$0xff]
      %v657 = vld [vmem:[%s1 + $0x3a0] sm:$0xff]
      %v658 = vld [vmem:[%s1 + $0x3a8] sm:$0xff]
      %v659 = vld [vmem:[%s1 + $0x3b0] sm:$0xff]
      %v660 = vld [vmem:[%s1 + $0x3b8] sm:$0xff]
      %v661 = vld [vmem:[%s1 + $0x3c0] sm:$0xff]
      %v662 = vld [vmem:[%s1 + $0x3c8] sm:$0xff]
      %v663 = vld [vmem:[%s1 + $0x3d0] sm:$0xff]
      %v664 = vld [vmem:[%s1 + $0x3d8] sm:$0xff]
      %v665 = vld [vmem:[%s1 + $0x3e0] sm:$0xff]
      %v666 = vld [vmem:[%s1 + $0x3e8] sm:$0xff]
      %v667 = vld [vmem:[%s1 + $0x3f0] sm:$0xff]
      %v668 = vld [vmem:[%s1 + $0x3f8] sm:$0xff]
      %v669 = vld [vmem:[%s1 + $0x400] sm:$0xff]
      %v670 = vld [vmem:[%s1 + $0x408] sm:$0xff]
      %v671 = vld [vmem:[%s1 + $0x410] sm:$0xff]
      %v672 = vld [vmem:[%s1 + $0x418] sm:$0xff]
      %v673 = vld [vmem:[%s1 + $0x420] sm:$0xff]
      %v674 = vld [vmem:[%s1 + $0x428] sm:$0xff]
      %v675 = vld [vmem:[%s1 + $0x430] sm:$0xff]
      %v676 = vld [vmem:[%s1 + $0x438] sm:$0xff]
      %v677 = vld [vmem:[%s1 + $0x440] sm:$0xff]
      %v678 = vld [vmem:[%s1 + $0x448] sm:$0xff]
      %v679 = vld [vmem:[%s1 + $0x450] sm:$0xff]
      %v680 = vld [vmem:[%s1 + $0x458] sm:$0xff]
      %v681 = vld [vmem:[%s1 + $0x460] sm:$0xff]
      %v682 = vld [vmem:[%s1 + $0x468] sm:$0xff]
      %v683 = vld [vmem:[%s1 + $0x470] sm:$0xff]
      %v684 = vld [vmem:[%s1 + $0x478] sm:$0xff]
      %v685 = vld [vmem:[%s2] sm:$0x1]
      %v687 = vlaneseq
      %v688 = vshrl.u32 %v687, 7
      %v689 = vsub.s32 0, %v688
      %v690 = vrot.slane %v685, %v689
      %692 = vmatprep.subr.mxu0 0.0
      %693 = vmatpush1.msra.mxu0 %v541
      %694 = vmatprep.subr.mxu0 0.0
      %695 = vmatpush1.msra.mxu0 %v542
      %696 = vmatprep.subr.mxu0 0.0
      %697 = vmatpush1.msra.mxu0 %v543
      %698 = vmatprep.subr.mxu0 0.0
      %699 = vmatpush1.msra.mxu0 %v544
      %700 = vmatprep.subr.mxu0 0.0
      %701 = vmatpush1.msra.mxu0 %v545
      %702 = vmatprep.subr.mxu0 0.0
      %703 = vmatpush1.msra.mxu0 %v546
      %704 = vmatprep.subr.mxu0 0.0
      %705 = vmatpush1.msra.mxu0 %v547
      %706 = vmatprep.subr.mxu0 0.0
      %707 = vmatpush1.msra.mxu0 %v548
      %708 = vmatprep.subr.mxu0 0.0
      %709 = vmatpush1.msra.mxu0 %v549
      %710 = vmatprep.subr.mxu0 0.0
      %711 = vmatpush1.msra.mxu0 %v550
      %712 = vmatprep.subr.mxu0 0.0
      %713 = vmatpush1.msra.mxu0 %v551
      %714 = vmatprep.subr.mxu0 0.0
      %715 = vmatpush1.msra.mxu0 %v552
      %716 = vmatprep.subr.mxu0 0.0
      %717 = vmatpush1.msra.mxu0 %v553
      %718 = vmatprep.subr.mxu0 0.0
      %719 = vmatpush1.msra.mxu0 %v554
      %720 = vmatprep.subr.mxu0 0.0
      %721 = vmatpush1.msra.mxu0 %v555
      %722 = vmatprep.subr.mxu0 0.0
      %723 = vmatpush1.msra.mxu0 %v556
      %724 = vmatprep.subr.mxu0 0.0
      %725 = vmatpush1.msra.mxu0 %v557
      %726 = vmatprep.subr.mxu0 0.0
      %727 = vmatpush1.msra.mxu0 %v558
      %728 = vmatprep.subr.mxu0 0.0
      %729 = vmatpush1.msra.mxu0 %v559
      %730 = vmatprep.subr.mxu0 0.0
      %731 = vmatpush1.msra.mxu0 %v560
      %732 = vmatprep.subr.mxu0 0.0
      %733 = vmatpush1.msra.mxu0 %v561
      %734 = vmatprep.subr.mxu0 0.0
      %735 = vmatpush1.msra.mxu0 %v562
      %736 = vmatprep.subr.mxu0 0.0
      %737 = vmatpush1.msra.mxu0 %v563
      %738 = vmatprep.subr.mxu0 0.0
      %739 = vmatpush1.msra.mxu0 %v564
      %740 = vmatprep.subr.mxu0 0.0
      %741 = vmatpush1.msra.mxu0 %v565
      %742 = vmatprep.subr.mxu0 0.0
      %743 = vmatpush1.msra.mxu0 %v566
      %744 = vmatprep.subr.mxu0 0.0
      %745 = vmatpush1.msra.mxu0 %v567
      %746 = vmatprep.subr.mxu0 0.0
      %747 = vmatpush1.msra.mxu0 %v568
      %748 = vmatprep.subr.mxu0 0.0
      %749 = vmatpush1.msra.mxu0 %v569
      %750 = vmatprep.subr.mxu0 0.0
      %751 = vmatpush1.msra.mxu0 %v570
      %752 = vmatprep.subr.mxu0 0.0
      %753 = vmatpush1.msra.mxu0 %v571
      %754 = vmatprep.subr.mxu0 0.0
      %755 = vmatpush1.msra.mxu0 %v572
      %756 = vmatprep.mubr.f32.mxu0 %v254
      %757 = vmatmul.mubr.f32.gmra.mrb[0].mxu0 %v253
      %v758 = vpop.f32.mrb[0].mxu0
      %v759 = vadd.f32 %v690, %v758
      %v760 = vpop.f32.mrb[0].mxu0
      %761 = vmatprep.mubr.f32.mxu0 %v263
      %762 = vmatmul.mubr.f32.gmra.mrb[0].mxu0 %v262
      %v763 = vpop.f32.mrb[0].mxu0
      %v764 = vadd.f32 %v690, %v763
      %v765 = vpop.f32.mrb[0].mxu0
      %766 = vmatprep.mubr.f32.mxu0 %v272
      %767 = vmatmul.mubr.f32.gmra.mrb[0].mxu0 %v271
      %v768 = vpop.f32.mrb[0].mxu0
      %v769 = vadd.f32 %v690, %v768
      %v770 = vpop.f32.mrb[0].mxu0
      %771 = vmatprep.mubr.f32.mxu0 %v281
      %772 = vmatmul.mubr.f32.gmra.mrb[0].mxu0 %v280
      %v773 = vpop.f32.mrb[0].mxu0
      %v774 = vadd.f32 %v690, %v773
      %v775 = vpop.f32.mrb[0].mxu0
      %776 = vmatprep.mubr.f32.mxu0 %v290
      %777 = vmatmul.mubr.f32.gmra.mrb[0].mxu0 %v289
      %v778 = vpop.f32.mrb[0].mxu0
      %v779 = vadd.f32 %v690, %v778
      %v780 = vpop.f32.mrb[0].mxu0
      %781 = vmatprep.mubr.f32.mxu0 %v299
      %782 = vmatmul.mubr.f32.gmra.mrb[0].mxu0 %v298
      %v783 = vpop.f32.mrb[0].mxu0
      %v784 = vadd.f32 %v690, %v783
      %v785 = vpop.f32.mrb[0].mxu0
      %786 = vmatprep.mubr.f32.mxu0 %v308
      %787 = vmatmul.mubr.f32.gmra.mrb[0].mxu0 %v307
      %v788 = vpop.f32.mrb[0].mxu0
      %v789 = vadd.f32 %v690, %v788
      %v790 = vpop.f32.mrb[0].mxu0
      %791 = vmatprep.mubr.f32.mxu0 %v317
      %792 = vmatmul.mubr.f32.gmra.mrb[0].mxu0 %v316
      %v793 = vpop.f32.mrb[0].mxu0
      %v794 = vadd.f32 %v690, %v793
      %v795 = vpop.f32.mrb[0].mxu0
      %796 = vmatprep.mubr.f32.mxu0 %v326
      %797 = vmatmul.mubr.f32.gmra.mrb[0].mxu0 %v325
      %v798 = vpop.f32.mrb[0].mxu0
      %v799 = vadd.f32 %v690, %v798
      %v800 = vpop.f32.mrb[0].mxu0
      %801 = vmatprep.mubr.f32.mxu0 %v335
      %802 = vmatmul.mubr.f32.gmra.mrb[0].mxu0 %v334
      %v803 = vpop.f32.mrb[0].mxu0
      %v804 = vadd.f32 %v690, %v803
      %v805 = vpop.f32.mrb[0].mxu0
      %806 = vmatprep.mubr.f32.mxu0 %v344
      %807 = vmatmul.mubr.f32.gmra.mrb[0].mxu0 %v343
      %v808 = vpop.f32.mrb[0].mxu0
      %v809 = vadd.f32 %v690, %v808
      %v810 = vpop.f32.mrb[0].mxu0
      %811 = vmatprep.mubr.f32.mxu0 %v353
      %812 = vmatmul.mubr.f32.gmra.mrb[0].mxu0 %v352
      %v813 = vpop.f32.mrb[0].mxu0
      %v814 = vadd.f32 %v690, %v813
      %v815 = vpop.f32.mrb[0].mxu0
      %816 = vmatprep.mubr.f32.mxu0 %v362
      %817 = vmatmul.mubr.f32.gmra.mrb[0].mxu0 %v361
      %v818 = vpop.f32.mrb[0].mxu0
      %v819 = vadd.f32 %v690, %v818
      %v820 = vpop.f32.mrb[0].mxu0
      %821 = vmatprep.mubr.f32.mxu0 %v371
      %822 = vmatmul.mubr.f32.gmra.mrb[0].mxu0 %v370
      %v823 = vpop.f32.mrb[0].mxu0
      %v824 = vadd.f32 %v690, %v823
      %v825 = vpop.f32.mrb[0].mxu0
      %826 = vmatprep.mubr.f32.mxu0 %v380
      %827 = vmatmul.mubr.f32.gmra.mrb[0].mxu0 %v379
      %v828 = vpop.f32.mrb[0].mxu0
      %v829 = vadd.f32 %v690, %v828
      %v830 = vpop.f32.mrb[0].mxu0
      %831 = vmatprep.mubr.f32.mxu0 %v389
      %832 = vmatmul.mubr.f32.gmra.mrb[0].mxu0 %v388
      %v833 = vpop.f32.mrb[0].mxu0
      %v834 = vadd.f32 %v690, %v833
      %v835 = vpop.f32.mrb[0].mxu0
      %836 = vmatprep.mubr.f32.mxu0 %v398
      %837 = vmatmul.mubr.f32.gmra.mrb[0].mxu0 %v397
      %v838 = vpop.f32.mrb[0].mxu0
      %v839 = vadd.f32 %v690, %v838
      %v840 = vpop.f32.mrb[0].mxu0
      %841 = vmatprep.mubr.f32.mxu0 %v407
      %842 = vmatmul.mubr.f32.gmra.mrb[0].mxu0 %v406
      %v843 = vpop.f32.mrb[0].mxu0
      %v844 = vadd.f32 %v690, %v843
      %v845 = vpop.f32.mrb[0].mxu0
      %846 = vmatprep.mubr.f32.mxu0 %v416
      %847 = vmatmul.mubr.f32.gmra.mrb[0].mxu0 %v415
      %v848 = vpop.f32.mrb[0].mxu0
      %v849 = vadd.f32 %v690, %v848
      %v850 = vpop.f32.mrb[0].mxu0
      %851 = vmatprep.mubr.f32.mxu0 %v425
      %852 = vmatmul.mubr.f32.gmra.mrb[0].mxu0 %v424
      %v853 = vpop.f32.mrb[0].mxu0
      %v854 = vadd.f32 %v690, %v853
      %v855 = vpop.f32.mrb[0].mxu0
      %856 = vmatprep.mubr.f32.mxu0 %v434
      %857 = vmatmul.mubr.f32.gmra.mrb[0].mxu0 %v433
      %v858 = vpop.f32.mrb[0].mxu0
      %v859 = vadd.f32 %v690, %v858
      %v860 = vpop.f32.mrb[0].mxu0
      %861 = vmatprep.mubr.f32.mxu0 %v443
      %862 = vmatmul.mubr.f32.gmra.mrb[0].mxu0 %v442
      %v863 = vpop.f32.mrb[0].mxu0
      %v864 = vadd.f32 %v690, %v863
      %v865 = vpop.f32.mrb[0].mxu0
      %866 = vmatprep.mubr.f32.mxu0 %v452
      %867 = vmatmul.mubr.f32.gmra.mrb[0].mxu0 %v451
      %v868 = vpop.f32.mrb[0].mxu0
      %v869 = vadd.f32 %v690, %v868
      %v870 = vpop.f32.mrb[0].mxu0
      %871 = vmatprep.mubr.f32.mxu0 %v461
      %872 = vmatmul.mubr.f32.gmra.mrb[0].mxu0 %v460
      %v873 = vpop.f32.mrb[0].mxu0
      %v874 = vadd.f32 %v690, %v873
      %v875 = vpop.f32.mrb[0].mxu0
      %876 = vmatprep.mubr.f32.mxu0 %v470
      %877 = vmatmul.mubr.f32.gmra.mrb[0].mxu0 %v469
      %v878 = vpop.f32.mrb[0].mxu0
      %v879 = vadd.f32 %v690, %v878
      %v880 = vpop.f32.mrb[0].mxu0
      %881 = vmatprep.mubr.f32.mxu0 %v479
      %882 = vmatmul.mubr.f32.gmra.mrb[0].mxu0 %v478
      %v883 = vpop.f32.mrb[0].mxu0
      %v884 = vadd.f32 %v690, %v883
      %v885 = vpop.f32.mrb[0].mxu0
      %886 = vmatprep.mubr.f32.mxu0 %v488
      %887 = vmatmul.mubr.f32.gmra.mrb[0].mxu0 %v487
      %v888 = vpop.f32.mrb[0].mxu0
      %v889 = vadd.f32 %v690, %v888
      %v890 = vpop.f32.mrb[0].mxu0
      %891 = vmatprep.mubr.f32.mxu0 %v497
      %892 = vmatmul.mubr.f32.gmra.mrb[0].mxu0 %v496
      %v893 = vpop.f32.mrb[0].mxu0
      %v894 = vadd.f32 %v690, %v893
      %v895 = vpop.f32.mrb[0].mxu0
      %896 = vmatprep.mubr.f32.mxu0 %v506
      %897 = vmatmul.mubr.f32.gmra.mrb[0].mxu0 %v505
      %v898 = vpop.f32.mrb[0].mxu0
      %v899 = vadd.f32 %v690, %v898
      %v900 = vpop.f32.mrb[0].mxu0
      %901 = vmatprep.mubr.f32.mxu0 %v515
      %902 = vmatmul.mubr.f32.gmra.mrb[0].mxu0 %v514
      %v903 = vpop.f32.mrb[0].mxu0
      %v904 = vadd.f32 %v690, %v903
      %v905 = vpop.f32.mrb[0].mxu0
      %906 = vmatprep.mubr.f32.mxu0 %v524
      %907 = vmatmul.mubr.f32.gmra.mrb[0].mxu0 %v523
      %v908 = vpop.f32.mrb[0].mxu0
      %v909 = vadd.f32 %v690, %v908
      %v910 = vpop.f32.mrb[0].mxu0
      %911 = vmatprep.mubr.f32.mxu0 %v533
      %912 = vmatmul.mubr.f32.gmra.mrb[0].mxu0 %v532
      %v913 = vpop.f32.mrb[0].mxu0
      %v914 = vadd.f32 %v690, %v913
      %v915 = vpop.f32.mrb[0].mxu0
      %916 = vdwg.mxu0
      %917 = vmatprep.subr.mxu0 0.0
      %918 = vmatpush1.msra.mxu0 %v573
      %919 = vmatprep.subr.mxu0 0.0
      %920 = vmatpush1.msra.mxu0 %v574
      %921 = vmatprep.subr.mxu0 0.0
      %922 = vmatpush1.msra.mxu0 %v575
      %923 = vmatprep.subr.mxu0 0.0
      %924 = vmatpush1.msra.mxu0 %v576
      %925 = vmatprep.subr.mxu0 0.0
      %926 = vmatpush1.msra.mxu0 %v577
      %927 = vmatprep.subr.mxu0 0.0
      %928 = vmatpush1.msra.mxu0 %v578
      %929 = vmatprep.subr.mxu0 0.0
      %930 = vmatpush1.msra.mxu0 %v579
      %931 = vmatprep.subr.mxu0 0.0
      %932 = vmatpush1.msra.mxu0 %v580
      %933 = vmatprep.subr.mxu0 0.0
      %934 = vmatpush1.msra.mxu0 %v581
      %935 = vmatprep.subr.mxu0 0.0
      %936 = vmatpush1.msra.mxu0 %v582
      %937 = vmatprep.subr.mxu0 0.0
      %938 = vmatpush1.msra.mxu0 %v583
      %939 = vmatprep.subr.mxu0 0.0
      %940 = vmatpush1.msra.mxu0 %v584
      %941 = vmatprep.subr.mxu0 0.0
      %942 = vmatpush1.msra.mxu0 %v585
      %943 = vmatprep.subr.mxu0 0.0
      %944 = vmatpush1.msra.mxu0 %v586
      %945 = vmatprep.subr.mxu0 0.0
      %946 = vmatpush1.msra.mxu0 %v587
      %947 = vmatprep.subr.mxu0 0.0
      %948 = vmatpush1.msra.mxu0 %v588
      %949 = vmatprep.subr.mxu0 0.0
      %950 = vmatpush1.msra.mxu0 %v589
      %951 = vmatprep.subr.mxu0 0.0
      %952 = vmatpush1.msra.mxu0 %v590
      %953 = vmatprep.subr.mxu0 0.0
      %954 = vmatpush1.msra.mxu0 %v591
      %955 = vmatprep.subr.mxu0 0.0
      %956 = vmatpush1.msra.mxu0 %v592
      %957 = vmatprep.subr.mxu0 0.0
      %958 = vmatpush1.msra.mxu0 %v593
      %959 = vmatprep.subr.mxu0 0.0
      %960 = vmatpush1.msra.mxu0 %v594
      %961 = vmatprep.subr.mxu0 0.0
      %962 = vmatpush1.msra.mxu0 %v595
      %963 = vmatprep.subr.mxu0 0.0
      %964 = vmatpush1.msra.mxu0 %v596
      %965 = vmatprep.subr.mxu0 0.0
      %966 = vmatpush1.msra.mxu0 %v597
      %967 = vmatprep.subr.mxu0 0.0
      %968 = vmatpush1.msra.mxu0 %v598
      %969 = vmatprep.subr.mxu0 0.0
      %970 = vmatpush1.msra.mxu0 %v599
      %971 = vmatprep.subr.mxu0 0.0
      %972 = vmatpush1.msra.mxu0 %v600
      %973 = vmatprep.subr.mxu0 0.0
      %974 = vmatpush1.msra.mxu0 %v601
      %975 = vmatprep.subr.mxu0 0.0
      %976 = vmatpush1.msra.mxu0 %v602
      %977 = vmatprep.subr.mxu0 0.0
      %978 = vmatpush1.msra.mxu0 %v603
      %979 = vmatprep.subr.mxu0 0.0
      %980 = vmatpush1.msra.mxu0 %v604
      %981 = vmatprep.mubr.f32.mxu0 %v256
      %982 = vmatmul.mubr.f32.gmra.mrb[0].mxu0 %v255
      %v983 = vpop.f32.mrb[0].mxu0
      %v984 = vadd.f32 %v759, %v983
      %v985 = vpop.f32.mrb[0].mxu0
      %986 = vmatprep.mubr.f32.mxu0 %v265
      %987 = vmatmul.mubr.f32.gmra.mrb[0].mxu0 %v264
      %v988 = vpop.f32.mrb[0].mxu0
      %v989 = vadd.f32 %v764, %v988
      %v990 = vpop.f32.mrb[0].mxu0
      %991 = vmatprep.mubr.f32.mxu0 %v274
      %992 = vmatmul.mubr.f32.gmra.mrb[0].mxu0 %v273
      %v993 = vpop.f32.mrb[0].mxu0
      %v994 = vadd.f32 %v769, %v993
      %v995 = vpop.f32.mrb[0].mxu0
      %996 = vmatprep.mubr.f32.mxu0 %v283
      %997 = vmatmul.mubr.f32.gmra.mrb[0].mxu0 %v282
      %v998 = vpop.f32.mrb[0].mxu0
      %v999 = vadd.f32 %v774, %v998
      %v1000 = vpop.f32.mrb[0].mxu0
      %1001 = vmatprep.mubr.f32.mxu0 %v292
      %1002 = vmatmul.mubr.f32.gmra.mrb[0].mxu0 %v291
      %v1003 = vpop.f32.mrb[0].mxu0
      %v1004 = vadd.f32 %v779, %v1003
      %v1005 = vpop.f32.mrb[0].mxu0
      %1006 = vmatprep.mubr.f32.mxu0 %v301
      %1007 = vmatmul.mubr.f32.gmra.mrb[0].mxu0 %v300
      %v1008 = vpop.f32.mrb[0].mxu0
      %v1009 = vadd.f32 %v784, %v1008
      %v1010 = vpop.f32.mrb[0].mxu0
      %1011 = vmatprep.mubr.f32.mxu0 %v310
      %1012 = vmatmul.mubr.f32.gmra.mrb[0].mxu0 %v309
      %v1013 = vpop.f32.mrb[0].mxu0
      %v1014 = vadd.f32 %v789, %v1013
      %v1015 = vpop.f32.mrb[0].mxu0
      %1016 = vmatprep.mubr.f32.mxu0 %v319
      %1017 = vmatmul.mubr.f32.gmra.mrb[0].mxu0 %v318
      %v1018 = vpop.f32.mrb[0].mxu0
      %v1019 = vadd.f32 %v794, %v1018
      %v1020 = vpop.f32.mrb[0].mxu0
      %1021 = vmatprep.mubr.f32.mxu0 %v328
      %1022 = vmatmul.mubr.f32.gmra.mrb[0].mxu0 %v327
      %v1023 = vpop.f32.mrb[0].mxu0
      %v1024 = vadd.f32 %v799, %v1023
      %v1025 = vpop.f32.mrb[0].mxu0
      %1026 = vmatprep.mubr.f32.mxu0 %v337
      %1027 = vmatmul.mubr.f32.gmra.mrb[0].mxu0 %v336
      %v1028 = vpop.f32.mrb[0].mxu0
      %v1029 = vadd.f32 %v804, %v1028
      %v1030 = vpop.f32.mrb[0].mxu0
      %1031 = vmatprep.mubr.f32.mxu0 %v346
      %1032 = vmatmul.mubr.f32.gmra.mrb[0].mxu0 %v345
      %v1033 = vpop.f32.mrb[0].mxu0
      %v1034 = vadd.f32 %v809, %v1033
      %v1035 = vpop.f32.mrb[0].mxu0
      %1036 = vmatprep.mubr.f32.mxu0 %v355
      %1037 = vmatmul.mubr.f32.gmra.mrb[0].mxu0 %v354
      %v1038 = vpop.f32.mrb[0].mxu0
      %v1039 = vadd.f32 %v814, %v1038
      %v1040 = vpop.f32.mrb[0].mxu0
      %1041 = vmatprep.mubr.f32.mxu0 %v364
      %1042 = vmatmul.mubr.f32.gmra.mrb[0].mxu0 %v363
      %v1043 = vpop.f32.mrb[0].mxu0
      %v1044 = vadd.f32 %v819, %v1043
      %v1045 = vpop.f32.mrb[0].mxu0
      %1046 = vmatprep.mubr.f32.mxu0 %v373
      %1047 = vmatmul.mubr.f32.gmra.mrb[0].mxu0 %v372
      %v1048 = vpop.f32.mrb[0].mxu0
      %v1049 = vadd.f32 %v824, %v1048
      %v1050 = vpop.f32.mrb[0].mxu0
      %1051 = vmatprep.mubr.f32.mxu0 %v382
      %1052 = vmatmul.mubr.f32.gmra.mrb[0].mxu0 %v381
      %v1053 = vpop.f32.mrb[0].mxu0
      %v1054 = vadd.f32 %v829, %v1053
      %v1055 = vpop.f32.mrb[0].mxu0
      %1056 = vmatprep.mubr.f32.mxu0 %v391
      %1057 = vmatmul.mubr.f32.gmra.mrb[0].mxu0 %v390
      %v1058 = vpop.f32.mrb[0].mxu0
      %v1059 = vadd.f32 %v834, %v1058
      %v1060 = vpop.f32.mrb[0].mxu0
      %1061 = vmatprep.mubr.f32.mxu0 %v400
      %1062 = vmatmul.mubr.f32.gmra.mrb[0].mxu0 %v399
      %v1063 = vpop.f32.mrb[0].mxu0
      %v1064 = vadd.f32 %v839, %v1063
      %v1065 = vpop.f32.mrb[0].mxu0
      %1066 = vmatprep.mubr.f32.mxu0 %v409
      %1067 = vmatmul.mubr.f32.gmra.mrb[0].mxu0 %v408
      %v1068 = vpop.f32.mrb[0].mxu0
      %v1069 = vadd.f32 %v844, %v1068
      %v1070 = vpop.f32.mrb[0].mxu0
      %1071 = vmatprep.mubr.f32.mxu0 %v418
      %1072 = vmatmul.mubr.f32.gmra.mrb[0].mxu0 %v417
      %v1073 = vpop.f32.mrb[0].mxu0
      %v1074 = vadd.f32 %v849, %v1073
      %v1075 = vpop.f32.mrb[0].mxu0
      %1076 = vmatprep.mubr.f32.mxu0 %v427
      %1077 = vmatmul.mubr.f32.gmra.mrb[0].mxu0 %v426
      %v1078 = vpop.f32.mrb[0].mxu0
      %v1079 = vadd.f32 %v854, %v1078
      %v1080 = vpop.f32.mrb[0].mxu0
      %1081 = vmatprep.mubr.f32.mxu0 %v436
      %1082 = vmatmul.mubr.f32.gmra.mrb[0].mxu0 %v435
      %v1083 = vpop.f32.mrb[0].mxu0
      %v1084 = vadd.f32 %v859, %v1083
      %v1085 = vpop.f32.mrb[0].mxu0
      %1086 = vmatprep.mubr.f32.mxu0 %v445
      %1087 = vmatmul.mubr.f32.gmra.mrb[0].mxu0 %v444
      %v1088 = vpop.f32.mrb[0].mxu0
      %v1089 = vadd.f32 %v864, %v1088
      %v1090 = vpop.f32.mrb[0].mxu0
      %1091 = vmatprep.mubr.f32.mxu0 %v454
      %1092 = vmatmul.mubr.f32.gmra.mrb[0].mxu0 %v453
      %v1093 = vpop.f32.mrb[0].mxu0
      %v1094 = vadd.f32 %v869, %v1093
      %v1095 = vpop.f32.mrb[0].mxu0
      %1096 = vmatprep.mubr.f32.mxu0 %v463
      %1097 = vmatmul.mubr.f32.gmra.mrb[0].mxu0 %v462
      %v1098 = vpop.f32.mrb[0].mxu0
      %v1099 = vadd.f32 %v874, %v1098
      %v1100 = vpop.f32.mrb[0].mxu0
      %1101 = vmatprep.mubr.f32.mxu0 %v472
      %1102 = vmatmul.mubr.f32.gmra.mrb[0].mxu0 %v471
      %v1103 = vpop.f32.mrb[0].mxu0
      %v1104 = vadd.f32 %v879, %v1103
      %v1105 = vpop.f32.mrb[0].mxu0
      %1106 = vmatprep.mubr.f32.mxu0 %v481
      %1107 = vmatmul.mubr.f32.gmra.mrb[0].mxu0 %v480
      %v1108 = vpop.f32.mrb[0].mxu0
      %v1109 = vadd.f32 %v884, %v1108
      %v1110 = vpop.f32.mrb[0].mxu0
      %1111 = vmatprep.mubr.f32.mxu0 %v490
      %1112 = vmatmul.mubr.f32.gmra.mrb[0].mxu0 %v489
      %v1113 = vpop.f32.mrb[0].mxu0
      %v1114 = vadd.f32 %v889, %v1113
      %v1115 = vpop.f32.mrb[0].mxu0
      %1116 = vmatprep.mubr.f32.mxu0 %v499
      %1117 = vmatmul.mubr.f32.gmra.mrb[0].mxu0 %v498
      %v1118 = vpop.f32.mrb[0].mxu0
      %v1119 = vadd.f32 %v894, %v1118
      %v1120 = vpop.f32.mrb[0].mxu0
      %1121 = vmatprep.mubr.f32.mxu0 %v508
      %1122 = vmatmul.mubr.f32.gmra.mrb[0].mxu0 %v507
      %v1123 = vpop.f32.mrb[0].mxu0
      %v1124 = vadd.f32 %v899, %v1123
      %v1125 = vpop.f32.mrb[0].mxu0
      %1126 = vmatprep.mubr.f32.mxu0 %v517
      %1127 = vmatmul.mubr.f32.gmra.mrb[0].mxu0 %v516
      %v1128 = vpop.f32.mrb[0].mxu0
      %v1129 = vadd.f32 %v904, %v1128
      %v1130 = vpop.f32.mrb[0].mxu0
      %1131 = vmatprep.mubr.f32.mxu0 %v526
      %1132 = vmatmul.mubr.f32.gmra.mrb[0].mxu0 %v525
      %v1133 = vpop.f32.mrb[0].mxu0
      %v1134 = vadd.f32 %v909, %v1133
      %v1135 = vpop.f32.mrb[0].mxu0
      %1136 = vmatprep.mubr.f32.mxu0 %v535
      %1137 = vmatmul.mubr.f32.gmra.mrb[0].mxu0 %v534
      %v1138 = vpop.f32.mrb[0].mxu0
      %v1139 = vadd.f32 %v914, %v1138
      %v1140 = vpop.f32.mrb[0].mxu0
      %1141 = vdwg.mxu0
      %1142 = vmatprep.subr.mxu0 0.0
      %1143 = vmatpush1.msra.mxu0 %v605
      %1144 = vmatprep.subr.mxu0 0.0
      %1145 = vmatpush1.msra.mxu0 %v606
      %1146 = vmatprep.subr.mxu0 0.0
      %1147 = vmatpush1.msra.mxu0 %v607
      %1148 = vmatprep.subr.mxu0 0.0
      %1149 = vmatpush1.msra.mxu0 %v608
      %1150 = vmatprep.subr.mxu0 0.0
      %1151 = vmatpush1.msra.mxu0 %v609
      %1152 = vmatprep.subr.mxu0 0.0
      %1153 = vmatpush1.msra.mxu0 %v610
      %1154 = vmatprep.subr.mxu0 0.0
      %1155 = vmatpush1.msra.mxu0 %v611
      %1156 = vmatprep.subr.mxu0 0.0
      %1157 = vmatpush1.msra.mxu0 %v612
      %1158 = vmatprep.subr.mxu0 0.0
      %1159 = vmatpush1.msra.mxu0 %v613
      %1160 = vmatprep.subr.mxu0 0.0
      %1161 = vmatpush1.msra.mxu0 %v614
      %1162 = vmatprep.subr.mxu0 0.0
      %1163 = vmatpush1.msra.mxu0 %v615
      %1164 = vmatprep.subr.mxu0 0.0
      %1165 = vmatpush1.msra.mxu0 %v616
      %1166 = vmatprep.subr.mxu0 0.0
      %1167 = vmatpush1.msra.mxu0 %v617
      %1168 = vmatprep.subr.mxu0 0.0
      %1169 = vmatpush1.msra.mxu0 %v618
      %1170 = vmatprep.subr.mxu0 0.0
      %1171 = vmatpush1.msra.mxu0 %v619
      %1172 = vmatprep.subr.mxu0 0.0
      %1173 = vmatpush1.msra.mxu0 %v620
      %1174 = vmatprep.subr.mxu0 0.0
      %1175 = vmatpush1.msra.mxu0 %v621
      %1176 = vmatprep.subr.mxu0 0.0
      %1177 = vmatpush1.msra.mxu0 %v622
      %1178 = vmatprep.subr.mxu0 0.0
      %1179 = vmatpush1.msra.mxu0 %v623
      %1180 = vmatprep.subr.mxu0 0.0
      %1181 = vmatpush1.msra.mxu0 %v624
      %1182 = vmatprep.subr.mxu0 0.0
      %1183 = vmatpush1.msra.mxu0 %v625
      %1184 = vmatprep.subr.mxu0 0.0
      %1185 = vmatpush1.msra.mxu0 %v626
      %1186 = vmatprep.subr.mxu0 0.0
      %1187 = vmatpush1.msra.mxu0 %v627
      %1188 = vmatprep.subr.mxu0 0.0
      %1189 = vmatpush1.msra.mxu0 %v628
      %1190 = vmatprep.subr.mxu0 0.0
      %1191 = vmatpush1.msra.mxu0 %v629
      %1192 = vmatprep.subr.mxu0 0.0
      %1193 = vmatpush1.msra.mxu0 %v630
      %1194 = vmatprep.subr.mxu0 0.0
      %1195 = vmatpush1.msra.mxu0 %v631
      %1196 = vmatprep.subr.mxu0 0.0
      %1197 = vmatpush1.msra.mxu0 %v632
      %1198 = vmatprep.subr.mxu0 0.0
      %1199 = vmatpush1.msra.mxu0 %v633
      %1200 = vmatprep.subr.mxu0 0.0
      %1201 = vmatpush1.msra.mxu0 %v634
      %1202 = vmatprep.subr.mxu0 0.0
      %1203 = vmatpush1.msra.mxu0 %v635
      %1204 = vmatprep.subr.mxu0 0.0
      %1205 = vmatpush1.msra.mxu0 %v636
      %1206 = vmatprep.mubr.f32.mxu0 %v258
      %1207 = vmatmul.mubr.f32.gmra.mrb[0].mxu0 %v257
      %v1208 = vpop.f32.mrb[0].mxu0
      %v1209 = vadd.f32 %v984, %v1208
      %v1210 = vpop.f32.mrb[0].mxu0
      %1211 = vmatprep.mubr.f32.mxu0 %v267
      %1212 = vmatmul.mubr.f32.gmra.mrb[0].mxu0 %v266
      %v1213 = vpop.f32.mrb[0].mxu0
      %v1214 = vadd.f32 %v989, %v1213
      %v1215 = vpop.f32.mrb[0].mxu0
      %1216 = vmatprep.mubr.f32.mxu0 %v276
      %1217 = vmatmul.mubr.f32.gmra.mrb[0].mxu0 %v275
      %v1218 = vpop.f32.mrb[0].mxu0
      %v1219 = vadd.f32 %v994, %v1218
      %v1220 = vpop.f32.mrb[0].mxu0
      %1221 = vmatprep.mubr.f32.mxu0 %v285
      %1222 = vmatmul.mubr.f32.gmra.mrb[0].mxu0 %v284
      %v1223 = vpop.f32.mrb[0].mxu0
      %v1224 = vadd.f32 %v999, %v1223
      %v1225 = vpop.f32.mrb[0].mxu0
      %1226 = vmatprep.mubr.f32.mxu0 %v294
      %1227 = vmatmul.mubr.f32.gmra.mrb[0].mxu0 %v293
      %v1228 = vpop.f32.mrb[0].mxu0
      %v1229 = vadd.f32 %v1004, %v1228
      %v1230 = vpop.f32.mrb[0].mxu0
      %1231 = vmatprep.mubr.f32.mxu0 %v303
      %1232 = vmatmul.mubr.f32.gmra.mrb[0].mxu0 %v302
      %v1233 = vpop.f32.mrb[0].mxu0
      %v1234 = vadd.f32 %v1009, %v1233
      %v1235 = vpop.f32.mrb[0].mxu0
      %1236 = vmatprep.mubr.f32.mxu0 %v312
      %1237 = vmatmul.mubr.f32.gmra.mrb[0].mxu0 %v311
      %v1238 = vpop.f32.mrb[0].mxu0
      %v1239 = vadd.f32 %v1014, %v1238
      %v1240 = vpop.f32.mrb[0].mxu0
      %1241 = vmatprep.mubr.f32.mxu0 %v321
      %1242 = vmatmul.mubr.f32.gmra.mrb[0].mxu0 %v320
      %v1243 = vpop.f32.mrb[0].mxu0
      %v1244 = vadd.f32 %v1019, %v1243
      %v1245 = vpop.f32.mrb[0].mxu0
      %1246 = vmatprep.mubr.f32.mxu0 %v330
      %1247 = vmatmul.mubr.f32.gmra.mrb[0].mxu0 %v329
      %v1248 = vpop.f32.mrb[0].mxu0
      %v1249 = vadd.f32 %v1024, %v1248
      %v1250 = vpop.f32.mrb[0].mxu0
      %1251 = vmatprep.mubr.f32.mxu0 %v339
      %1252 = vmatmul.mubr.f32.gmra.mrb[0].mxu0 %v338
      %v1253 = vpop.f32.mrb[0].mxu0
      %v1254 = vadd.f32 %v1029, %v1253
      %v1255 = vpop.f32.mrb[0].mxu0
      %1256 = vmatprep.mubr.f32.mxu0 %v348
      %1257 = vmatmul.mubr.f32.gmra.mrb[0].mxu0 %v347
      %v1258 = vpop.f32.mrb[0].mxu0
      %v1259 = vadd.f32 %v1034, %v1258
      %v1260 = vpop.f32.mrb[0].mxu0
      %1261 = vmatprep.mubr.f32.mxu0 %v357
      %1262 = vmatmul.mubr.f32.gmra.mrb[0].mxu0 %v356
      %v1263 = vpop.f32.mrb[0].mxu0
      %v1264 = vadd.f32 %v1039, %v1263
      %v1265 = vpop.f32.mrb[0].mxu0
      %1266 = vmatprep.mubr.f32.mxu0 %v366
      %1267 = vmatmul.mubr.f32.gmra.mrb[0].mxu0 %v365
      %v1268 = vpop.f32.mrb[0].mxu0
      %v1269 = vadd.f32 %v1044, %v1268
      %v1270 = vpop.f32.mrb[0].mxu0
      %1271 = vmatprep.mubr.f32.mxu0 %v375
      %1272 = vmatmul.mubr.f32.gmra.mrb[0].mxu0 %v374
      %v1273 = vpop.f32.mrb[0].mxu0
      %v1274 = vadd.f32 %v1049, %v1273
      %v1275 = vpop.f32.mrb[0].mxu0
      %1276 = vmatprep.mubr.f32.mxu0 %v384
      %1277 = vmatmul.mubr.f32.gmra.mrb[0].mxu0 %v383
      %v1278 = vpop.f32.mrb[0].mxu0
      %v1279 = vadd.f32 %v1054, %v1278
      %v1280 = vpop.f32.mrb[0].mxu0
      %1281 = vmatprep.mubr.f32.mxu0 %v393
      %1282 = vmatmul.mubr.f32.gmra.mrb[0].mxu0 %v392
      %v1283 = vpop.f32.mrb[0].mxu0
      %v1284 = vadd.f32 %v1059, %v1283
      %v1285 = vpop.f32.mrb[0].mxu0
      %1286 = vmatprep.mubr.f32.mxu0 %v402
      %1287 = vmatmul.mubr.f32.gmra.mrb[0].mxu0 %v401
      %v1288 = vpop.f32.mrb[0].mxu0
      %v1289 = vadd.f32 %v1064, %v1288
      %v1290 = vpop.f32.mrb[0].mxu0
      %1291 = vmatprep.mubr.f32.mxu0 %v411
      %1292 = vmatmul.mubr.f32.gmra.mrb[0].mxu0 %v410
      %v1293 = vpop.f32.mrb[0].mxu0
      %v1294 = vadd.f32 %v1069, %v1293
      %v1295 = vpop.f32.mrb[0].mxu0
      %1296 = vmatprep.mubr.f32.mxu0 %v420
      %1297 = vmatmul.mubr.f32.gmra.mrb[0].mxu0 %v419
      %v1298 = vpop.f32.mrb[0].mxu0
      %v1299 = vadd.f32 %v1074, %v1298
      %v1300 = vpop.f32.mrb[0].mxu0
      %1301 = vmatprep.mubr.f32.mxu0 %v429
      %1302 = vmatmul.mubr.f32.gmra.mrb[0].mxu0 %v428
      %v1303 = vpop.f32.mrb[0].mxu0
      %v1304 = vadd.f32 %v1079, %v1303
      %v1305 = vpop.f32.mrb[0].mxu0
      %1306 = vmatprep.mubr.f32.mxu0 %v438
      %1307 = vmatmul.mubr.f32.gmra.mrb[0].mxu0 %v437
      %v1308 = vpop.f32.mrb[0].mxu0
      %v1309 = vadd.f32 %v1084, %v1308
      %v1310 = vpop.f32.mrb[0].mxu0
      %1311 = vmatprep.mubr.f32.mxu0 %v447
      %1312 = vmatmul.mubr.f32.gmra.mrb[0].mxu0 %v446
      %v1313 = vpop.f32.mrb[0].mxu0
      %v1314 = vadd.f32 %v1089, %v1313
      %v1315 = vpop.f32.mrb[0].mxu0
      %1316 = vmatprep.mubr.f32.mxu0 %v456
      %1317 = vmatmul.mubr.f32.gmra.mrb[0].mxu0 %v455
      %v1318 = vpop.f32.mrb[0].mxu0
      %v1319 = vadd.f32 %v1094, %v1318
      %v1320 = vpop.f32.mrb[0].mxu0
      %1321 = vmatprep.mubr.f32.mxu0 %v465
      %1322 = vmatmul.mubr.f32.gmra.mrb[0].mxu0 %v464
      %v1323 = vpop.f32.mrb[0].mxu0
      %v1324 = vadd.f32 %v1099, %v1323
      %v1325 = vpop.f32.mrb[0].mxu0
      %1326 = vmatprep.mubr.f32.mxu0 %v474
      %1327 = vmatmul.mubr.f32.gmra.mrb[0].mxu0 %v473
      %v1328 = vpop.f32.mrb[0].mxu0
      %v1329 = vadd.f32 %v1104, %v1328
      %v1330 = vpop.f32.mrb[0].mxu0
      %1331 = vmatprep.mubr.f32.mxu0 %v483
      %1332 = vmatmul.mubr.f32.gmra.mrb[0].mxu0 %v482
      %v1333 = vpop.f32.mrb[0].mxu0
      %v1334 = vadd.f32 %v1109, %v1333
      %v1335 = vpop.f32.mrb[0].mxu0
      %1336 = vmatprep.mubr.f32.mxu0 %v492
      %1337 = vmatmul.mubr.f32.gmra.mrb[0].mxu0 %v491
      %v1338 = vpop.f32.mrb[0].mxu0
      %v1339 = vadd.f32 %v1114, %v1338
      %v1340 = vpop.f32.mrb[0].mxu0
      %1341 = vmatprep.mubr.f32.mxu0 %v501
      %1342 = vmatmul.mubr.f32.gmra.mrb[0].mxu0 %v500
      %v1343 = vpop.f32.mrb[0].mxu0
      %v1344 = vadd.f32 %v1119, %v1343
      %v1345 = vpop.f32.mrb[0].mxu0
      %1346 = vmatprep.mubr.f32.mxu0 %v510
      %1347 = vmatmul.mubr.f32.gmra.mrb[0].mxu0 %v509
      %v1348 = vpop.f32.mrb[0].mxu0
      %v1349 = vadd.f32 %v1124, %v1348
      %v1350 = vpop.f32.mrb[0].mxu0
      %1351 = vmatprep.mubr.f32.mxu0 %v519
      %1352 = vmatmul.mubr.f32.gmra.mrb[0].mxu0 %v518
      %v1353 = vpop.f32.mrb[0].mxu0
      %v1354 = vadd.f32 %v1129, %v1353
      %v1355 = vpop.f32.mrb[0].mxu0
      %1356 = vmatprep.mubr.f32.mxu0 %v528
      %1357 = vmatmul.mubr.f32.gmra.mrb[0].mxu0 %v527
      %v1358 = vpop.f32.mrb[0].mxu0
      %v1359 = vadd.f32 %v1134, %v1358
      %v1360 = vpop.f32.mrb[0].mxu0
      %1361 = vmatprep.mubr.f32.mxu0 %v537
      %1362 = vmatmul.mubr.f32.gmra.mrb[0].mxu0 %v536
      %v1363 = vpop.f32.mrb[0].mxu0
      %v1364 = vadd.f32 %v1139, %v1363
      %v1365 = vpop.f32.mrb[0].mxu0
      %1366 = vdwg.mxu0
      %1367 = vmatprep.subr.mxu0 0.0
      %1368 = vmatpush1.msra.mxu0 %v637
      %1369 = vmatprep.subr.mxu0 0.0
      %1370 = vmatpush1.msra.mxu0 %v638
      %1371 = vmatprep.subr.mxu0 0.0
      %1372 = vmatpush1.msra.mxu0 %v639
      %1373 = vmatprep.subr.mxu0 0.0
      %1374 = vmatpush1.msra.mxu0 %v640
      %1375 = vmatprep.subr.mxu0 0.0
      %1376 = vmatpush1.msra.mxu0 %v641
      %1377 = vmatprep.subr.mxu0 0.0
      %1378 = vmatpush1.msra.mxu0 %v642
      %1379 = vmatprep.subr.mxu0 0.0
      %1380 = vmatpush1.msra.mxu0 %v643
      %1381 = vmatprep.subr.mxu0 0.0
      %1382 = vmatpush1.msra.mxu0 %v644
      %1383 = vmatprep.subr.mxu0 0.0
      %1384 = vmatpush1.msra.mxu0 %v645
      %1385 = vmatprep.subr.mxu0 0.0
      %1386 = vmatpush1.msra.mxu0 %v646
      %1387 = vmatprep.subr.mxu0 0.0
      %1388 = vmatpush1.msra.mxu0 %v647
      %1389 = vmatprep.subr.mxu0 0.0
      %1390 = vmatpush1.msra.mxu0 %v648
      %1391 = vmatprep.subr.mxu0 0.0
      %1392 = vmatpush1.msra.mxu0 %v649
      %1393 = vmatprep.subr.mxu0 0.0
      %1394 = vmatpush1.msra.mxu0 %v650
      %1395 = vmatprep.subr.mxu0 0.0
      %1396 = vmatpush1.msra.mxu0 %v651
      %1397 = vmatprep.subr.mxu0 0.0
      %1398 = vmatpush1.msra.mxu0 %v652
      %1399 = vmatprep.subr.mxu0 0.0
      %1400 = vmatpush1.msra.mxu0 %v653
      %1401 = vmatprep.subr.mxu0 0.0
      %1402 = vmatpush1.msra.mxu0 %v654
      %1403 = vmatprep.subr.mxu0 0.0
      %1404 = vmatpush1.msra.mxu0 %v655
      %1405 = vmatprep.subr.mxu0 0.0
      %1406 = vmatpush1.msra.mxu0 %v656
      %1407 = vmatprep.subr.mxu0 0.0
      %1408 = vmatpush1.msra.mxu0 %v657
      %1409 = vmatprep.subr.mxu0 0.0
      %1410 = vmatpush1.msra.mxu0 %v658
      %1411 = vmatprep.subr.mxu0 0.0
      %1412 = vmatpush1.msra.mxu0 %v659
      %1413 = vmatprep.subr.mxu0 0.0
      %1414 = vmatpush1.msra.mxu0 %v660
      %1415 = vmatprep.subr.mxu0 0.0
      %1416 = vmatpush1.msra.mxu0 %v661
      %1417 = vmatprep.subr.mxu0 0.0
      %1418 = vmatpush1.msra.mxu0 %v662
      %1419 = vmatprep.subr.mxu0 0.0
      %1420 = vmatpush1.msra.mxu0 %v663
      %1421 = vmatprep.subr.mxu0 0.0
      %1422 = vmatpush1.msra.mxu0 %v664
      %1423 = vmatprep.subr.mxu0 0.0
      %1424 = vmatpush1.msra.mxu0 %v665
      %1425 = vmatprep.subr.mxu0 0.0
      %1426 = vmatpush1.msra.mxu0 %v666
      %1427 = vmatprep.subr.mxu0 0.0
      %1428 = vmatpush1.msra.mxu0 %v667
      %1429 = vmatprep.subr.mxu0 0.0
      %1430 = vmatpush1.msra.mxu0 %v668
      %1431 = vmatprep.mubr.f32.mxu0 %v260
      %1432 = vmatmul.mubr.f32.gmra.mrb[0].mxu0 %v259
      %v1433 = vpop.f32.mrb[0].mxu0
      %v1434 = vadd.f32 %v1209, %v1433
      %v1435 = vpop.f32.mrb[0].mxu0
      %1436 = vmatprep.mubr.f32.mxu0 %v269
      %1437 = vmatmul.mubr.f32.gmra.mrb[0].mxu0 %v268
      %v1438 = vpop.f32.mrb[0].mxu0
      %v1439 = vadd.f32 %v1214, %v1438
      %v1440 = vpop.f32.mrb[0].mxu0
      %1441 = vmatprep.mubr.f32.mxu0 %v278
      %1442 = vmatmul.mubr.f32.gmra.mrb[0].mxu0 %v277
      %v1443 = vpop.f32.mrb[0].mxu0
      %v1444 = vadd.f32 %v1219, %v1443
      %v1445 = vpop.f32.mrb[0].mxu0
      %1446 = vmatprep.mubr.f32.mxu0 %v287
      %1447 = vmatmul.mubr.f32.gmra.mrb[0].mxu0 %v286
      %v1448 = vpop.f32.mrb[0].mxu0
      %v1449 = vadd.f32 %v1224, %v1448
      %v1450 = vpop.f32.mrb[0].mxu0
      %1451 = vmatprep.mubr.f32.mxu0 %v296
      %1452 = vmatmul.mubr.f32.gmra.mrb[0].mxu0 %v295
      %v1453 = vpop.f32.mrb[0].mxu0
      %v1454 = vadd.f32 %v1229, %v1453
      %v1455 = vpop.f32.mrb[0].mxu0
      %1456 = vmatprep.mubr.f32.mxu0 %v305
      %1457 = vmatmul.mubr.f32.gmra.mrb[0].mxu0 %v304
      %v1458 = vpop.f32.mrb[0].mxu0
      %v1459 = vadd.f32 %v1234, %v1458
      %v1460 = vpop.f32.mrb[0].mxu0
      %1461 = vmatprep.mubr.f32.mxu0 %v314
      %1462 = vmatmul.mubr.f32.gmra.mrb[0].mxu0 %v313
      %v1463 = vpop.f32.mrb[0].mxu0
      %v1464 = vadd.f32 %v1239, %v1463
      %v1465 = vpop.f32.mrb[0].mxu0
      %1466 = vmatprep.mubr.f32.mxu0 %v323
      %1467 = vmatmul.mubr.f32.gmra.mrb[0].mxu0 %v322
      %v1468 = vpop.f32.mrb[0].mxu0
      %v1469 = vadd.f32 %v1244, %v1468
      %v1470 = vpop.f32.mrb[0].mxu0
      %1471 = vmatprep.mubr.f32.mxu0 %v332
      %1472 = vmatmul.mubr.f32.gmra.mrb[0].mxu0 %v331
      %v1473 = vpop.f32.mrb[0].mxu0
      %v1474 = vadd.f32 %v1249, %v1473
      %v1475 = vpop.f32.mrb[0].mxu0
      %1476 = vmatprep.mubr.f32.mxu0 %v341
      %1477 = vmatmul.mubr.f32.gmra.mrb[0].mxu0 %v340
      %v1478 = vpop.f32.mrb[0].mxu0
      %v1479 = vadd.f32 %v1254, %v1478
      %v1480 = vpop.f32.mrb[0].mxu0
      %1481 = vmatprep.mubr.f32.mxu0 %v350
      %1482 = vmatmul.mubr.f32.gmra.mrb[0].mxu0 %v349
      %v1483 = vpop.f32.mrb[0].mxu0
      %v1484 = vadd.f32 %v1259, %v1483
      %v1485 = vpop.f32.mrb[0].mxu0
      %1486 = vmatprep.mubr.f32.mxu0 %v359
      %1487 = vmatmul.mubr.f32.gmra.mrb[0].mxu0 %v358
      %v1488 = vpop.f32.mrb[0].mxu0
      %v1489 = vadd.f32 %v1264, %v1488
      %v1490 = vpop.f32.mrb[0].mxu0
      %1491 = vmatprep.mubr.f32.mxu0 %v368
      %1492 = vmatmul.mubr.f32.gmra.mrb[0].mxu0 %v367
      %v1493 = vpop.f32.mrb[0].mxu0
      %v1494 = vadd.f32 %v1269, %v1493
      %v1495 = vpop.f32.mrb[0].mxu0
      %1496 = vmatprep.mubr.f32.mxu0 %v377
      %1497 = vmatmul.mubr.f32.gmra.mrb[0].mxu0 %v376
      %v1498 = vpop.f32.mrb[0].mxu0
      %v1499 = vadd.f32 %v1274, %v1498
      %v1500 = vpop.f32.mrb[0].mxu0
      %1501 = vmatprep.mubr.f32.mxu0 %v386
      %1502 = vmatmul.mubr.f32.gmra.mrb[0].mxu0 %v385
      %v1503 = vpop.f32.mrb[0].mxu0
      %v1504 = vadd.f32 %v1279, %v1503
      %v1505 = vpop.f32.mrb[0].mxu0
      %1506 = vmatprep.mubr.f32.mxu0 %v395
      %1507 = vmatmul.mubr.f32.gmra.mrb[0].mxu0 %v394
      %v1508 = vpop.f32.mrb[0].mxu0
      %v1509 = vadd.f32 %v1284, %v1508
      %v1510 = vpop.f32.mrb[0].mxu0
      %1511 = vmatprep.mubr.f32.mxu0 %v404
      %1512 = vmatmul.mubr.f32.gmra.mrb[0].mxu0 %v403
      %v1513 = vpop.f32.mrb[0].mxu0
      %v1514 = vadd.f32 %v1289, %v1513
      %v1515 = vpop.f32.mrb[0].mxu0
      %1516 = vmatprep.mubr.f32.mxu0 %v413
      %1517 = vmatmul.mubr.f32.gmra.mrb[0].mxu0 %v412
      %v1518 = vpop.f32.mrb[0].mxu0
      %v1519 = vadd.f32 %v1294, %v1518
      %v1520 = vpop.f32.mrb[0].mxu0
      %1521 = vmatprep.mubr.f32.mxu0 %v422
      %1522 = vmatmul.mubr.f32.gmra.mrb[0].mxu0 %v421
      %v1523 = vpop.f32.mrb[0].mxu0
      %v1524 = vadd.f32 %v1299, %v1523
      %v1525 = vpop.f32.mrb[0].mxu0
      %1526 = vmatprep.mubr.f32.mxu0 %v431
      %1527 = vmatmul.mubr.f32.gmra.mrb[0].mxu0 %v430
      %v1528 = vpop.f32.mrb[0].mxu0
      %v1529 = vadd.f32 %v1304, %v1528
      %v1530 = vpop.f32.mrb[0].mxu0
      %1531 = vmatprep.mubr.f32.mxu0 %v440
      %1532 = vmatmul.mubr.f32.gmra.mrb[0].mxu0 %v439
      %v1533 = vpop.f32.mrb[0].mxu0
      %v1534 = vadd.f32 %v1309, %v1533
      %v1535 = vpop.f32.mrb[0].mxu0
      %1536 = vmatprep.mubr.f32.mxu0 %v449
      %1537 = vmatmul.mubr.f32.gmra.mrb[0].mxu0 %v448
      %v1538 = vpop.f32.mrb[0].mxu0
      %v1539 = vadd.f32 %v1314, %v1538
      %v1540 = vpop.f32.mrb[0].mxu0
      %1541 = vmatprep.mubr.f32.mxu0 %v458
      %1542 = vmatmul.mubr.f32.gmra.mrb[0].mxu0 %v457
      %v1543 = vpop.f32.mrb[0].mxu0
      %v1544 = vadd.f32 %v1319, %v1543
      %v1545 = vpop.f32.mrb[0].mxu0
      %1546 = vmatprep.mubr.f32.mxu0 %v467
      %1547 = vmatmul.mubr.f32.gmra.mrb[0].mxu0 %v466
      %v1548 = vpop.f32.mrb[0].mxu0
      %v1549 = vadd.f32 %v1324, %v1548
      %v1550 = vpop.f32.mrb[0].mxu0
      %1551 = vmatprep.mubr.f32.mxu0 %v476
      %1552 = vmatmul.mubr.f32.gmra.mrb[0].mxu0 %v475
      %v1553 = vpop.f32.mrb[0].mxu0
      %v1554 = vadd.f32 %v1329, %v1553
      %v1555 = vpop.f32.mrb[0].mxu0
      %1556 = vmatprep.mubr.f32.mxu0 %v485
      %1557 = vmatmul.mubr.f32.gmra.mrb[0].mxu0 %v484
      %v1558 = vpop.f32.mrb[0].mxu0
      %v1559 = vadd.f32 %v1334, %v1558
      %v1560 = vpop.f32.mrb[0].mxu0
      %1561 = vmatprep.mubr.f32.mxu0 %v494
      %1562 = vmatmul.mubr.f32.gmra.mrb[0].mxu0 %v493
      %v1563 = vpop.f32.mrb[0].mxu0
      %v1564 = vadd.f32 %v1339, %v1563
      %v1565 = vpop.f32.mrb[0].mxu0
      %1566 = vmatprep.mubr.f32.mxu0 %v503
      %1567 = vmatmul.mubr.f32.gmra.mrb[0].mxu0 %v502
      %v1568 = vpop.f32.mrb[0].mxu0
      %v1569 = vadd.f32 %v1344, %v1568
      %v1570 = vpop.f32.mrb[0].mxu0
      %1571 = vmatprep.mubr.f32.mxu0 %v512
      %1572 = vmatmul.mubr.f32.gmra.mrb[0].mxu0 %v511
      %v1573 = vpop.f32.mrb[0].mxu0
      %v1574 = vadd.f32 %v1349, %v1573
      %v1575 = vpop.f32.mrb[0].mxu0
      %1576 = vmatprep.mubr.f32.mxu0 %v521
      %1577 = vmatmul.mubr.f32.gmra.mrb[0].mxu0 %v520
      %v1578 = vpop.f32.mrb[0].mxu0
      %v1579 = vadd.f32 %v1354, %v1578
      %v1580 = vpop.f32.mrb[0].mxu0
      %1581 = vmatprep.mubr.f32.mxu0 %v530
      %1582 = vmatmul.mubr.f32.gmra.mrb[0].mxu0 %v529
      %v1583 = vpop.f32.mrb[0].mxu0
      %v1584 = vadd.f32 %v1359, %v1583
      %v1585 = vpop.f32.mrb[0].mxu0
      %1586 = vmatprep.mubr.f32.mxu0 %v539
      %1587 = vmatmul.mubr.f32.gmra.mrb[0].mxu0 %v538
      %v1588 = vpop.f32.mrb[0].mxu0
      %v1589 = vadd.f32 %v1364, %v1588
      %v1590 = vpop.f32.mrb[0].mxu0
      %1591 = vdwg.mxu0
      %1592 = vmatprep.subr.mxu0 0.0
      %1593 = vmatpush1.msra.mxu0 %v669
      %1594 = vmatprep.subr.mxu0 0.0
      %1595 = vmatpush1.msra.mxu0 %v670
      %1596 = vmatprep.subr.mxu0 0.0
      %1597 = vmatpush1.msra.mxu0 %v671
      %1598 = vmatprep.subr.mxu0 0.0
      %1599 = vmatpush1.msra.mxu0 %v672
      %1600 = vmatprep.subr.mxu0 0.0
      %1601 = vmatpush1.msra.mxu0 %v673
      %1602 = vmatprep.subr.mxu0 0.0
      %1603 = vmatpush1.msra.mxu0 %v674
      %1604 = vmatprep.subr.mxu0 0.0
      %1605 = vmatpush1.msra.mxu0 %v675
      %1606 = vmatprep.subr.mxu0 0.0
      %1607 = vmatpush1.msra.mxu0 %v676
      %1608 = vmatprep.subr.mxu0 0.0
      %1609 = vmatpush1.msra.mxu0 %v677
      %1610 = vmatprep.subr.mxu0 0.0
      %1611 = vmatpush1.msra.mxu0 %v678
      %1612 = vmatprep.subr.mxu0 0.0
      %1613 = vmatpush1.msra.mxu0 %v679
      %1614 = vmatprep.subr.mxu0 0.0
      %1615 = vmatpush1.msra.mxu0 %v680
      %1616 = vmatprep.subr.mxu0 0.0
      %1617 = vmatpush1.msra.mxu0 %v681
      %1618 = vmatprep.subr.mxu0 0.0
      %1619 = vmatpush1.msra.mxu0 %v682
      %1620 = vmatprep.subr.mxu0 0.0
      %1621 = vmatpush1.msra.mxu0 %v683
      %1622 = vmatprep.subr.mxu0 0.0
      %1623 = vmatpush1.msra.mxu0 %v684
      %1624 = vmatprep.subr.mxu0 0.0
      %1625 = vmatpush1.msra.mxu0 0.0
      %1626 = vmatprep.subr.mxu0 0.0
      %1627 = vmatpush1.msra.mxu0 0.0
      %1628 = vmatprep.subr.mxu0 0.0
      %1629 = vmatpush1.msra.mxu0 0.0
      %1630 = vmatprep.subr.mxu0 0.0
      %1631 = vmatpush1.msra.mxu0 0.0
      %1632 = vmatprep.subr.mxu0 0.0
      %1633 = vmatpush1.msra.mxu0 0.0
      %1634 = vmatprep.subr.mxu0 0.0
      %1635 = vmatpush1.msra.mxu0 0.0
      %1636 = vmatprep.subr.mxu0 0.0
      %1637 = vmatpush1.msra.mxu0 0.0
      %1638 = vmatprep.subr.mxu0 0.0
      %1639 = vmatpush1.msra.mxu0 0.0
      %1640 = vmatprep.subr.mxu0 0.0
      %1641 = vmatpush1.msra.mxu0 0.0
      %1642 = vmatprep.subr.mxu0 0.0
      %1643 = vmatpush1.msra.mxu0 0.0
      %1644 = vmatprep.subr.mxu0 0.0
      %1645 = vmatpush1.msra.mxu0 0.0
      %1646 = vmatprep.subr.mxu0 0.0
      %1647 = vmatpush1.msra.mxu0 0.0
      %1648 = vmatprep.subr.mxu0 0.0
      %1649 = vmatpush1.msra.mxu0 0.0
      %1650 = vmatprep.subr.mxu0 0.0
      %1651 = vmatpush1.msra.mxu0 0.0
      %1652 = vmatprep.subr.mxu0 0.0
      %1653 = vmatpush1.msra.mxu0 0.0
      %1654 = vmatprep.subr.mxu0 0.0
      %1655 = vmatpush1.msra.mxu0 0.0
      %1656 = vmatprep.mubr.f32.mxu0 0.0
      %1657 = vmatmul.mubr.f32.gmra.mrb[0].mxu0 %v261
      %v1658 = vpop.f32.mrb[0].mxu0
      %v1659 = vadd.f32 %v1434, %v1658
      %v1660 = vpop.f32.mrb[0].mxu0
      %1661 = vmatprep.mubr.f32.mxu0 0.0
      %1662 = vmatmul.mubr.f32.gmra.mrb[0].mxu0 %v270
      %v1663 = vpop.f32.mrb[0].mxu0
      %v1664 = vadd.f32 %v1439, %v1663
      %v1665 = vpop.f32.mrb[0].mxu0
      %1666 = vmatprep.mubr.f32.mxu0 0.0
      %1667 = vmatmul.mubr.f32.gmra.mrb[0].mxu0 %v279
      %v1668 = vpop.f32.mrb[0].mxu0
      %v1669 = vadd.f32 %v1444, %v1668
      %v1670 = vpop.f32.mrb[0].mxu0
      %1671 = vmatprep.mubr.f32.mxu0 0.0
      %1672 = vmatmul.mubr.f32.gmra.mrb[0].mxu0 %v288
      %v1673 = vpop.f32.mrb[0].mxu0
      %v1674 = vadd.f32 %v1449, %v1673
      %v1675 = vpop.f32.mrb[0].mxu0
      %1676 = vmatprep.mubr.f32.mxu0 0.0
      %1677 = vmatmul.mubr.f32.gmra.mrb[0].mxu0 %v297
      %v1678 = vpop.f32.mrb[0].mxu0
      %v1679 = vadd.f32 %v1454, %v1678
      %v1680 = vpop.f32.mrb[0].mxu0
      %1681 = vmatprep.mubr.f32.mxu0 0.0
      %1682 = vmatmul.mubr.f32.gmra.mrb[0].mxu0 %v306
      %v1683 = vpop.f32.mrb[0].mxu0
      %v1684 = vadd.f32 %v1459, %v1683
      %v1685 = vpop.f32.mrb[0].mxu0
      %1686 = vmatprep.mubr.f32.mxu0 0.0
      %1687 = vmatmul.mubr.f32.gmra.mrb[0].mxu0 %v315
      %v1688 = vpop.f32.mrb[0].mxu0
      %v1689 = vadd.f32 %v1464, %v1688
      %v1690 = vpop.f32.mrb[0].mxu0
      %1691 = vmatprep.mubr.f32.mxu0 0.0
      %1692 = vmatmul.mubr.f32.gmra.mrb[0].mxu0 %v324
      %v1693 = vpop.f32.mrb[0].mxu0
      %v1694 = vadd.f32 %v1469, %v1693
      %v1695 = vpop.f32.mrb[0].mxu0
      %1696 = vmatprep.mubr.f32.mxu0 0.0
      %1697 = vmatmul.mubr.f32.gmra.mrb[0].mxu0 %v333
      %v1698 = vpop.f32.mrb[0].mxu0
      %v1699 = vadd.f32 %v1474, %v1698
      %v1700 = vpop.f32.mrb[0].mxu0
      %1701 = vmatprep.mubr.f32.mxu0 0.0
      %1702 = vmatmul.mubr.f32.gmra.mrb[0].mxu0 %v342
      %v1703 = vpop.f32.mrb[0].mxu0
      %v1704 = vadd.f32 %v1479, %v1703
      %v1705 = vpop.f32.mrb[0].mxu0
      %1706 = vmatprep.mubr.f32.mxu0 0.0
      %1707 = vmatmul.mubr.f32.gmra.mrb[0].mxu0 %v351
      %v1708 = vpop.f32.mrb[0].mxu0
      %v1709 = vadd.f32 %v1484, %v1708
      %v1710 = vpop.f32.mrb[0].mxu0
      %1711 = vmatprep.mubr.f32.mxu0 0.0
      %1712 = vmatmul.mubr.f32.gmra.mrb[0].mxu0 %v360
      %v1713 = vpop.f32.mrb[0].mxu0
      %v1714 = vadd.f32 %v1489, %v1713
      %v1715 = vpop.f32.mrb[0].mxu0
      %1716 = vmatprep.mubr.f32.mxu0 0.0
      %1717 = vmatmul.mubr.f32.gmra.mrb[0].mxu0 %v369
      %v1718 = vpop.f32.mrb[0].mxu0
      %v1719 = vadd.f32 %v1494, %v1718
      %v1720 = vpop.f32.mrb[0].mxu0
      %1721 = vmatprep.mubr.f32.mxu0 0.0
      %1722 = vmatmul.mubr.f32.gmra.mrb[0].mxu0 %v378
      %v1723 = vpop.f32.mrb[0].mxu0
      %v1724 = vadd.f32 %v1499, %v1723
      %v1725 = vpop.f32.mrb[0].mxu0
      %1726 = vmatprep.mubr.f32.mxu0 0.0
      %1727 = vmatmul.mubr.f32.gmra.mrb[0].mxu0 %v387
      %v1728 = vpop.f32.mrb[0].mxu0
      %v1729 = vadd.f32 %v1504, %v1728
      %v1730 = vpop.f32.mrb[0].mxu0
      %1731 = vmatprep.mubr.f32.mxu0 0.0
      %1732 = vmatmul.mubr.f32.gmra.mrb[0].mxu0 %v396
      %v1733 = vpop.f32.mrb[0].mxu0
      %v1734 = vadd.f32 %v1509, %v1733
      %v1735 = vpop.f32.mrb[0].mxu0
      %1736 = vmatprep.mubr.f32.mxu0 0.0
      %1737 = vmatmul.mubr.f32.gmra.mrb[0].mxu0 %v405
      %v1738 = vpop.f32.mrb[0].mxu0
      %v1739 = vadd.f32 %v1514, %v1738
      %v1740 = vpop.f32.mrb[0].mxu0
      %1741 = vmatprep.mubr.f32.mxu0 0.0
      %1742 = vmatmul.mubr.f32.gmra.mrb[0].mxu0 %v414
      %v1743 = vpop.f32.mrb[0].mxu0
      %v1744 = vadd.f32 %v1519, %v1743
      %v1745 = vpop.f32.mrb[0].mxu0
      %1746 = vmatprep.mubr.f32.mxu0 0.0
      %1747 = vmatmul.mubr.f32.gmra.mrb[0].mxu0 %v423
      %v1748 = vpop.f32.mrb[0].mxu0
      %v1749 = vadd.f32 %v1524, %v1748
      %v1750 = vpop.f32.mrb[0].mxu0
      %1751 = vmatprep.mubr.f32.mxu0 0.0
      %1752 = vmatmul.mubr.f32.gmra.mrb[0].mxu0 %v432
      %v1753 = vpop.f32.mrb[0].mxu0
      %v1754 = vadd.f32 %v1529, %v1753
      %v1755 = vpop.f32.mrb[0].mxu0
      %1756 = vmatprep.mubr.f32.mxu0 0.0
      %1757 = vmatmul.mubr.f32.gmra.mrb[0].mxu0 %v441
      %v1758 = vpop.f32.mrb[0].mxu0
      %v1759 = vadd.f32 %v1534, %v1758
      %v1760 = vpop.f32.mrb[0].mxu0
      %1761 = vmatprep.mubr.f32.mxu0 0.0
      %1762 = vmatmul.mubr.f32.gmra.mrb[0].mxu0 %v450
      %v1763 = vpop.f32.mrb[0].mxu0
      %v1764 = vadd.f32 %v1539, %v1763
      %v1765 = vpop.f32.mrb[0].mxu0
      %1766 = vmatprep.mubr.f32.mxu0 0.0
      %1767 = vmatmul.mubr.f32.gmra.mrb[0].mxu0 %v459
      %v1768 = vpop.f32.mrb[0].mxu0
      %v1769 = vadd.f32 %v1544, %v1768
      %v1770 = vpop.f32.mrb[0].mxu0
      %1771 = vmatprep.mubr.f32.mxu0 0.0
      %1772 = vmatmul.mubr.f32.gmra.mrb[0].mxu0 %v468
      %v1773 = vpop.f32.mrb[0].mxu0
      %v1774 = vadd.f32 %v1549, %v1773
      %v1775 = vpop.f32.mrb[0].mxu0
      %1776 = vmatprep.mubr.f32.mxu0 0.0
      %1777 = vmatmul.mubr.f32.gmra.mrb[0].mxu0 %v477
      %v1778 = vpop.f32.mrb[0].mxu0
      %v1779 = vadd.f32 %v1554, %v1778
      %v1780 = vpop.f32.mrb[0].mxu0
      %1781 = vmatprep.mubr.f32.mxu0 0.0
      %1782 = vmatmul.mubr.f32.gmra.mrb[0].mxu0 %v486
      %v1783 = vpop.f32.mrb[0].mxu0
      %v1784 = vadd.f32 %v1559, %v1783
      %v1785 = vpop.f32.mrb[0].mxu0
      %1786 = vmatprep.mubr.f32.mxu0 0.0
      %1787 = vmatmul.mubr.f32.gmra.mrb[0].mxu0 %v495
      %v1788 = vpop.f32.mrb[0].mxu0
      %v1789 = vadd.f32 %v1564, %v1788
      %v1790 = vpop.f32.mrb[0].mxu0
      %1791 = vmatprep.mubr.f32.mxu0 0.0
      %1792 = vmatmul.mubr.f32.gmra.mrb[0].mxu0 %v504
      %v1793 = vpop.f32.mrb[0].mxu0
      %v1794 = vadd.f32 %v1569, %v1793
      %v1795 = vpop.f32.mrb[0].mxu0
      %1796 = vmatprep.mubr.f32.mxu0 0.0
      %1797 = vmatmul.mubr.f32.gmra.mrb[0].mxu0 %v513
      %v1798 = vpop.f32.mrb[0].mxu0
      %v1799 = vadd.f32 %v1574, %v1798
      %v1800 = vpop.f32.mrb[0].mxu0
      %1801 = vmatprep.mubr.f32.mxu0 0.0
      %1802 = vmatmul.mubr.f32.gmra.mrb[0].mxu0 %v522
      %v1803 = vpop.f32.mrb[0].mxu0
      %v1804 = vadd.f32 %v1579, %v1803
      %v1805 = vpop.f32.mrb[0].mxu0
      %1806 = vmatprep.mubr.f32.mxu0 0.0
      %1807 = vmatmul.mubr.f32.gmra.mrb[0].mxu0 %v531
      %v1808 = vpop.f32.mrb[0].mxu0
      %v1809 = vadd.f32 %v1584, %v1808
      %v1810 = vpop.f32.mrb[0].mxu0
      %1811 = vmatprep.mubr.f32.mxu0 0.0
      %1812 = vmatmul.mubr.f32.gmra.mrb[0].mxu0 %v540
      %v1813 = vpop.f32.mrb[0].mxu0
      %v1814 = vadd.f32 %v1589, %v1813
      %v1815 = vpop.f32.mrb[0].mxu0
      %1816 = vdwg.mxu0
      %v1817 = vmax.f32 %v1659, 0.0
      %v1818 = vmax.f32 %v1664, 0.0
      %v1819 = vmax.f32 %v1669, 0.0
      %v1820 = vmax.f32 %v1674, 0.0
      %v1821 = vmax.f32 %v1679, 0.0
      %v1822 = vmax.f32 %v1684, 0.0
      %v1823 = vmax.f32 %v1689, 0.0
      %v1824 = vmax.f32 %v1694, 0.0
      %v1825 = vmax.f32 %v1699, 0.0
      %v1826 = vmax.f32 %v1704, 0.0
      %v1827 = vmax.f32 %v1709, 0.0
      %v1828 = vmax.f32 %v1714, 0.0
      %v1829 = vmax.f32 %v1719, 0.0
      %v1830 = vmax.f32 %v1724, 0.0
      %v1831 = vmax.f32 %v1729, 0.0
      %v1832 = vmax.f32 %v1734, 0.0
      %v1833 = vmax.f32 %v1739, 0.0
      %v1834 = vmax.f32 %v1744, 0.0
      %v1835 = vmax.f32 %v1749, 0.0
      %v1836 = vmax.f32 %v1754, 0.0
      %v1837 = vmax.f32 %v1759, 0.0
      %v1838 = vmax.f32 %v1764, 0.0
      %v1839 = vmax.f32 %v1769, 0.0
      %v1840 = vmax.f32 %v1774, 0.0
      %v1841 = vmax.f32 %v1779, 0.0
      %v1842 = vmax.f32 %v1784, 0.0
      %v1843 = vmax.f32 %v1789, 0.0
      %v1844 = vmax.f32 %v1794, 0.0
      %v1845 = vmax.f32 %v1799, 0.0
      %v1846 = vmax.f32 %v1804, 0.0
      %v1847 = vmax.f32 %v1809, 0.0
      %v1848 = vmax.f32 %v1814, 0.0
      %v1849 = vld [vmem:[%s3] sm:$0xff]
      %v1850 = vld [vmem:[%s3 + $0x8] sm:$0xff]
      %v1851 = vld [vmem:[%s3 + $0x10] sm:$0xff]
      %v1852 = vld [vmem:[%s3 + $0x18] sm:$0xff]
      %v1853 = vld [vmem:[%s3 + $0x20] sm:$0xff]
      %v1854 = vld [vmem:[%s3 + $0x28] sm:$0xff]
      %v1855 = vld [vmem:[%s3 + $0x30] sm:$0xff]
      %v1856 = vld [vmem:[%s3 + $0x38] sm:$0xff]
      %v1857 = vld [vmem:[%s3 + $0x40] sm:$0xff]
      %v1858 = vld [vmem:[%s3 + $0x48] sm:$0xff]
      %v1859 = vld [vmem:[%s3 + $0x50] sm:$0xff]
      %v1860 = vld [vmem:[%s3 + $0x58] sm:$0xff]
      %v1861 = vld [vmem:[%s3 + $0x60] sm:$0xff]
      %v1862 = vld [vmem:[%s3 + $0x68] sm:$0xff]
      %v1863 = vld [vmem:[%s3 + $0x70] sm:$0xff]
      %v1864 = vld [vmem:[%s3 + $0x78] sm:$0xff]
      %v1865 = vld [vmem:[%s245] sm:$0xff]
      %v1866 = vld [vmem:[%s245 + $0x8] sm:$0xff]
      %v1867 = vld [vmem:[%s245 + $0x10] sm:$0xff]
      %v1868 = vld [vmem:[%s245 + $0x18] sm:$0xff]
      %v1869 = vld [vmem:[%s245 + $0x20] sm:$0xff]
      %v1870 = vld [vmem:[%s245 + $0x28] sm:$0xff]
      %v1871 = vld [vmem:[%s245 + $0x30] sm:$0xff]
      %v1872 = vld [vmem:[%s245 + $0x38] sm:$0xff]
      %v1873 = vld [vmem:[%s245 + $0x40] sm:$0xff]
      %v1874 = vld [vmem:[%s245 + $0x48] sm:$0xff]
      %v1875 = vld [vmem:[%s245 + $0x50] sm:$0xff]
      %v1876 = vld [vmem:[%s245 + $0x58] sm:$0xff]
      %v1877 = vld [vmem:[%s245 + $0x60] sm:$0xff]
      %v1878 = vld [vmem:[%s245 + $0x68] sm:$0xff]
      %v1879 = vld [vmem:[%s245 + $0x70] sm:$0xff]
      %v1880 = vld [vmem:[%s245 + $0x78] sm:$0xff]
      %v1881 = vld [vmem:[%s245 + $0x80] sm:$0xff]
      %v1882 = vld [vmem:[%s245 + $0x88] sm:$0xff]
      %v1883 = vld [vmem:[%s245 + $0x90] sm:$0xff]
      %v1884 = vld [vmem:[%s245 + $0x98] sm:$0xff]
      %v1885 = vld [vmem:[%s245 + $0xa0] sm:$0xff]
      %v1886 = vld [vmem:[%s245 + $0xa8] sm:$0xff]
      %v1887 = vld [vmem:[%s245 + $0xb0] sm:$0xff]
      %v1888 = vld [vmem:[%s245 + $0xb8] sm:$0xff]
      %v1889 = vld [vmem:[%s245 + $0xc0] sm:$0xff]
      %v1890 = vld [vmem:[%s245 + $0xc8] sm:$0xff]
      %v1891 = vld [vmem:[%s245 + $0xd0] sm:$0xff]
      %v1892 = vld [vmem:[%s245 + $0xd8] sm:$0xff]
      %v1893 = vld [vmem:[%s245 + $0xe0] sm:$0xff]
      %v1894 = vld [vmem:[%s245 + $0xe8] sm:$0xff]
      %v1895 = vld [vmem:[%s245 + $0xf0] sm:$0xff]
      %v1896 = vld [vmem:[%s245 + $0xf8] sm:$0xff]
      %1897 = vmatprep.subr.mxu0 0.0
      %1898 = vmatpush1.msra.mxu0 %v1849
      %1899 = vmatprep.subr.mxu0 0.0
      %1900 = vmatpush1.msra.mxu0 %v1850
      %1901 = vmatprep.subr.mxu0 0.0
      %1902 = vmatpush1.msra.mxu0 %v1851
      %1903 = vmatprep.subr.mxu0 0.0
      %1904 = vmatpush1.msra.mxu0 %v1852
      %1905 = vmatprep.subr.mxu0 0.0
      %1906 = vmatpush1.msra.mxu0 %v1853
      %1907 = vmatprep.subr.mxu0 0.0
      %1908 = vmatpush1.msra.mxu0 %v1854
      %1909 = vmatprep.subr.mxu0 0.0
      %1910 = vmatpush1.msra.mxu0 %v1855
      %1911 = vmatprep.subr.mxu0 0.0
      %1912 = vmatpush1.msra.mxu0 %v1856
      %1913 = vmatprep.subr.mxu0 0.0
      %1914 = vmatpush1.msra.mxu0 %v1857
      %1915 = vmatprep.subr.mxu0 0.0
      %1916 = vmatpush1.msra.mxu0 %v1858
      %1917 = vmatprep.subr.mxu0 0.0
      %1918 = vmatpush1.msra.mxu0 %v1859
      %1919 = vmatprep.subr.mxu0 0.0
      %1920 = vmatpush1.msra.mxu0 %v1860
      %1921 = vmatprep.subr.mxu0 0.0
      %1922 = vmatpush1.msra.mxu0 %v1861
      %1923 = vmatprep.subr.mxu0 0.0
      %1924 = vmatpush1.msra.mxu0 %v1862
      %1925 = vmatprep.subr.mxu0 0.0
      %1926 = vmatpush1.msra.mxu0 %v1863
      %1927 = vmatprep.subr.mxu0 0.0
      %1928 = vmatpush1.msra.mxu0 %v1864
      %1929 = vmatprep.subr.mxu0 0.0
      %1930 = vmatpush1.msra.mxu0 0.0
      %1931 = vmatprep.subr.mxu0 0.0
      %1932 = vmatpush1.msra.mxu0 0.0
      %1933 = vmatprep.subr.mxu0 0.0
      %1934 = vmatpush1.msra.mxu0 0.0
      %1935 = vmatprep.subr.mxu0 0.0
      %1936 = vmatpush1.msra.mxu0 0.0
      %1937 = vmatprep.subr.mxu0 0.0
      %1938 = vmatpush1.msra.mxu0 0.0
      %1939 = vmatprep.subr.mxu0 0.0
      %1940 = vmatpush1.msra.mxu0 0.0
      %1941 = vmatprep.subr.mxu0 0.0
      %1942 = vmatpush1.msra.mxu0 0.0
      %1943 = vmatprep.subr.mxu0 0.0
      %1944 = vmatpush1.msra.mxu0 0.0
      %1945 = vmatprep.subr.mxu0 0.0
      %1946 = vmatpush1.msra.mxu0 0.0
      %1947 = vmatprep.subr.mxu0 0.0
      %1948 = vmatpush1.msra.mxu0 0.0
      %1949 = vmatprep.subr.mxu0 0.0
      %1950 = vmatpush1.msra.mxu0 0.0
      %1951 = vmatprep.subr.mxu0 0.0
      %1952 = vmatpush1.msra.mxu0 0.0
      %1953 = vmatprep.subr.mxu0 0.0
      %1954 = vmatpush1.msra.mxu0 0.0
      %1955 = vmatprep.subr.mxu0 0.0
      %1956 = vmatpush1.msra.mxu0 0.0
      %1957 = vmatprep.subr.mxu0 0.0
      %1958 = vmatpush1.msra.mxu0 0.0
      %1959 = vmatprep.subr.mxu0 0.0
      %1960 = vmatpush1.msra.mxu0 0.0
      %1961 = vmatprep.mubr.f32.mxu0 0.0
      %1962 = vmatmul.mubr.f32.gmra.mrb[0].mxu0 %v1817
      %v1963 = vpop.f32.mrb[0].mxu0
      %v1964 = vadd.f32 %v1865, %v1963
      %v1965 = vpop.f32.mrb[0].mxu0
      %1966 = vmatprep.mubr.f32.mxu0 0.0
      %1967 = vmatmul.mubr.f32.gmra.mrb[0].mxu0 %v1818
      %v1968 = vpop.f32.mrb[0].mxu0
      %v1969 = vadd.f32 %v1866, %v1968
      %v1970 = vpop.f32.mrb[0].mxu0
      %1971 = vmatprep.mubr.f32.mxu0 0.0
      %1972 = vmatmul.mubr.f32.gmra.mrb[0].mxu0 %v1819
      %v1973 = vpop.f32.mrb[0].mxu0
      %v1974 = vadd.f32 %v1867, %v1973
      %v1975 = vpop.f32.mrb[0].mxu0
      %1976 = vmatprep.mubr.f32.mxu0 0.0
      %1977 = vmatmul.mubr.f32.gmra.mrb[0].mxu0 %v1820
      %v1978 = vpop.f32.mrb[0].mxu0
      %v1979 = vadd.f32 %v1868, %v1978
      %v1980 = vpop.f32.mrb[0].mxu0
      %1981 = vmatprep.mubr.f32.mxu0 0.0
      %1982 = vmatmul.mubr.f32.gmra.mrb[0].mxu0 %v1821
      %v1983 = vpop.f32.mrb[0].mxu0
      %v1984 = vadd.f32 %v1869, %v1983
      %v1985 = vpop.f32.mrb[0].mxu0
      %1986 = vmatprep.mubr.f32.mxu0 0.0
      %1987 = vmatmul.mubr.f32.gmra.mrb[0].mxu0 %v1822
      %v1988 = vpop.f32.mrb[0].mxu0
      %v1989 = vadd.f32 %v1870, %v1988
      %v1990 = vpop.f32.mrb[0].mxu0
      %1991 = vmatprep.mubr.f32.mxu0 0.0
      %1992 = vmatmul.mubr.f32.gmra.mrb[0].mxu0 %v1823
      %v1993 = vpop.f32.mrb[0].mxu0
      %v1994 = vadd.f32 %v1871, %v1993
      %v1995 = vpop.f32.mrb[0].mxu0
      %1996 = vmatprep.mubr.f32.mxu0 0.0
      %1997 = vmatmul.mubr.f32.gmra.mrb[0].mxu0 %v1824
      %v1998 = vpop.f32.mrb[0].mxu0
      %v1999 = vadd.f32 %v1872, %v1998
      %v2000 = vpop.f32.mrb[0].mxu0
      %2001 = vmatprep.mubr.f32.mxu0 0.0
      %2002 = vmatmul.mubr.f32.gmra.mrb[0].mxu0 %v1825
      %v2003 = vpop.f32.mrb[0].mxu0
      %v2004 = vadd.f32 %v1873, %v2003
      %v2005 = vpop.f32.mrb[0].mxu0
      %2006 = vmatprep.mubr.f32.mxu0 0.0
      %2007 = vmatmul.mubr.f32.gmra.mrb[0].mxu0 %v1826
      %v2008 = vpop.f32.mrb[0].mxu0
      %v2009 = vadd.f32 %v1874, %v2008
      %v2010 = vpop.f32.mrb[0].mxu0
      %2011 = vmatprep.mubr.f32.mxu0 0.0
      %2012 = vmatmul.mubr.f32.gmra.mrb[0].mxu0 %v1827
      %v2013 = vpop.f32.mrb[0].mxu0
      %v2014 = vadd.f32 %v1875, %v2013
      %v2015 = vpop.f32.mrb[0].mxu0
      %2016 = vmatprep.mubr.f32.mxu0 0.0
      %2017 = vmatmul.mubr.f32.gmra.mrb[0].mxu0 %v1828
      %v2018 = vpop.f32.mrb[0].mxu0
      %v2019 = vadd.f32 %v1876, %v2018
      %v2020 = vpop.f32.mrb[0].mxu0
      %2021 = vmatprep.mubr.f32.mxu0 0.0
      %2022 = vmatmul.mubr.f32.gmra.mrb[0].mxu0 %v1829
      %v2023 = vpop.f32.mrb[0].mxu0
      %v2024 = vadd.f32 %v1877, %v2023
      %v2025 = vpop.f32.mrb[0].mxu0
      %2026 = vmatprep.mubr.f32.mxu0 0.0
      %2027 = vmatmul.mubr.f32.gmra.mrb[0].mxu0 %v1830
      %v2028 = vpop.f32.mrb[0].mxu0
      %v2029 = vadd.f32 %v1878, %v2028
      %v2030 = vpop.f32.mrb[0].mxu0
      %2031 = vmatprep.mubr.f32.mxu0 0.0
      %2032 = vmatmul.mubr.f32.gmra.mrb[0].mxu0 %v1831
      %v2033 = vpop.f32.mrb[0].mxu0
      %v2034 = vadd.f32 %v1879, %v2033
      %v2035 = vpop.f32.mrb[0].mxu0
      %2036 = vmatprep.mubr.f32.mxu0 0.0
      %2037 = vmatmul.mubr.f32.gmra.mrb[0].mxu0 %v1832
      %v2038 = vpop.f32.mrb[0].mxu0
      %v2039 = vadd.f32 %v1880, %v2038
      %v2040 = vpop.f32.mrb[0].mxu0
      %2041 = vmatprep.mubr.f32.mxu0 0.0
      %2042 = vmatmul.mubr.f32.gmra.mrb[0].mxu0 %v1833
      %v2043 = vpop.f32.mrb[0].mxu0
      %v2044 = vadd.f32 %v1881, %v2043
      %v2045 = vpop.f32.mrb[0].mxu0
      %2046 = vmatprep.mubr.f32.mxu0 0.0
      %2047 = vmatmul.mubr.f32.gmra.mrb[0].mxu0 %v1834
      %v2048 = vpop.f32.mrb[0].mxu0
      %v2049 = vadd.f32 %v1882, %v2048
      %v2050 = vpop.f32.mrb[0].mxu0
      %2051 = vmatprep.mubr.f32.mxu0 0.0
      %2052 = vmatmul.mubr.f32.gmra.mrb[0].mxu0 %v1835
      %v2053 = vpop.f32.mrb[0].mxu0
      %v2054 = vadd.f32 %v1883, %v2053
      %v2055 = vpop.f32.mrb[0].mxu0
      %2056 = vmatprep.mubr.f32.mxu0 0.0
      %2057 = vmatmul.mubr.f32.gmra.mrb[0].mxu0 %v1836
      %v2058 = vpop.f32.mrb[0].mxu0
      %v2059 = vadd.f32 %v1884, %v2058
      %v2060 = vpop.f32.mrb[0].mxu0
      %2061 = vmatprep.mubr.f32.mxu0 0.0
      %2062 = vmatmul.mubr.f32.gmra.mrb[0].mxu0 %v1837
      %v2063 = vpop.f32.mrb[0].mxu0
      %v2064 = vadd.f32 %v1885, %v2063
      %v2065 = vpop.f32.mrb[0].mxu0
      %2066 = vmatprep.mubr.f32.mxu0 0.0
      %2067 = vmatmul.mubr.f32.gmra.mrb[0].mxu0 %v1838
      %v2068 = vpop.f32.mrb[0].mxu0
      %v2069 = vadd.f32 %v1886, %v2068
      %v2070 = vpop.f32.mrb[0].mxu0
      %2071 = vmatprep.mubr.f32.mxu0 0.0
      %2072 = vmatmul.mubr.f32.gmra.mrb[0].mxu0 %v1839
      %v2073 = vpop.f32.mrb[0].mxu0
      %v2074 = vadd.f32 %v1887, %v2073
      %v2075 = vpop.f32.mrb[0].mxu0
      %2076 = vmatprep.mubr.f32.mxu0 0.0
      %2077 = vmatmul.mubr.f32.gmra.mrb[0].mxu0 %v1840
      %v2078 = vpop.f32.mrb[0].mxu0
      %v2079 = vadd.f32 %v1888, %v2078
      %v2080 = vpop.f32.mrb[0].mxu0
      %2081 = vmatprep.mubr.f32.mxu0 0.0
      %2082 = vmatmul.mubr.f32.gmra.mrb[0].mxu0 %v1841
      %v2083 = vpop.f32.mrb[0].mxu0
      %v2084 = vadd.f32 %v1889, %v2083
      %v2085 = vpop.f32.mrb[0].mxu0
      %2086 = vmatprep.mubr.f32.mxu0 0.0
      %2087 = vmatmul.mubr.f32.gmra.mrb[0].mxu0 %v1842
      %v2088 = vpop.f32.mrb[0].mxu0
      %v2089 = vadd.f32 %v1890, %v2088
      %v2090 = vpop.f32.mrb[0].mxu0
      %2091 = vmatprep.mubr.f32.mxu0 0.0
      %2092 = vmatmul.mubr.f32.gmra.mrb[0].mxu0 %v1843
      %v2093 = vpop.f32.mrb[0].mxu0
      %v2094 = vadd.f32 %v1891, %v2093
      %v2095 = vpop.f32.mrb[0].mxu0
      %2096 = vmatprep.mubr.f32.mxu0 0.0
      %2097 = vmatmul.mubr.f32.gmra.mrb[0].mxu0 %v1844
      %v2098 = vpop.f32.mrb[0].mxu0
      %v2099 = vadd.f32 %v1892, %v2098
      %v2100 = vpop.f32.mrb[0].mxu0
      %2101 = vmatprep.mubr.f32.mxu0 0.0
      %2102 = vmatmul.mubr.f32.gmra.mrb[0].mxu0 %v1845
      %v2103 = vpop.f32.mrb[0].mxu0
      %v2104 = vadd.f32 %v1893, %v2103
      %v2105 = vpop.f32.mrb[0].mxu0
      %2106 = vmatprep.mubr.f32.mxu0 0.0
      %2107 = vmatmul.mubr.f32.gmra.mrb[0].mxu0 %v1846
      %v2108 = vpop.f32.mrb[0].mxu0
      %v2109 = vadd.f32 %v1894, %v2108
      %v2110 = vpop.f32.mrb[0].mxu0
      %2111 = vmatprep.mubr.f32.mxu0 0.0
      %2112 = vmatmul.mubr.f32.gmra.mrb[0].mxu0 %v1847
      %v2113 = vpop.f32.mrb[0].mxu0
      %v2114 = vadd.f32 %v1895, %v2113
      %v2115 = vpop.f32.mrb[0].mxu0
      %2116 = vmatprep.mubr.f32.mxu0 0.0
      %2117 = vmatmul.mubr.f32.gmra.mrb[0].mxu0 %v1848
      %v2118 = vpop.f32.mrb[0].mxu0
      %v2119 = vadd.f32 %v1896, %v2118
      %v2120 = vpop.f32.mrb[0].mxu0
      %2121 = vdwg.mxu0
      %2122 = vst [vmem:[%s251] sm:$0xff] %v1964
      %2123 = vst [vmem:[%s251 + $0x8] sm:$0xff] %v1969
      %2124 = vst [vmem:[%s251 + $0x10] sm:$0xff] %v1974
      %2125 = vst [vmem:[%s251 + $0x18] sm:$0xff] %v1979
      %2126 = vst [vmem:[%s251 + $0x20] sm:$0xff] %v1984
      %2127 = vst [vmem:[%s251 + $0x28] sm:$0xff] %v1989
      %2128 = vst [vmem:[%s251 + $0x30] sm:$0xff] %v1994
      %2129 = vst [vmem:[%s251 + $0x38] sm:$0xff] %v1999
      %2130 = vst [vmem:[%s251 + $0x40] sm:$0xff] %v2004
      %2131 = vst [vmem:[%s251 + $0x48] sm:$0xff] %v2009
      %2132 = vst [vmem:[%s251 + $0x50] sm:$0xff] %v2014
      %2133 = vst [vmem:[%s251 + $0x58] sm:$0xff] %v2019
      %2134 = vst [vmem:[%s251 + $0x60] sm:$0xff] %v2024
      %2135 = vst [vmem:[%s251 + $0x68] sm:$0xff] %v2029
      %2136 = vst [vmem:[%s251 + $0x70] sm:$0xff] %v2034
      %2137 = vst [vmem:[%s251 + $0x78] sm:$0xff] %v2039
      %2138 = vst [vmem:[%s251 + $0x80] sm:$0xff] %v2044
      %2139 = vst [vmem:[%s251 + $0x88] sm:$0xff] %v2049
      %2140 = vst [vmem:[%s251 + $0x90] sm:$0xff] %v2054
      %2141 = vst [vmem:[%s251 + $0x98] sm:$0xff] %v2059
      %2142 = vst [vmem:[%s251 + $0xa0] sm:$0xff] %v2064
      %2143 = vst [vmem:[%s251 + $0xa8] sm:$0xff] %v2069
      %2144 = vst [vmem:[%s251 + $0xb0] sm:$0xff] %v2074
      %2145 = vst [vmem:[%s251 + $0xb8] sm:$0xff] %v2079
      %2146 = vst [vmem:[%s251 + $0xc0] sm:$0xff] %v2084
      %2147 = vst [vmem:[%s251 + $0xc8] sm:$0xff] %v2089
      %2148 = vst [vmem:[%s251 + $0xd0] sm:$0xff] %v2094
      %2149 = vst [vmem:[%s251 + $0xd8] sm:$0xff] %v2099
      %2150 = vst [vmem:[%s251 + $0xe0] sm:$0xff] %v2104
      %2151 = vst [vmem:[%s251 + $0xe8] sm:$0xff] %v2109
      %2152 = vst [vmem:[%s251 + $0xf0] sm:$0xff] %v2114
      %2153 = vst [vmem:[%s251 + $0xf8] sm:$0xff] %v2119
      %s2154 = smul.u32 32, %s16
      %p2155 = scmp.lt.s32.totalorder %s2154, 63
      %s2156 = scalar_select %p2155, %s2154, 63
      %s2157 = smul.addr %s2156, 8
      %s2158 = scalar_lea.vmem %s5, %s2157
      // Predicated region
      $region41: #{apm_forward_pallas.5} parent=39 // pred_check
        %p2159 = pneg %p149
      $region42: #{apm_forward_pallas.5} parent=39 // pred_check_branch
        %2161 = sbr.rel (%p2159) target = $region44
      $region43: #{apm_forward_pallas.5} parent=39 // pred_region
        %s2162 = smul.u32 32, %s16
      $region44: #{apm_forward_pallas.5} parent=39 // pred_fallthru
        _
    $region40: #{apm_forward_pallas.5} parent=5 // pred_fallthru
      _
    %p2163 = scmp.le.s32.totalorder 2, %s11
    // Predicated region
    $region45: #{apm_forward_pallas.5} parent=5 // pred_check
      %p2164 = pneg %p2163
    $region46: #{apm_forward_pallas.5} parent=5 // pred_check_branch
      %2166 = sbr.rel (%p2164) target = $region48
    $region47: #{apm_forward_pallas.5} parent=5 // pred_region
      %s2167 = ssub.s32 %s11, 2
      // Predicated region
      $region49: #{apm_forward_pallas.5} parent=47 // pred_check
        %p2168 = pneg %p155
      $region50: #{apm_forward_pallas.5} parent=47 // pred_check_branch
        %2170 = sbr.rel (%p2168) target = $region52
      $region51: #{apm_forward_pallas.5} parent=47 // pred_region
        %s2171 = smul.u32 32, %s17
        %p2172 = scmp.lt.s32.totalorder %s2171, 63
        %s2173 = scalar_select %p2172, %s2171, 63
        %s2174 = smul.addr %s2173, 8
        %s2175 = scalar_lea.vmem %s5, %s2174
      $region52: #{apm_forward_pallas.5} parent=47 // pred_fallthru
        _
    $region48: #{apm_forward_pallas.5} parent=5 // pred_fallthru
      _
  $region6: #{apm_forward_pallas.5} parent=0 // loop_footer
    %s15 = sadd.s32 1, %s11
  $region7: #{apm_forward_pallas.5} parent=0 // loop_footer_branch
    %10 = sbr.rel target = $region3
  $region8: #{apm_forward_pallas.5} parent=0 // loop_exit
    _

// kernel: apm_forward_pallas.7
$region0: #{apm_forward_pallas.7}
  #allocation0 [shape = 'u32[]', space=smem, size = 0x4, offset = 0x4, fixed_abs, tag = 'smem constant byte address 0x4 - core index']
  #allocation1 [shape = 'u32[144,128]{1,0:T(1,128)}', space=vmem, size = 0x12000, scoped, tag = 'internal scratch']
  #allocation2 [shape = 'f32[1,1]{1,0:T(1,128)S(1)}', space=vmem, size = 0x200, scoped, tag = 'scoped memory for apm_forward_pallas.7']
  %s0 = inlined_call_operand.vmem [shape: f32[512,1152], index: 0, kind: input, shape index: {}]
  %s1 = inlined_call_operand.vmem [shape: f32[1152,128], index: 1, kind: input, shape index: {}]
  %s2 = inlined_call_operand.vmem [shape: f32[1,128], index: 2, kind: input, shape index: {}]
  %s3 = inlined_call_operand.<no memory space> [shape: f32[1,1], index: 3, kind: input, shape index: {}]
  %s4 = inlined_call_operand.vmem [shape: f32[128,128], index: 4, kind: input, shape index: {}]
  %s5 = inlined_call_operand.vmem [shape: f32[1,128], index: 5, kind: input, shape index: {}]
  %s6 = inlined_call_operand.vmem [shape: f32[512,128], index: 6, kind: output, shape index: {}]
  %s7 = sld [smem:[#allocation0]]
  $region57: #{apm_forward_pallas.7} parent=0
    _
  %s9 = ssub.s32 1, %s7
  %s10 = scalar_select 0, %s9, %s7
  %v11 = vstv %s3
  %12 = vst [vmem:[#allocation2] sm:$0x1] %v11
  loop: start=0, step=1, limit=4
  $region2: #{apm_forward_pallas.7} parent=0 // loop_pre_header
    _
  $region3: #{apm_forward_pallas.7} parent=0 // loop_header
    %s14 = sphi 0, %s18
    %p15 = scmp.ge.s32.totalorder %s14, 4
    %s24 = sphi 0, %s26
    %s27 = sphi 0, %s24
    %s28 = sphi 0, %s27
    %s44 = sphi 0, %s28
    %s48 = sphi 0, %s48
    %s50 = sphi 0, %s48
    %s51 = sphi 0, %s50
    %s65 = sphi 0, %s51
    %s69 = sphi 0, %s69
    %s71 = sphi 0, %s69
    %s72 = sphi 0, %s71
    %s86 = sphi 0, %s72
    %s90 = sphi 0, %s90
    %s92 = sphi 0, %s90
    %s93 = sphi 0, %s92
    %s107 = sphi 0, %s93
    %s111 = sphi 0, %s111
    %s113 = sphi 0, %s111
    %s114 = sphi 0, %s113
    %s128 = sphi 0, %s114
    %s132 = sphi 0, %s132
    %s134 = sphi 0, %s132
    %s135 = sphi 0, %s134
    %s149 = sphi 0, %s135
    %s155 = sphi 0, %s157
    %s158 = sphi 0, %s155
    %s159 = sphi 0, %s158
    %s175 = sphi 0, %s159
  $region4: #{apm_forward_pallas.7} parent=0 // loop_header_branch
    %17 = sbr.rel (%p15) target = $region8
  $region5: #{apm_forward_pallas.7} parent=0 // loop_body
    %s19 = ssub.s32 %s14, 1
    %s20 = ssub.s32 %s14, 2
    %s21 = sadd.s32 %s14, 1
    %s22 = ssub.s32 %s14, %s21
    %p23 = scmp.eq.s32.totalorder %s22, 0
    %s25 = sadd.s32 %s24, 1
    %s26 = scalar_select %p23, %s24, %s25
    %p29 = pneg %p23
    %p30 = scmp.eq.s32.totalorder %s14, 1
    %p31 = por %p29, %p30
    %p32 = scmp.ne.s32.totalorder %s24, %s27
    %p33 = scmp.eq.s32.totalorder %s14, 0
    %p34 = por %p32, %p33
    %p35 = scmp.ne.s32.totalorder %s24, %s27
    %p36 = scmp.eq.s32.totalorder %s19, 1
    %p37 = por %p35, %p36
    %p38 = scmp.ne.s32.totalorder %s27, %s28
    %p39 = scmp.eq.s32.totalorder %s19, 0
    %p40 = por %p38, %p39
    %p41 = scmp.ne.s32.totalorder %s27, %s28
    %p42 = scmp.eq.s32.totalorder %s20, 1
    %p43 = por %p41, %p42
    %p45 = scmp.ne.s32.totalorder %s28, %s44
    %p46 = scmp.eq.s32.totalorder %s20, 0
    %p47 = por %p45, %p46
    %s49 = sadd.s32 %s48, 1
    %p52 = scmp.eq.s32.totalorder %s14, 1
    %p53 = scmp.ne.s32.totalorder %s48, %s50
    %p54 = scmp.eq.s32.totalorder %s14, 0
    %p55 = por %p53, %p54
    %p56 = scmp.ne.s32.totalorder %s48, %s50
    %p57 = scmp.eq.s32.totalorder %s19, 1
    %p58 = por %p56, %p57
    %p59 = scmp.ne.s32.totalorder %s50, %s51
    %p60 = scmp.eq.s32.totalorder %s19, 0
    %p61 = por %p59, %p60
    %p62 = scmp.ne.s32.totalorder %s50, %s51
    %p63 = scmp.eq.s32.totalorder %s20, 1
    %p64 = por %p62, %p63
    %p66 = scmp.ne.s32.totalorder %s51, %s65
    %p67 = scmp.eq.s32.totalorder %s20, 0
    %p68 = por %p66, %p67
    %s70 = sadd.s32 %s69, 1
    %p73 = scmp.eq.s32.totalorder %s14, 1
    %p74 = scmp.ne.s32.totalorder %s69, %s71
    %p75 = scmp.eq.s32.totalorder %s14, 0
    %p76 = por %p74, %p75
    %p77 = scmp.ne.s32.totalorder %s69, %s71
    %p78 = scmp.eq.s32.totalorder %s19, 1
    %p79 = por %p77, %p78
    %p80 = scmp.ne.s32.totalorder %s71, %s72
    %p81 = scmp.eq.s32.totalorder %s19, 0
    %p82 = por %p80, %p81
    %p83 = scmp.ne.s32.totalorder %s71, %s72
    %p84 = scmp.eq.s32.totalorder %s20, 1
    %p85 = por %p83, %p84
    %p87 = scmp.ne.s32.totalorder %s72, %s86
    %p88 = scmp.eq.s32.totalorder %s20, 0
    %p89 = por %p87, %p88
    %s91 = sadd.s32 %s90, 1
    %p94 = scmp.eq.s32.totalorder %s14, 1
    %p95 = scmp.ne.s32.totalorder %s90, %s92
    %p96 = scmp.eq.s32.totalorder %s14, 0
    %p97 = por %p95, %p96
    %p98 = scmp.ne.s32.totalorder %s90, %s92
    %p99 = scmp.eq.s32.totalorder %s19, 1
    %p100 = por %p98, %p99
    %p101 = scmp.ne.s32.totalorder %s92, %s93
    %p102 = scmp.eq.s32.totalorder %s19, 0
    %p103 = por %p101, %p102
    %p104 = scmp.ne.s32.totalorder %s92, %s93
    %p105 = scmp.eq.s32.totalorder %s20, 1
    %p106 = por %p104, %p105
    %p108 = scmp.ne.s32.totalorder %s93, %s107
    %p109 = scmp.eq.s32.totalorder %s20, 0
    %p110 = por %p108, %p109
    %s112 = sadd.s32 %s111, 1
    %p115 = scmp.eq.s32.totalorder %s14, 1
    %p116 = scmp.ne.s32.totalorder %s111, %s113
    %p117 = scmp.eq.s32.totalorder %s14, 0
    %p118 = por %p116, %p117
    %p119 = scmp.ne.s32.totalorder %s111, %s113
    %p120 = scmp.eq.s32.totalorder %s19, 1
    %p121 = por %p119, %p120
    %p122 = scmp.ne.s32.totalorder %s113, %s114
    %p123 = scmp.eq.s32.totalorder %s19, 0
    %p124 = por %p122, %p123
    %p125 = scmp.ne.s32.totalorder %s113, %s114
    %p126 = scmp.eq.s32.totalorder %s20, 1
    %p127 = por %p125, %p126
    %p129 = scmp.ne.s32.totalorder %s114, %s128
    %p130 = scmp.eq.s32.totalorder %s20, 0
    %p131 = por %p129, %p130
    %s133 = sadd.s32 %s132, 1
    %p136 = scmp.eq.s32.totalorder %s14, 1
    %p137 = scmp.ne.s32.totalorder %s132, %s134
    %p138 = scmp.eq.s32.totalorder %s14, 0
    %p139 = por %p137, %p138
    %p140 = scmp.ne.s32.totalorder %s132, %s134
    %p141 = scmp.eq.s32.totalorder %s19, 1
    %p142 = por %p140, %p141
    %p143 = scmp.ne.s32.totalorder %s134, %s135
    %p144 = scmp.eq.s32.totalorder %s19, 0
    %p145 = por %p143, %p144
    %p146 = scmp.ne.s32.totalorder %s134, %s135
    %p147 = scmp.eq.s32.totalorder %s20, 1
    %p148 = por %p146, %p147
    %p150 = scmp.ne.s32.totalorder %s135, %s149
    %p151 = scmp.eq.s32.totalorder %s20, 0
    %p152 = por %p150, %p151
    %s153 = ssub.s32 %s14, %s21
    %p154 = scmp.eq.s32.totalorder %s153, 0
    %s156 = sadd.s32 %s155, 1
    %s157 = scalar_select %p154, %s155, %s156
    %p160 = pneg %p154
    %p161 = scmp.eq.s32.totalorder %s14, 1
    %p162 = por %p160, %p161
    %p163 = scmp.ne.s32.totalorder %s155, %s158
    %p164 = scmp.eq.s32.totalorder %s14, 0
    %p165 = por %p163, %p164
    %p166 = scmp.ne.s32.totalorder %s155, %s158
    %p167 = scmp.eq.s32.totalorder %s19, 1
    %p168 = por %p166, %p167
    %p169 = scmp.ne.s32.totalorder %s158, %s159
    %p170 = scmp.eq.s32.totalorder %s19, 0
    %p171 = por %p169, %p170
    %p172 = scmp.ne.s32.totalorder %s158, %s159
    %p173 = scmp.eq.s32.totalorder %s20, 1
    %p174 = por %p172, %p173
    %p176 = scmp.ne.s32.totalorder %s159, %s175
    %p177 = scmp.eq.s32.totalorder %s20, 0
    %p178 = por %p176, %p177
    %p179 = scmp.le.s32.totalorder 1, %s14
    %p180 = scmp.lt.s32.totalorder %s14, 3
    %p181 = pnand %p179, %p180
    %p182 = pneg %p181
    // Predicated region
    $region9: #{apm_forward_pallas.7} parent=5 // pred_check
      _
    $region10: #{apm_forward_pallas.7} parent=5 // pred_check_branch
      %184 = sbr.rel (%p181) target = $region12
    $region11: #{apm_forward_pallas.7} parent=5 // pred_region
      %s185 = ssub.s32 %s14, 1
      // Predicated region
      $region13: #{apm_forward_pallas.7} parent=11 // pred_check
        %p186 = pneg %p61
      $region14: #{apm_forward_pallas.7} parent=11 // pred_check_branch
        %188 = sbr.rel (%p186) target = $region16
      $region15: #{apm_forward_pallas.7} parent=11 // pred_region
        _
      $region16: #{apm_forward_pallas.7} parent=11 // pred_fallthru
        _
      // Predicated region
      $region17: #{apm_forward_pallas.7} parent=11 // pred_check
        %p189 = pneg %p82
      $region18: #{apm_forward_pallas.7} parent=11 // pred_check_branch
        %191 = sbr.rel (%p189) target = $region20
      $region19: #{apm_forward_pallas.7} parent=11 // pred_region
        _
      $region20: #{apm_forward_pallas.7} parent=11 // pred_fallthru
        _
      // Predicated region
      $region21: #{apm_forward_pallas.7} parent=11 // pred_check
        %p192 = pneg %p103
      $region22: #{apm_forward_pallas.7} parent=11 // pred_check_branch
        %194 = sbr.rel (%p192) target = $region24
      $region23: #{apm_forward_pallas.7} parent=11 // pred_region
        _
      $region24: #{apm_forward_pallas.7} parent=11 // pred_fallthru
        _
      // Predicated region
      $region25: #{apm_forward_pallas.7} parent=11 // pred_check
        %p195 = pneg %p124
      $region26: #{apm_forward_pallas.7} parent=11 // pred_check_branch
        %197 = sbr.rel (%p195) target = $region28
      $region27: #{apm_forward_pallas.7} parent=11 // pred_region
        _
      $region28: #{apm_forward_pallas.7} parent=11 // pred_fallthru
        _
      // Predicated region
      $region29: #{apm_forward_pallas.7} parent=11 // pred_check
        %p198 = pneg %p145
      $region30: #{apm_forward_pallas.7} parent=11 // pred_check_branch
        %200 = sbr.rel (%p198) target = $region32
      $region31: #{apm_forward_pallas.7} parent=11 // pred_region
        _
      $region32: #{apm_forward_pallas.7} parent=11 // pred_fallthru
        _
    $region12: #{apm_forward_pallas.7} parent=5 // pred_fallthru
      _
    %p201 = scmp.lt.s32.totalorder %s14, 2
    // Predicated region
    $region33: #{apm_forward_pallas.7} parent=5 // pred_check
      %p202 = pneg %p201
    $region34: #{apm_forward_pallas.7} parent=5 // pred_check_branch
      %204 = sbr.rel (%p202) target = $region36
    $region35: #{apm_forward_pallas.7} parent=5 // pred_region
      // Predicated region
      $region37: #{apm_forward_pallas.7} parent=35 // pred_check
        %p205 = pneg %p34
      $region38: #{apm_forward_pallas.7} parent=35 // pred_check_branch
        %207 = sbr.rel (%p205) target = $region40
      $region39: #{apm_forward_pallas.7} parent=35 // pred_region
        %s208 = smul.u32 32, %s14
        %p209 = scmp.lt.s32.totalorder %s208, 63
        %s210 = scalar_select %p209, %s208, 63
        %s211 = smul.addr %s210, 9
        %s212 = smul.addr %s211, 8
        %s213 = scalar_lea.vmem %s0, %s212
        %s214 = smul.u32 32, %s14
      $region40: #{apm_forward_pallas.7} parent=35 // pred_fallthru
        _
    $region36: #{apm_forward_pallas.7} parent=5 // pred_fallthru
      _
    %p215 = scmp.le.s32.totalorder 1, %s14
    %p216 = scmp.lt.s32.totalorder %s14, 3
    %p217 = pnand %p215, %p216
    %p218 = pneg %p217
    // Predicated region
    $region41: #{apm_forward_pallas.7} parent=5 // pred_check
      _
    $region42: #{apm_forward_pallas.7} parent=5 // pred_check_branch
      %220 = sbr.rel (%p217) target = $region44
    $region43: #{apm_forward_pallas.7} parent=5 // pred_region
      %s221 = ssub.s32 %s14, 1
      %s222 = smul.u32 32, %s19
      %p223 = scmp.lt.s32.totalorder %s222, 63
      %s224 = scalar_select %p223, %s222, 63
      %s225 = smul.addr %s224, 9
      %s226 = smul.addr %s225, 8
      %s227 = scalar_lea.vmem %s0, %s226
      %p228 = pneg %p40
      %p229 = pneg %p37
      %p230 = pneg %p61
      %p231 = pneg %p58
      %p232 = pneg %p82
      %p233 = pneg %p79
      %p234 = pneg %p103
      %p235 = pneg %p100
      %p236 = pneg %p124
      %p237 = pneg %p121
      %p238 = pneg %p145
      %p239 = pneg %p142
      %p240 = pneg %p171
      %p241 = pneg %p168
      %s242 = smul.u32 32, %s19
      %p243 = scmp.lt.s32.totalorder %s242, 63
      %s244 = scalar_select %p243, %s242, 63
      %s245 = smul.addr %s244, 8
      %s246 = scalar_lea.vmem %s6, %s245
      %s247 = smul.u32 32, %s19
      %p248 = scmp.lt.s32.totalorder %s247, 63
      %s249 = scalar_select %p248, %s247, 63
      %s250 = smul.addr %s249, 9
      %s251 = smul.addr %s250, 8
      %s252 = scalar_lea.vmem %s0, %s251
      %s253 = smul.u32 32, %s19
      %s254 = smul.u32 32, %s19
      %p255 = scmp.lt.s32.totalorder %s254, 63
      %s256 = scalar_select %p255, %s254, 63
      %s257 = smul.addr %s256, 8
      %s258 = scalar_lea.vmem %s6, %s257
      %s259 = smul.u32 32, %s19
      %v260 = vld [vmem:[%s252] sm:$0xff]
      %v261 = vld [vmem:[%s252 + $0x8] sm:$0xff]
      %v262 = vld [vmem:[%s252 + $0x10] sm:$0xff]
      %v263 = vld [vmem:[%s252 + $0x18] sm:$0xff]
      %v264 = vld [vmem:[%s252 + $0x20] sm:$0xff]
      %v265 = vld [vmem:[%s252 + $0x28] sm:$0xff]
      %v266 = vld [vmem:[%s252 + $0x30] sm:$0xff]
      %v267 = vld [vmem:[%s252 + $0x38] sm:$0xff]
      %v268 = vld [vmem:[%s252 + $0x40] sm:$0xff]
      %v269 = vld [vmem:[%s252 + $0x48] sm:$0xff]
      %v270 = vld [vmem:[%s252 + $0x50] sm:$0xff]
      %v271 = vld [vmem:[%s252 + $0x58] sm:$0xff]
      %v272 = vld [vmem:[%s252 + $0x60] sm:$0xff]
      %v273 = vld [vmem:[%s252 + $0x68] sm:$0xff]
      %v274 = vld [vmem:[%s252 + $0x70] sm:$0xff]
      %v275 = vld [vmem:[%s252 + $0x78] sm:$0xff]
      %v276 = vld [vmem:[%s252 + $0x80] sm:$0xff]
      %v277 = vld [vmem:[%s252 + $0x88] sm:$0xff]
      %v278 = vld [vmem:[%s252 + $0x90] sm:$0xff]
      %v279 = vld [vmem:[%s252 + $0x98] sm:$0xff]
      %v280 = vld [vmem:[%s252 + $0xa0] sm:$0xff]
      %v281 = vld [vmem:[%s252 + $0xa8] sm:$0xff]
      %v282 = vld [vmem:[%s252 + $0xb0] sm:$0xff]
      %v283 = vld [vmem:[%s252 + $0xb8] sm:$0xff]
      %v284 = vld [vmem:[%s252 + $0xc0] sm:$0xff]
      %v285 = vld [vmem:[%s252 + $0xc8] sm:$0xff]
      %v286 = vld [vmem:[%s252 + $0xd0] sm:$0xff]
      %v287 = vld [vmem:[%s252 + $0xd8] sm:$0xff]
      %v288 = vld [vmem:[%s252 + $0xe0] sm:$0xff]
      %v289 = vld [vmem:[%s252 + $0xe8] sm:$0xff]
      %v290 = vld [vmem:[%s252 + $0xf0] sm:$0xff]
      %v291 = vld [vmem:[%s252 + $0xf8] sm:$0xff]
      %v292 = vld [vmem:[%s252 + $0x100] sm:$0xff]
      %v293 = vld [vmem:[%s252 + $0x108] sm:$0xff]
      %v294 = vld [vmem:[%s252 + $0x110] sm:$0xff]
      %v295 = vld [vmem:[%s252 + $0x118] sm:$0xff]
      %v296 = vld [vmem:[%s252 + $0x120] sm:$0xff]
      %v297 = vld [vmem:[%s252 + $0x128] sm:$0xff]
      %v298 = vld [vmem:[%s252 + $0x130] sm:$0xff]
      %v299 = vld [vmem:[%s252 + $0x138] sm:$0xff]
      %v300 = vld [vmem:[%s252 + $0x140] sm:$0xff]
      %v301 = vld [vmem:[%s252 + $0x148] sm:$0xff]
      %v302 = vld [vmem:[%s252 + $0x150] sm:$0xff]
      %v303 = vld [vmem:[%s252 + $0x158] sm:$0xff]
      %v304 = vld [vmem:[%s252 + $0x160] sm:$0xff]
      %v305 = vld [vmem:[%s252 + $0x168] sm:$0xff]
      %v306 = vld [vmem:[%s252 + $0x170] sm:$0xff]
      %v307 = vld [vmem:[%s252 + $0x178] sm:$0xff]
      %v308 = vld [vmem:[%s252 + $0x180] sm:$0xff]
      %v309 = vld [vmem:[%s252 + $0x188] sm:$0xff]
      %v310 = vld [vmem:[%s252 + $0x190] sm:$0xff]
      %v311 = vld [vmem:[%s252 + $0x198] sm:$0xff]
      %v312 = vld [vmem:[%s252 + $0x1a0] sm:$0xff]
      %v313 = vld [vmem:[%s252 + $0x1a8] sm:$0xff]
      %v314 = vld [vmem:[%s252 + $0x1b0] sm:$0xff]
      %v315 = vld [vmem:[%s252 + $0x1b8] sm:$0xff]
      %v316 = vld [vmem:[%s252 + $0x1c0] sm:$0xff]
      %v317 = vld [vmem:[%s252 + $0x1c8] sm:$0xff]
      %v318 = vld [vmem:[%s252 + $0x1d0] sm:$0xff]
      %v319 = vld [vmem:[%s252 + $0x1d8] sm:$0xff]
      %v320 = vld [vmem:[%s252 + $0x1e0] sm:$0xff]
      %v321 = vld [vmem:[%s252 + $0x1e8] sm:$0xff]
      %v322 = vld [vmem:[%s252 + $0x1f0] sm:$0xff]
      %v323 = vld [vmem:[%s252 + $0x1f8] sm:$0xff]
      %v324 = vld [vmem:[%s252 + $0x200] sm:$0xff]
      %v325 = vld [vmem:[%s252 + $0x208] sm:$0xff]
      %v326 = vld [vmem:[%s252 + $0x210] sm:$0xff]
      %v327 = vld [vmem:[%s252 + $0x218] sm:$0xff]
      %v328 = vld [vmem:[%s252 + $0x220] sm:$0xff]
      %v329 = vld [vmem:[%s252 + $0x228] sm:$0xff]
      %v330 = vld [vmem:[%s252 + $0x230] sm:$0xff]
      %v331 = vld [vmem:[%s252 + $0x238] sm:$0xff]
      %v332 = vld [vmem:[%s252 + $0x240] sm:$0xff]
      %v333 = vld [vmem:[%s252 + $0x248] sm:$0xff]
      %v334 = vld [vmem:[%s252 + $0x250] sm:$0xff]
      %v335 = vld [vmem:[%s252 + $0x258] sm:$0xff]
      %v336 = vld [vmem:[%s252 + $0x260] sm:$0xff]
      %v337 = vld [vmem:[%s252 + $0x268] sm:$0xff]
      %v338 = vld [vmem:[%s252 + $0x270] sm:$0xff]
      %v339 = vld [vmem:[%s252 + $0x278] sm:$0xff]
      %v340 = vld [vmem:[%s252 + $0x280] sm:$0xff]
      %v341 = vld [vmem:[%s252 + $0x288] sm:$0xff]
      %v342 = vld [vmem:[%s252 + $0x290] sm:$0xff]
      %v343 = vld [vmem:[%s252 + $0x298] sm:$0xff]
      %v344 = vld [vmem:[%s252 + $0x2a0] sm:$0xff]
      %v345 = vld [vmem:[%s252 + $0x2a8] sm:$0xff]
      %v346 = vld [vmem:[%s252 + $0x2b0] sm:$0xff]
      %v347 = vld [vmem:[%s252 + $0x2b8] sm:$0xff]
      %v348 = vld [vmem:[%s252 + $0x2c0] sm:$0xff]
      %v349 = vld [vmem:[%s252 + $0x2c8] sm:$0xff]
      %v350 = vld [vmem:[%s252 + $0x2d0] sm:$0xff]
      %v351 = vld [vmem:[%s252 + $0x2d8] sm:$0xff]
      %v352 = vld [vmem:[%s252 + $0x2e0] sm:$0xff]
      %v353 = vld [vmem:[%s252 + $0x2e8] sm:$0xff]
      %v354 = vld [vmem:[%s252 + $0x2f0] sm:$0xff]
      %v355 = vld [vmem:[%s252 + $0x2f8] sm:$0xff]
      %v356 = vld [vmem:[%s252 + $0x300] sm:$0xff]
      %v357 = vld [vmem:[%s252 + $0x308] sm:$0xff]
      %v358 = vld [vmem:[%s252 + $0x310] sm:$0xff]
      %v359 = vld [vmem:[%s252 + $0x318] sm:$0xff]
      %v360 = vld [vmem:[%s252 + $0x320] sm:$0xff]
      %v361 = vld [vmem:[%s252 + $0x328] sm:$0xff]
      %v362 = vld [vmem:[%s252 + $0x330] sm:$0xff]
      %v363 = vld [vmem:[%s252 + $0x338] sm:$0xff]
      %v364 = vld [vmem:[%s252 + $0x340] sm:$0xff]
      %v365 = vld [vmem:[%s252 + $0x348] sm:$0xff]
      %v366 = vld [vmem:[%s252 + $0x350] sm:$0xff]
      %v367 = vld [vmem:[%s252 + $0x358] sm:$0xff]
      %v368 = vld [vmem:[%s252 + $0x360] sm:$0xff]
      %v369 = vld [vmem:[%s252 + $0x368] sm:$0xff]
      %v370 = vld [vmem:[%s252 + $0x370] sm:$0xff]
      %v371 = vld [vmem:[%s252 + $0x378] sm:$0xff]
      %v372 = vld [vmem:[%s252 + $0x380] sm:$0xff]
      %v373 = vld [vmem:[%s252 + $0x388] sm:$0xff]
      %v374 = vld [vmem:[%s252 + $0x390] sm:$0xff]
      %v375 = vld [vmem:[%s252 + $0x398] sm:$0xff]
      %v376 = vld [vmem:[%s252 + $0x3a0] sm:$0xff]
      %v377 = vld [vmem:[%s252 + $0x3a8] sm:$0xff]
      %v378 = vld [vmem:[%s252 + $0x3b0] sm:$0xff]
      %v379 = vld [vmem:[%s252 + $0x3b8] sm:$0xff]
      %v380 = vld [vmem:[%s252 + $0x3c0] sm:$0xff]
      %v381 = vld [vmem:[%s252 + $0x3c8] sm:$0xff]
      %v382 = vld [vmem:[%s252 + $0x3d0] sm:$0xff]
      %v383 = vld [vmem:[%s252 + $0x3d8] sm:$0xff]
      %v384 = vld [vmem:[%s252 + $0x3e0] sm:$0xff]
      %v385 = vld [vmem:[%s252 + $0x3e8] sm:$0xff]
      %v386 = vld [vmem:[%s252 + $0x3f0] sm:$0xff]
      %v387 = vld [vmem:[%s252 + $0x3f8] sm:$0xff]
      %v388 = vld [vmem:[%s252 + $0x400] sm:$0xff]
      %v389 = vld [vmem:[%s252 + $0x408] sm:$0xff]
      %v390 = vld [vmem:[%s252 + $0x410] sm:$0xff]
      %v391 = vld [vmem:[%s252 + $0x418] sm:$0xff]
      %v392 = vld [vmem:[%s252 + $0x420] sm:$0xff]
      %v393 = vld [vmem:[%s252 + $0x428] sm:$0xff]
      %v394 = vld [vmem:[%s252 + $0x430] sm:$0xff]
      %v395 = vld [vmem:[%s252 + $0x438] sm:$0xff]
      %v396 = vld [vmem:[%s252 + $0x440] sm:$0xff]
      %v397 = vld [vmem:[%s252 + $0x448] sm:$0xff]
      %v398 = vld [vmem:[%s252 + $0x450] sm:$0xff]
      %v399 = vld [vmem:[%s252 + $0x458] sm:$0xff]
      %v400 = vld [vmem:[%s252 + $0x460] sm:$0xff]
      %v401 = vld [vmem:[%s252 + $0x468] sm:$0xff]
      %v402 = vld [vmem:[%s252 + $0x470] sm:$0xff]
      %v403 = vld [vmem:[%s252 + $0x478] sm:$0xff]
      %v404 = vld [vmem:[%s252 + $0x480] sm:$0xff]
      %v405 = vld [vmem:[%s252 + $0x488] sm:$0xff]
      %v406 = vld [vmem:[%s252 + $0x490] sm:$0xff]
      %v407 = vld [vmem:[%s252 + $0x498] sm:$0xff]
      %v408 = vld [vmem:[%s252 + $0x4a0] sm:$0xff]
      %v409 = vld [vmem:[%s252 + $0x4a8] sm:$0xff]
      %v410 = vld [vmem:[%s252 + $0x4b0] sm:$0xff]
      %v411 = vld [vmem:[%s252 + $0x4b8] sm:$0xff]
      %v412 = vld [vmem:[%s252 + $0x4c0] sm:$0xff]
      %v413 = vld [vmem:[%s252 + $0x4c8] sm:$0xff]
      %v414 = vld [vmem:[%s252 + $0x4d0] sm:$0xff]
      %v415 = vld [vmem:[%s252 + $0x4d8] sm:$0xff]
      %v416 = vld [vmem:[%s252 + $0x4e0] sm:$0xff]
      %v417 = vld [vmem:[%s252 + $0x4e8] sm:$0xff]
      %v418 = vld [vmem:[%s252 + $0x4f0] sm:$0xff]
      %v419 = vld [vmem:[%s252 + $0x4f8] sm:$0xff]
      %v420 = vld [vmem:[%s252 + $0x500] sm:$0xff]
      %v421 = vld [vmem:[%s252 + $0x508] sm:$0xff]
      %v422 = vld [vmem:[%s252 + $0x510] sm:$0xff]
      %v423 = vld [vmem:[%s252 + $0x518] sm:$0xff]
      %v424 = vld [vmem:[%s252 + $0x520] sm:$0xff]
      %v425 = vld [vmem:[%s252 + $0x528] sm:$0xff]
      %v426 = vld [vmem:[%s252 + $0x530] sm:$0xff]
      %v427 = vld [vmem:[%s252 + $0x538] sm:$0xff]
      %v428 = vld [vmem:[%s252 + $0x540] sm:$0xff]
      %v429 = vld [vmem:[%s252 + $0x548] sm:$0xff]
      %v430 = vld [vmem:[%s252 + $0x550] sm:$0xff]
      %v431 = vld [vmem:[%s252 + $0x558] sm:$0xff]
      %v432 = vld [vmem:[%s252 + $0x560] sm:$0xff]
      %v433 = vld [vmem:[%s252 + $0x568] sm:$0xff]
      %v434 = vld [vmem:[%s252 + $0x570] sm:$0xff]
      %v435 = vld [vmem:[%s252 + $0x578] sm:$0xff]
      %v436 = vld [vmem:[%s252 + $0x580] sm:$0xff]
      %v437 = vld [vmem:[%s252 + $0x588] sm:$0xff]
      %v438 = vld [vmem:[%s252 + $0x590] sm:$0xff]
      %v439 = vld [vmem:[%s252 + $0x598] sm:$0xff]
      %v440 = vld [vmem:[%s252 + $0x5a0] sm:$0xff]
      %v441 = vld [vmem:[%s252 + $0x5a8] sm:$0xff]
      %v442 = vld [vmem:[%s252 + $0x5b0] sm:$0xff]
      %v443 = vld [vmem:[%s252 + $0x5b8] sm:$0xff]
      %v444 = vld [vmem:[%s252 + $0x5c0] sm:$0xff]
      %v445 = vld [vmem:[%s252 + $0x5c8] sm:$0xff]
      %v446 = vld [vmem:[%s252 + $0x5d0] sm:$0xff]
      %v447 = vld [vmem:[%s252 + $0x5d8] sm:$0xff]
      %v448 = vld [vmem:[%s252 + $0x5e0] sm:$0xff]
      %v449 = vld [vmem:[%s252 + $0x5e8] sm:$0xff]
      %v450 = vld [vmem:[%s252 + $0x5f0] sm:$0xff]
      %v451 = vld [vmem:[%s252 + $0x5f8] sm:$0xff]
      %v452 = vld [vmem:[%s252 + $0x600] sm:$0xff]
      %v453 = vld [vmem:[%s252 + $0x608] sm:$0xff]
      %v454 = vld [vmem:[%s252 + $0x610] sm:$0xff]
      %v455 = vld [vmem:[%s252 + $0x618] sm:$0xff]
      %v456 = vld [vmem:[%s252 + $0x620] sm:$0xff]
      %v457 = vld [vmem:[%s252 + $0x628] sm:$0xff]
      %v458 = vld [vmem:[%s252 + $0x630] sm:$0xff]
      %v459 = vld [vmem:[%s252 + $0x638] sm:$0xff]
      %v460 = vld [vmem:[%s252 + $0x640] sm:$0xff]
      %v461 = vld [vmem:[%s252 + $0x648] sm:$0xff]
      %v462 = vld [vmem:[%s252 + $0x650] sm:$0xff]
      %v463 = vld [vmem:[%s252 + $0x658] sm:$0xff]
      %v464 = vld [vmem:[%s252 + $0x660] sm:$0xff]
      %v465 = vld [vmem:[%s252 + $0x668] sm:$0xff]
      %v466 = vld [vmem:[%s252 + $0x670] sm:$0xff]
      %v467 = vld [vmem:[%s252 + $0x678] sm:$0xff]
      %v468 = vld [vmem:[%s252 + $0x680] sm:$0xff]
      %v469 = vld [vmem:[%s252 + $0x688] sm:$0xff]
      %v470 = vld [vmem:[%s252 + $0x690] sm:$0xff]
      %v471 = vld [vmem:[%s252 + $0x698] sm:$0xff]
      %v472 = vld [vmem:[%s252 + $0x6a0] sm:$0xff]
      %v473 = vld [vmem:[%s252 + $0x6a8] sm:$0xff]
      %v474 = vld [vmem:[%s252 + $0x6b0] sm:$0xff]
      %v475 = vld [vmem:[%s252 + $0x6b8] sm:$0xff]
      %v476 = vld [vmem:[%s252 + $0x6c0] sm:$0xff]
      %v477 = vld [vmem:[%s252 + $0x6c8] sm:$0xff]
      %v478 = vld [vmem:[%s252 + $0x6d0] sm:$0xff]
      %v479 = vld [vmem:[%s252 + $0x6d8] sm:$0xff]
      %v480 = vld [vmem:[%s252 + $0x6e0] sm:$0xff]
      %v481 = vld [vmem:[%s252 + $0x6e8] sm:$0xff]
      %v482 = vld [vmem:[%s252 + $0x6f0] sm:$0xff]
      %v483 = vld [vmem:[%s252 + $0x6f8] sm:$0xff]
      %v484 = vld [vmem:[%s252 + $0x700] sm:$0xff]
      %v485 = vld [vmem:[%s252 + $0x708] sm:$0xff]
      %v486 = vld [vmem:[%s252 + $0x710] sm:$0xff]
      %v487 = vld [vmem:[%s252 + $0x718] sm:$0xff]
      %v488 = vld [vmem:[%s252 + $0x720] sm:$0xff]
      %v489 = vld [vmem:[%s252 + $0x728] sm:$0xff]
      %v490 = vld [vmem:[%s252 + $0x730] sm:$0xff]
      %v491 = vld [vmem:[%s252 + $0x738] sm:$0xff]
      %v492 = vld [vmem:[%s252 + $0x740] sm:$0xff]
      %v493 = vld [vmem:[%s252 + $0x748] sm:$0xff]
      %v494 = vld [vmem:[%s252 + $0x750] sm:$0xff]
      %v495 = vld [vmem:[%s252 + $0x758] sm:$0xff]
      %v496 = vld [vmem:[%s252 + $0x760] sm:$0xff]
      %v497 = vld [vmem:[%s252 + $0x768] sm:$0xff]
      %v498 = vld [vmem:[%s252 + $0x770] sm:$0xff]
      %v499 = vld [vmem:[%s252 + $0x778] sm:$0xff]
      %v500 = vld [vmem:[%s252 + $0x780] sm:$0xff]
      %v501 = vld [vmem:[%s252 + $0x788] sm:$0xff]
      %v502 = vld [vmem:[%s252 + $0x790] sm:$0xff]
      %v503 = vld [vmem:[%s252 + $0x798] sm:$0xff]
      %v504 = vld [vmem:[%s252 + $0x7a0] sm:$0xff]
      %v505 = vld [vmem:[%s252 + $0x7a8] sm:$0xff]
      %v506 = vld [vmem:[%s252 + $0x7b0] sm:$0xff]
      %v507 = vld [vmem:[%s252 + $0x7b8] sm:$0xff]
      %v508 = vld [vmem:[%s252 + $0x7c0] sm:$0xff]
      %v509 = vld [vmem:[%s252 + $0x7c8] sm:$0xff]
      %v510 = vld [vmem:[%s252 + $0x7d0] sm:$0xff]
      %v511 = vld [vmem:[%s252 + $0x7d8] sm:$0xff]
      %v512 = vld [vmem:[%s252 + $0x7e0] sm:$0xff]
      %v513 = vld [vmem:[%s252 + $0x7e8] sm:$0xff]
      %v514 = vld [vmem:[%s252 + $0x7f0] sm:$0xff]
      %v515 = vld [vmem:[%s252 + $0x7f8] sm:$0xff]
      %v516 = vld [vmem:[%s252 + $0x800] sm:$0xff]
      %v517 = vld [vmem:[%s252 + $0x808] sm:$0xff]
      %v518 = vld [vmem:[%s252 + $0x810] sm:$0xff]
      %v519 = vld [vmem:[%s252 + $0x818] sm:$0xff]
      %v520 = vld [vmem:[%s252 + $0x820] sm:$0xff]
      %v521 = vld [vmem:[%s252 + $0x828] sm:$0xff]
      %v522 = vld [vmem:[%s252 + $0x830] sm:$0xff]
      %v523 = vld [vmem:[%s252 + $0x838] sm:$0xff]
      %v524 = vld [vmem:[%s252 + $0x840] sm:$0xff]
      %v525 = vld [vmem:[%s252 + $0x848] sm:$0xff]
      %v526 = vld [vmem:[%s252 + $0x850] sm:$0xff]
      %v527 = vld [vmem:[%s252 + $0x858] sm:$0xff]
      %v528 = vld [vmem:[%s252 + $0x860] sm:$0xff]
      %v529 = vld [vmem:[%s252 + $0x868] sm:$0xff]
      %v530 = vld [vmem:[%s252 + $0x870] sm:$0xff]
      %v531 = vld [vmem:[%s252 + $0x878] sm:$0xff]
      %v532 = vld [vmem:[%s252 + $0x880] sm:$0xff]
      %v533 = vld [vmem:[%s252 + $0x888] sm:$0xff]
      %v534 = vld [vmem:[%s252 + $0x890] sm:$0xff]
      %v535 = vld [vmem:[%s252 + $0x898] sm:$0xff]
      %v536 = vld [vmem:[%s252 + $0x8a0] sm:$0xff]
      %v537 = vld [vmem:[%s252 + $0x8a8] sm:$0xff]
      %v538 = vld [vmem:[%s252 + $0x8b0] sm:$0xff]
      %v539 = vld [vmem:[%s252 + $0x8b8] sm:$0xff]
      %v540 = vld [vmem:[%s252 + $0x8c0] sm:$0xff]
      %v541 = vld [vmem:[%s252 + $0x8c8] sm:$0xff]
      %v542 = vld [vmem:[%s252 + $0x8d0] sm:$0xff]
      %v543 = vld [vmem:[%s252 + $0x8d8] sm:$0xff]
      %v544 = vld [vmem:[%s252 + $0x8e0] sm:$0xff]
      %v545 = vld [vmem:[%s252 + $0x8e8] sm:$0xff]
      %v546 = vld [vmem:[%s252 + $0x8f0] sm:$0xff]
      %v547 = vld [vmem:[%s252 + $0x8f8] sm:$0xff]
      %v548 = vld [vmem:[%s1] sm:$0xff]
      %v549 = vld [vmem:[%s1 + $0x8] sm:$0xff]
      %v550 = vld [vmem:[%s1 + $0x10] sm:$0xff]
      %v551 = vld [vmem:[%s1 + $0x18] sm:$0xff]
      %v552 = vld [vmem:[%s1 + $0x20] sm:$0xff]
      %v553 = vld [vmem:[%s1 + $0x28] sm:$0xff]
      %v554 = vld [vmem:[%s1 + $0x30] sm:$0xff]
      %v555 = vld [vmem:[%s1 + $0x38] sm:$0xff]
      %v556 = vld [vmem:[%s1 + $0x40] sm:$0xff]
      %v557 = vld [vmem:[%s1 + $0x48] sm:$0xff]
      %v558 = vld [vmem:[%s1 + $0x50] sm:$0xff]
      %v559 = vld [vmem:[%s1 + $0x58] sm:$0xff]
      %v560 = vld [vmem:[%s1 + $0x60] sm:$0xff]
      %v561 = vld [vmem:[%s1 + $0x68] sm:$0xff]
      %v562 = vld [vmem:[%s1 + $0x70] sm:$0xff]
      %v563 = vld [vmem:[%s1 + $0x78] sm:$0xff]
      %v564 = vld [vmem:[%s1 + $0x80] sm:$0xff]
      %v565 = vld [vmem:[%s1 + $0x88] sm:$0xff]
      %v566 = vld [vmem:[%s1 + $0x90] sm:$0xff]
      %v567 = vld [vmem:[%s1 + $0x98] sm:$0xff]
      %v568 = vld [vmem:[%s1 + $0xa0] sm:$0xff]
      %v569 = vld [vmem:[%s1 + $0xa8] sm:$0xff]
      %v570 = vld [vmem:[%s1 + $0xb0] sm:$0xff]
      %v571 = vld [vmem:[%s1 + $0xb8] sm:$0xff]
      %v572 = vld [vmem:[%s1 + $0xc0] sm:$0xff]
      %v573 = vld [vmem:[%s1 + $0xc8] sm:$0xff]
      %v574 = vld [vmem:[%s1 + $0xd0] sm:$0xff]
      %v575 = vld [vmem:[%s1 + $0xd8] sm:$0xff]
      %v576 = vld [vmem:[%s1 + $0xe0] sm:$0xff]
      %v577 = vld [vmem:[%s1 + $0xe8] sm:$0xff]
      %v578 = vld [vmem:[%s1 + $0xf0] sm:$0xff]
      %v579 = vld [vmem:[%s1 + $0xf8] sm:$0xff]
      %v580 = vld [vmem:[%s1 + $0x100] sm:$0xff]
      %v581 = vld [vmem:[%s1 + $0x108] sm:$0xff]
      %v582 = vld [vmem:[%s1 + $0x110] sm:$0xff]
      %v583 = vld [vmem:[%s1 + $0x118] sm:$0xff]
      %v584 = vld [vmem:[%s1 + $0x120] sm:$0xff]
      %v585 = vld [vmem:[%s1 + $0x128] sm:$0xff]
      %v586 = vld [vmem:[%s1 + $0x130] sm:$0xff]
      %v587 = vld [vmem:[%s1 + $0x138] sm:$0xff]
      %v588 = vld [vmem:[%s1 + $0x140] sm:$0xff]
      %v589 = vld [vmem:[%s1 + $0x148] sm:$0xff]
      %v590 = vld [vmem:[%s1 + $0x150] sm:$0xff]
      %v591 = vld [vmem:[%s1 + $0x158] sm:$0xff]
      %v592 = vld [vmem:[%s1 + $0x160] sm:$0xff]
      %v593 = vld [vmem:[%s1 + $0x168] sm:$0xff]
      %v594 = vld [vmem:[%s1 + $0x170] sm:$0xff]
      %v595 = vld [vmem:[%s1 + $0x178] sm:$0xff]
      %v596 = vld [vmem:[%s1 + $0x180] sm:$0xff]
      %v597 = vld [vmem:[%s1 + $0x188] sm:$0xff]
      %v598 = vld [vmem:[%s1 + $0x190] sm:$0xff]
      %v599 = vld [vmem:[%s1 + $0x198] sm:$0xff]
      %v600 = vld [vmem:[%s1 + $0x1a0] sm:$0xff]
      %v601 = vld [vmem:[%s1 + $0x1a8] sm:$0xff]
      %v602 = vld [vmem:[%s1 + $0x1b0] sm:$0xff]
      %v603 = vld [vmem:[%s1 + $0x1b8] sm:$0xff]
      %v604 = vld [vmem:[%s1 + $0x1c0] sm:$0xff]
      %v605 = vld [vmem:[%s1 + $0x1c8] sm:$0xff]
      %v606 = vld [vmem:[%s1 + $0x1d0] sm:$0xff]
      %v607 = vld [vmem:[%s1 + $0x1d8] sm:$0xff]
      %v608 = vld [vmem:[%s1 + $0x1e0] sm:$0xff]
      %v609 = vld [vmem:[%s1 + $0x1e8] sm:$0xff]
      %v610 = vld [vmem:[%s1 + $0x1f0] sm:$0xff]
      %v611 = vld [vmem:[%s1 + $0x1f8] sm:$0xff]
      %v612 = vld [vmem:[%s1 + $0x200] sm:$0xff]
      %v613 = vld [vmem:[%s1 + $0x208] sm:$0xff]
      %v614 = vld [vmem:[%s1 + $0x210] sm:$0xff]
      %v615 = vld [vmem:[%s1 + $0x218] sm:$0xff]
      %v616 = vld [vmem:[%s1 + $0x220] sm:$0xff]
      %v617 = vld [vmem:[%s1 + $0x228] sm:$0xff]
      %v618 = vld [vmem:[%s1 + $0x230] sm:$0xff]
      %v619 = vld [vmem:[%s1 + $0x238] sm:$0xff]
      %v620 = vld [vmem:[%s1 + $0x240] sm:$0xff]
      %v621 = vld [vmem:[%s1 + $0x248] sm:$0xff]
      %v622 = vld [vmem:[%s1 + $0x250] sm:$0xff]
      %v623 = vld [vmem:[%s1 + $0x258] sm:$0xff]
      %v624 = vld [vmem:[%s1 + $0x260] sm:$0xff]
      %v625 = vld [vmem:[%s1 + $0x268] sm:$0xff]
      %v626 = vld [vmem:[%s1 + $0x270] sm:$0xff]
      %v627 = vld [vmem:[%s1 + $0x278] sm:$0xff]
      %v628 = vld [vmem:[%s1 + $0x280] sm:$0xff]
      %v629 = vld [vmem:[%s1 + $0x288] sm:$0xff]
      %v630 = vld [vmem:[%s1 + $0x290] sm:$0xff]
      %v631 = vld [vmem:[%s1 + $0x298] sm:$0xff]
      %v632 = vld [vmem:[%s1 + $0x2a0] sm:$0xff]
      %v633 = vld [vmem:[%s1 + $0x2a8] sm:$0xff]
      %v634 = vld [vmem:[%s1 + $0x2b0] sm:$0xff]
      %v635 = vld [vmem:[%s1 + $0x2b8] sm:$0xff]
      %v636 = vld [vmem:[%s1 + $0x2c0] sm:$0xff]
      %v637 = vld [vmem:[%s1 + $0x2c8] sm:$0xff]
      %v638 = vld [vmem:[%s1 + $0x2d0] sm:$0xff]
      %v639 = vld [vmem:[%s1 + $0x2d8] sm:$0xff]
      %v640 = vld [vmem:[%s1 + $0x2e0] sm:$0xff]
      %v641 = vld [vmem:[%s1 + $0x2e8] sm:$0xff]
      %v642 = vld [vmem:[%s1 + $0x2f0] sm:$0xff]
      %v643 = vld [vmem:[%s1 + $0x2f8] sm:$0xff]
      %v644 = vld [vmem:[%s1 + $0x300] sm:$0xff]
      %v645 = vld [vmem:[%s1 + $0x308] sm:$0xff]
      %v646 = vld [vmem:[%s1 + $0x310] sm:$0xff]
      %v647 = vld [vmem:[%s1 + $0x318] sm:$0xff]
      %v648 = vld [vmem:[%s1 + $0x320] sm:$0xff]
      %v649 = vld [vmem:[%s1 + $0x328] sm:$0xff]
      %v650 = vld [vmem:[%s1 + $0x330] sm:$0xff]
      %v651 = vld [vmem:[%s1 + $0x338] sm:$0xff]
      %v652 = vld [vmem:[%s1 + $0x340] sm:$0xff]
      %v653 = vld [vmem:[%s1 + $0x348] sm:$0xff]
      %v654 = vld [vmem:[%s1 + $0x350] sm:$0xff]
      %v655 = vld [vmem:[%s1 + $0x358] sm:$0xff]
      %v656 = vld [vmem:[%s1 + $0x360] sm:$0xff]
      %v657 = vld [vmem:[%s1 + $0x368] sm:$0xff]
      %v658 = vld [vmem:[%s1 + $0x370] sm:$0xff]
      %v659 = vld [vmem:[%s1 + $0x378] sm:$0xff]
      %v660 = vld [vmem:[%s1 + $0x380] sm:$0xff]
      %v661 = vld [vmem:[%s1 + $0x388] sm:$0xff]
      %v662 = vld [vmem:[%s1 + $0x390] sm:$0xff]
      %v663 = vld [vmem:[%s1 + $0x398] sm:$0xff]
      %v664 = vld [vmem:[%s1 + $0x3a0] sm:$0xff]
      %v665 = vld [vmem:[%s1 + $0x3a8] sm:$0xff]
      %v666 = vld [vmem:[%s1 + $0x3b0] sm:$0xff]
      %v667 = vld [vmem:[%s1 + $0x3b8] sm:$0xff]
      %v668 = vld [vmem:[%s1 + $0x3c0] sm:$0xff]
      %v669 = vld [vmem:[%s1 + $0x3c8] sm:$0xff]
      %v670 = vld [vmem:[%s1 + $0x3d0] sm:$0xff]
      %v671 = vld [vmem:[%s1 + $0x3d8] sm:$0xff]
      %v672 = vld [vmem:[%s1 + $0x3e0] sm:$0xff]
      %v673 = vld [vmem:[%s1 + $0x3e8] sm:$0xff]
      %v674 = vld [vmem:[%s1 + $0x3f0] sm:$0xff]
      %v675 = vld [vmem:[%s1 + $0x3f8] sm:$0xff]
      %v676 = vld [vmem:[%s1 + $0x400] sm:$0xff]
      %v677 = vld [vmem:[%s1 + $0x408] sm:$0xff]
      %v678 = vld [vmem:[%s1 + $0x410] sm:$0xff]
      %v679 = vld [vmem:[%s1 + $0x418] sm:$0xff]
      %v680 = vld [vmem:[%s1 + $0x420] sm:$0xff]
      %v681 = vld [vmem:[%s1 + $0x428] sm:$0xff]
      %v682 = vld [vmem:[%s1 + $0x430] sm:$0xff]
      %v683 = vld [vmem:[%s1 + $0x438] sm:$0xff]
      %v684 = vld [vmem:[%s1 + $0x440] sm:$0xff]
      %v685 = vld [vmem:[%s1 + $0x448] sm:$0xff]
      %v686 = vld [vmem:[%s1 + $0x450] sm:$0xff]
      %v687 = vld [vmem:[%s1 + $0x458] sm:$0xff]
      %v688 = vld [vmem:[%s1 + $0x460] sm:$0xff]
      %v689 = vld [vmem:[%s1 + $0x468] sm:$0xff]
      %v690 = vld [vmem:[%s1 + $0x470] sm:$0xff]
      %v691 = vld [vmem:[%s1 + $0x478] sm:$0xff]
      %v692 = vld [vmem:[%s2] sm:$0x1]
      %v694 = vlaneseq
      %v695 = vshrl.u32 %v694, 7
      %v696 = vsub.s32 0, %v695
      %v697 = vrot.slane %v692, %v696
      %699 = vmatprep.subr.mxu0 0.0
      %700 = vmatpush1.msra.mxu0 %v548
      %701 = vmatprep.subr.mxu0 0.0
      %702 = vmatpush1.msra.mxu0 %v549
      %703 = vmatprep.subr.mxu0 0.0
      %704 = vmatpush1.msra.mxu0 %v550
      %705 = vmatprep.subr.mxu0 0.0
      %706 = vmatpush1.msra.mxu0 %v551
      %707 = vmatprep.subr.mxu0 0.0
      %708 = vmatpush1.msra.mxu0 %v552
      %709 = vmatprep.subr.mxu0 0.0
      %710 = vmatpush1.msra.mxu0 %v553
      %711 = vmatprep.subr.mxu0 0.0
      %712 = vmatpush1.msra.mxu0 %v554
      %713 = vmatprep.subr.mxu0 0.0
      %714 = vmatpush1.msra.mxu0 %v555
      %715 = vmatprep.subr.mxu0 0.0
      %716 = vmatpush1.msra.mxu0 %v556
      %717 = vmatprep.subr.mxu0 0.0
      %718 = vmatpush1.msra.mxu0 %v557
      %719 = vmatprep.subr.mxu0 0.0
      %720 = vmatpush1.msra.mxu0 %v558
      %721 = vmatprep.subr.mxu0 0.0
      %722 = vmatpush1.msra.mxu0 %v559
      %723 = vmatprep.subr.mxu0 0.0
      %724 = vmatpush1.msra.mxu0 %v560
      %725 = vmatprep.subr.mxu0 0.0
      %726 = vmatpush1.msra.mxu0 %v561
      %727 = vmatprep.subr.mxu0 0.0
      %728 = vmatpush1.msra.mxu0 %v562
      %729 = vmatprep.subr.mxu0 0.0
      %730 = vmatpush1.msra.mxu0 %v563
      %731 = vmatprep.subr.mxu0 0.0
      %732 = vmatpush1.msra.mxu0 %v564
      %733 = vmatprep.subr.mxu0 0.0
      %734 = vmatpush1.msra.mxu0 %v565
      %735 = vmatprep.subr.mxu0 0.0
      %736 = vmatpush1.msra.mxu0 %v566
      %737 = vmatprep.subr.mxu0 0.0
      %738 = vmatpush1.msra.mxu0 %v567
      %739 = vmatprep.subr.mxu0 0.0
      %740 = vmatpush1.msra.mxu0 %v568
      %741 = vmatprep.subr.mxu0 0.0
      %742 = vmatpush1.msra.mxu0 %v569
      %743 = vmatprep.subr.mxu0 0.0
      %744 = vmatpush1.msra.mxu0 %v570
      %745 = vmatprep.subr.mxu0 0.0
      %746 = vmatpush1.msra.mxu0 %v571
      %747 = vmatprep.subr.mxu0 0.0
      %748 = vmatpush1.msra.mxu0 %v572
      %749 = vmatprep.subr.mxu0 0.0
      %750 = vmatpush1.msra.mxu0 %v573
      %751 = vmatprep.subr.mxu0 0.0
      %752 = vmatpush1.msra.mxu0 %v574
      %753 = vmatprep.subr.mxu0 0.0
      %754 = vmatpush1.msra.mxu0 %v575
      %755 = vmatprep.subr.mxu0 0.0
      %756 = vmatpush1.msra.mxu0 %v576
      %757 = vmatprep.subr.mxu0 0.0
      %758 = vmatpush1.msra.mxu0 %v577
      %759 = vmatprep.subr.mxu0 0.0
      %760 = vmatpush1.msra.mxu0 %v578
      %761 = vmatprep.subr.mxu0 0.0
      %762 = vmatpush1.msra.mxu0 %v579
      %763 = vmatprep.mubr.f32.mxu0 %v261
      %764 = vmatmul.mubr.f32.gmra.mrb[0].mxu0 %v260
      %v765 = vpop.f32.mrb[0].mxu0
      %v766 = vadd.f32 %v697, %v765
      %v767 = vpop.f32.mrb[0].mxu0
      %768 = vmatprep.mubr.f32.mxu0 %v270
      %769 = vmatmul.mubr.f32.gmra.mrb[0].mxu0 %v269
      %v770 = vpop.f32.mrb[0].mxu0
      %v771 = vadd.f32 %v697, %v770
      %v772 = vpop.f32.mrb[0].mxu0
      %773 = vmatprep.mubr.f32.mxu0 %v279
      %774 = vmatmul.mubr.f32.gmra.mrb[0].mxu0 %v278
      %v775 = vpop.f32.mrb[0].mxu0
      %v776 = vadd.f32 %v697, %v775
      %v777 = vpop.f32.mrb[0].mxu0
      %778 = vmatprep.mubr.f32.mxu0 %v288
      %779 = vmatmul.mubr.f32.gmra.mrb[0].mxu0 %v287
      %v780 = vpop.f32.mrb[0].mxu0
      %v781 = vadd.f32 %v697, %v780
      %v782 = vpop.f32.mrb[0].mxu0
      %783 = vmatprep.mubr.f32.mxu0 %v297
      %784 = vmatmul.mubr.f32.gmra.mrb[0].mxu0 %v296
      %v785 = vpop.f32.mrb[0].mxu0
      %v786 = vadd.f32 %v697, %v785
      %v787 = vpop.f32.mrb[0].mxu0
      %788 = vmatprep.mubr.f32.mxu0 %v306
      %789 = vmatmul.mubr.f32.gmra.mrb[0].mxu0 %v305
      %v790 = vpop.f32.mrb[0].mxu0
      %v791 = vadd.f32 %v697, %v790
      %v792 = vpop.f32.mrb[0].mxu0
      %793 = vmatprep.mubr.f32.mxu0 %v315
      %794 = vmatmul.mubr.f32.gmra.mrb[0].mxu0 %v314
      %v795 = vpop.f32.mrb[0].mxu0
      %v796 = vadd.f32 %v697, %v795
      %v797 = vpop.f32.mrb[0].mxu0
      %798 = vmatprep.mubr.f32.mxu0 %v324
      %799 = vmatmul.mubr.f32.gmra.mrb[0].mxu0 %v323
      %v800 = vpop.f32.mrb[0].mxu0
      %v801 = vadd.f32 %v697, %v800
      %v802 = vpop.f32.mrb[0].mxu0
      %803 = vmatprep.mubr.f32.mxu0 %v333
      %804 = vmatmul.mubr.f32.gmra.mrb[0].mxu0 %v332
      %v805 = vpop.f32.mrb[0].mxu0
      %v806 = vadd.f32 %v697, %v805
      %v807 = vpop.f32.mrb[0].mxu0
      %808 = vmatprep.mubr.f32.mxu0 %v342
      %809 = vmatmul.mubr.f32.gmra.mrb[0].mxu0 %v341
      %v810 = vpop.f32.mrb[0].mxu0
      %v811 = vadd.f32 %v697, %v810
      %v812 = vpop.f32.mrb[0].mxu0
      %813 = vmatprep.mubr.f32.mxu0 %v351
      %814 = vmatmul.mubr.f32.gmra.mrb[0].mxu0 %v350
      %v815 = vpop.f32.mrb[0].mxu0
      %v816 = vadd.f32 %v697, %v815
      %v817 = vpop.f32.mrb[0].mxu0
      %818 = vmatprep.mubr.f32.mxu0 %v360
      %819 = vmatmul.mubr.f32.gmra.mrb[0].mxu0 %v359
      %v820 = vpop.f32.mrb[0].mxu0
      %v821 = vadd.f32 %v697, %v820
      %v822 = vpop.f32.mrb[0].mxu0
      %823 = vmatprep.mubr.f32.mxu0 %v369
      %824 = vmatmul.mubr.f32.gmra.mrb[0].mxu0 %v368
      %v825 = vpop.f32.mrb[0].mxu0
      %v826 = vadd.f32 %v697, %v825
      %v827 = vpop.f32.mrb[0].mxu0
      %828 = vmatprep.mubr.f32.mxu0 %v378
      %829 = vmatmul.mubr.f32.gmra.mrb[0].mxu0 %v377
      %v830 = vpop.f32.mrb[0].mxu0
      %v831 = vadd.f32 %v697, %v830
      %v832 = vpop.f32.mrb[0].mxu0
      %833 = vmatprep.mubr.f32.mxu0 %v387
      %834 = vmatmul.mubr.f32.gmra.mrb[0].mxu0 %v386
      %v835 = vpop.f32.mrb[0].mxu0
      %v836 = vadd.f32 %v697, %v835
      %v837 = vpop.f32.mrb[0].mxu0
      %838 = vmatprep.mubr.f32.mxu0 %v396
      %839 = vmatmul.mubr.f32.gmra.mrb[0].mxu0 %v395
      %v840 = vpop.f32.mrb[0].mxu0
      %v841 = vadd.f32 %v697, %v840
      %v842 = vpop.f32.mrb[0].mxu0
      %843 = vmatprep.mubr.f32.mxu0 %v405
      %844 = vmatmul.mubr.f32.gmra.mrb[0].mxu0 %v404
      %v845 = vpop.f32.mrb[0].mxu0
      %v846 = vadd.f32 %v697, %v845
      %v847 = vpop.f32.mrb[0].mxu0
      %848 = vmatprep.mubr.f32.mxu0 %v414
      %849 = vmatmul.mubr.f32.gmra.mrb[0].mxu0 %v413
      %v850 = vpop.f32.mrb[0].mxu0
      %v851 = vadd.f32 %v697, %v850
      %v852 = vpop.f32.mrb[0].mxu0
      %853 = vmatprep.mubr.f32.mxu0 %v423
      %854 = vmatmul.mubr.f32.gmra.mrb[0].mxu0 %v422
      %v855 = vpop.f32.mrb[0].mxu0
      %v856 = vadd.f32 %v697, %v855
      %v857 = vpop.f32.mrb[0].mxu0
      %858 = vmatprep.mubr.f32.mxu0 %v432
      %859 = vmatmul.mubr.f32.gmra.mrb[0].mxu0 %v431
      %v860 = vpop.f32.mrb[0].mxu0
      %v861 = vadd.f32 %v697, %v860
      %v862 = vpop.f32.mrb[0].mxu0
      %863 = vmatprep.mubr.f32.mxu0 %v441
      %864 = vmatmul.mubr.f32.gmra.mrb[0].mxu0 %v440
      %v865 = vpop.f32.mrb[0].mxu0
      %v866 = vadd.f32 %v697, %v865
      %v867 = vpop.f32.mrb[0].mxu0
      %868 = vmatprep.mubr.f32.mxu0 %v450
      %869 = vmatmul.mubr.f32.gmra.mrb[0].mxu0 %v449
      %v870 = vpop.f32.mrb[0].mxu0
      %v871 = vadd.f32 %v697, %v870
      %v872 = vpop.f32.mrb[0].mxu0
      %873 = vmatprep.mubr.f32.mxu0 %v459
      %874 = vmatmul.mubr.f32.gmra.mrb[0].mxu0 %v458
      %v875 = vpop.f32.mrb[0].mxu0
      %v876 = vadd.f32 %v697, %v875
      %v877 = vpop.f32.mrb[0].mxu0
      %878 = vmatprep.mubr.f32.mxu0 %v468
      %879 = vmatmul.mubr.f32.gmra.mrb[0].mxu0 %v467
      %v880 = vpop.f32.mrb[0].mxu0
      %v881 = vadd.f32 %v697, %v880
      %v882 = vpop.f32.mrb[0].mxu0
      %883 = vmatprep.mubr.f32.mxu0 %v477
      %884 = vmatmul.mubr.f32.gmra.mrb[0].mxu0 %v476
      %v885 = vpop.f32.mrb[0].mxu0
      %v886 = vadd.f32 %v697, %v885
      %v887 = vpop.f32.mrb[0].mxu0
      %888 = vmatprep.mubr.f32.mxu0 %v486
      %889 = vmatmul.mubr.f32.gmra.mrb[0].mxu0 %v485
      %v890 = vpop.f32.mrb[0].mxu0
      %v891 = vadd.f32 %v697, %v890
      %v892 = vpop.f32.mrb[0].mxu0
      %893 = vmatprep.mubr.f32.mxu0 %v495
      %894 = vmatmul.mubr.f32.gmra.mrb[0].mxu0 %v494
      %v895 = vpop.f32.mrb[0].mxu0
      %v896 = vadd.f32 %v697, %v895
      %v897 = vpop.f32.mrb[0].mxu0
      %898 = vmatprep.mubr.f32.mxu0 %v504
      %899 = vmatmul.mubr.f32.gmra.mrb[0].mxu0 %v503
      %v900 = vpop.f32.mrb[0].mxu0
      %v901 = vadd.f32 %v697, %v900
      %v902 = vpop.f32.mrb[0].mxu0
      %903 = vmatprep.mubr.f32.mxu0 %v513
      %904 = vmatmul.mubr.f32.gmra.mrb[0].mxu0 %v512
      %v905 = vpop.f32.mrb[0].mxu0
      %v906 = vadd.f32 %v697, %v905
      %v907 = vpop.f32.mrb[0].mxu0
      %908 = vmatprep.mubr.f32.mxu0 %v522
      %909 = vmatmul.mubr.f32.gmra.mrb[0].mxu0 %v521
      %v910 = vpop.f32.mrb[0].mxu0
      %v911 = vadd.f32 %v697, %v910
      %v912 = vpop.f32.mrb[0].mxu0
      %913 = vmatprep.mubr.f32.mxu0 %v531
      %914 = vmatmul.mubr.f32.gmra.mrb[0].mxu0 %v530
      %v915 = vpop.f32.mrb[0].mxu0
      %v916 = vadd.f32 %v697, %v915
      %v917 = vpop.f32.mrb[0].mxu0
      %918 = vmatprep.mubr.f32.mxu0 %v540
      %919 = vmatmul.mubr.f32.gmra.mrb[0].mxu0 %v539
      %v920 = vpop.f32.mrb[0].mxu0
      %v921 = vadd.f32 %v697, %v920
      %v922 = vpop.f32.mrb[0].mxu0
      %923 = vdwg.mxu0
      %924 = vmatprep.subr.mxu0 0.0
      %925 = vmatpush1.msra.mxu0 %v580
      %926 = vmatprep.subr.mxu0 0.0
      %927 = vmatpush1.msra.mxu0 %v581
      %928 = vmatprep.subr.mxu0 0.0
      %929 = vmatpush1.msra.mxu0 %v582
      %930 = vmatprep.subr.mxu0 0.0
      %931 = vmatpush1.msra.mxu0 %v583
      %932 = vmatprep.subr.mxu0 0.0
      %933 = vmatpush1.msra.mxu0 %v584
      %934 = vmatprep.subr.mxu0 0.0
      %935 = vmatpush1.msra.mxu0 %v585
      %936 = vmatprep.subr.mxu0 0.0
      %937 = vmatpush1.msra.mxu0 %v586
      %938 = vmatprep.subr.mxu0 0.0
      %939 = vmatpush1.msra.mxu0 %v587
      %940 = vmatprep.subr.mxu0 0.0
      %941 = vmatpush1.msra.mxu0 %v588
      %942 = vmatprep.subr.mxu0 0.0
      %943 = vmatpush1.msra.mxu0 %v589
      %944 = vmatprep.subr.mxu0 0.0
      %945 = vmatpush1.msra.mxu0 %v590
      %946 = vmatprep.subr.mxu0 0.0
      %947 = vmatpush1.msra.mxu0 %v591
      %948 = vmatprep.subr.mxu0 0.0
      %949 = vmatpush1.msra.mxu0 %v592
      %950 = vmatprep.subr.mxu0 0.0
      %951 = vmatpush1.msra.mxu0 %v593
      %952 = vmatprep.subr.mxu0 0.0
      %953 = vmatpush1.msra.mxu0 %v594
      %954 = vmatprep.subr.mxu0 0.0
      %955 = vmatpush1.msra.mxu0 %v595
      %956 = vmatprep.subr.mxu0 0.0
      %957 = vmatpush1.msra.mxu0 %v596
      %958 = vmatprep.subr.mxu0 0.0
      %959 = vmatpush1.msra.mxu0 %v597
      %960 = vmatprep.subr.mxu0 0.0
      %961 = vmatpush1.msra.mxu0 %v598
      %962 = vmatprep.subr.mxu0 0.0
      %963 = vmatpush1.msra.mxu0 %v599
      %964 = vmatprep.subr.mxu0 0.0
      %965 = vmatpush1.msra.mxu0 %v600
      %966 = vmatprep.subr.mxu0 0.0
      %967 = vmatpush1.msra.mxu0 %v601
      %968 = vmatprep.subr.mxu0 0.0
      %969 = vmatpush1.msra.mxu0 %v602
      %970 = vmatprep.subr.mxu0 0.0
      %971 = vmatpush1.msra.mxu0 %v603
      %972 = vmatprep.subr.mxu0 0.0
      %973 = vmatpush1.msra.mxu0 %v604
      %974 = vmatprep.subr.mxu0 0.0
      %975 = vmatpush1.msra.mxu0 %v605
      %976 = vmatprep.subr.mxu0 0.0
      %977 = vmatpush1.msra.mxu0 %v606
      %978 = vmatprep.subr.mxu0 0.0
      %979 = vmatpush1.msra.mxu0 %v607
      %980 = vmatprep.subr.mxu0 0.0
      %981 = vmatpush1.msra.mxu0 %v608
      %982 = vmatprep.subr.mxu0 0.0
      %983 = vmatpush1.msra.mxu0 %v609
      %984 = vmatprep.subr.mxu0 0.0
      %985 = vmatpush1.msra.mxu0 %v610
      %986 = vmatprep.subr.mxu0 0.0
      %987 = vmatpush1.msra.mxu0 %v611
      %988 = vmatprep.mubr.f32.mxu0 %v263
      %989 = vmatmul.mubr.f32.gmra.mrb[0].mxu0 %v262
      %v990 = vpop.f32.mrb[0].mxu0
      %v991 = vadd.f32 %v766, %v990
      %v992 = vpop.f32.mrb[0].mxu0
      %993 = vmatprep.mubr.f32.mxu0 %v272
      %994 = vmatmul.mubr.f32.gmra.mrb[0].mxu0 %v271
      %v995 = vpop.f32.mrb[0].mxu0
      %v996 = vadd.f32 %v771, %v995
      %v997 = vpop.f32.mrb[0].mxu0
      %998 = vmatprep.mubr.f32.mxu0 %v281
      %999 = vmatmul.mubr.f32.gmra.mrb[0].mxu0 %v280
      %v1000 = vpop.f32.mrb[0].mxu0
      %v1001 = vadd.f32 %v776, %v1000
      %v1002 = vpop.f32.mrb[0].mxu0
      %1003 = vmatprep.mubr.f32.mxu0 %v290
      %1004 = vmatmul.mubr.f32.gmra.mrb[0].mxu0 %v289
      %v1005 = vpop.f32.mrb[0].mxu0
      %v1006 = vadd.f32 %v781, %v1005
      %v1007 = vpop.f32.mrb[0].mxu0
      %1008 = vmatprep.mubr.f32.mxu0 %v299
      %1009 = vmatmul.mubr.f32.gmra.mrb[0].mxu0 %v298
      %v1010 = vpop.f32.mrb[0].mxu0
      %v1011 = vadd.f32 %v786, %v1010
      %v1012 = vpop.f32.mrb[0].mxu0
      %1013 = vmatprep.mubr.f32.mxu0 %v308
      %1014 = vmatmul.mubr.f32.gmra.mrb[0].mxu0 %v307
      %v1015 = vpop.f32.mrb[0].mxu0
      %v1016 = vadd.f32 %v791, %v1015
      %v1017 = vpop.f32.mrb[0].mxu0
      %1018 = vmatprep.mubr.f32.mxu0 %v317
      %1019 = vmatmul.mubr.f32.gmra.mrb[0].mxu0 %v316
      %v1020 = vpop.f32.mrb[0].mxu0
      %v1021 = vadd.f32 %v796, %v1020
      %v1022 = vpop.f32.mrb[0].mxu0
      %1023 = vmatprep.mubr.f32.mxu0 %v326
      %1024 = vmatmul.mubr.f32.gmra.mrb[0].mxu0 %v325
      %v1025 = vpop.f32.mrb[0].mxu0
      %v1026 = vadd.f32 %v801, %v1025
      %v1027 = vpop.f32.mrb[0].mxu0
      %1028 = vmatprep.mubr.f32.mxu0 %v335
      %1029 = vmatmul.mubr.f32.gmra.mrb[0].mxu0 %v334
      %v1030 = vpop.f32.mrb[0].mxu0
      %v1031 = vadd.f32 %v806, %v1030
      %v1032 = vpop.f32.mrb[0].mxu0
      %1033 = vmatprep.mubr.f32.mxu0 %v344
      %1034 = vmatmul.mubr.f32.gmra.mrb[0].mxu0 %v343
      %v1035 = vpop.f32.mrb[0].mxu0
      %v1036 = vadd.f32 %v811, %v1035
      %v1037 = vpop.f32.mrb[0].mxu0
      %1038 = vmatprep.mubr.f32.mxu0 %v353
      %1039 = vmatmul.mubr.f32.gmra.mrb[0].mxu0 %v352
      %v1040 = vpop.f32.mrb[0].mxu0
      %v1041 = vadd.f32 %v816, %v1040
      %v1042 = vpop.f32.mrb[0].mxu0
      %1043 = vmatprep.mubr.f32.mxu0 %v362
      %1044 = vmatmul.mubr.f32.gmra.mrb[0].mxu0 %v361
      %v1045 = vpop.f32.mrb[0].mxu0
      %v1046 = vadd.f32 %v821, %v1045
      %v1047 = vpop.f32.mrb[0].mxu0
      %1048 = vmatprep.mubr.f32.mxu0 %v371
      %1049 = vmatmul.mubr.f32.gmra.mrb[0].mxu0 %v370
      %v1050 = vpop.f32.mrb[0].mxu0
      %v1051 = vadd.f32 %v826, %v1050
      %v1052 = vpop.f32.mrb[0].mxu0
      %1053 = vmatprep.mubr.f32.mxu0 %v380
      %1054 = vmatmul.mubr.f32.gmra.mrb[0].mxu0 %v379
      %v1055 = vpop.f32.mrb[0].mxu0
      %v1056 = vadd.f32 %v831, %v1055
      %v1057 = vpop.f32.mrb[0].mxu0
      %1058 = vmatprep.mubr.f32.mxu0 %v389
      %1059 = vmatmul.mubr.f32.gmra.mrb[0].mxu0 %v388
      %v1060 = vpop.f32.mrb[0].mxu0
      %v1061 = vadd.f32 %v836, %v1060
      %v1062 = vpop.f32.mrb[0].mxu0
      %1063 = vmatprep.mubr.f32.mxu0 %v398
      %1064 = vmatmul.mubr.f32.gmra.mrb[0].mxu0 %v397
      %v1065 = vpop.f32.mrb[0].mxu0
      %v1066 = vadd.f32 %v841, %v1065
      %v1067 = vpop.f32.mrb[0].mxu0
      %1068 = vmatprep.mubr.f32.mxu0 %v407
      %1069 = vmatmul.mubr.f32.gmra.mrb[0].mxu0 %v406
      %v1070 = vpop.f32.mrb[0].mxu0
      %v1071 = vadd.f32 %v846, %v1070
      %v1072 = vpop.f32.mrb[0].mxu0
      %1073 = vmatprep.mubr.f32.mxu0 %v416
      %1074 = vmatmul.mubr.f32.gmra.mrb[0].mxu0 %v415
      %v1075 = vpop.f32.mrb[0].mxu0
      %v1076 = vadd.f32 %v851, %v1075
      %v1077 = vpop.f32.mrb[0].mxu0
      %1078 = vmatprep.mubr.f32.mxu0 %v425
      %1079 = vmatmul.mubr.f32.gmra.mrb[0].mxu0 %v424
      %v1080 = vpop.f32.mrb[0].mxu0
      %v1081 = vadd.f32 %v856, %v1080
      %v1082 = vpop.f32.mrb[0].mxu0
      %1083 = vmatprep.mubr.f32.mxu0 %v434
      %1084 = vmatmul.mubr.f32.gmra.mrb[0].mxu0 %v433
      %v1085 = vpop.f32.mrb[0].mxu0
      %v1086 = vadd.f32 %v861, %v1085
      %v1087 = vpop.f32.mrb[0].mxu0
      %1088 = vmatprep.mubr.f32.mxu0 %v443
      %1089 = vmatmul.mubr.f32.gmra.mrb[0].mxu0 %v442
      %v1090 = vpop.f32.mrb[0].mxu0
      %v1091 = vadd.f32 %v866, %v1090
      %v1092 = vpop.f32.mrb[0].mxu0
      %1093 = vmatprep.mubr.f32.mxu0 %v452
      %1094 = vmatmul.mubr.f32.gmra.mrb[0].mxu0 %v451
      %v1095 = vpop.f32.mrb[0].mxu0
      %v1096 = vadd.f32 %v871, %v1095
      %v1097 = vpop.f32.mrb[0].mxu0
      %1098 = vmatprep.mubr.f32.mxu0 %v461
      %1099 = vmatmul.mubr.f32.gmra.mrb[0].mxu0 %v460
      %v1100 = vpop.f32.mrb[0].mxu0
      %v1101 = vadd.f32 %v876, %v1100
      %v1102 = vpop.f32.mrb[0].mxu0
      %1103 = vmatprep.mubr.f32.mxu0 %v470
      %1104 = vmatmul.mubr.f32.gmra.mrb[0].mxu0 %v469
      %v1105 = vpop.f32.mrb[0].mxu0
      %v1106 = vadd.f32 %v881, %v1105
      %v1107 = vpop.f32.mrb[0].mxu0
      %1108 = vmatprep.mubr.f32.mxu0 %v479
      %1109 = vmatmul.mubr.f32.gmra.mrb[0].mxu0 %v478
      %v1110 = vpop.f32.mrb[0].mxu0
      %v1111 = vadd.f32 %v886, %v1110
      %v1112 = vpop.f32.mrb[0].mxu0
      %1113 = vmatprep.mubr.f32.mxu0 %v488
      %1114 = vmatmul.mubr.f32.gmra.mrb[0].mxu0 %v487
      %v1115 = vpop.f32.mrb[0].mxu0
      %v1116 = vadd.f32 %v891, %v1115
      %v1117 = vpop.f32.mrb[0].mxu0
      %1118 = vmatprep.mubr.f32.mxu0 %v497
      %1119 = vmatmul.mubr.f32.gmra.mrb[0].mxu0 %v496
      %v1120 = vpop.f32.mrb[0].mxu0
      %v1121 = vadd.f32 %v896, %v1120
      %v1122 = vpop.f32.mrb[0].mxu0
      %1123 = vmatprep.mubr.f32.mxu0 %v506
      %1124 = vmatmul.mubr.f32.gmra.mrb[0].mxu0 %v505
      %v1125 = vpop.f32.mrb[0].mxu0
      %v1126 = vadd.f32 %v901, %v1125
      %v1127 = vpop.f32.mrb[0].mxu0
      %1128 = vmatprep.mubr.f32.mxu0 %v515
      %1129 = vmatmul.mubr.f32.gmra.mrb[0].mxu0 %v514
      %v1130 = vpop.f32.mrb[0].mxu0
      %v1131 = vadd.f32 %v906, %v1130
      %v1132 = vpop.f32.mrb[0].mxu0
      %1133 = vmatprep.mubr.f32.mxu0 %v524
      %1134 = vmatmul.mubr.f32.gmra.mrb[0].mxu0 %v523
      %v1135 = vpop.f32.mrb[0].mxu0
      %v1136 = vadd.f32 %v911, %v1135
      %v1137 = vpop.f32.mrb[0].mxu0
      %1138 = vmatprep.mubr.f32.mxu0 %v533
      %1139 = vmatmul.mubr.f32.gmra.mrb[0].mxu0 %v532
      %v1140 = vpop.f32.mrb[0].mxu0
      %v1141 = vadd.f32 %v916, %v1140
      %v1142 = vpop.f32.mrb[0].mxu0
      %1143 = vmatprep.mubr.f32.mxu0 %v542
      %1144 = vmatmul.mubr.f32.gmra.mrb[0].mxu0 %v541
      %v1145 = vpop.f32.mrb[0].mxu0
      %v1146 = vadd.f32 %v921, %v1145
      %v1147 = vpop.f32.mrb[0].mxu0
      %1148 = vdwg.mxu0
      %1149 = vmatprep.subr.mxu0 0.0
      %1150 = vmatpush1.msra.mxu0 %v612
      %1151 = vmatprep.subr.mxu0 0.0
      %1152 = vmatpush1.msra.mxu0 %v613
      %1153 = vmatprep.subr.mxu0 0.0
      %1154 = vmatpush1.msra.mxu0 %v614
      %1155 = vmatprep.subr.mxu0 0.0
      %1156 = vmatpush1.msra.mxu0 %v615
      %1157 = vmatprep.subr.mxu0 0.0
      %1158 = vmatpush1.msra.mxu0 %v616
      %1159 = vmatprep.subr.mxu0 0.0
      %1160 = vmatpush1.msra.mxu0 %v617
      %1161 = vmatprep.subr.mxu0 0.0
      %1162 = vmatpush1.msra.mxu0 %v618
      %1163 = vmatprep.subr.mxu0 0.0
      %1164 = vmatpush1.msra.mxu0 %v619
      %1165 = vmatprep.subr.mxu0 0.0
      %1166 = vmatpush1.msra.mxu0 %v620
      %1167 = vmatprep.subr.mxu0 0.0
      %1168 = vmatpush1.msra.mxu0 %v621
      %1169 = vmatprep.subr.mxu0 0.0
      %1170 = vmatpush1.msra.mxu0 %v622
      %1171 = vmatprep.subr.mxu0 0.0
      %1172 = vmatpush1.msra.mxu0 %v623
      %1173 = vmatprep.subr.mxu0 0.0
      %1174 = vmatpush1.msra.mxu0 %v624
      %1175 = vmatprep.subr.mxu0 0.0
      %1176 = vmatpush1.msra.mxu0 %v625
      %1177 = vmatprep.subr.mxu0 0.0
      %1178 = vmatpush1.msra.mxu0 %v626
      %1179 = vmatprep.subr.mxu0 0.0
      %1180 = vmatpush1.msra.mxu0 %v627
      %1181 = vmatprep.subr.mxu0 0.0
      %1182 = vmatpush1.msra.mxu0 %v628
      %1183 = vmatprep.subr.mxu0 0.0
      %1184 = vmatpush1.msra.mxu0 %v629
      %1185 = vmatprep.subr.mxu0 0.0
      %1186 = vmatpush1.msra.mxu0 %v630
      %1187 = vmatprep.subr.mxu0 0.0
      %1188 = vmatpush1.msra.mxu0 %v631
      %1189 = vmatprep.subr.mxu0 0.0
      %1190 = vmatpush1.msra.mxu0 %v632
      %1191 = vmatprep.subr.mxu0 0.0
      %1192 = vmatpush1.msra.mxu0 %v633
      %1193 = vmatprep.subr.mxu0 0.0
      %1194 = vmatpush1.msra.mxu0 %v634
      %1195 = vmatprep.subr.mxu0 0.0
      %1196 = vmatpush1.msra.mxu0 %v635
      %1197 = vmatprep.subr.mxu0 0.0
      %1198 = vmatpush1.msra.mxu0 %v636
      %1199 = vmatprep.subr.mxu0 0.0
      %1200 = vmatpush1.msra.mxu0 %v637
      %1201 = vmatprep.subr.mxu0 0.0
      %1202 = vmatpush1.msra.mxu0 %v638
      %1203 = vmatprep.subr.mxu0 0.0
      %1204 = vmatpush1.msra.mxu0 %v639
      %1205 = vmatprep.subr.mxu0 0.0
      %1206 = vmatpush1.msra.mxu0 %v640
      %1207 = vmatprep.subr.mxu0 0.0
      %1208 = vmatpush1.msra.mxu0 %v641
      %1209 = vmatprep.subr.mxu0 0.0
      %1210 = vmatpush1.msra.mxu0 %v642
      %1211 = vmatprep.subr.mxu0 0.0
      %1212 = vmatpush1.msra.mxu0 %v643
      %1213 = vmatprep.mubr.f32.mxu0 %v265
      %1214 = vmatmul.mubr.f32.gmra.mrb[0].mxu0 %v264
      %v1215 = vpop.f32.mrb[0].mxu0
      %v1216 = vadd.f32 %v991, %v1215
      %v1217 = vpop.f32.mrb[0].mxu0
      %1218 = vmatprep.mubr.f32.mxu0 %v274
      %1219 = vmatmul.mubr.f32.gmra.mrb[0].mxu0 %v273
      %v1220 = vpop.f32.mrb[0].mxu0
      %v1221 = vadd.f32 %v996, %v1220
      %v1222 = vpop.f32.mrb[0].mxu0
      %1223 = vmatprep.mubr.f32.mxu0 %v283
      %1224 = vmatmul.mubr.f32.gmra.mrb[0].mxu0 %v282
      %v1225 = vpop.f32.mrb[0].mxu0
      %v1226 = vadd.f32 %v1001, %v1225
      %v1227 = vpop.f32.mrb[0].mxu0
      %1228 = vmatprep.mubr.f32.mxu0 %v292
      %1229 = vmatmul.mubr.f32.gmra.mrb[0].mxu0 %v291
      %v1230 = vpop.f32.mrb[0].mxu0
      %v1231 = vadd.f32 %v1006, %v1230
      %v1232 = vpop.f32.mrb[0].mxu0
      %1233 = vmatprep.mubr.f32.mxu0 %v301
      %1234 = vmatmul.mubr.f32.gmra.mrb[0].mxu0 %v300
      %v1235 = vpop.f32.mrb[0].mxu0
      %v1236 = vadd.f32 %v1011, %v1235
      %v1237 = vpop.f32.mrb[0].mxu0
      %1238 = vmatprep.mubr.f32.mxu0 %v310
      %1239 = vmatmul.mubr.f32.gmra.mrb[0].mxu0 %v309
      %v1240 = vpop.f32.mrb[0].mxu0
      %v1241 = vadd.f32 %v1016, %v1240
      %v1242 = vpop.f32.mrb[0].mxu0
      %1243 = vmatprep.mubr.f32.mxu0 %v319
      %1244 = vmatmul.mubr.f32.gmra.mrb[0].mxu0 %v318
      %v1245 = vpop.f32.mrb[0].mxu0
      %v1246 = vadd.f32 %v1021, %v1245
      %v1247 = vpop.f32.mrb[0].mxu0
      %1248 = vmatprep.mubr.f32.mxu0 %v328
      %1249 = vmatmul.mubr.f32.gmra.mrb[0].mxu0 %v327
      %v1250 = vpop.f32.mrb[0].mxu0
      %v1251 = vadd.f32 %v1026, %v1250
      %v1252 = vpop.f32.mrb[0].mxu0
      %1253 = vmatprep.mubr.f32.mxu0 %v337
      %1254 = vmatmul.mubr.f32.gmra.mrb[0].mxu0 %v336
      %v1255 = vpop.f32.mrb[0].mxu0
      %v1256 = vadd.f32 %v1031, %v1255
      %v1257 = vpop.f32.mrb[0].mxu0
      %1258 = vmatprep.mubr.f32.mxu0 %v346
      %1259 = vmatmul.mubr.f32.gmra.mrb[0].mxu0 %v345
      %v1260 = vpop.f32.mrb[0].mxu0
      %v1261 = vadd.f32 %v1036, %v1260
      %v1262 = vpop.f32.mrb[0].mxu0
      %1263 = vmatprep.mubr.f32.mxu0 %v355
      %1264 = vmatmul.mubr.f32.gmra.mrb[0].mxu0 %v354
      %v1265 = vpop.f32.mrb[0].mxu0
      %v1266 = vadd.f32 %v1041, %v1265
      %v1267 = vpop.f32.mrb[0].mxu0
      %1268 = vmatprep.mubr.f32.mxu0 %v364
      %1269 = vmatmul.mubr.f32.gmra.mrb[0].mxu0 %v363
      %v1270 = vpop.f32.mrb[0].mxu0
      %v1271 = vadd.f32 %v1046, %v1270
      %v1272 = vpop.f32.mrb[0].mxu0
      %1273 = vmatprep.mubr.f32.mxu0 %v373
      %1274 = vmatmul.mubr.f32.gmra.mrb[0].mxu0 %v372
      %v1275 = vpop.f32.mrb[0].mxu0
      %v1276 = vadd.f32 %v1051, %v1275
      %v1277 = vpop.f32.mrb[0].mxu0
      %1278 = vmatprep.mubr.f32.mxu0 %v382
      %1279 = vmatmul.mubr.f32.gmra.mrb[0].mxu0 %v381
      %v1280 = vpop.f32.mrb[0].mxu0
      %v1281 = vadd.f32 %v1056, %v1280
      %v1282 = vpop.f32.mrb[0].mxu0
      %1283 = vmatprep.mubr.f32.mxu0 %v391
      %1284 = vmatmul.mubr.f32.gmra.mrb[0].mxu0 %v390
      %v1285 = vpop.f32.mrb[0].mxu0
      %v1286 = vadd.f32 %v1061, %v1285
      %v1287 = vpop.f32.mrb[0].mxu0
      %1288 = vmatprep.mubr.f32.mxu0 %v400
      %1289 = vmatmul.mubr.f32.gmra.mrb[0].mxu0 %v399
      %v1290 = vpop.f32.mrb[0].mxu0
      %v1291 = vadd.f32 %v1066, %v1290
      %v1292 = vpop.f32.mrb[0].mxu0
      %1293 = vmatprep.mubr.f32.mxu0 %v409
      %1294 = vmatmul.mubr.f32.gmra.mrb[0].mxu0 %v408
      %v1295 = vpop.f32.mrb[0].mxu0
      %v1296 = vadd.f32 %v1071, %v1295
      %v1297 = vpop.f32.mrb[0].mxu0
      %1298 = vmatprep.mubr.f32.mxu0 %v418
      %1299 = vmatmul.mubr.f32.gmra.mrb[0].mxu0 %v417
      %v1300 = vpop.f32.mrb[0].mxu0
      %v1301 = vadd.f32 %v1076, %v1300
      %v1302 = vpop.f32.mrb[0].mxu0
      %1303 = vmatprep.mubr.f32.mxu0 %v427
      %1304 = vmatmul.mubr.f32.gmra.mrb[0].mxu0 %v426
      %v1305 = vpop.f32.mrb[0].mxu0
      %v1306 = vadd.f32 %v1081, %v1305
      %v1307 = vpop.f32.mrb[0].mxu0
      %1308 = vmatprep.mubr.f32.mxu0 %v436
      %1309 = vmatmul.mubr.f32.gmra.mrb[0].mxu0 %v435
      %v1310 = vpop.f32.mrb[0].mxu0
      %v1311 = vadd.f32 %v1086, %v1310
      %v1312 = vpop.f32.mrb[0].mxu0
      %1313 = vmatprep.mubr.f32.mxu0 %v445
      %1314 = vmatmul.mubr.f32.gmra.mrb[0].mxu0 %v444
      %v1315 = vpop.f32.mrb[0].mxu0
      %v1316 = vadd.f32 %v1091, %v1315
      %v1317 = vpop.f32.mrb[0].mxu0
      %1318 = vmatprep.mubr.f32.mxu0 %v454
      %1319 = vmatmul.mubr.f32.gmra.mrb[0].mxu0 %v453
      %v1320 = vpop.f32.mrb[0].mxu0
      %v1321 = vadd.f32 %v1096, %v1320
      %v1322 = vpop.f32.mrb[0].mxu0
      %1323 = vmatprep.mubr.f32.mxu0 %v463
      %1324 = vmatmul.mubr.f32.gmra.mrb[0].mxu0 %v462
      %v1325 = vpop.f32.mrb[0].mxu0
      %v1326 = vadd.f32 %v1101, %v1325
      %v1327 = vpop.f32.mrb[0].mxu0
      %1328 = vmatprep.mubr.f32.mxu0 %v472
      %1329 = vmatmul.mubr.f32.gmra.mrb[0].mxu0 %v471
      %v1330 = vpop.f32.mrb[0].mxu0
      %v1331 = vadd.f32 %v1106, %v1330
      %v1332 = vpop.f32.mrb[0].mxu0
      %1333 = vmatprep.mubr.f32.mxu0 %v481
      %1334 = vmatmul.mubr.f32.gmra.mrb[0].mxu0 %v480
      %v1335 = vpop.f32.mrb[0].mxu0
      %v1336 = vadd.f32 %v1111, %v1335
      %v1337 = vpop.f32.mrb[0].mxu0
      %1338 = vmatprep.mubr.f32.mxu0 %v490
      %1339 = vmatmul.mubr.f32.gmra.mrb[0].mxu0 %v489
      %v1340 = vpop.f32.mrb[0].mxu0
      %v1341 = vadd.f32 %v1116, %v1340
      %v1342 = vpop.f32.mrb[0].mxu0
      %1343 = vmatprep.mubr.f32.mxu0 %v499
      %1344 = vmatmul.mubr.f32.gmra.mrb[0].mxu0 %v498
      %v1345 = vpop.f32.mrb[0].mxu0
      %v1346 = vadd.f32 %v1121, %v1345
      %v1347 = vpop.f32.mrb[0].mxu0
      %1348 = vmatprep.mubr.f32.mxu0 %v508
      %1349 = vmatmul.mubr.f32.gmra.mrb[0].mxu0 %v507
      %v1350 = vpop.f32.mrb[0].mxu0
      %v1351 = vadd.f32 %v1126, %v1350
      %v1352 = vpop.f32.mrb[0].mxu0
      %1353 = vmatprep.mubr.f32.mxu0 %v517
      %1354 = vmatmul.mubr.f32.gmra.mrb[0].mxu0 %v516
      %v1355 = vpop.f32.mrb[0].mxu0
      %v1356 = vadd.f32 %v1131, %v1355
      %v1357 = vpop.f32.mrb[0].mxu0
      %1358 = vmatprep.mubr.f32.mxu0 %v526
      %1359 = vmatmul.mubr.f32.gmra.mrb[0].mxu0 %v525
      %v1360 = vpop.f32.mrb[0].mxu0
      %v1361 = vadd.f32 %v1136, %v1360
      %v1362 = vpop.f32.mrb[0].mxu0
      %1363 = vmatprep.mubr.f32.mxu0 %v535
      %1364 = vmatmul.mubr.f32.gmra.mrb[0].mxu0 %v534
      %v1365 = vpop.f32.mrb[0].mxu0
      %v1366 = vadd.f32 %v1141, %v1365
      %v1367 = vpop.f32.mrb[0].mxu0
      %1368 = vmatprep.mubr.f32.mxu0 %v544
      %1369 = vmatmul.mubr.f32.gmra.mrb[0].mxu0 %v543
      %v1370 = vpop.f32.mrb[0].mxu0
      %v1371 = vadd.f32 %v1146, %v1370
      %v1372 = vpop.f32.mrb[0].mxu0
      %1373 = vdwg.mxu0
      %1374 = vmatprep.subr.mxu0 0.0
      %1375 = vmatpush1.msra.mxu0 %v644
      %1376 = vmatprep.subr.mxu0 0.0
      %1377 = vmatpush1.msra.mxu0 %v645
      %1378 = vmatprep.subr.mxu0 0.0
      %1379 = vmatpush1.msra.mxu0 %v646
      %1380 = vmatprep.subr.mxu0 0.0
      %1381 = vmatpush1.msra.mxu0 %v647
      %1382 = vmatprep.subr.mxu0 0.0
      %1383 = vmatpush1.msra.mxu0 %v648
      %1384 = vmatprep.subr.mxu0 0.0
      %1385 = vmatpush1.msra.mxu0 %v649
      %1386 = vmatprep.subr.mxu0 0.0
      %1387 = vmatpush1.msra.mxu0 %v650
      %1388 = vmatprep.subr.mxu0 0.0
      %1389 = vmatpush1.msra.mxu0 %v651
      %1390 = vmatprep.subr.mxu0 0.0
      %1391 = vmatpush1.msra.mxu0 %v652
      %1392 = vmatprep.subr.mxu0 0.0
      %1393 = vmatpush1.msra.mxu0 %v653
      %1394 = vmatprep.subr.mxu0 0.0
      %1395 = vmatpush1.msra.mxu0 %v654
      %1396 = vmatprep.subr.mxu0 0.0
      %1397 = vmatpush1.msra.mxu0 %v655
      %1398 = vmatprep.subr.mxu0 0.0
      %1399 = vmatpush1.msra.mxu0 %v656
      %1400 = vmatprep.subr.mxu0 0.0
      %1401 = vmatpush1.msra.mxu0 %v657
      %1402 = vmatprep.subr.mxu0 0.0
      %1403 = vmatpush1.msra.mxu0 %v658
      %1404 = vmatprep.subr.mxu0 0.0
      %1405 = vmatpush1.msra.mxu0 %v659
      %1406 = vmatprep.subr.mxu0 0.0
      %1407 = vmatpush1.msra.mxu0 %v660
      %1408 = vmatprep.subr.mxu0 0.0
      %1409 = vmatpush1.msra.mxu0 %v661
      %1410 = vmatprep.subr.mxu0 0.0
      %1411 = vmatpush1.msra.mxu0 %v662
      %1412 = vmatprep.subr.mxu0 0.0
      %1413 = vmatpush1.msra.mxu0 %v663
      %1414 = vmatprep.subr.mxu0 0.0
      %1415 = vmatpush1.msra.mxu0 %v664
      %1416 = vmatprep.subr.mxu0 0.0
      %1417 = vmatpush1.msra.mxu0 %v665
      %1418 = vmatprep.subr.mxu0 0.0
      %1419 = vmatpush1.msra.mxu0 %v666
      %1420 = vmatprep.subr.mxu0 0.0
      %1421 = vmatpush1.msra.mxu0 %v667
      %1422 = vmatprep.subr.mxu0 0.0
      %1423 = vmatpush1.msra.mxu0 %v668
      %1424 = vmatprep.subr.mxu0 0.0
      %1425 = vmatpush1.msra.mxu0 %v669
      %1426 = vmatprep.subr.mxu0 0.0
      %1427 = vmatpush1.msra.mxu0 %v670
      %1428 = vmatprep.subr.mxu0 0.0
      %1429 = vmatpush1.msra.mxu0 %v671
      %1430 = vmatprep.subr.mxu0 0.0
      %1431 = vmatpush1.msra.mxu0 %v672
      %1432 = vmatprep.subr.mxu0 0.0
      %1433 = vmatpush1.msra.mxu0 %v673
      %1434 = vmatprep.subr.mxu0 0.0
      %1435 = vmatpush1.msra.mxu0 %v674
      %1436 = vmatprep.subr.mxu0 0.0
      %1437 = vmatpush1.msra.mxu0 %v675
      %1438 = vmatprep.mubr.f32.mxu0 %v267
      %1439 = vmatmul.mubr.f32.gmra.mrb[0].mxu0 %v266
      %v1440 = vpop.f32.mrb[0].mxu0
      %v1441 = vadd.f32 %v1216, %v1440
      %v1442 = vpop.f32.mrb[0].mxu0
      %1443 = vmatprep.mubr.f32.mxu0 %v276
      %1444 = vmatmul.mubr.f32.gmra.mrb[0].mxu0 %v275
      %v1445 = vpop.f32.mrb[0].mxu0
      %v1446 = vadd.f32 %v1221, %v1445
      %v1447 = vpop.f32.mrb[0].mxu0
      %1448 = vmatprep.mubr.f32.mxu0 %v285
      %1449 = vmatmul.mubr.f32.gmra.mrb[0].mxu0 %v284
      %v1450 = vpop.f32.mrb[0].mxu0
      %v1451 = vadd.f32 %v1226, %v1450
      %v1452 = vpop.f32.mrb[0].mxu0
      %1453 = vmatprep.mubr.f32.mxu0 %v294
      %1454 = vmatmul.mubr.f32.gmra.mrb[0].mxu0 %v293
      %v1455 = vpop.f32.mrb[0].mxu0
      %v1456 = vadd.f32 %v1231, %v1455
      %v1457 = vpop.f32.mrb[0].mxu0
      %1458 = vmatprep.mubr.f32.mxu0 %v303
      %1459 = vmatmul.mubr.f32.gmra.mrb[0].mxu0 %v302
      %v1460 = vpop.f32.mrb[0].mxu0
      %v1461 = vadd.f32 %v1236, %v1460
      %v1462 = vpop.f32.mrb[0].mxu0
      %1463 = vmatprep.mubr.f32.mxu0 %v312
      %1464 = vmatmul.mubr.f32.gmra.mrb[0].mxu0 %v311
      %v1465 = vpop.f32.mrb[0].mxu0
      %v1466 = vadd.f32 %v1241, %v1465
      %v1467 = vpop.f32.mrb[0].mxu0
      %1468 = vmatprep.mubr.f32.mxu0 %v321
      %1469 = vmatmul.mubr.f32.gmra.mrb[0].mxu0 %v320
      %v1470 = vpop.f32.mrb[0].mxu0
      %v1471 = vadd.f32 %v1246, %v1470
      %v1472 = vpop.f32.mrb[0].mxu0
      %1473 = vmatprep.mubr.f32.mxu0 %v330
      %1474 = vmatmul.mubr.f32.gmra.mrb[0].mxu0 %v329
      %v1475 = vpop.f32.mrb[0].mxu0
      %v1476 = vadd.f32 %v1251, %v1475
      %v1477 = vpop.f32.mrb[0].mxu0
      %1478 = vmatprep.mubr.f32.mxu0 %v339
      %1479 = vmatmul.mubr.f32.gmra.mrb[0].mxu0 %v338
      %v1480 = vpop.f32.mrb[0].mxu0
      %v1481 = vadd.f32 %v1256, %v1480
      %v1482 = vpop.f32.mrb[0].mxu0
      %1483 = vmatprep.mubr.f32.mxu0 %v348
      %1484 = vmatmul.mubr.f32.gmra.mrb[0].mxu0 %v347
      %v1485 = vpop.f32.mrb[0].mxu0
      %v1486 = vadd.f32 %v1261, %v1485
      %v1487 = vpop.f32.mrb[0].mxu0
      %1488 = vmatprep.mubr.f32.mxu0 %v357
      %1489 = vmatmul.mubr.f32.gmra.mrb[0].mxu0 %v356
      %v1490 = vpop.f32.mrb[0].mxu0
      %v1491 = vadd.f32 %v1266, %v1490
      %v1492 = vpop.f32.mrb[0].mxu0
      %1493 = vmatprep.mubr.f32.mxu0 %v366
      %1494 = vmatmul.mubr.f32.gmra.mrb[0].mxu0 %v365
      %v1495 = vpop.f32.mrb[0].mxu0
      %v1496 = vadd.f32 %v1271, %v1495
      %v1497 = vpop.f32.mrb[0].mxu0
      %1498 = vmatprep.mubr.f32.mxu0 %v375
      %1499 = vmatmul.mubr.f32.gmra.mrb[0].mxu0 %v374
      %v1500 = vpop.f32.mrb[0].mxu0
      %v1501 = vadd.f32 %v1276, %v1500
      %v1502 = vpop.f32.mrb[0].mxu0
      %1503 = vmatprep.mubr.f32.mxu0 %v384
      %1504 = vmatmul.mubr.f32.gmra.mrb[0].mxu0 %v383
      %v1505 = vpop.f32.mrb[0].mxu0
      %v1506 = vadd.f32 %v1281, %v1505
      %v1507 = vpop.f32.mrb[0].mxu0
      %1508 = vmatprep.mubr.f32.mxu0 %v393
      %1509 = vmatmul.mubr.f32.gmra.mrb[0].mxu0 %v392
      %v1510 = vpop.f32.mrb[0].mxu0
      %v1511 = vadd.f32 %v1286, %v1510
      %v1512 = vpop.f32.mrb[0].mxu0
      %1513 = vmatprep.mubr.f32.mxu0 %v402
      %1514 = vmatmul.mubr.f32.gmra.mrb[0].mxu0 %v401
      %v1515 = vpop.f32.mrb[0].mxu0
      %v1516 = vadd.f32 %v1291, %v1515
      %v1517 = vpop.f32.mrb[0].mxu0
      %1518 = vmatprep.mubr.f32.mxu0 %v411
      %1519 = vmatmul.mubr.f32.gmra.mrb[0].mxu0 %v410
      %v1520 = vpop.f32.mrb[0].mxu0
      %v1521 = vadd.f32 %v1296, %v1520
      %v1522 = vpop.f32.mrb[0].mxu0
      %1523 = vmatprep.mubr.f32.mxu0 %v420
      %1524 = vmatmul.mubr.f32.gmra.mrb[0].mxu0 %v419
      %v1525 = vpop.f32.mrb[0].mxu0
      %v1526 = vadd.f32 %v1301, %v1525
      %v1527 = vpop.f32.mrb[0].mxu0
      %1528 = vmatprep.mubr.f32.mxu0 %v429
      %1529 = vmatmul.mubr.f32.gmra.mrb[0].mxu0 %v428
      %v1530 = vpop.f32.mrb[0].mxu0
      %v1531 = vadd.f32 %v1306, %v1530
      %v1532 = vpop.f32.mrb[0].mxu0
      %1533 = vmatprep.mubr.f32.mxu0 %v438
      %1534 = vmatmul.mubr.f32.gmra.mrb[0].mxu0 %v437
      %v1535 = vpop.f32.mrb[0].mxu0
      %v1536 = vadd.f32 %v1311, %v1535
      %v1537 = vpop.f32.mrb[0].mxu0
      %1538 = vmatprep.mubr.f32.mxu0 %v447
      %1539 = vmatmul.mubr.f32.gmra.mrb[0].mxu0 %v446
      %v1540 = vpop.f32.mrb[0].mxu0
      %v1541 = vadd.f32 %v1316, %v1540
      %v1542 = vpop.f32.mrb[0].mxu0
      %1543 = vmatprep.mubr.f32.mxu0 %v456
      %1544 = vmatmul.mubr.f32.gmra.mrb[0].mxu0 %v455
      %v1545 = vpop.f32.mrb[0].mxu0
      %v1546 = vadd.f32 %v1321, %v1545
      %v1547 = vpop.f32.mrb[0].mxu0
      %1548 = vmatprep.mubr.f32.mxu0 %v465
      %1549 = vmatmul.mubr.f32.gmra.mrb[0].mxu0 %v464
      %v1550 = vpop.f32.mrb[0].mxu0
      %v1551 = vadd.f32 %v1326, %v1550
      %v1552 = vpop.f32.mrb[0].mxu0
      %1553 = vmatprep.mubr.f32.mxu0 %v474
      %1554 = vmatmul.mubr.f32.gmra.mrb[0].mxu0 %v473
      %v1555 = vpop.f32.mrb[0].mxu0
      %v1556 = vadd.f32 %v1331, %v1555
      %v1557 = vpop.f32.mrb[0].mxu0
      %1558 = vmatprep.mubr.f32.mxu0 %v483
      %1559 = vmatmul.mubr.f32.gmra.mrb[0].mxu0 %v482
      %v1560 = vpop.f32.mrb[0].mxu0
      %v1561 = vadd.f32 %v1336, %v1560
      %v1562 = vpop.f32.mrb[0].mxu0
      %1563 = vmatprep.mubr.f32.mxu0 %v492
      %1564 = vmatmul.mubr.f32.gmra.mrb[0].mxu0 %v491
      %v1565 = vpop.f32.mrb[0].mxu0
      %v1566 = vadd.f32 %v1341, %v1565
      %v1567 = vpop.f32.mrb[0].mxu0
      %1568 = vmatprep.mubr.f32.mxu0 %v501
      %1569 = vmatmul.mubr.f32.gmra.mrb[0].mxu0 %v500
      %v1570 = vpop.f32.mrb[0].mxu0
      %v1571 = vadd.f32 %v1346, %v1570
      %v1572 = vpop.f32.mrb[0].mxu0
      %1573 = vmatprep.mubr.f32.mxu0 %v510
      %1574 = vmatmul.mubr.f32.gmra.mrb[0].mxu0 %v509
      %v1575 = vpop.f32.mrb[0].mxu0
      %v1576 = vadd.f32 %v1351, %v1575
      %v1577 = vpop.f32.mrb[0].mxu0
      %1578 = vmatprep.mubr.f32.mxu0 %v519
      %1579 = vmatmul.mubr.f32.gmra.mrb[0].mxu0 %v518
      %v1580 = vpop.f32.mrb[0].mxu0
      %v1581 = vadd.f32 %v1356, %v1580
      %v1582 = vpop.f32.mrb[0].mxu0
      %1583 = vmatprep.mubr.f32.mxu0 %v528
      %1584 = vmatmul.mubr.f32.gmra.mrb[0].mxu0 %v527
      %v1585 = vpop.f32.mrb[0].mxu0
      %v1586 = vadd.f32 %v1361, %v1585
      %v1587 = vpop.f32.mrb[0].mxu0
      %1588 = vmatprep.mubr.f32.mxu0 %v537
      %1589 = vmatmul.mubr.f32.gmra.mrb[0].mxu0 %v536
      %v1590 = vpop.f32.mrb[0].mxu0
      %v1591 = vadd.f32 %v1366, %v1590
      %v1592 = vpop.f32.mrb[0].mxu0
      %1593 = vmatprep.mubr.f32.mxu0 %v546
      %1594 = vmatmul.mubr.f32.gmra.mrb[0].mxu0 %v545
      %v1595 = vpop.f32.mrb[0].mxu0
      %v1596 = vadd.f32 %v1371, %v1595
      %v1597 = vpop.f32.mrb[0].mxu0
      %1598 = vdwg.mxu0
      %1599 = vmatprep.subr.mxu0 0.0
      %1600 = vmatpush1.msra.mxu0 %v676
      %1601 = vmatprep.subr.mxu0 0.0
      %1602 = vmatpush1.msra.mxu0 %v677
      %1603 = vmatprep.subr.mxu0 0.0
      %1604 = vmatpush1.msra.mxu0 %v678
      %1605 = vmatprep.subr.mxu0 0.0
      %1606 = vmatpush1.msra.mxu0 %v679
      %1607 = vmatprep.subr.mxu0 0.0
      %1608 = vmatpush1.msra.mxu0 %v680
      %1609 = vmatprep.subr.mxu0 0.0
      %1610 = vmatpush1.msra.mxu0 %v681
      %1611 = vmatprep.subr.mxu0 0.0
      %1612 = vmatpush1.msra.mxu0 %v682
      %1613 = vmatprep.subr.mxu0 0.0
      %1614 = vmatpush1.msra.mxu0 %v683
      %1615 = vmatprep.subr.mxu0 0.0
      %1616 = vmatpush1.msra.mxu0 %v684
      %1617 = vmatprep.subr.mxu0 0.0
      %1618 = vmatpush1.msra.mxu0 %v685
      %1619 = vmatprep.subr.mxu0 0.0
      %1620 = vmatpush1.msra.mxu0 %v686
      %1621 = vmatprep.subr.mxu0 0.0
      %1622 = vmatpush1.msra.mxu0 %v687
      %1623 = vmatprep.subr.mxu0 0.0
      %1624 = vmatpush1.msra.mxu0 %v688
      %1625 = vmatprep.subr.mxu0 0.0
      %1626 = vmatpush1.msra.mxu0 %v689
      %1627 = vmatprep.subr.mxu0 0.0
      %1628 = vmatpush1.msra.mxu0 %v690
      %1629 = vmatprep.subr.mxu0 0.0
      %1630 = vmatpush1.msra.mxu0 %v691
      %1631 = vmatprep.subr.mxu0 0.0
      %1632 = vmatpush1.msra.mxu0 0.0
      %1633 = vmatprep.subr.mxu0 0.0
      %1634 = vmatpush1.msra.mxu0 0.0
      %1635 = vmatprep.subr.mxu0 0.0
      %1636 = vmatpush1.msra.mxu0 0.0
      %1637 = vmatprep.subr.mxu0 0.0
      %1638 = vmatpush1.msra.mxu0 0.0
      %1639 = vmatprep.subr.mxu0 0.0
      %1640 = vmatpush1.msra.mxu0 0.0
      %1641 = vmatprep.subr.mxu0 0.0
      %1642 = vmatpush1.msra.mxu0 0.0
      %1643 = vmatprep.subr.mxu0 0.0
      %1644 = vmatpush1.msra.mxu0 0.0
      %1645 = vmatprep.subr.mxu0 0.0
      %1646 = vmatpush1.msra.mxu0 0.0
      %1647 = vmatprep.subr.mxu0 0.0
      %1648 = vmatpush1.msra.mxu0 0.0
      %1649 = vmatprep.subr.mxu0 0.0
      %1650 = vmatpush1.msra.mxu0 0.0
      %1651 = vmatprep.subr.mxu0 0.0
      %1652 = vmatpush1.msra.mxu0 0.0
      %1653 = vmatprep.subr.mxu0 0.0
      %1654 = vmatpush1.msra.mxu0 0.0
      %1655 = vmatprep.subr.mxu0 0.0
      %1656 = vmatpush1.msra.mxu0 0.0
      %1657 = vmatprep.subr.mxu0 0.0
      %1658 = vmatpush1.msra.mxu0 0.0
      %1659 = vmatprep.subr.mxu0 0.0
      %1660 = vmatpush1.msra.mxu0 0.0
      %1661 = vmatprep.subr.mxu0 0.0
      %1662 = vmatpush1.msra.mxu0 0.0
      %1663 = vmatprep.mubr.f32.mxu0 0.0
      %1664 = vmatmul.mubr.f32.gmra.mrb[0].mxu0 %v268
      %v1665 = vpop.f32.mrb[0].mxu0
      %v1666 = vadd.f32 %v1441, %v1665
      %v1667 = vpop.f32.mrb[0].mxu0
      %1668 = vmatprep.mubr.f32.mxu0 0.0
      %1669 = vmatmul.mubr.f32.gmra.mrb[0].mxu0 %v277
      %v1670 = vpop.f32.mrb[0].mxu0
      %v1671 = vadd.f32 %v1446, %v1670
      %v1672 = vpop.f32.mrb[0].mxu0
      %1673 = vmatprep.mubr.f32.mxu0 0.0
      %1674 = vmatmul.mubr.f32.gmra.mrb[0].mxu0 %v286
      %v1675 = vpop.f32.mrb[0].mxu0
      %v1676 = vadd.f32 %v1451, %v1675
      %v1677 = vpop.f32.mrb[0].mxu0
      %1678 = vmatprep.mubr.f32.mxu0 0.0
      %1679 = vmatmul.mubr.f32.gmra.mrb[0].mxu0 %v295
      %v1680 = vpop.f32.mrb[0].mxu0
      %v1681 = vadd.f32 %v1456, %v1680
      %v1682 = vpop.f32.mrb[0].mxu0
      %1683 = vmatprep.mubr.f32.mxu0 0.0
      %1684 = vmatmul.mubr.f32.gmra.mrb[0].mxu0 %v304
      %v1685 = vpop.f32.mrb[0].mxu0
      %v1686 = vadd.f32 %v1461, %v1685
      %v1687 = vpop.f32.mrb[0].mxu0
      %1688 = vmatprep.mubr.f32.mxu0 0.0
      %1689 = vmatmul.mubr.f32.gmra.mrb[0].mxu0 %v313
      %v1690 = vpop.f32.mrb[0].mxu0
      %v1691 = vadd.f32 %v1466, %v1690
      %v1692 = vpop.f32.mrb[0].mxu0
      %1693 = vmatprep.mubr.f32.mxu0 0.0
      %1694 = vmatmul.mubr.f32.gmra.mrb[0].mxu0 %v322
      %v1695 = vpop.f32.mrb[0].mxu0
      %v1696 = vadd.f32 %v1471, %v1695
      %v1697 = vpop.f32.mrb[0].mxu0
      %1698 = vmatprep.mubr.f32.mxu0 0.0
      %1699 = vmatmul.mubr.f32.gmra.mrb[0].mxu0 %v331
      %v1700 = vpop.f32.mrb[0].mxu0
      %v1701 = vadd.f32 %v1476, %v1700
      %v1702 = vpop.f32.mrb[0].mxu0
      %1703 = vmatprep.mubr.f32.mxu0 0.0
      %1704 = vmatmul.mubr.f32.gmra.mrb[0].mxu0 %v340
      %v1705 = vpop.f32.mrb[0].mxu0
      %v1706 = vadd.f32 %v1481, %v1705
      %v1707 = vpop.f32.mrb[0].mxu0
      %1708 = vmatprep.mubr.f32.mxu0 0.0
      %1709 = vmatmul.mubr.f32.gmra.mrb[0].mxu0 %v349
      %v1710 = vpop.f32.mrb[0].mxu0
      %v1711 = vadd.f32 %v1486, %v1710
      %v1712 = vpop.f32.mrb[0].mxu0
      %1713 = vmatprep.mubr.f32.mxu0 0.0
      %1714 = vmatmul.mubr.f32.gmra.mrb[0].mxu0 %v358
      %v1715 = vpop.f32.mrb[0].mxu0
      %v1716 = vadd.f32 %v1491, %v1715
      %v1717 = vpop.f32.mrb[0].mxu0
      %1718 = vmatprep.mubr.f32.mxu0 0.0
      %1719 = vmatmul.mubr.f32.gmra.mrb[0].mxu0 %v367
      %v1720 = vpop.f32.mrb[0].mxu0
      %v1721 = vadd.f32 %v1496, %v1720
      %v1722 = vpop.f32.mrb[0].mxu0
      %1723 = vmatprep.mubr.f32.mxu0 0.0
      %1724 = vmatmul.mubr.f32.gmra.mrb[0].mxu0 %v376
      %v1725 = vpop.f32.mrb[0].mxu0
      %v1726 = vadd.f32 %v1501, %v1725
      %v1727 = vpop.f32.mrb[0].mxu0
      %1728 = vmatprep.mubr.f32.mxu0 0.0
      %1729 = vmatmul.mubr.f32.gmra.mrb[0].mxu0 %v385
      %v1730 = vpop.f32.mrb[0].mxu0
      %v1731 = vadd.f32 %v1506, %v1730
      %v1732 = vpop.f32.mrb[0].mxu0
      %1733 = vmatprep.mubr.f32.mxu0 0.0
      %1734 = vmatmul.mubr.f32.gmra.mrb[0].mxu0 %v394
      %v1735 = vpop.f32.mrb[0].mxu0
      %v1736 = vadd.f32 %v1511, %v1735
      %v1737 = vpop.f32.mrb[0].mxu0
      %1738 = vmatprep.mubr.f32.mxu0 0.0
      %1739 = vmatmul.mubr.f32.gmra.mrb[0].mxu0 %v403
      %v1740 = vpop.f32.mrb[0].mxu0
      %v1741 = vadd.f32 %v1516, %v1740
      %v1742 = vpop.f32.mrb[0].mxu0
      %1743 = vmatprep.mubr.f32.mxu0 0.0
      %1744 = vmatmul.mubr.f32.gmra.mrb[0].mxu0 %v412
      %v1745 = vpop.f32.mrb[0].mxu0
      %v1746 = vadd.f32 %v1521, %v1745
      %v1747 = vpop.f32.mrb[0].mxu0
      %1748 = vmatprep.mubr.f32.mxu0 0.0
      %1749 = vmatmul.mubr.f32.gmra.mrb[0].mxu0 %v421
      %v1750 = vpop.f32.mrb[0].mxu0
      %v1751 = vadd.f32 %v1526, %v1750
      %v1752 = vpop.f32.mrb[0].mxu0
      %1753 = vmatprep.mubr.f32.mxu0 0.0
      %1754 = vmatmul.mubr.f32.gmra.mrb[0].mxu0 %v430
      %v1755 = vpop.f32.mrb[0].mxu0
      %v1756 = vadd.f32 %v1531, %v1755
      %v1757 = vpop.f32.mrb[0].mxu0
      %1758 = vmatprep.mubr.f32.mxu0 0.0
      %1759 = vmatmul.mubr.f32.gmra.mrb[0].mxu0 %v439
      %v1760 = vpop.f32.mrb[0].mxu0
      %v1761 = vadd.f32 %v1536, %v1760
      %v1762 = vpop.f32.mrb[0].mxu0
      %1763 = vmatprep.mubr.f32.mxu0 0.0
      %1764 = vmatmul.mubr.f32.gmra.mrb[0].mxu0 %v448
      %v1765 = vpop.f32.mrb[0].mxu0
      %v1766 = vadd.f32 %v1541, %v1765
      %v1767 = vpop.f32.mrb[0].mxu0
      %1768 = vmatprep.mubr.f32.mxu0 0.0
      %1769 = vmatmul.mubr.f32.gmra.mrb[0].mxu0 %v457
      %v1770 = vpop.f32.mrb[0].mxu0
      %v1771 = vadd.f32 %v1546, %v1770
      %v1772 = vpop.f32.mrb[0].mxu0
      %1773 = vmatprep.mubr.f32.mxu0 0.0
      %1774 = vmatmul.mubr.f32.gmra.mrb[0].mxu0 %v466
      %v1775 = vpop.f32.mrb[0].mxu0
      %v1776 = vadd.f32 %v1551, %v1775
      %v1777 = vpop.f32.mrb[0].mxu0
      %1778 = vmatprep.mubr.f32.mxu0 0.0
      %1779 = vmatmul.mubr.f32.gmra.mrb[0].mxu0 %v475
      %v1780 = vpop.f32.mrb[0].mxu0
      %v1781 = vadd.f32 %v1556, %v1780
      %v1782 = vpop.f32.mrb[0].mxu0
      %1783 = vmatprep.mubr.f32.mxu0 0.0
      %1784 = vmatmul.mubr.f32.gmra.mrb[0].mxu0 %v484
      %v1785 = vpop.f32.mrb[0].mxu0
      %v1786 = vadd.f32 %v1561, %v1785
      %v1787 = vpop.f32.mrb[0].mxu0
      %1788 = vmatprep.mubr.f32.mxu0 0.0
      %1789 = vmatmul.mubr.f32.gmra.mrb[0].mxu0 %v493
      %v1790 = vpop.f32.mrb[0].mxu0
      %v1791 = vadd.f32 %v1566, %v1790
      %v1792 = vpop.f32.mrb[0].mxu0
      %1793 = vmatprep.mubr.f32.mxu0 0.0
      %1794 = vmatmul.mubr.f32.gmra.mrb[0].mxu0 %v502
      %v1795 = vpop.f32.mrb[0].mxu0
      %v1796 = vadd.f32 %v1571, %v1795
      %v1797 = vpop.f32.mrb[0].mxu0
      %1798 = vmatprep.mubr.f32.mxu0 0.0
      %1799 = vmatmul.mubr.f32.gmra.mrb[0].mxu0 %v511
      %v1800 = vpop.f32.mrb[0].mxu0
      %v1801 = vadd.f32 %v1576, %v1800
      %v1802 = vpop.f32.mrb[0].mxu0
      %1803 = vmatprep.mubr.f32.mxu0 0.0
      %1804 = vmatmul.mubr.f32.gmra.mrb[0].mxu0 %v520
      %v1805 = vpop.f32.mrb[0].mxu0
      %v1806 = vadd.f32 %v1581, %v1805
      %v1807 = vpop.f32.mrb[0].mxu0
      %1808 = vmatprep.mubr.f32.mxu0 0.0
      %1809 = vmatmul.mubr.f32.gmra.mrb[0].mxu0 %v529
      %v1810 = vpop.f32.mrb[0].mxu0
      %v1811 = vadd.f32 %v1586, %v1810
      %v1812 = vpop.f32.mrb[0].mxu0
      %1813 = vmatprep.mubr.f32.mxu0 0.0
      %1814 = vmatmul.mubr.f32.gmra.mrb[0].mxu0 %v538
      %v1815 = vpop.f32.mrb[0].mxu0
      %v1816 = vadd.f32 %v1591, %v1815
      %v1817 = vpop.f32.mrb[0].mxu0
      %1818 = vmatprep.mubr.f32.mxu0 0.0
      %1819 = vmatmul.mubr.f32.gmra.mrb[0].mxu0 %v547
      %v1820 = vpop.f32.mrb[0].mxu0
      %v1821 = vadd.f32 %v1596, %v1820
      %v1822 = vpop.f32.mrb[0].mxu0
      %1823 = vdwg.mxu0
      %vm1824 = vcmp.gt.f32.partialorder %v1666, 0.0
      %vm1825 = vcmp.gt.f32.partialorder %v1671, 0.0
      %vm1826 = vcmp.gt.f32.partialorder %v1676, 0.0
      %vm1827 = vcmp.gt.f32.partialorder %v1681, 0.0
      %vm1828 = vcmp.gt.f32.partialorder %v1686, 0.0
      %vm1829 = vcmp.gt.f32.partialorder %v1691, 0.0
      %vm1830 = vcmp.gt.f32.partialorder %v1696, 0.0
      %vm1831 = vcmp.gt.f32.partialorder %v1701, 0.0
      %vm1832 = vcmp.gt.f32.partialorder %v1706, 0.0
      %vm1833 = vcmp.gt.f32.partialorder %v1711, 0.0
      %vm1834 = vcmp.gt.f32.partialorder %v1716, 0.0
      %vm1835 = vcmp.gt.f32.partialorder %v1721, 0.0
      %vm1836 = vcmp.gt.f32.partialorder %v1726, 0.0
      %vm1837 = vcmp.gt.f32.partialorder %v1731, 0.0
      %vm1838 = vcmp.gt.f32.partialorder %v1736, 0.0
      %vm1839 = vcmp.gt.f32.partialorder %v1741, 0.0
      %vm1840 = vcmp.gt.f32.partialorder %v1746, 0.0
      %vm1841 = vcmp.gt.f32.partialorder %v1751, 0.0
      %vm1842 = vcmp.gt.f32.partialorder %v1756, 0.0
      %vm1843 = vcmp.gt.f32.partialorder %v1761, 0.0
      %vm1844 = vcmp.gt.f32.partialorder %v1766, 0.0
      %vm1845 = vcmp.gt.f32.partialorder %v1771, 0.0
      %vm1846 = vcmp.gt.f32.partialorder %v1776, 0.0
      %vm1847 = vcmp.gt.f32.partialorder %v1781, 0.0
      %vm1848 = vcmp.gt.f32.partialorder %v1786, 0.0
      %vm1849 = vcmp.gt.f32.partialorder %v1791, 0.0
      %vm1850 = vcmp.gt.f32.partialorder %v1796, 0.0
      %vm1851 = vcmp.gt.f32.partialorder %v1801, 0.0
      %vm1852 = vcmp.gt.f32.partialorder %v1806, 0.0
      %vm1853 = vcmp.gt.f32.partialorder %v1811, 0.0
      %vm1854 = vcmp.gt.f32.partialorder %v1816, 0.0
      %vm1855 = vcmp.gt.f32.partialorder %v1821, 0.0
      %v1856 = vld [vmem:[#allocation2] sm:$0x1]
      %v1858 = vlaneseq
      %v1859 = vshrl.u32 %v1858, 7
      %v1860 = vsub.s32 0, %v1859
      %v1861 = vrot.slane %v1856, %v1860
      %1862 = vset.pattern.permute.xlu0 0
      %1863 = vperm.xlu0 %1862, %v1861
      %v1864 = vpop.permute.xlu0 %1863
      %v1866 = vmul.f32 %v1666, %v1864
      %v1867 = vmul.f32 %v1671, %v1864
      %v1868 = vmul.f32 %v1676, %v1864
      %v1869 = vmul.f32 %v1681, %v1864
      %v1870 = vmul.f32 %v1686, %v1864
      %v1871 = vmul.f32 %v1691, %v1864
      %v1872 = vmul.f32 %v1696, %v1864
      %v1873 = vmul.f32 %v1701, %v1864
      %v1874 = vmul.f32 %v1706, %v1864
      %v1875 = vmul.f32 %v1711, %v1864
      %v1876 = vmul.f32 %v1716, %v1864
      %v1877 = vmul.f32 %v1721, %v1864
      %v1878 = vmul.f32 %v1726, %v1864
      %v1879 = vmul.f32 %v1731, %v1864
      %v1880 = vmul.f32 %v1736, %v1864
      %v1881 = vmul.f32 %v1741, %v1864
      %v1882 = vmul.f32 %v1746, %v1864
      %v1883 = vmul.f32 %v1751, %v1864
      %v1884 = vmul.f32 %v1756, %v1864
      %v1885 = vmul.f32 %v1761, %v1864
      %v1886 = vmul.f32 %v1766, %v1864
      %v1887 = vmul.f32 %v1771, %v1864
      %v1888 = vmul.f32 %v1776, %v1864
      %v1889 = vmul.f32 %v1781, %v1864
      %v1890 = vmul.f32 %v1786, %v1864
      %v1891 = vmul.f32 %v1791, %v1864
      %v1892 = vmul.f32 %v1796, %v1864
      %v1893 = vmul.f32 %v1801, %v1864
      %v1894 = vmul.f32 %v1806, %v1864
      %v1895 = vmul.f32 %v1811, %v1864
      %v1896 = vmul.f32 %v1816, %v1864
      %v1897 = vmul.f32 %v1821, %v1864
      %v1898 = vsel %vm1824, %v1666, %v1866
      %v1899 = vsel %vm1825, %v1671, %v1867
      %v1900 = vsel %vm1826, %v1676, %v1868
      %v1901 = vsel %vm1827, %v1681, %v1869
      %v1902 = vsel %vm1828, %v1686, %v1870
      %v1903 = vsel %vm1829, %v1691, %v1871
      %v1904 = vsel %vm1830, %v1696, %v1872
      %v1905 = vsel %vm1831, %v1701, %v1873
      %v1906 = vsel %vm1832, %v1706, %v1874
      %v1907 = vsel %vm1833, %v1711, %v1875
      %v1908 = vsel %vm1834, %v1716, %v1876
      %v1909 = vsel %vm1835, %v1721, %v1877
      %v1910 = vsel %vm1836, %v1726, %v1878
      %v1911 = vsel %vm1837, %v1731, %v1879
      %v1912 = vsel %vm1838, %v1736, %v1880
      %v1913 = vsel %vm1839, %v1741, %v1881
      %v1914 = vsel %vm1840, %v1746, %v1882
      %v1915 = vsel %vm1841, %v1751, %v1883
      %v1916 = vsel %vm1842, %v1756, %v1884
      %v1917 = vsel %vm1843, %v1761, %v1885
      %v1918 = vsel %vm1844, %v1766, %v1886
      %v1919 = vsel %vm1845, %v1771, %v1887
      %v1920 = vsel %vm1846, %v1776, %v1888
      %v1921 = vsel %vm1847, %v1781, %v1889
      %v1922 = vsel %vm1848, %v1786, %v1890
      %v1923 = vsel %vm1849, %v1791, %v1891
      %v1924 = vsel %vm1850, %v1796, %v1892
      %v1925 = vsel %vm1851, %v1801, %v1893
      %v1926 = vsel %vm1852, %v1806, %v1894
      %v1927 = vsel %vm1853, %v1811, %v1895
      %v1928 = vsel %vm1854, %v1816, %v1896
      %v1929 = vsel %vm1855, %v1821, %v1897
      %v1930 = vld [vmem:[%s4] sm:$0xff]
      %v1931 = vld [vmem:[%s4 + $0x8] sm:$0xff]
      %v1932 = vld [vmem:[%s4 + $0x10] sm:$0xff]
      %v1933 = vld [vmem:[%s4 + $0x18] sm:$0xff]
      %v1934 = vld [vmem:[%s4 + $0x20] sm:$0xff]
      %v1935 = vld [vmem:[%s4 + $0x28] sm:$0xff]
      %v1936 = vld [vmem:[%s4 + $0x30] sm:$0xff]
      %v1937 = vld [vmem:[%s4 + $0x38] sm:$0xff]
      %v1938 = vld [vmem:[%s4 + $0x40] sm:$0xff]
      %v1939 = vld [vmem:[%s4 + $0x48] sm:$0xff]
      %v1940 = vld [vmem:[%s4 + $0x50] sm:$0xff]
      %v1941 = vld [vmem:[%s4 + $0x58] sm:$0xff]
      %v1942 = vld [vmem:[%s4 + $0x60] sm:$0xff]
      %v1943 = vld [vmem:[%s4 + $0x68] sm:$0xff]
      %v1944 = vld [vmem:[%s4 + $0x70] sm:$0xff]
      %v1945 = vld [vmem:[%s4 + $0x78] sm:$0xff]
      %v1946 = vld [vmem:[%s5] sm:$0x1]
      %v1948 = vlaneseq
      %v1949 = vshrl.u32 %v1948, 7
      %v1950 = vsub.s32 0, %v1949
      %v1951 = vrot.slane %v1946, %v1950
      %1953 = vmatprep.subr.mxu0 0.0
      %1954 = vmatpush1.msra.mxu0 %v1930
      %1955 = vmatprep.subr.mxu0 0.0
      %1956 = vmatpush1.msra.mxu0 %v1931
      %1957 = vmatprep.subr.mxu0 0.0
      %1958 = vmatpush1.msra.mxu0 %v1932
      %1959 = vmatprep.subr.mxu0 0.0
      %1960 = vmatpush1.msra.mxu0 %v1933
      %1961 = vmatprep.subr.mxu0 0.0
      %1962 = vmatpush1.msra.mxu0 %v1934
      %1963 = vmatprep.subr.mxu0 0.0
      %1964 = vmatpush1.msra.mxu0 %v1935
      %1965 = vmatprep.subr.mxu0 0.0
      %1966 = vmatpush1.msra.mxu0 %v1936
      %1967 = vmatprep.subr.mxu0 0.0
      %1968 = vmatpush1.msra.mxu0 %v1937
      %1969 = vmatprep.subr.mxu0 0.0
      %1970 = vmatpush1.msra.mxu0 %v1938
      %1971 = vmatprep.subr.mxu0 0.0
      %1972 = vmatpush1.msra.mxu0 %v1939
      %1973 = vmatprep.subr.mxu0 0.0
      %1974 = vmatpush1.msra.mxu0 %v1940
      %1975 = vmatprep.subr.mxu0 0.0
      %1976 = vmatpush1.msra.mxu0 %v1941
      %1977 = vmatprep.subr.mxu0 0.0
      %1978 = vmatpush1.msra.mxu0 %v1942
      %1979 = vmatprep.subr.mxu0 0.0
      %1980 = vmatpush1.msra.mxu0 %v1943
      %1981 = vmatprep.subr.mxu0 0.0
      %1982 = vmatpush1.msra.mxu0 %v1944
      %1983 = vmatprep.subr.mxu0 0.0
      %1984 = vmatpush1.msra.mxu0 %v1945
      %1985 = vmatprep.subr.mxu0 0.0
      %1986 = vmatpush1.msra.mxu0 0.0
      %1987 = vmatprep.subr.mxu0 0.0
      %1988 = vmatpush1.msra.mxu0 0.0
      %1989 = vmatprep.subr.mxu0 0.0
      %1990 = vmatpush1.msra.mxu0 0.0
      %1991 = vmatprep.subr.mxu0 0.0
      %1992 = vmatpush1.msra.mxu0 0.0
      %1993 = vmatprep.subr.mxu0 0.0
      %1994 = vmatpush1.msra.mxu0 0.0
      %1995 = vmatprep.subr.mxu0 0.0
      %1996 = vmatpush1.msra.mxu0 0.0
      %1997 = vmatprep.subr.mxu0 0.0
      %1998 = vmatpush1.msra.mxu0 0.0
      %1999 = vmatprep.subr.mxu0 0.0
      %2000 = vmatpush1.msra.mxu0 0.0
      %2001 = vmatprep.subr.mxu0 0.0
      %2002 = vmatpush1.msra.mxu0 0.0
      %2003 = vmatprep.subr.mxu0 0.0
      %2004 = vmatpush1.msra.mxu0 0.0
      %2005 = vmatprep.subr.mxu0 0.0
      %2006 = vmatpush1.msra.mxu0 0.0
      %2007 = vmatprep.subr.mxu0 0.0
      %2008 = vmatpush1.msra.mxu0 0.0
      %2009 = vmatprep.subr.mxu0 0.0
      %2010 = vmatpush1.msra.mxu0 0.0
      %2011 = vmatprep.subr.mxu0 0.0
      %2012 = vmatpush1.msra.mxu0 0.0
      %2013 = vmatprep.subr.mxu0 0.0
      %2014 = vmatpush1.msra.mxu0 0.0
      %2015 = vmatprep.subr.mxu0 0.0
      %2016 = vmatpush1.msra.mxu0 0.0
      %2017 = vmatprep.mubr.f32.mxu0 0.0
      %2018 = vmatmul.mubr.f32.gmra.mrb[0].mxu0 %v1898
      %v2019 = vpop.f32.mrb[0].mxu0
      %v2020 = vadd.f32 %v1951, %v2019
      %v2021 = vpop.f32.mrb[0].mxu0
      %2022 = vmatprep.mubr.f32.mxu0 0.0
      %2023 = vmatmul.mubr.f32.gmra.mrb[0].mxu0 %v1899
      %v2024 = vpop.f32.mrb[0].mxu0
      %v2025 = vadd.f32 %v1951, %v2024
      %v2026 = vpop.f32.mrb[0].mxu0
      %2027 = vmatprep.mubr.f32.mxu0 0.0
      %2028 = vmatmul.mubr.f32.gmra.mrb[0].mxu0 %v1900
      %v2029 = vpop.f32.mrb[0].mxu0
      %v2030 = vadd.f32 %v1951, %v2029
      %v2031 = vpop.f32.mrb[0].mxu0
      %2032 = vmatprep.mubr.f32.mxu0 0.0
      %2033 = vmatmul.mubr.f32.gmra.mrb[0].mxu0 %v1901
      %v2034 = vpop.f32.mrb[0].mxu0
      %v2035 = vadd.f32 %v1951, %v2034
      %v2036 = vpop.f32.mrb[0].mxu0
      %2037 = vmatprep.mubr.f32.mxu0 0.0
      %2038 = vmatmul.mubr.f32.gmra.mrb[0].mxu0 %v1902
      %v2039 = vpop.f32.mrb[0].mxu0
      %v2040 = vadd.f32 %v1951, %v2039
      %v2041 = vpop.f32.mrb[0].mxu0
      %2042 = vmatprep.mubr.f32.mxu0 0.0
      %2043 = vmatmul.mubr.f32.gmra.mrb[0].mxu0 %v1903
      %v2044 = vpop.f32.mrb[0].mxu0
      %v2045 = vadd.f32 %v1951, %v2044
      %v2046 = vpop.f32.mrb[0].mxu0
      %2047 = vmatprep.mubr.f32.mxu0 0.0
      %2048 = vmatmul.mubr.f32.gmra.mrb[0].mxu0 %v1904
      %v2049 = vpop.f32.mrb[0].mxu0
      %v2050 = vadd.f32 %v1951, %v2049
      %v2051 = vpop.f32.mrb[0].mxu0
      %2052 = vmatprep.mubr.f32.mxu0 0.0
      %2053 = vmatmul.mubr.f32.gmra.mrb[0].mxu0 %v1905
      %v2054 = vpop.f32.mrb[0].mxu0
      %v2055 = vadd.f32 %v1951, %v2054
      %v2056 = vpop.f32.mrb[0].mxu0
      %2057 = vmatprep.mubr.f32.mxu0 0.0
      %2058 = vmatmul.mubr.f32.gmra.mrb[0].mxu0 %v1906
      %v2059 = vpop.f32.mrb[0].mxu0
      %v2060 = vadd.f32 %v1951, %v2059
      %v2061 = vpop.f32.mrb[0].mxu0
      %2062 = vmatprep.mubr.f32.mxu0 0.0
      %2063 = vmatmul.mubr.f32.gmra.mrb[0].mxu0 %v1907
      %v2064 = vpop.f32.mrb[0].mxu0
      %v2065 = vadd.f32 %v1951, %v2064
      %v2066 = vpop.f32.mrb[0].mxu0
      %2067 = vmatprep.mubr.f32.mxu0 0.0
      %2068 = vmatmul.mubr.f32.gmra.mrb[0].mxu0 %v1908
      %v2069 = vpop.f32.mrb[0].mxu0
      %v2070 = vadd.f32 %v1951, %v2069
      %v2071 = vpop.f32.mrb[0].mxu0
      %2072 = vmatprep.mubr.f32.mxu0 0.0
      %2073 = vmatmul.mubr.f32.gmra.mrb[0].mxu0 %v1909
      %v2074 = vpop.f32.mrb[0].mxu0
      %v2075 = vadd.f32 %v1951, %v2074
      %v2076 = vpop.f32.mrb[0].mxu0
      %2077 = vmatprep.mubr.f32.mxu0 0.0
      %2078 = vmatmul.mubr.f32.gmra.mrb[0].mxu0 %v1910
      %v2079 = vpop.f32.mrb[0].mxu0
      %v2080 = vadd.f32 %v1951, %v2079
      %v2081 = vpop.f32.mrb[0].mxu0
      %2082 = vmatprep.mubr.f32.mxu0 0.0
      %2083 = vmatmul.mubr.f32.gmra.mrb[0].mxu0 %v1911
      %v2084 = vpop.f32.mrb[0].mxu0
      %v2085 = vadd.f32 %v1951, %v2084
      %v2086 = vpop.f32.mrb[0].mxu0
      %2087 = vmatprep.mubr.f32.mxu0 0.0
      %2088 = vmatmul.mubr.f32.gmra.mrb[0].mxu0 %v1912
      %v2089 = vpop.f32.mrb[0].mxu0
      %v2090 = vadd.f32 %v1951, %v2089
      %v2091 = vpop.f32.mrb[0].mxu0
      %2092 = vmatprep.mubr.f32.mxu0 0.0
      %2093 = vmatmul.mubr.f32.gmra.mrb[0].mxu0 %v1913
      %v2094 = vpop.f32.mrb[0].mxu0
      %v2095 = vadd.f32 %v1951, %v2094
      %v2096 = vpop.f32.mrb[0].mxu0
      %2097 = vmatprep.mubr.f32.mxu0 0.0
      %2098 = vmatmul.mubr.f32.gmra.mrb[0].mxu0 %v1914
      %v2099 = vpop.f32.mrb[0].mxu0
      %v2100 = vadd.f32 %v1951, %v2099
      %v2101 = vpop.f32.mrb[0].mxu0
      %2102 = vmatprep.mubr.f32.mxu0 0.0
      %2103 = vmatmul.mubr.f32.gmra.mrb[0].mxu0 %v1915
      %v2104 = vpop.f32.mrb[0].mxu0
      %v2105 = vadd.f32 %v1951, %v2104
      %v2106 = vpop.f32.mrb[0].mxu0
      %2107 = vmatprep.mubr.f32.mxu0 0.0
      %2108 = vmatmul.mubr.f32.gmra.mrb[0].mxu0 %v1916
      %v2109 = vpop.f32.mrb[0].mxu0
      %v2110 = vadd.f32 %v1951, %v2109
      %v2111 = vpop.f32.mrb[0].mxu0
      %2112 = vmatprep.mubr.f32.mxu0 0.0
      %2113 = vmatmul.mubr.f32.gmra.mrb[0].mxu0 %v1917
      %v2114 = vpop.f32.mrb[0].mxu0
      %v2115 = vadd.f32 %v1951, %v2114
      %v2116 = vpop.f32.mrb[0].mxu0
      %2117 = vmatprep.mubr.f32.mxu0 0.0
      %2118 = vmatmul.mubr.f32.gmra.mrb[0].mxu0 %v1918
      %v2119 = vpop.f32.mrb[0].mxu0
      %v2120 = vadd.f32 %v1951, %v2119
      %v2121 = vpop.f32.mrb[0].mxu0
      %2122 = vmatprep.mubr.f32.mxu0 0.0
      %2123 = vmatmul.mubr.f32.gmra.mrb[0].mxu0 %v1919
      %v2124 = vpop.f32.mrb[0].mxu0
      %v2125 = vadd.f32 %v1951, %v2124
      %v2126 = vpop.f32.mrb[0].mxu0
      %2127 = vmatprep.mubr.f32.mxu0 0.0
      %2128 = vmatmul.mubr.f32.gmra.mrb[0].mxu0 %v1920
      %v2129 = vpop.f32.mrb[0].mxu0
      %v2130 = vadd.f32 %v1951, %v2129
      %v2131 = vpop.f32.mrb[0].mxu0
      %2132 = vmatprep.mubr.f32.mxu0 0.0
      %2133 = vmatmul.mubr.f32.gmra.mrb[0].mxu0 %v1921
      %v2134 = vpop.f32.mrb[0].mxu0
      %v2135 = vadd.f32 %v1951, %v2134
      %v2136 = vpop.f32.mrb[0].mxu0
      %2137 = vmatprep.mubr.f32.mxu0 0.0
      %2138 = vmatmul.mubr.f32.gmra.mrb[0].mxu0 %v1922
      %v2139 = vpop.f32.mrb[0].mxu0
      %v2140 = vadd.f32 %v1951, %v2139
      %v2141 = vpop.f32.mrb[0].mxu0
      %2142 = vmatprep.mubr.f32.mxu0 0.0
      %2143 = vmatmul.mubr.f32.gmra.mrb[0].mxu0 %v1923
      %v2144 = vpop.f32.mrb[0].mxu0
      %v2145 = vadd.f32 %v1951, %v2144
      %v2146 = vpop.f32.mrb[0].mxu0
      %2147 = vmatprep.mubr.f32.mxu0 0.0
      %2148 = vmatmul.mubr.f32.gmra.mrb[0].mxu0 %v1924
      %v2149 = vpop.f32.mrb[0].mxu0
      %v2150 = vadd.f32 %v1951, %v2149
      %v2151 = vpop.f32.mrb[0].mxu0
      %2152 = vmatprep.mubr.f32.mxu0 0.0
      %2153 = vmatmul.mubr.f32.gmra.mrb[0].mxu0 %v1925
      %v2154 = vpop.f32.mrb[0].mxu0
      %v2155 = vadd.f32 %v1951, %v2154
      %v2156 = vpop.f32.mrb[0].mxu0
      %2157 = vmatprep.mubr.f32.mxu0 0.0
      %2158 = vmatmul.mubr.f32.gmra.mrb[0].mxu0 %v1926
      %v2159 = vpop.f32.mrb[0].mxu0
      %v2160 = vadd.f32 %v1951, %v2159
      %v2161 = vpop.f32.mrb[0].mxu0
      %2162 = vmatprep.mubr.f32.mxu0 0.0
      %2163 = vmatmul.mubr.f32.gmra.mrb[0].mxu0 %v1927
      %v2164 = vpop.f32.mrb[0].mxu0
      %v2165 = vadd.f32 %v1951, %v2164
      %v2166 = vpop.f32.mrb[0].mxu0
      %2167 = vmatprep.mubr.f32.mxu0 0.0
      %2168 = vmatmul.mubr.f32.gmra.mrb[0].mxu0 %v1928
      %v2169 = vpop.f32.mrb[0].mxu0
      %v2170 = vadd.f32 %v1951, %v2169
      %v2171 = vpop.f32.mrb[0].mxu0
      %2172 = vmatprep.mubr.f32.mxu0 0.0
      %2173 = vmatmul.mubr.f32.gmra.mrb[0].mxu0 %v1929
      %v2174 = vpop.f32.mrb[0].mxu0
      %v2175 = vadd.f32 %v1951, %v2174
      %v2176 = vpop.f32.mrb[0].mxu0
      %2177 = vdwg.mxu0
      %2178 = vst [vmem:[%s258] sm:$0xff] %v2020
      %2179 = vst [vmem:[%s258 + $0x8] sm:$0xff] %v2025
      %2180 = vst [vmem:[%s258 + $0x10] sm:$0xff] %v2030
      %2181 = vst [vmem:[%s258 + $0x18] sm:$0xff] %v2035
      %2182 = vst [vmem:[%s258 + $0x20] sm:$0xff] %v2040
      %2183 = vst [vmem:[%s258 + $0x28] sm:$0xff] %v2045
      %2184 = vst [vmem:[%s258 + $0x30] sm:$0xff] %v2050
      %2185 = vst [vmem:[%s258 + $0x38] sm:$0xff] %v2055
      %2186 = vst [vmem:[%s258 + $0x40] sm:$0xff] %v2060
      %2187 = vst [vmem:[%s258 + $0x48] sm:$0xff] %v2065
      %2188 = vst [vmem:[%s258 + $0x50] sm:$0xff] %v2070
      %2189 = vst [vmem:[%s258 + $0x58] sm:$0xff] %v2075
      %2190 = vst [vmem:[%s258 + $0x60] sm:$0xff] %v2080
      %2191 = vst [vmem:[%s258 + $0x68] sm:$0xff] %v2085
      %2192 = vst [vmem:[%s258 + $0x70] sm:$0xff] %v2090
      %2193 = vst [vmem:[%s258 + $0x78] sm:$0xff] %v2095
      %2194 = vst [vmem:[%s258 + $0x80] sm:$0xff] %v2100
      %2195 = vst [vmem:[%s258 + $0x88] sm:$0xff] %v2105
      %2196 = vst [vmem:[%s258 + $0x90] sm:$0xff] %v2110
      %2197 = vst [vmem:[%s258 + $0x98] sm:$0xff] %v2115
      %2198 = vst [vmem:[%s258 + $0xa0] sm:$0xff] %v2120
      %2199 = vst [vmem:[%s258 + $0xa8] sm:$0xff] %v2125
      %2200 = vst [vmem:[%s258 + $0xb0] sm:$0xff] %v2130
      %2201 = vst [vmem:[%s258 + $0xb8] sm:$0xff] %v2135
      %2202 = vst [vmem:[%s258 + $0xc0] sm:$0xff] %v2140
      %2203 = vst [vmem:[%s258 + $0xc8] sm:$0xff] %v2145
      %2204 = vst [vmem:[%s258 + $0xd0] sm:$0xff] %v2150
      %2205 = vst [vmem:[%s258 + $0xd8] sm:$0xff] %v2155
      %2206 = vst [vmem:[%s258 + $0xe0] sm:$0xff] %v2160
      %2207 = vst [vmem:[%s258 + $0xe8] sm:$0xff] %v2165
      %2208 = vst [vmem:[%s258 + $0xf0] sm:$0xff] %v2170
      %2209 = vst [vmem:[%s258 + $0xf8] sm:$0xff] %v2175
      %s2210 = smul.u32 32, %s19
      %p2211 = scmp.lt.s32.totalorder %s2210, 63
      %s2212 = scalar_select %p2211, %s2210, 63
      %s2213 = smul.addr %s2212, 8
      %s2214 = scalar_lea.vmem %s6, %s2213
      // Predicated region
      $region45: #{apm_forward_pallas.7} parent=43 // pred_check
        %p2215 = pneg %p168
      $region46: #{apm_forward_pallas.7} parent=43 // pred_check_branch
        %2217 = sbr.rel (%p2215) target = $region48
      $region47: #{apm_forward_pallas.7} parent=43 // pred_region
        %s2218 = smul.u32 32, %s19
      $region48: #{apm_forward_pallas.7} parent=43 // pred_fallthru
        _
    $region44: #{apm_forward_pallas.7} parent=5 // pred_fallthru
      _
    %p2219 = scmp.le.s32.totalorder 2, %s14
    // Predicated region
    $region49: #{apm_forward_pallas.7} parent=5 // pred_check
      %p2220 = pneg %p2219
    $region50: #{apm_forward_pallas.7} parent=5 // pred_check_branch
      %2222 = sbr.rel (%p2220) target = $region52
    $region51: #{apm_forward_pallas.7} parent=5 // pred_region
      %s2223 = ssub.s32 %s14, 2
      // Predicated region
      $region53: #{apm_forward_pallas.7} parent=51 // pred_check
        %p2224 = pneg %p174
      $region54: #{apm_forward_pallas.7} parent=51 // pred_check_branch
        %2226 = sbr.rel (%p2224) target = $region56
      $region55: #{apm_forward_pallas.7} parent=51 // pred_region
        %s2227 = smul.u32 32, %s20
        %p2228 = scmp.lt.s32.totalorder %s2227, 63
        %s2229 = scalar_select %p2228, %s2227, 63
        %s2230 = smul.addr %s2229, 8
        %s2231 = scalar_lea.vmem %s6, %s2230
      $region56: #{apm_forward_pallas.7} parent=51 // pred_fallthru
        _
    $region52: #{apm_forward_pallas.7} parent=5 // pred_fallthru
      _
  $region6: #{apm_forward_pallas.7} parent=0 // loop_footer
    %s18 = sadd.s32 1, %s14
  $region7: #{apm_forward_pallas.7} parent=0 // loop_footer_branch
    %13 = sbr.rel target = $region3
  $region8: #{apm_forward_pallas.7} parent=0 // loop_exit
    _

// kernel: apm_forward_pallas.6
$region0: #{apm_forward_pallas.6}
  #allocation0 [shape = 'u32[]', space=smem, size = 0x4, offset = 0x4, fixed_abs, tag = 'smem constant byte address 0x4 - core index']
  #allocation1 [shape = 'u32[144,128]{1,0:T(1,128)}', space=vmem, size = 0x12000, scoped, tag = 'internal scratch']
  #allocation2 [shape = 'f32[1,1]{1,0:T(1,128)S(1)}', space=vmem, size = 0x200, scoped, tag = 'scoped memory for apm_forward_pallas.6']
  %s0 = inlined_call_operand.vmem [shape: f32[512,2304], index: 0, kind: input, shape index: {}]
  %s1 = inlined_call_operand.vmem [shape: f32[2304,128], index: 1, kind: input, shape index: {}]
  %s2 = inlined_call_operand.vmem [shape: f32[1,128], index: 2, kind: input, shape index: {}]
  %s3 = inlined_call_operand.vmem [shape: f32[128,128], index: 3, kind: input, shape index: {}]
  %s4 = inlined_call_operand.vmem [shape: f32[1,128], index: 4, kind: input, shape index: {}]
  %s5 = inlined_call_operand.vmem [shape: f32[128,128], index: 5, kind: input, shape index: {}]
  %s6 = inlined_call_operand.vmem [shape: f32[1,128], index: 6, kind: input, shape index: {}]
  %s7 = inlined_call_operand.vmem [shape: f32[128,128], index: 7, kind: input, shape index: {}]
  %s8 = inlined_call_operand.vmem [shape: f32[1,128], index: 8, kind: input, shape index: {}]
  %s9 = inlined_call_operand.<no memory space> [shape: f32[1,1], index: 9, kind: input, shape index: {}]
  %s10 = inlined_call_operand.vmem [shape: f32[512,128], index: 10, kind: output, shape index: {}]
  %s11 = sld [smem:[#allocation0]]
  $region73: #{apm_forward_pallas.6} parent=0
    _
  %s13 = ssub.s32 1, %s11
  %s14 = scalar_select 0, %s13, %s11
  %v15 = vstv %s9
  %16 = vst [vmem:[#allocation2] sm:$0x1] %v15
  loop: start=0, step=1, limit=4
  $region2: #{apm_forward_pallas.6} parent=0 // loop_pre_header
    _
  $region3: #{apm_forward_pallas.6} parent=0 // loop_header
    %s18 = sphi 0, %s22
    %p19 = scmp.ge.s32.totalorder %s18, 4
    %s28 = sphi 0, %s30
    %s31 = sphi 0, %s28
    %s32 = sphi 0, %s31
    %s48 = sphi 0, %s32
    %s52 = sphi 0, %s52
    %s54 = sphi 0, %s52
    %s55 = sphi 0, %s54
    %s69 = sphi 0, %s55
    %s73 = sphi 0, %s73
    %s75 = sphi 0, %s73
    %s76 = sphi 0, %s75
    %s90 = sphi 0, %s76
    %s94 = sphi 0, %s94
    %s96 = sphi 0, %s94
    %s97 = sphi 0, %s96
    %s111 = sphi 0, %s97
    %s115 = sphi 0, %s115
    %s117 = sphi 0, %s115
    %s118 = sphi 0, %s117
    %s132 = sphi 0, %s118
    %s136 = sphi 0, %s136
    %s138 = sphi 0, %s136
    %s139 = sphi 0, %s138
    %s153 = sphi 0, %s139
    %s157 = sphi 0, %s157
    %s159 = sphi 0, %s157
    %s160 = sphi 0, %s159
    %s174 = sphi 0, %s160
    %s178 = sphi 0, %s178
    %s180 = sphi 0, %s178
    %s181 = sphi 0, %s180
    %s195 = sphi 0, %s181
    %s199 = sphi 0, %s199
    %s201 = sphi 0, %s199
    %s202 = sphi 0, %s201
    %s216 = sphi 0, %s202
    %s220 = sphi 0, %s220
    %s222 = sphi 0, %s220
    %s223 = sphi 0, %s222
    %s237 = sphi 0, %s223
    %s243 = sphi 0, %s245
    %s246 = sphi 0, %s243
    %s247 = sphi 0, %s246
    %s263 = sphi 0, %s247
  $region4: #{apm_forward_pallas.6} parent=0 // loop_header_branch
    %21 = sbr.rel (%p19) target = $region8
  $region5: #{apm_forward_pallas.6} parent=0 // loop_body
    %s23 = ssub.s32 %s18, 1
    %s24 = ssub.s32 %s18, 2
    %s25 = sadd.s32 %s18, 1
    %s26 = ssub.s32 %s18, %s25
    %p27 = scmp.eq.s32.totalorder %s26, 0
    %s29 = sadd.s32 %s28, 1
    %s30 = scalar_select %p27, %s28, %s29
    %p33 = pneg %p27
    %p34 = scmp.eq.s32.totalorder %s18, 1
    %p35 = por %p33, %p34
    %p36 = scmp.ne.s32.totalorder %s28, %s31
    %p37 = scmp.eq.s32.totalorder %s18, 0
    %p38 = por %p36, %p37
    %p39 = scmp.ne.s32.totalorder %s28, %s31
    %p40 = scmp.eq.s32.totalorder %s23, 1
    %p41 = por %p39, %p40
    %p42 = scmp.ne.s32.totalorder %s31, %s32
    %p43 = scmp.eq.s32.totalorder %s23, 0
    %p44 = por %p42, %p43
    %p45 = scmp.ne.s32.totalorder %s31, %s32
    %p46 = scmp.eq.s32.totalorder %s24, 1
    %p47 = por %p45, %p46
    %p49 = scmp.ne.s32.totalorder %s32, %s48
    %p50 = scmp.eq.s32.totalorder %s24, 0
    %p51 = por %p49, %p50
    %s53 = sadd.s32 %s52, 1
    %p56 = scmp.eq.s32.totalorder %s18, 1
    %p57 = scmp.ne.s32.totalorder %s52, %s54
    %p58 = scmp.eq.s32.totalorder %s18, 0
    %p59 = por %p57, %p58
    %p60 = scmp.ne.s32.totalorder %s52, %s54
    %p61 = scmp.eq.s32.totalorder %s23, 1
    %p62 = por %p60, %p61
    %p63 = scmp.ne.s32.totalorder %s54, %s55
    %p64 = scmp.eq.s32.totalorder %s23, 0
    %p65 = por %p63, %p64
    %p66 = scmp.ne.s32.totalorder %s54, %s55
    %p67 = scmp.eq.s32.totalorder %s24, 1
    %p68 = por %p66, %p67
    %p70 = scmp.ne.s32.totalorder %s55, %s69
    %p71 = scmp.eq.s32.totalorder %s24, 0
    %p72 = por %p70, %p71
    %s74 = sadd.s32 %s73, 1
    %p77 = scmp.eq.s32.totalorder %s18, 1
    %p78 = scmp.ne.s32.totalorder %s73, %s75
    %p79 = scmp.eq.s32.totalorder %s18, 0
    %p80 = por %p78, %p79
    %p81 = scmp.ne.s32.totalorder %s73, %s75
    %p82 = scmp.eq.s32.totalorder %s23, 1
    %p83 = por %p81, %p82
    %p84 = scmp.ne.s32.totalorder %s75, %s76
    %p85 = scmp.eq.s32.totalorder %s23, 0
    %p86 = por %p84, %p85
    %p87 = scmp.ne.s32.totalorder %s75, %s76
    %p88 = scmp.eq.s32.totalorder %s24, 1
    %p89 = por %p87, %p88
    %p91 = scmp.ne.s32.totalorder %s76, %s90
    %p92 = scmp.eq.s32.totalorder %s24, 0
    %p93 = por %p91, %p92
    %s95 = sadd.s32 %s94, 1
    %p98 = scmp.eq.s32.totalorder %s18, 1
    %p99 = scmp.ne.s32.totalorder %s94, %s96
    %p100 = scmp.eq.s32.totalorder %s18, 0
    %p101 = por %p99, %p100
    %p102 = scmp.ne.s32.totalorder %s94, %s96
    %p103 = scmp.eq.s32.totalorder %s23, 1
    %p104 = por %p102, %p103
    %p105 = scmp.ne.s32.totalorder %s96, %s97
    %p106 = scmp.eq.s32.totalorder %s23, 0
    %p107 = por %p105, %p106
    %p108 = scmp.ne.s32.totalorder %s96, %s97
    %p109 = scmp.eq.s32.totalorder %s24, 1
    %p110 = por %p108, %p109
    %p112 = scmp.ne.s32.totalorder %s97, %s111
    %p113 = scmp.eq.s32.totalorder %s24, 0
    %p114 = por %p112, %p113
    %s116 = sadd.s32 %s115, 1
    %p119 = scmp.eq.s32.totalorder %s18, 1
    %p120 = scmp.ne.s32.totalorder %s115, %s117
    %p121 = scmp.eq.s32.totalorder %s18, 0
    %p122 = por %p120, %p121
    %p123 = scmp.ne.s32.totalorder %s115, %s117
    %p124 = scmp.eq.s32.totalorder %s23, 1
    %p125 = por %p123, %p124
    %p126 = scmp.ne.s32.totalorder %s117, %s118
    %p127 = scmp.eq.s32.totalorder %s23, 0
    %p128 = por %p126, %p127
    %p129 = scmp.ne.s32.totalorder %s117, %s118
    %p130 = scmp.eq.s32.totalorder %s24, 1
    %p131 = por %p129, %p130
    %p133 = scmp.ne.s32.totalorder %s118, %s132
    %p134 = scmp.eq.s32.totalorder %s24, 0
    %p135 = por %p133, %p134
    %s137 = sadd.s32 %s136, 1
    %p140 = scmp.eq.s32.totalorder %s18, 1
    %p141 = scmp.ne.s32.totalorder %s136, %s138
    %p142 = scmp.eq.s32.totalorder %s18, 0
    %p143 = por %p141, %p142
    %p144 = scmp.ne.s32.totalorder %s136, %s138
    %p145 = scmp.eq.s32.totalorder %s23, 1
    %p146 = por %p144, %p145
    %p147 = scmp.ne.s32.totalorder %s138, %s139
    %p148 = scmp.eq.s32.totalorder %s23, 0
    %p149 = por %p147, %p148
    %p150 = scmp.ne.s32.totalorder %s138, %s139
    %p151 = scmp.eq.s32.totalorder %s24, 1
    %p152 = por %p150, %p151
    %p154 = scmp.ne.s32.totalorder %s139, %s153
    %p155 = scmp.eq.s32.totalorder %s24, 0
    %p156 = por %p154, %p155
    %s158 = sadd.s32 %s157, 1
    %p161 = scmp.eq.s32.totalorder %s18, 1
    %p162 = scmp.ne.s32.totalorder %s157, %s159
    %p163 = scmp.eq.s32.totalorder %s18, 0
    %p164 = por %p162, %p163
    %p165 = scmp.ne.s32.totalorder %s157, %s159
    %p166 = scmp.eq.s32.totalorder %s23, 1
    %p167 = por %p165, %p166
    %p168 = scmp.ne.s32.totalorder %s159, %s160
    %p169 = scmp.eq.s32.totalorder %s23, 0
    %p170 = por %p168, %p169
    %p171 = scmp.ne.s32.totalorder %s159, %s160
    %p172 = scmp.eq.s32.totalorder %s24, 1
    %p173 = por %p171, %p172
    %p175 = scmp.ne.s32.totalorder %s160, %s174
    %p176 = scmp.eq.s32.totalorder %s24, 0
    %p177 = por %p175, %p176
    %s179 = sadd.s32 %s178, 1
    %p182 = scmp.eq.s32.totalorder %s18, 1
    %p183 = scmp.ne.s32.totalorder %s178, %s180
    %p184 = scmp.eq.s32.totalorder %s18, 0
    %p185 = por %p183, %p184
    %p186 = scmp.ne.s32.totalorder %s178, %s180
    %p187 = scmp.eq.s32.totalorder %s23, 1
    %p188 = por %p186, %p187
    %p189 = scmp.ne.s32.totalorder %s180, %s181
    %p190 = scmp.eq.s32.totalorder %s23, 0
    %p191 = por %p189, %p190
    %p192 = scmp.ne.s32.totalorder %s180, %s181
    %p193 = scmp.eq.s32.totalorder %s24, 1
    %p194 = por %p192, %p193
    %p196 = scmp.ne.s32.totalorder %s181, %s195
    %p197 = scmp.eq.s32.totalorder %s24, 0
    %p198 = por %p196, %p197
    %s200 = sadd.s32 %s199, 1
    %p203 = scmp.eq.s32.totalorder %s18, 1
    %p204 = scmp.ne.s32.totalorder %s199, %s201
    %p205 = scmp.eq.s32.totalorder %s18, 0
    %p206 = por %p204, %p205
    %p207 = scmp.ne.s32.totalorder %s199, %s201
    %p208 = scmp.eq.s32.totalorder %s23, 1
    %p209 = por %p207, %p208
    %p210 = scmp.ne.s32.totalorder %s201, %s202
    %p211 = scmp.eq.s32.totalorder %s23, 0
    %p212 = por %p210, %p211
    %p213 = scmp.ne.s32.totalorder %s201, %s202
    %p214 = scmp.eq.s32.totalorder %s24, 1
    %p215 = por %p213, %p214
    %p217 = scmp.ne.s32.totalorder %s202, %s216
    %p218 = scmp.eq.s32.totalorder %s24, 0
    %p219 = por %p217, %p218
    %s221 = sadd.s32 %s220, 1
    %p224 = scmp.eq.s32.totalorder %s18, 1
    %p225 = scmp.ne.s32.totalorder %s220, %s222
    %p226 = scmp.eq.s32.totalorder %s18, 0
    %p227 = por %p225, %p226
    %p228 = scmp.ne.s32.totalorder %s220, %s222
    %p229 = scmp.eq.s32.totalorder %s23, 1
    %p230 = por %p228, %p229
    %p231 = scmp.ne.s32.totalorder %s222, %s223
    %p232 = scmp.eq.s32.totalorder %s23, 0
    %p233 = por %p231, %p232
    %p234 = scmp.ne.s32.totalorder %s222, %s223
    %p235 = scmp.eq.s32.totalorder %s24, 1
    %p236 = por %p234, %p235
    %p238 = scmp.ne.s32.totalorder %s223, %s237
    %p239 = scmp.eq.s32.totalorder %s24, 0
    %p240 = por %p238, %p239
    %s241 = ssub.s32 %s18, %s25
    %p242 = scmp.eq.s32.totalorder %s241, 0
    %s244 = sadd.s32 %s243, 1
    %s245 = scalar_select %p242, %s243, %s244
    %p248 = pneg %p242
    %p249 = scmp.eq.s32.totalorder %s18, 1
    %p250 = por %p248, %p249
    %p251 = scmp.ne.s32.totalorder %s243, %s246
    %p252 = scmp.eq.s32.totalorder %s18, 0
    %p253 = por %p251, %p252
    %p254 = scmp.ne.s32.totalorder %s243, %s246
    %p255 = scmp.eq.s32.totalorder %s23, 1
    %p256 = por %p254, %p255
    %p257 = scmp.ne.s32.totalorder %s246, %s247
    %p258 = scmp.eq.s32.totalorder %s23, 0
    %p259 = por %p257, %p258
    %p260 = scmp.ne.s32.totalorder %s246, %s247
    %p261 = scmp.eq.s32.totalorder %s24, 1
    %p262 = por %p260, %p261
    %p264 = scmp.ne.s32.totalorder %s247, %s263
    %p265 = scmp.eq.s32.totalorder %s24, 0
    %p266 = por %p264, %p265
    %p267 = scmp.le.s32.totalorder 1, %s18
    %p268 = scmp.lt.s32.totalorder %s18, 3
    %p269 = pnand %p267, %p268
    %p270 = pneg %p269
    // Predicated region
    $region9: #{apm_forward_pallas.6} parent=5 // pred_check
      _
    $region10: #{apm_forward_pallas.6} parent=5 // pred_check_branch
      %272 = sbr.rel (%p269) target = $region12
    $region11: #{apm_forward_pallas.6} parent=5 // pred_region
      %s273 = ssub.s32 %s18, 1
      // Predicated region
      $region13: #{apm_forward_pallas.6} parent=11 // pred_check
        %p274 = pneg %p65
      $region14: #{apm_forward_pallas.6} parent=11 // pred_check_branch
        %276 = sbr.rel (%p274) target = $region16
      $region15: #{apm_forward_pallas.6} parent=11 // pred_region
        _
      $region16: #{apm_forward_pallas.6} parent=11 // pred_fallthru
        _
      // Predicated region
      $region17: #{apm_forward_pallas.6} parent=11 // pred_check
        %p277 = pneg %p86
      $region18: #{apm_forward_pallas.6} parent=11 // pred_check_branch
        %279 = sbr.rel (%p277) target = $region20
      $region19: #{apm_forward_pallas.6} parent=11 // pred_region
        _
      $region20: #{apm_forward_pallas.6} parent=11 // pred_fallthru
        _
      // Predicated region
      $region21: #{apm_forward_pallas.6} parent=11 // pred_check
        %p280 = pneg %p107
      $region22: #{apm_forward_pallas.6} parent=11 // pred_check_branch
        %282 = sbr.rel (%p280) target = $region24
      $region23: #{apm_forward_pallas.6} parent=11 // pred_region
        _
      $region24: #{apm_forward_pallas.6} parent=11 // pred_fallthru
        _
      // Predicated region
      $region25: #{apm_forward_pallas.6} parent=11 // pred_check
        %p283 = pneg %p128
      $region26: #{apm_forward_pallas.6} parent=11 // pred_check_branch
        %285 = sbr.rel (%p283) target = $region28
      $region27: #{apm_forward_pallas.6} parent=11 // pred_region
        _
      $region28: #{apm_forward_pallas.6} parent=11 // pred_fallthru
        _
      // Predicated region
      $region29: #{apm_forward_pallas.6} parent=11 // pred_check
        %p286 = pneg %p149
      $region30: #{apm_forward_pallas.6} parent=11 // pred_check_branch
        %288 = sbr.rel (%p286) target = $region32
      $region31: #{apm_forward_pallas.6} parent=11 // pred_region
        _
      $region32: #{apm_forward_pallas.6} parent=11 // pred_fallthru
        _
      // Predicated region
      $region33: #{apm_forward_pallas.6} parent=11 // pred_check
        %p289 = pneg %p170
      $region34: #{apm_forward_pallas.6} parent=11 // pred_check_branch
        %291 = sbr.rel (%p289) target = $region36
      $region35: #{apm_forward_pallas.6} parent=11 // pred_region
        _
      $region36: #{apm_forward_pallas.6} parent=11 // pred_fallthru
        _
      // Predicated region
      $region37: #{apm_forward_pallas.6} parent=11 // pred_check
        %p292 = pneg %p191
      $region38: #{apm_forward_pallas.6} parent=11 // pred_check_branch
        %294 = sbr.rel (%p292) target = $region40
      $region39: #{apm_forward_pallas.6} parent=11 // pred_region
        _
      $region40: #{apm_forward_pallas.6} parent=11 // pred_fallthru
        _
      // Predicated region
      $region41: #{apm_forward_pallas.6} parent=11 // pred_check
        %p295 = pneg %p212
      $region42: #{apm_forward_pallas.6} parent=11 // pred_check_branch
        %297 = sbr.rel (%p295) target = $region44
      $region43: #{apm_forward_pallas.6} parent=11 // pred_region
        _
      $region44: #{apm_forward_pallas.6} parent=11 // pred_fallthru
        _
      // Predicated region
      $region45: #{apm_forward_pallas.6} parent=11 // pred_check
        %p298 = pneg %p233
      $region46: #{apm_forward_pallas.6} parent=11 // pred_check_branch
        %300 = sbr.rel (%p298) target = $region48
      $region47: #{apm_forward_pallas.6} parent=11 // pred_region
        _
      $region48: #{apm_forward_pallas.6} parent=11 // pred_fallthru
        _
    $region12: #{apm_forward_pallas.6} parent=5 // pred_fallthru
      _
    %p301 = scmp.lt.s32.totalorder %s18, 2
    // Predicated region
    $region49: #{apm_forward_pallas.6} parent=5 // pred_check
      %p302 = pneg %p301
    $region50: #{apm_forward_pallas.6} parent=5 // pred_check_branch
      %304 = sbr.rel (%p302) target = $region52
    $region51: #{apm_forward_pallas.6} parent=5 // pred_region
      // Predicated region
      $region53: #{apm_forward_pallas.6} parent=51 // pred_check
        %p305 = pneg %p38
      $region54: #{apm_forward_pallas.6} parent=51 // pred_check_branch
        %307 = sbr.rel (%p305) target = $region56
      $region55: #{apm_forward_pallas.6} parent=51 // pred_region
        %s308 = smul.u32 32, %s18
        %p309 = scmp.lt.s32.totalorder %s308, 63
        %s310 = scalar_select %p309, %s308, 63
        %s311 = smul.addr %s310, 18
        %s312 = smul.addr %s311, 8
        %s313 = scalar_lea.vmem %s0, %s312
        %s314 = smul.u32 32, %s18
      $region56: #{apm_forward_pallas.6} parent=51 // pred_fallthru
        _
    $region52: #{apm_forward_pallas.6} parent=5 // pred_fallthru
      _
    %p315 = scmp.le.s32.totalorder 1, %s18
    %p316 = scmp.lt.s32.totalorder %s18, 3
    %p317 = pnand %p315, %p316
    %p318 = pneg %p317
    // Predicated region
    $region57: #{apm_forward_pallas.6} parent=5 // pred_check
      _
    $region58: #{apm_forward_pallas.6} parent=5 // pred_check_branch
      %320 = sbr.rel (%p317) target = $region60
    $region59: #{apm_forward_pallas.6} parent=5 // pred_region
      %s321 = ssub.s32 %s18, 1
      %s322 = smul.u32 32, %s23
      %p323 = scmp.lt.s32.totalorder %s322, 63
      %s324 = scalar_select %p323, %s322, 63
      %s325 = smul.addr %s324, 18
      %s326 = smul.addr %s325, 8
      %s327 = scalar_lea.vmem %s0, %s326
      %p328 = pneg %p44
      %p329 = pneg %p41
      %p330 = pneg %p65
      %p331 = pneg %p62
      %p332 = pneg %p86
      %p333 = pneg %p83
      %p334 = pneg %p107
      %p335 = pneg %p104
      %p336 = pneg %p128
      %p337 = pneg %p125
      %p338 = pneg %p149
      %p339 = pneg %p146
      %p340 = pneg %p170
      %p341 = pneg %p167
      %p342 = pneg %p191
      %p343 = pneg %p188
      %p344 = pneg %p212
      %p345 = pneg %p209
      %p346 = pneg %p233
      %p347 = pneg %p230
      %p348 = pneg %p259
      %p349 = pneg %p256
      %s350 = smul.u32 32, %s23
      %p351 = scmp.lt.s32.totalorder %s350, 63
      %s352 = scalar_select %p351, %s350, 63
      %s353 = smul.addr %s352, 8
      %s354 = scalar_lea.vmem %s10, %s353
      %s355 = smul.u32 32, %s23
      %p356 = scmp.lt.s32.totalorder %s355, 63
      %s357 = scalar_select %p356, %s355, 63
      %s358 = smul.addr %s357, 18
      %s359 = smul.addr %s358, 8
      %s360 = scalar_lea.vmem %s0, %s359
      %s361 = smul.u32 32, %s23
      %s362 = smul.u32 32, %s23
      %p363 = scmp.lt.s32.totalorder %s362, 63
      %s364 = scalar_select %p363, %s362, 63
      %s365 = smul.addr %s364, 8
      %s366 = scalar_lea.vmem %s10, %s365
      %s367 = smul.u32 32, %s23
      %v368 = vld [vmem:[%s360] sm:$0xff]
      %v369 = vld [vmem:[%s360 + $0x8] sm:$0xff]
      %v370 = vld [vmem:[%s360 + $0x10] sm:$0xff]
      %v371 = vld [vmem:[%s360 + $0x18] sm:$0xff]
      %v372 = vld [vmem:[%s360 + $0x20] sm:$0xff]
      %v373 = vld [vmem:[%s360 + $0x28] sm:$0xff]
      %v374 = vld [vmem:[%s360 + $0x30] sm:$0xff]
      %v375 = vld [vmem:[%s360 + $0x38] sm:$0xff]
      %v376 = vld [vmem:[%s360 + $0x40] sm:$0xff]
      %v377 = vld [vmem:[%s360 + $0x48] sm:$0xff]
      %v378 = vld [vmem:[%s360 + $0x50] sm:$0xff]
      %v379 = vld [vmem:[%s360 + $0x58] sm:$0xff]
      %v380 = vld [vmem:[%s360 + $0x60] sm:$0xff]
      %v381 = vld [vmem:[%s360 + $0x68] sm:$0xff]
      %v382 = vld [vmem:[%s360 + $0x70] sm:$0xff]
      %v383 = vld [vmem:[%s360 + $0x78] sm:$0xff]
      %v384 = vld [vmem:[%s360 + $0x80] sm:$0xff]
      %v385 = vld [vmem:[%s360 + $0x88] sm:$0xff]
      %v386 = vld [vmem:[%s360 + $0x90] sm:$0xff]
      %v387 = vld [vmem:[%s360 + $0x98] sm:$0xff]
      %v388 = vld [vmem:[%s360 + $0xa0] sm:$0xff]
      %v389 = vld [vmem:[%s360 + $0xa8] sm:$0xff]
      %v390 = vld [vmem:[%s360 + $0xb0] sm:$0xff]
      %v391 = vld [vmem:[%s360 + $0xb8] sm:$0xff]
      %v392 = vld [vmem:[%s360 + $0xc0] sm:$0xff]
      %v393 = vld [vmem:[%s360 + $0xc8] sm:$0xff]
      %v394 = vld [vmem:[%s360 + $0xd0] sm:$0xff]
      %v395 = vld [vmem:[%s360 + $0xd8] sm:$0xff]
      %v396 = vld [vmem:[%s360 + $0xe0] sm:$0xff]
      %v397 = vld [vmem:[%s360 + $0xe8] sm:$0xff]
      %v398 = vld [vmem:[%s360 + $0xf0] sm:$0xff]
      %v399 = vld [vmem:[%s360 + $0xf8] sm:$0xff]
      %v400 = vld [vmem:[%s360 + $0x100] sm:$0xff]
      %v401 = vld [vmem:[%s360 + $0x108] sm:$0xff]
      %v402 = vld [vmem:[%s360 + $0x110] sm:$0xff]
      %v403 = vld [vmem:[%s360 + $0x118] sm:$0xff]
      %v404 = vld [vmem:[%s360 + $0x120] sm:$0xff]
      %v405 = vld [vmem:[%s360 + $0x128] sm:$0xff]
      %v406 = vld [vmem:[%s360 + $0x130] sm:$0xff]
      %v407 = vld [vmem:[%s360 + $0x138] sm:$0xff]
      %v408 = vld [vmem:[%s360 + $0x140] sm:$0xff]
      %v409 = vld [vmem:[%s360 + $0x148] sm:$0xff]
      %v410 = vld [vmem:[%s360 + $0x150] sm:$0xff]
      %v411 = vld [vmem:[%s360 + $0x158] sm:$0xff]
      %v412 = vld [vmem:[%s360 + $0x160] sm:$0xff]
      %v413 = vld [vmem:[%s360 + $0x168] sm:$0xff]
      %v414 = vld [vmem:[%s360 + $0x170] sm:$0xff]
      %v415 = vld [vmem:[%s360 + $0x178] sm:$0xff]
      %v416 = vld [vmem:[%s360 + $0x180] sm:$0xff]
      %v417 = vld [vmem:[%s360 + $0x188] sm:$0xff]
      %v418 = vld [vmem:[%s360 + $0x190] sm:$0xff]
      %v419 = vld [vmem:[%s360 + $0x198] sm:$0xff]
      %v420 = vld [vmem:[%s360 + $0x1a0] sm:$0xff]
      %v421 = vld [vmem:[%s360 + $0x1a8] sm:$0xff]
      %v422 = vld [vmem:[%s360 + $0x1b0] sm:$0xff]
      %v423 = vld [vmem:[%s360 + $0x1b8] sm:$0xff]
      %v424 = vld [vmem:[%s360 + $0x1c0] sm:$0xff]
      %v425 = vld [vmem:[%s360 + $0x1c8] sm:$0xff]
      %v426 = vld [vmem:[%s360 + $0x1d0] sm:$0xff]
      %v427 = vld [vmem:[%s360 + $0x1d8] sm:$0xff]
      %v428 = vld [vmem:[%s360 + $0x1e0] sm:$0xff]
      %v429 = vld [vmem:[%s360 + $0x1e8] sm:$0xff]
      %v430 = vld [vmem:[%s360 + $0x1f0] sm:$0xff]
      %v431 = vld [vmem:[%s360 + $0x1f8] sm:$0xff]
      %v432 = vld [vmem:[%s360 + $0x200] sm:$0xff]
      %v433 = vld [vmem:[%s360 + $0x208] sm:$0xff]
      %v434 = vld [vmem:[%s360 + $0x210] sm:$0xff]
      %v435 = vld [vmem:[%s360 + $0x218] sm:$0xff]
      %v436 = vld [vmem:[%s360 + $0x220] sm:$0xff]
      %v437 = vld [vmem:[%s360 + $0x228] sm:$0xff]
      %v438 = vld [vmem:[%s360 + $0x230] sm:$0xff]
      %v439 = vld [vmem:[%s360 + $0x238] sm:$0xff]
      %v440 = vld [vmem:[%s360 + $0x240] sm:$0xff]
      %v441 = vld [vmem:[%s360 + $0x248] sm:$0xff]
      %v442 = vld [vmem:[%s360 + $0x250] sm:$0xff]
      %v443 = vld [vmem:[%s360 + $0x258] sm:$0xff]
      %v444 = vld [vmem:[%s360 + $0x260] sm:$0xff]
      %v445 = vld [vmem:[%s360 + $0x268] sm:$0xff]
      %v446 = vld [vmem:[%s360 + $0x270] sm:$0xff]
      %v447 = vld [vmem:[%s360 + $0x278] sm:$0xff]
      %v448 = vld [vmem:[%s360 + $0x280] sm:$0xff]
      %v449 = vld [vmem:[%s360 + $0x288] sm:$0xff]
      %v450 = vld [vmem:[%s360 + $0x290] sm:$0xff]
      %v451 = vld [vmem:[%s360 + $0x298] sm:$0xff]
      %v452 = vld [vmem:[%s360 + $0x2a0] sm:$0xff]
      %v453 = vld [vmem:[%s360 + $0x2a8] sm:$0xff]
      %v454 = vld [vmem:[%s360 + $0x2b0] sm:$0xff]
      %v455 = vld [vmem:[%s360 + $0x2b8] sm:$0xff]
      %v456 = vld [vmem:[%s360 + $0x2c0] sm:$0xff]
      %v457 = vld [vmem:[%s360 + $0x2c8] sm:$0xff]
      %v458 = vld [vmem:[%s360 + $0x2d0] sm:$0xff]
      %v459 = vld [vmem:[%s360 + $0x2d8] sm:$0xff]
      %v460 = vld [vmem:[%s360 + $0x2e0] sm:$0xff]
      %v461 = vld [vmem:[%s360 + $0x2e8] sm:$0xff]
      %v462 = vld [vmem:[%s360 + $0x2f0] sm:$0xff]
      %v463 = vld [vmem:[%s360 + $0x2f8] sm:$0xff]
      %v464 = vld [vmem:[%s360 + $0x300] sm:$0xff]
      %v465 = vld [vmem:[%s360 + $0x308] sm:$0xff]
      %v466 = vld [vmem:[%s360 + $0x310] sm:$0xff]
      %v467 = vld [vmem:[%s360 + $0x318] sm:$0xff]
      %v468 = vld [vmem:[%s360 + $0x320] sm:$0xff]
      %v469 = vld [vmem:[%s360 + $0x328] sm:$0xff]
      %v470 = vld [vmem:[%s360 + $0x330] sm:$0xff]
      %v471 = vld [vmem:[%s360 + $0x338] sm:$0xff]
      %v472 = vld [vmem:[%s360 + $0x340] sm:$0xff]
      %v473 = vld [vmem:[%s360 + $0x348] sm:$0xff]
      %v474 = vld [vmem:[%s360 + $0x350] sm:$0xff]
      %v475 = vld [vmem:[%s360 + $0x358] sm:$0xff]
      %v476 = vld [vmem:[%s360 + $0x360] sm:$0xff]
      %v477 = vld [vmem:[%s360 + $0x368] sm:$0xff]
      %v478 = vld [vmem:[%s360 + $0x370] sm:$0xff]
      %v479 = vld [vmem:[%s360 + $0x378] sm:$0xff]
      %v480 = vld [vmem:[%s360 + $0x380] sm:$0xff]
      %v481 = vld [vmem:[%s360 + $0x388] sm:$0xff]
      %v482 = vld [vmem:[%s360 + $0x390] sm:$0xff]
      %v483 = vld [vmem:[%s360 + $0x398] sm:$0xff]
      %v484 = vld [vmem:[%s360 + $0x3a0] sm:$0xff]
      %v485 = vld [vmem:[%s360 + $0x3a8] sm:$0xff]
      %v486 = vld [vmem:[%s360 + $0x3b0] sm:$0xff]
      %v487 = vld [vmem:[%s360 + $0x3b8] sm:$0xff]
      %v488 = vld [vmem:[%s360 + $0x3c0] sm:$0xff]
      %v489 = vld [vmem:[%s360 + $0x3c8] sm:$0xff]
      %v490 = vld [vmem:[%s360 + $0x3d0] sm:$0xff]
      %v491 = vld [vmem:[%s360 + $0x3d8] sm:$0xff]
      %v492 = vld [vmem:[%s360 + $0x3e0] sm:$0xff]
      %v493 = vld [vmem:[%s360 + $0x3e8] sm:$0xff]
      %v494 = vld [vmem:[%s360 + $0x3f0] sm:$0xff]
      %v495 = vld [vmem:[%s360 + $0x3f8] sm:$0xff]
      %v496 = vld [vmem:[%s360 + $0x400] sm:$0xff]
      %v497 = vld [vmem:[%s360 + $0x408] sm:$0xff]
      %v498 = vld [vmem:[%s360 + $0x410] sm:$0xff]
      %v499 = vld [vmem:[%s360 + $0x418] sm:$0xff]
      %v500 = vld [vmem:[%s360 + $0x420] sm:$0xff]
      %v501 = vld [vmem:[%s360 + $0x428] sm:$0xff]
      %v502 = vld [vmem:[%s360 + $0x430] sm:$0xff]
      %v503 = vld [vmem:[%s360 + $0x438] sm:$0xff]
      %v504 = vld [vmem:[%s360 + $0x440] sm:$0xff]
      %v505 = vld [vmem:[%s360 + $0x448] sm:$0xff]
      %v506 = vld [vmem:[%s360 + $0x450] sm:$0xff]
      %v507 = vld [vmem:[%s360 + $0x458] sm:$0xff]
      %v508 = vld [vmem:[%s360 + $0x460] sm:$0xff]
      %v509 = vld [vmem:[%s360 + $0x468] sm:$0xff]
      %v510 = vld [vmem:[%s360 + $0x470] sm:$0xff]
      %v511 = vld [vmem:[%s360 + $0x478] sm:$0xff]
      %v512 = vld [vmem:[%s360 + $0x480] sm:$0xff]
      %v513 = vld [vmem:[%s360 + $0x488] sm:$0xff]
      %v514 = vld [vmem:[%s360 + $0x490] sm:$0xff]
      %v515 = vld [vmem:[%s360 + $0x498] sm:$0xff]
      %v516 = vld [vmem:[%s360 + $0x4a0] sm:$0xff]
      %v517 = vld [vmem:[%s360 + $0x4a8] sm:$0xff]
      %v518 = vld [vmem:[%s360 + $0x4b0] sm:$0xff]
      %v519 = vld [vmem:[%s360 + $0x4b8] sm:$0xff]
      %v520 = vld [vmem:[%s360 + $0x4c0] sm:$0xff]
      %v521 = vld [vmem:[%s360 + $0x4c8] sm:$0xff]
      %v522 = vld [vmem:[%s360 + $0x4d0] sm:$0xff]
      %v523 = vld [vmem:[%s360 + $0x4d8] sm:$0xff]
      %v524 = vld [vmem:[%s360 + $0x4e0] sm:$0xff]
      %v525 = vld [vmem:[%s360 + $0x4e8] sm:$0xff]
      %v526 = vld [vmem:[%s360 + $0x4f0] sm:$0xff]
      %v527 = vld [vmem:[%s360 + $0x4f8] sm:$0xff]
      %v528 = vld [vmem:[%s360 + $0x500] sm:$0xff]
      %v529 = vld [vmem:[%s360 + $0x508] sm:$0xff]
      %v530 = vld [vmem:[%s360 + $0x510] sm:$0xff]
      %v531 = vld [vmem:[%s360 + $0x518] sm:$0xff]
      %v532 = vld [vmem:[%s360 + $0x520] sm:$0xff]
      %v533 = vld [vmem:[%s360 + $0x528] sm:$0xff]
      %v534 = vld [vmem:[%s360 + $0x530] sm:$0xff]
      %v535 = vld [vmem:[%s360 + $0x538] sm:$0xff]
      %v536 = vld [vmem:[%s360 + $0x540] sm:$0xff]
      %v537 = vld [vmem:[%s360 + $0x548] sm:$0xff]
      %v538 = vld [vmem:[%s360 + $0x550] sm:$0xff]
      %v539 = vld [vmem:[%s360 + $0x558] sm:$0xff]
      %v540 = vld [vmem:[%s360 + $0x560] sm:$0xff]
      %v541 = vld [vmem:[%s360 + $0x568] sm:$0xff]
      %v542 = vld [vmem:[%s360 + $0x570] sm:$0xff]
      %v543 = vld [vmem:[%s360 + $0x578] sm:$0xff]
      %v544 = vld [vmem:[%s360 + $0x580] sm:$0xff]
      %v545 = vld [vmem:[%s360 + $0x588] sm:$0xff]
      %v546 = vld [vmem:[%s360 + $0x590] sm:$0xff]
      %v547 = vld [vmem:[%s360 + $0x598] sm:$0xff]
      %v548 = vld [vmem:[%s360 + $0x5a0] sm:$0xff]
      %v549 = vld [vmem:[%s360 + $0x5a8] sm:$0xff]
      %v550 = vld [vmem:[%s360 + $0x5b0] sm:$0xff]
      %v551 = vld [vmem:[%s360 + $0x5b8] sm:$0xff]
      %v552 = vld [vmem:[%s360 + $0x5c0] sm:$0xff]
      %v553 = vld [vmem:[%s360 + $0x5c8] sm:$0xff]
      %v554 = vld [vmem:[%s360 + $0x5d0] sm:$0xff]
      %v555 = vld [vmem:[%s360 + $0x5d8] sm:$0xff]
      %v556 = vld [vmem:[%s360 + $0x5e0] sm:$0xff]
      %v557 = vld [vmem:[%s360 + $0x5e8] sm:$0xff]
      %v558 = vld [vmem:[%s360 + $0x5f0] sm:$0xff]
      %v559 = vld [vmem:[%s360 + $0x5f8] sm:$0xff]
      %v560 = vld [vmem:[%s360 + $0x600] sm:$0xff]
      %v561 = vld [vmem:[%s360 + $0x608] sm:$0xff]
      %v562 = vld [vmem:[%s360 + $0x610] sm:$0xff]
      %v563 = vld [vmem:[%s360 + $0x618] sm:$0xff]
      %v564 = vld [vmem:[%s360 + $0x620] sm:$0xff]
      %v565 = vld [vmem:[%s360 + $0x628] sm:$0xff]
      %v566 = vld [vmem:[%s360 + $0x630] sm:$0xff]
      %v567 = vld [vmem:[%s360 + $0x638] sm:$0xff]
      %v568 = vld [vmem:[%s360 + $0x640] sm:$0xff]
      %v569 = vld [vmem:[%s360 + $0x648] sm:$0xff]
      %v570 = vld [vmem:[%s360 + $0x650] sm:$0xff]
      %v571 = vld [vmem:[%s360 + $0x658] sm:$0xff]
      %v572 = vld [vmem:[%s360 + $0x660] sm:$0xff]
      %v573 = vld [vmem:[%s360 + $0x668] sm:$0xff]
      %v574 = vld [vmem:[%s360 + $0x670] sm:$0xff]
      %v575 = vld [vmem:[%s360 + $0x678] sm:$0xff]
      %v576 = vld [vmem:[%s360 + $0x680] sm:$0xff]
      %v577 = vld [vmem:[%s360 + $0x688] sm:$0xff]
      %v578 = vld [vmem:[%s360 + $0x690] sm:$0xff]
      %v579 = vld [vmem:[%s360 + $0x698] sm:$0xff]
      %v580 = vld [vmem:[%s360 + $0x6a0] sm:$0xff]
      %v581 = vld [vmem:[%s360 + $0x6a8] sm:$0xff]
      %v582 = vld [vmem:[%s360 + $0x6b0] sm:$0xff]
      %v583 = vld [vmem:[%s360 + $0x6b8] sm:$0xff]
      %v584 = vld [vmem:[%s360 + $0x6c0] sm:$0xff]
      %v585 = vld [vmem:[%s360 + $0x6c8] sm:$0xff]
      %v586 = vld [vmem:[%s360 + $0x6d0] sm:$0xff]
      %v587 = vld [vmem:[%s360 + $0x6d8] sm:$0xff]
      %v588 = vld [vmem:[%s360 + $0x6e0] sm:$0xff]
      %v589 = vld [vmem:[%s360 + $0x6e8] sm:$0xff]
      %v590 = vld [vmem:[%s360 + $0x6f0] sm:$0xff]
      %v591 = vld [vmem:[%s360 + $0x6f8] sm:$0xff]
      %v592 = vld [vmem:[%s360 + $0x700] sm:$0xff]
      %v593 = vld [vmem:[%s360 + $0x708] sm:$0xff]
      %v594 = vld [vmem:[%s360 + $0x710] sm:$0xff]
      %v595 = vld [vmem:[%s360 + $0x718] sm:$0xff]
      %v596 = vld [vmem:[%s360 + $0x720] sm:$0xff]
      %v597 = vld [vmem:[%s360 + $0x728] sm:$0xff]
      %v598 = vld [vmem:[%s360 + $0x730] sm:$0xff]
      %v599 = vld [vmem:[%s360 + $0x738] sm:$0xff]
      %v600 = vld [vmem:[%s360 + $0x740] sm:$0xff]
      %v601 = vld [vmem:[%s360 + $0x748] sm:$0xff]
      %v602 = vld [vmem:[%s360 + $0x750] sm:$0xff]
      %v603 = vld [vmem:[%s360 + $0x758] sm:$0xff]
      %v604 = vld [vmem:[%s360 + $0x760] sm:$0xff]
      %v605 = vld [vmem:[%s360 + $0x768] sm:$0xff]
      %v606 = vld [vmem:[%s360 + $0x770] sm:$0xff]
      %v607 = vld [vmem:[%s360 + $0x778] sm:$0xff]
      %v608 = vld [vmem:[%s360 + $0x780] sm:$0xff]
      %v609 = vld [vmem:[%s360 + $0x788] sm:$0xff]
      %v610 = vld [vmem:[%s360 + $0x790] sm:$0xff]
      %v611 = vld [vmem:[%s360 + $0x798] sm:$0xff]
      %v612 = vld [vmem:[%s360 + $0x7a0] sm:$0xff]
      %v613 = vld [vmem:[%s360 + $0x7a8] sm:$0xff]
      %v614 = vld [vmem:[%s360 + $0x7b0] sm:$0xff]
      %v615 = vld [vmem:[%s360 + $0x7b8] sm:$0xff]
      %v616 = vld [vmem:[%s360 + $0x7c0] sm:$0xff]
      %v617 = vld [vmem:[%s360 + $0x7c8] sm:$0xff]
      %v618 = vld [vmem:[%s360 + $0x7d0] sm:$0xff]
      %v619 = vld [vmem:[%s360 + $0x7d8] sm:$0xff]
      %v620 = vld [vmem:[%s360 + $0x7e0] sm:$0xff]
      %v621 = vld [vmem:[%s360 + $0x7e8] sm:$0xff]
      %v622 = vld [vmem:[%s360 + $0x7f0] sm:$0xff]
      %v623 = vld [vmem:[%s360 + $0x7f8] sm:$0xff]
      %v624 = vld [vmem:[%s360 + $0x800] sm:$0xff]
      %v625 = vld [vmem:[%s360 + $0x808] sm:$0xff]
      %v626 = vld [vmem:[%s360 + $0x810] sm:$0xff]
      %v627 = vld [vmem:[%s360 + $0x818] sm:$0xff]
      %v628 = vld [vmem:[%s360 + $0x820] sm:$0xff]
      %v629 = vld [vmem:[%s360 + $0x828] sm:$0xff]
      %v630 = vld [vmem:[%s360 + $0x830] sm:$0xff]
      %v631 = vld [vmem:[%s360 + $0x838] sm:$0xff]
      %v632 = vld [vmem:[%s360 + $0x840] sm:$0xff]
      %v633 = vld [vmem:[%s360 + $0x848] sm:$0xff]
      %v634 = vld [vmem:[%s360 + $0x850] sm:$0xff]
      %v635 = vld [vmem:[%s360 + $0x858] sm:$0xff]
      %v636 = vld [vmem:[%s360 + $0x860] sm:$0xff]
      %v637 = vld [vmem:[%s360 + $0x868] sm:$0xff]
      %v638 = vld [vmem:[%s360 + $0x870] sm:$0xff]
      %v639 = vld [vmem:[%s360 + $0x878] sm:$0xff]
      %v640 = vld [vmem:[%s360 + $0x880] sm:$0xff]
      %v641 = vld [vmem:[%s360 + $0x888] sm:$0xff]
      %v642 = vld [vmem:[%s360 + $0x890] sm:$0xff]
      %v643 = vld [vmem:[%s360 + $0x898] sm:$0xff]
      %v644 = vld [vmem:[%s360 + $0x8a0] sm:$0xff]
      %v645 = vld [vmem:[%s360 + $0x8a8] sm:$0xff]
      %v646 = vld [vmem:[%s360 + $0x8b0] sm:$0xff]
      %v647 = vld [vmem:[%s360 + $0x8b8] sm:$0xff]
      %v648 = vld [vmem:[%s360 + $0x8c0] sm:$0xff]
      %v649 = vld [vmem:[%s360 + $0x8c8] sm:$0xff]
      %v650 = vld [vmem:[%s360 + $0x8d0] sm:$0xff]
      %v651 = vld [vmem:[%s360 + $0x8d8] sm:$0xff]
      %v652 = vld [vmem:[%s360 + $0x8e0] sm:$0xff]
      %v653 = vld [vmem:[%s360 + $0x8e8] sm:$0xff]
      %v654 = vld [vmem:[%s360 + $0x8f0] sm:$0xff]
      %v655 = vld [vmem:[%s360 + $0x8f8] sm:$0xff]
      %v656 = vld [vmem:[%s360 + $0x900] sm:$0xff]
      %v657 = vld [vmem:[%s360 + $0x908] sm:$0xff]
      %v658 = vld [vmem:[%s360 + $0x910] sm:$0xff]
      %v659 = vld [vmem:[%s360 + $0x918] sm:$0xff]
      %v660 = vld [vmem:[%s360 + $0x920] sm:$0xff]
      %v661 = vld [vmem:[%s360 + $0x928] sm:$0xff]
      %v662 = vld [vmem:[%s360 + $0x930] sm:$0xff]
      %v663 = vld [vmem:[%s360 + $0x938] sm:$0xff]
      %v664 = vld [vmem:[%s360 + $0x940] sm:$0xff]
      %v665 = vld [vmem:[%s360 + $0x948] sm:$0xff]
      %v666 = vld [vmem:[%s360 + $0x950] sm:$0xff]
      %v667 = vld [vmem:[%s360 + $0x958] sm:$0xff]
      %v668 = vld [vmem:[%s360 + $0x960] sm:$0xff]
      %v669 = vld [vmem:[%s360 + $0x968] sm:$0xff]
      %v670 = vld [vmem:[%s360 + $0x970] sm:$0xff]
      %v671 = vld [vmem:[%s360 + $0x978] sm:$0xff]
      %v672 = vld [vmem:[%s360 + $0x980] sm:$0xff]
      %v673 = vld [vmem:[%s360 + $0x988] sm:$0xff]
      %v674 = vld [vmem:[%s360 + $0x990] sm:$0xff]
      %v675 = vld [vmem:[%s360 + $0x998] sm:$0xff]
      %v676 = vld [vmem:[%s360 + $0x9a0] sm:$0xff]
      %v677 = vld [vmem:[%s360 + $0x9a8] sm:$0xff]
      %v678 = vld [vmem:[%s360 + $0x9b0] sm:$0xff]
      %v679 = vld [vmem:[%s360 + $0x9b8] sm:$0xff]
      %v680 = vld [vmem:[%s360 + $0x9c0] sm:$0xff]
      %v681 = vld [vmem:[%s360 + $0x9c8] sm:$0xff]
      %v682 = vld [vmem:[%s360 + $0x9d0] sm:$0xff]
      %v683 = vld [vmem:[%s360 + $0x9d8] sm:$0xff]
      %v684 = vld [vmem:[%s360 + $0x9e0] sm:$0xff]
      %v685 = vld [vmem:[%s360 + $0x9e8] sm:$0xff]
      %v686 = vld [vmem:[%s360 + $0x9f0] sm:$0xff]
      %v687 = vld [vmem:[%s360 + $0x9f8] sm:$0xff]
      %v688 = vld [vmem:[%s360 + $0xa00] sm:$0xff]
      %v689 = vld [vmem:[%s360 + $0xa08] sm:$0xff]
      %v690 = vld [vmem:[%s360 + $0xa10] sm:$0xff]
      %v691 = vld [vmem:[%s360 + $0xa18] sm:$0xff]
      %v692 = vld [vmem:[%s360 + $0xa20] sm:$0xff]
      %v693 = vld [vmem:[%s360 + $0xa28] sm:$0xff]
      %v694 = vld [vmem:[%s360 + $0xa30] sm:$0xff]
      %v695 = vld [vmem:[%s360 + $0xa38] sm:$0xff]
      %v696 = vld [vmem:[%s360 + $0xa40] sm:$0xff]
      %v697 = vld [vmem:[%s360 + $0xa48] sm:$0xff]
      %v698 = vld [vmem:[%s360 + $0xa50] sm:$0xff]
      %v699 = vld [vmem:[%s360 + $0xa58] sm:$0xff]
      %v700 = vld [vmem:[%s360 + $0xa60] sm:$0xff]
      %v701 = vld [vmem:[%s360 + $0xa68] sm:$0xff]
      %v702 = vld [vmem:[%s360 + $0xa70] sm:$0xff]
      %v703 = vld [vmem:[%s360 + $0xa78] sm:$0xff]
      %v704 = vld [vmem:[%s360 + $0xa80] sm:$0xff]
      %v705 = vld [vmem:[%s360 + $0xa88] sm:$0xff]
      %v706 = vld [vmem:[%s360 + $0xa90] sm:$0xff]
      %v707 = vld [vmem:[%s360 + $0xa98] sm:$0xff]
      %v708 = vld [vmem:[%s360 + $0xaa0] sm:$0xff]
      %v709 = vld [vmem:[%s360 + $0xaa8] sm:$0xff]
      %v710 = vld [vmem:[%s360 + $0xab0] sm:$0xff]
      %v711 = vld [vmem:[%s360 + $0xab8] sm:$0xff]
      %v712 = vld [vmem:[%s360 + $0xac0] sm:$0xff]
      %v713 = vld [vmem:[%s360 + $0xac8] sm:$0xff]
      %v714 = vld [vmem:[%s360 + $0xad0] sm:$0xff]
      %v715 = vld [vmem:[%s360 + $0xad8] sm:$0xff]
      %v716 = vld [vmem:[%s360 + $0xae0] sm:$0xff]
      %v717 = vld [vmem:[%s360 + $0xae8] sm:$0xff]
      %v718 = vld [vmem:[%s360 + $0xaf0] sm:$0xff]
      %v719 = vld [vmem:[%s360 + $0xaf8] sm:$0xff]
      %v720 = vld [vmem:[%s360 + $0xb00] sm:$0xff]
      %v721 = vld [vmem:[%s360 + $0xb08] sm:$0xff]
      %v722 = vld [vmem:[%s360 + $0xb10] sm:$0xff]
      %v723 = vld [vmem:[%s360 + $0xb18] sm:$0xff]
      %v724 = vld [vmem:[%s360 + $0xb20] sm:$0xff]
      %v725 = vld [vmem:[%s360 + $0xb28] sm:$0xff]
      %v726 = vld [vmem:[%s360 + $0xb30] sm:$0xff]
      %v727 = vld [vmem:[%s360 + $0xb38] sm:$0xff]
      %v728 = vld [vmem:[%s360 + $0xb40] sm:$0xff]
      %v729 = vld [vmem:[%s360 + $0xb48] sm:$0xff]
      %v730 = vld [vmem:[%s360 + $0xb50] sm:$0xff]
      %v731 = vld [vmem:[%s360 + $0xb58] sm:$0xff]
      %v732 = vld [vmem:[%s360 + $0xb60] sm:$0xff]
      %v733 = vld [vmem:[%s360 + $0xb68] sm:$0xff]
      %v734 = vld [vmem:[%s360 + $0xb70] sm:$0xff]
      %v735 = vld [vmem:[%s360 + $0xb78] sm:$0xff]
      %v736 = vld [vmem:[%s360 + $0xb80] sm:$0xff]
      %v737 = vld [vmem:[%s360 + $0xb88] sm:$0xff]
      %v738 = vld [vmem:[%s360 + $0xb90] sm:$0xff]
      %v739 = vld [vmem:[%s360 + $0xb98] sm:$0xff]
      %v740 = vld [vmem:[%s360 + $0xba0] sm:$0xff]
      %v741 = vld [vmem:[%s360 + $0xba8] sm:$0xff]
      %v742 = vld [vmem:[%s360 + $0xbb0] sm:$0xff]
      %v743 = vld [vmem:[%s360 + $0xbb8] sm:$0xff]
      %v744 = vld [vmem:[%s360 + $0xbc0] sm:$0xff]
      %v745 = vld [vmem:[%s360 + $0xbc8] sm:$0xff]
      %v746 = vld [vmem:[%s360 + $0xbd0] sm:$0xff]
      %v747 = vld [vmem:[%s360 + $0xbd8] sm:$0xff]
      %v748 = vld [vmem:[%s360 + $0xbe0] sm:$0xff]
      %v749 = vld [vmem:[%s360 + $0xbe8] sm:$0xff]
      %v750 = vld [vmem:[%s360 + $0xbf0] sm:$0xff]
      %v751 = vld [vmem:[%s360 + $0xbf8] sm:$0xff]
      %v752 = vld [vmem:[%s360 + $0xc00] sm:$0xff]
      %v753 = vld [vmem:[%s360 + $0xc08] sm:$0xff]
      %v754 = vld [vmem:[%s360 + $0xc10] sm:$0xff]
      %v755 = vld [vmem:[%s360 + $0xc18] sm:$0xff]
      %v756 = vld [vmem:[%s360 + $0xc20] sm:$0xff]
      %v757 = vld [vmem:[%s360 + $0xc28] sm:$0xff]
      %v758 = vld [vmem:[%s360 + $0xc30] sm:$0xff]
      %v759 = vld [vmem:[%s360 + $0xc38] sm:$0xff]
      %v760 = vld [vmem:[%s360 + $0xc40] sm:$0xff]
      %v761 = vld [vmem:[%s360 + $0xc48] sm:$0xff]
      %v762 = vld [vmem:[%s360 + $0xc50] sm:$0xff]
      %v763 = vld [vmem:[%s360 + $0xc58] sm:$0xff]
      %v764 = vld [vmem:[%s360 + $0xc60] sm:$0xff]
      %v765 = vld [vmem:[%s360 + $0xc68] sm:$0xff]
      %v766 = vld [vmem:[%s360 + $0xc70] sm:$0xff]
      %v767 = vld [vmem:[%s360 + $0xc78] sm:$0xff]
      %v768 = vld [vmem:[%s360 + $0xc80] sm:$0xff]
      %v769 = vld [vmem:[%s360 + $0xc88] sm:$0xff]
      %v770 = vld [vmem:[%s360 + $0xc90] sm:$0xff]
      %v771 = vld [vmem:[%s360 + $0xc98] sm:$0xff]
      %v772 = vld [vmem:[%s360 + $0xca0] sm:$0xff]
      %v773 = vld [vmem:[%s360 + $0xca8] sm:$0xff]
      %v774 = vld [vmem:[%s360 + $0xcb0] sm:$0xff]
      %v775 = vld [vmem:[%s360 + $0xcb8] sm:$0xff]
      %v776 = vld [vmem:[%s360 + $0xcc0] sm:$0xff]
      %v777 = vld [vmem:[%s360 + $0xcc8] sm:$0xff]
      %v778 = vld [vmem:[%s360 + $0xcd0] sm:$0xff]
      %v779 = vld [vmem:[%s360 + $0xcd8] sm:$0xff]
      %v780 = vld [vmem:[%s360 + $0xce0] sm:$0xff]
      %v781 = vld [vmem:[%s360 + $0xce8] sm:$0xff]
      %v782 = vld [vmem:[%s360 + $0xcf0] sm:$0xff]
      %v783 = vld [vmem:[%s360 + $0xcf8] sm:$0xff]
      %v784 = vld [vmem:[%s360 + $0xd00] sm:$0xff]
      %v785 = vld [vmem:[%s360 + $0xd08] sm:$0xff]
      %v786 = vld [vmem:[%s360 + $0xd10] sm:$0xff]
      %v787 = vld [vmem:[%s360 + $0xd18] sm:$0xff]
      %v788 = vld [vmem:[%s360 + $0xd20] sm:$0xff]
      %v789 = vld [vmem:[%s360 + $0xd28] sm:$0xff]
      %v790 = vld [vmem:[%s360 + $0xd30] sm:$0xff]
      %v791 = vld [vmem:[%s360 + $0xd38] sm:$0xff]
      %v792 = vld [vmem:[%s360 + $0xd40] sm:$0xff]
      %v793 = vld [vmem:[%s360 + $0xd48] sm:$0xff]
      %v794 = vld [vmem:[%s360 + $0xd50] sm:$0xff]
      %v795 = vld [vmem:[%s360 + $0xd58] sm:$0xff]
      %v796 = vld [vmem:[%s360 + $0xd60] sm:$0xff]
      %v797 = vld [vmem:[%s360 + $0xd68] sm:$0xff]
      %v798 = vld [vmem:[%s360 + $0xd70] sm:$0xff]
      %v799 = vld [vmem:[%s360 + $0xd78] sm:$0xff]
      %v800 = vld [vmem:[%s360 + $0xd80] sm:$0xff]
      %v801 = vld [vmem:[%s360 + $0xd88] sm:$0xff]
      %v802 = vld [vmem:[%s360 + $0xd90] sm:$0xff]
      %v803 = vld [vmem:[%s360 + $0xd98] sm:$0xff]
      %v804 = vld [vmem:[%s360 + $0xda0] sm:$0xff]
      %v805 = vld [vmem:[%s360 + $0xda8] sm:$0xff]
      %v806 = vld [vmem:[%s360 + $0xdb0] sm:$0xff]
      %v807 = vld [vmem:[%s360 + $0xdb8] sm:$0xff]
      %v808 = vld [vmem:[%s360 + $0xdc0] sm:$0xff]
      %v809 = vld [vmem:[%s360 + $0xdc8] sm:$0xff]
      %v810 = vld [vmem:[%s360 + $0xdd0] sm:$0xff]
      %v811 = vld [vmem:[%s360 + $0xdd8] sm:$0xff]
      %v812 = vld [vmem:[%s360 + $0xde0] sm:$0xff]
      %v813 = vld [vmem:[%s360 + $0xde8] sm:$0xff]
      %v814 = vld [vmem:[%s360 + $0xdf0] sm:$0xff]
      %v815 = vld [vmem:[%s360 + $0xdf8] sm:$0xff]
      %v816 = vld [vmem:[%s360 + $0xe00] sm:$0xff]
      %v817 = vld [vmem:[%s360 + $0xe08] sm:$0xff]
      %v818 = vld [vmem:[%s360 + $0xe10] sm:$0xff]
      %v819 = vld [vmem:[%s360 + $0xe18] sm:$0xff]
      %v820 = vld [vmem:[%s360 + $0xe20] sm:$0xff]
      %v821 = vld [vmem:[%s360 + $0xe28] sm:$0xff]
      %v822 = vld [vmem:[%s360 + $0xe30] sm:$0xff]
      %v823 = vld [vmem:[%s360 + $0xe38] sm:$0xff]
      %v824 = vld [vmem:[%s360 + $0xe40] sm:$0xff]
      %v825 = vld [vmem:[%s360 + $0xe48] sm:$0xff]
      %v826 = vld [vmem:[%s360 + $0xe50] sm:$0xff]
      %v827 = vld [vmem:[%s360 + $0xe58] sm:$0xff]
      %v828 = vld [vmem:[%s360 + $0xe60] sm:$0xff]
      %v829 = vld [vmem:[%s360 + $0xe68] sm:$0xff]
      %v830 = vld [vmem:[%s360 + $0xe70] sm:$0xff]
      %v831 = vld [vmem:[%s360 + $0xe78] sm:$0xff]
      %v832 = vld [vmem:[%s360 + $0xe80] sm:$0xff]
      %v833 = vld [vmem:[%s360 + $0xe88] sm:$0xff]
      %v834 = vld [vmem:[%s360 + $0xe90] sm:$0xff]
      %v835 = vld [vmem:[%s360 + $0xe98] sm:$0xff]
      %v836 = vld [vmem:[%s360 + $0xea0] sm:$0xff]
      %v837 = vld [vmem:[%s360 + $0xea8] sm:$0xff]
      %v838 = vld [vmem:[%s360 + $0xeb0] sm:$0xff]
      %v839 = vld [vmem:[%s360 + $0xeb8] sm:$0xff]
      %v840 = vld [vmem:[%s360 + $0xec0] sm:$0xff]
      %v841 = vld [vmem:[%s360 + $0xec8] sm:$0xff]
      %v842 = vld [vmem:[%s360 + $0xed0] sm:$0xff]
      %v843 = vld [vmem:[%s360 + $0xed8] sm:$0xff]
      %v844 = vld [vmem:[%s360 + $0xee0] sm:$0xff]
      %v845 = vld [vmem:[%s360 + $0xee8] sm:$0xff]
      %v846 = vld [vmem:[%s360 + $0xef0] sm:$0xff]
      %v847 = vld [vmem:[%s360 + $0xef8] sm:$0xff]
      %v848 = vld [vmem:[%s360 + $0xf00] sm:$0xff]
      %v849 = vld [vmem:[%s360 + $0xf08] sm:$0xff]
      %v850 = vld [vmem:[%s360 + $0xf10] sm:$0xff]
      %v851 = vld [vmem:[%s360 + $0xf18] sm:$0xff]
      %v852 = vld [vmem:[%s360 + $0xf20] sm:$0xff]
      %v853 = vld [vmem:[%s360 + $0xf28] sm:$0xff]
      %v854 = vld [vmem:[%s360 + $0xf30] sm:$0xff]
      %v855 = vld [vmem:[%s360 + $0xf38] sm:$0xff]
      %v856 = vld [vmem:[%s360 + $0xf40] sm:$0xff]
      %v857 = vld [vmem:[%s360 + $0xf48] sm:$0xff]
      %v858 = vld [vmem:[%s360 + $0xf50] sm:$0xff]
      %v859 = vld [vmem:[%s360 + $0xf58] sm:$0xff]
      %v860 = vld [vmem:[%s360 + $0xf60] sm:$0xff]
      %v861 = vld [vmem:[%s360 + $0xf68] sm:$0xff]
      %v862 = vld [vmem:[%s360 + $0xf70] sm:$0xff]
      %v863 = vld [vmem:[%s360 + $0xf78] sm:$0xff]
      %v864 = vld [vmem:[%s360 + $0xf80] sm:$0xff]
      %v865 = vld [vmem:[%s360 + $0xf88] sm:$0xff]
      %v866 = vld [vmem:[%s360 + $0xf90] sm:$0xff]
      %v867 = vld [vmem:[%s360 + $0xf98] sm:$0xff]
      %v868 = vld [vmem:[%s360 + $0xfa0] sm:$0xff]
      %v869 = vld [vmem:[%s360 + $0xfa8] sm:$0xff]
      %v870 = vld [vmem:[%s360 + $0xfb0] sm:$0xff]
      %v871 = vld [vmem:[%s360 + $0xfb8] sm:$0xff]
      %v872 = vld [vmem:[%s360 + $0xfc0] sm:$0xff]
      %v873 = vld [vmem:[%s360 + $0xfc8] sm:$0xff]
      %v874 = vld [vmem:[%s360 + $0xfd0] sm:$0xff]
      %v875 = vld [vmem:[%s360 + $0xfd8] sm:$0xff]
      %v876 = vld [vmem:[%s360 + $0xfe0] sm:$0xff]
      %v877 = vld [vmem:[%s360 + $0xfe8] sm:$0xff]
      %v878 = vld [vmem:[%s360 + $0xff0] sm:$0xff]
      %v879 = vld [vmem:[%s360 + $0xff8] sm:$0xff]
      %v880 = vld [vmem:[%s360 + $0x1000] sm:$0xff]
      %v881 = vld [vmem:[%s360 + $0x1008] sm:$0xff]
      %v882 = vld [vmem:[%s360 + $0x1010] sm:$0xff]
      %v883 = vld [vmem:[%s360 + $0x1018] sm:$0xff]
      %v884 = vld [vmem:[%s360 + $0x1020] sm:$0xff]
      %v885 = vld [vmem:[%s360 + $0x1028] sm:$0xff]
      %v886 = vld [vmem:[%s360 + $0x1030] sm:$0xff]
      %v887 = vld [vmem:[%s360 + $0x1038] sm:$0xff]
      %v888 = vld [vmem:[%s360 + $0x1040] sm:$0xff]
      %v889 = vld [vmem:[%s360 + $0x1048] sm:$0xff]
      %v890 = vld [vmem:[%s360 + $0x1050] sm:$0xff]
      %v891 = vld [vmem:[%s360 + $0x1058] sm:$0xff]
      %v892 = vld [vmem:[%s360 + $0x1060] sm:$0xff]
      %v893 = vld [vmem:[%s360 + $0x1068] sm:$0xff]
      %v894 = vld [vmem:[%s360 + $0x1070] sm:$0xff]
      %v895 = vld [vmem:[%s360 + $0x1078] sm:$0xff]
      %v896 = vld [vmem:[%s360 + $0x1080] sm:$0xff]
      %v897 = vld [vmem:[%s360 + $0x1088] sm:$0xff]
      %v898 = vld [vmem:[%s360 + $0x1090] sm:$0xff]
      %v899 = vld [vmem:[%s360 + $0x1098] sm:$0xff]
      %v900 = vld [vmem:[%s360 + $0x10a0] sm:$0xff]
      %v901 = vld [vmem:[%s360 + $0x10a8] sm:$0xff]
      %v902 = vld [vmem:[%s360 + $0x10b0] sm:$0xff]
      %v903 = vld [vmem:[%s360 + $0x10b8] sm:$0xff]
      %v904 = vld [vmem:[%s360 + $0x10c0] sm:$0xff]
      %v905 = vld [vmem:[%s360 + $0x10c8] sm:$0xff]
      %v906 = vld [vmem:[%s360 + $0x10d0] sm:$0xff]
      %v907 = vld [vmem:[%s360 + $0x10d8] sm:$0xff]
      %v908 = vld [vmem:[%s360 + $0x10e0] sm:$0xff]
      %v909 = vld [vmem:[%s360 + $0x10e8] sm:$0xff]
      %v910 = vld [vmem:[%s360 + $0x10f0] sm:$0xff]
      %v911 = vld [vmem:[%s360 + $0x10f8] sm:$0xff]
      %v912 = vld [vmem:[%s360 + $0x1100] sm:$0xff]
      %v913 = vld [vmem:[%s360 + $0x1108] sm:$0xff]
      %v914 = vld [vmem:[%s360 + $0x1110] sm:$0xff]
      %v915 = vld [vmem:[%s360 + $0x1118] sm:$0xff]
      %v916 = vld [vmem:[%s360 + $0x1120] sm:$0xff]
      %v917 = vld [vmem:[%s360 + $0x1128] sm:$0xff]
      %v918 = vld [vmem:[%s360 + $0x1130] sm:$0xff]
      %v919 = vld [vmem:[%s360 + $0x1138] sm:$0xff]
      %v920 = vld [vmem:[%s360 + $0x1140] sm:$0xff]
      %v921 = vld [vmem:[%s360 + $0x1148] sm:$0xff]
      %v922 = vld [vmem:[%s360 + $0x1150] sm:$0xff]
      %v923 = vld [vmem:[%s360 + $0x1158] sm:$0xff]
      %v924 = vld [vmem:[%s360 + $0x1160] sm:$0xff]
      %v925 = vld [vmem:[%s360 + $0x1168] sm:$0xff]
      %v926 = vld [vmem:[%s360 + $0x1170] sm:$0xff]
      %v927 = vld [vmem:[%s360 + $0x1178] sm:$0xff]
      %v928 = vld [vmem:[%s360 + $0x1180] sm:$0xff]
      %v929 = vld [vmem:[%s360 + $0x1188] sm:$0xff]
      %v930 = vld [vmem:[%s360 + $0x1190] sm:$0xff]
      %v931 = vld [vmem:[%s360 + $0x1198] sm:$0xff]
      %v932 = vld [vmem:[%s360 + $0x11a0] sm:$0xff]
      %v933 = vld [vmem:[%s360 + $0x11a8] sm:$0xff]
      %v934 = vld [vmem:[%s360 + $0x11b0] sm:$0xff]
      %v935 = vld [vmem:[%s360 + $0x11b8] sm:$0xff]
      %v936 = vld [vmem:[%s360 + $0x11c0] sm:$0xff]
      %v937 = vld [vmem:[%s360 + $0x11c8] sm:$0xff]
      %v938 = vld [vmem:[%s360 + $0x11d0] sm:$0xff]
      %v939 = vld [vmem:[%s360 + $0x11d8] sm:$0xff]
      %v940 = vld [vmem:[%s360 + $0x11e0] sm:$0xff]
      %v941 = vld [vmem:[%s360 + $0x11e8] sm:$0xff]
      %v942 = vld [vmem:[%s360 + $0x11f0] sm:$0xff]
      %v943 = vld [vmem:[%s360 + $0x11f8] sm:$0xff]
      %v944 = vld [vmem:[%s1] sm:$0xff]
      %v945 = vld [vmem:[%s1 + $0x8] sm:$0xff]
      %v946 = vld [vmem:[%s1 + $0x10] sm:$0xff]
      %v947 = vld [vmem:[%s1 + $0x18] sm:$0xff]
      %v948 = vld [vmem:[%s1 + $0x20] sm:$0xff]
      %v949 = vld [vmem:[%s1 + $0x28] sm:$0xff]
      %v950 = vld [vmem:[%s1 + $0x30] sm:$0xff]
      %v951 = vld [vmem:[%s1 + $0x38] sm:$0xff]
      %v952 = vld [vmem:[%s1 + $0x40] sm:$0xff]
      %v953 = vld [vmem:[%s1 + $0x48] sm:$0xff]
      %v954 = vld [vmem:[%s1 + $0x50] sm:$0xff]
      %v955 = vld [vmem:[%s1 + $0x58] sm:$0xff]
      %v956 = vld [vmem:[%s1 + $0x60] sm:$0xff]
      %v957 = vld [vmem:[%s1 + $0x68] sm:$0xff]
      %v958 = vld [vmem:[%s1 + $0x70] sm:$0xff]
      %v959 = vld [vmem:[%s1 + $0x78] sm:$0xff]
      %v960 = vld [vmem:[%s1 + $0x80] sm:$0xff]
      %v961 = vld [vmem:[%s1 + $0x88] sm:$0xff]
      %v962 = vld [vmem:[%s1 + $0x90] sm:$0xff]
      %v963 = vld [vmem:[%s1 + $0x98] sm:$0xff]
      %v964 = vld [vmem:[%s1 + $0xa0] sm:$0xff]
      %v965 = vld [vmem:[%s1 + $0xa8] sm:$0xff]
      %v966 = vld [vmem:[%s1 + $0xb0] sm:$0xff]
      %v967 = vld [vmem:[%s1 + $0xb8] sm:$0xff]
      %v968 = vld [vmem:[%s1 + $0xc0] sm:$0xff]
      %v969 = vld [vmem:[%s1 + $0xc8] sm:$0xff]
      %v970 = vld [vmem:[%s1 + $0xd0] sm:$0xff]
      %v971 = vld [vmem:[%s1 + $0xd8] sm:$0xff]
      %v972 = vld [vmem:[%s1 + $0xe0] sm:$0xff]
      %v973 = vld [vmem:[%s1 + $0xe8] sm:$0xff]
      %v974 = vld [vmem:[%s1 + $0xf0] sm:$0xff]
      %v975 = vld [vmem:[%s1 + $0xf8] sm:$0xff]
      %v976 = vld [vmem:[%s1 + $0x100] sm:$0xff]
      %v977 = vld [vmem:[%s1 + $0x108] sm:$0xff]
      %v978 = vld [vmem:[%s1 + $0x110] sm:$0xff]
      %v979 = vld [vmem:[%s1 + $0x118] sm:$0xff]
      %v980 = vld [vmem:[%s1 + $0x120] sm:$0xff]
      %v981 = vld [vmem:[%s1 + $0x128] sm:$0xff]
      %v982 = vld [vmem:[%s1 + $0x130] sm:$0xff]
      %v983 = vld [vmem:[%s1 + $0x138] sm:$0xff]
      %v984 = vld [vmem:[%s1 + $0x140] sm:$0xff]
      %v985 = vld [vmem:[%s1 + $0x148] sm:$0xff]
      %v986 = vld [vmem:[%s1 + $0x150] sm:$0xff]
      %v987 = vld [vmem:[%s1 + $0x158] sm:$0xff]
      %v988 = vld [vmem:[%s1 + $0x160] sm:$0xff]
      %v989 = vld [vmem:[%s1 + $0x168] sm:$0xff]
      %v990 = vld [vmem:[%s1 + $0x170] sm:$0xff]
      %v991 = vld [vmem:[%s1 + $0x178] sm:$0xff]
      %v992 = vld [vmem:[%s1 + $0x180] sm:$0xff]
      %v993 = vld [vmem:[%s1 + $0x188] sm:$0xff]
      %v994 = vld [vmem:[%s1 + $0x190] sm:$0xff]
      %v995 = vld [vmem:[%s1 + $0x198] sm:$0xff]
      %v996 = vld [vmem:[%s1 + $0x1a0] sm:$0xff]
      %v997 = vld [vmem:[%s1 + $0x1a8] sm:$0xff]
      %v998 = vld [vmem:[%s1 + $0x1b0] sm:$0xff]
      %v999 = vld [vmem:[%s1 + $0x1b8] sm:$0xff]
      %v1000 = vld [vmem:[%s1 + $0x1c0] sm:$0xff]
      %v1001 = vld [vmem:[%s1 + $0x1c8] sm:$0xff]
      %v1002 = vld [vmem:[%s1 + $0x1d0] sm:$0xff]
      %v1003 = vld [vmem:[%s1 + $0x1d8] sm:$0xff]
      %v1004 = vld [vmem:[%s1 + $0x1e0] sm:$0xff]
      %v1005 = vld [vmem:[%s1 + $0x1e8] sm:$0xff]
      %v1006 = vld [vmem:[%s1 + $0x1f0] sm:$0xff]
      %v1007 = vld [vmem:[%s1 + $0x1f8] sm:$0xff]
      %v1008 = vld [vmem:[%s1 + $0x200] sm:$0xff]
      %v1009 = vld [vmem:[%s1 + $0x208] sm:$0xff]
      %v1010 = vld [vmem:[%s1 + $0x210] sm:$0xff]
      %v1011 = vld [vmem:[%s1 + $0x218] sm:$0xff]
      %v1012 = vld [vmem:[%s1 + $0x220] sm:$0xff]
      %v1013 = vld [vmem:[%s1 + $0x228] sm:$0xff]
      %v1014 = vld [vmem:[%s1 + $0x230] sm:$0xff]
      %v1015 = vld [vmem:[%s1 + $0x238] sm:$0xff]
      %v1016 = vld [vmem:[%s1 + $0x240] sm:$0xff]
      %v1017 = vld [vmem:[%s1 + $0x248] sm:$0xff]
      %v1018 = vld [vmem:[%s1 + $0x250] sm:$0xff]
      %v1019 = vld [vmem:[%s1 + $0x258] sm:$0xff]
      %v1020 = vld [vmem:[%s1 + $0x260] sm:$0xff]
      %v1021 = vld [vmem:[%s1 + $0x268] sm:$0xff]
      %v1022 = vld [vmem:[%s1 + $0x270] sm:$0xff]
      %v1023 = vld [vmem:[%s1 + $0x278] sm:$0xff]
      %v1024 = vld [vmem:[%s1 + $0x280] sm:$0xff]
      %v1025 = vld [vmem:[%s1 + $0x288] sm:$0xff]
      %v1026 = vld [vmem:[%s1 + $0x290] sm:$0xff]
      %v1027 = vld [vmem:[%s1 + $0x298] sm:$0xff]
      %v1028 = vld [vmem:[%s1 + $0x2a0] sm:$0xff]
      %v1029 = vld [vmem:[%s1 + $0x2a8] sm:$0xff]
      %v1030 = vld [vmem:[%s1 + $0x2b0] sm:$0xff]
      %v1031 = vld [vmem:[%s1 + $0x2b8] sm:$0xff]
      %v1032 = vld [vmem:[%s1 + $0x2c0] sm:$0xff]
      %v1033 = vld [vmem:[%s1 + $0x2c8] sm:$0xff]
      %v1034 = vld [vmem:[%s1 + $0x2d0] sm:$0xff]
      %v1035 = vld [vmem:[%s1 + $0x2d8] sm:$0xff]
      %v1036 = vld [vmem:[%s1 + $0x2e0] sm:$0xff]
      %v1037 = vld [vmem:[%s1 + $0x2e8] sm:$0xff]
      %v1038 = vld [vmem:[%s1 + $0x2f0] sm:$0xff]
      %v1039 = vld [vmem:[%s1 + $0x2f8] sm:$0xff]
      %v1040 = vld [vmem:[%s1 + $0x300] sm:$0xff]
      %v1041 = vld [vmem:[%s1 + $0x308] sm:$0xff]
      %v1042 = vld [vmem:[%s1 + $0x310] sm:$0xff]
      %v1043 = vld [vmem:[%s1 + $0x318] sm:$0xff]
      %v1044 = vld [vmem:[%s1 + $0x320] sm:$0xff]
      %v1045 = vld [vmem:[%s1 + $0x328] sm:$0xff]
      %v1046 = vld [vmem:[%s1 + $0x330] sm:$0xff]
      %v1047 = vld [vmem:[%s1 + $0x338] sm:$0xff]
      %v1048 = vld [vmem:[%s1 + $0x340] sm:$0xff]
      %v1049 = vld [vmem:[%s1 + $0x348] sm:$0xff]
      %v1050 = vld [vmem:[%s1 + $0x350] sm:$0xff]
      %v1051 = vld [vmem:[%s1 + $0x358] sm:$0xff]
      %v1052 = vld [vmem:[%s1 + $0x360] sm:$0xff]
      %v1053 = vld [vmem:[%s1 + $0x368] sm:$0xff]
      %v1054 = vld [vmem:[%s1 + $0x370] sm:$0xff]
      %v1055 = vld [vmem:[%s1 + $0x378] sm:$0xff]
      %v1056 = vld [vmem:[%s1 + $0x380] sm:$0xff]
      %v1057 = vld [vmem:[%s1 + $0x388] sm:$0xff]
      %v1058 = vld [vmem:[%s1 + $0x390] sm:$0xff]
      %v1059 = vld [vmem:[%s1 + $0x398] sm:$0xff]
      %v1060 = vld [vmem:[%s1 + $0x3a0] sm:$0xff]
      %v1061 = vld [vmem:[%s1 + $0x3a8] sm:$0xff]
      %v1062 = vld [vmem:[%s1 + $0x3b0] sm:$0xff]
      %v1063 = vld [vmem:[%s1 + $0x3b8] sm:$0xff]
      %v1064 = vld [vmem:[%s1 + $0x3c0] sm:$0xff]
      %v1065 = vld [vmem:[%s1 + $0x3c8] sm:$0xff]
      %v1066 = vld [vmem:[%s1 + $0x3d0] sm:$0xff]
      %v1067 = vld [vmem:[%s1 + $0x3d8] sm:$0xff]
      %v1068 = vld [vmem:[%s1 + $0x3e0] sm:$0xff]
      %v1069 = vld [vmem:[%s1 + $0x3e8] sm:$0xff]
      %v1070 = vld [vmem:[%s1 + $0x3f0] sm:$0xff]
      %v1071 = vld [vmem:[%s1 + $0x3f8] sm:$0xff]
      %v1072 = vld [vmem:[%s1 + $0x400] sm:$0xff]
      %v1073 = vld [vmem:[%s1 + $0x408] sm:$0xff]
      %v1074 = vld [vmem:[%s1 + $0x410] sm:$0xff]
      %v1075 = vld [vmem:[%s1 + $0x418] sm:$0xff]
      %v1076 = vld [vmem:[%s1 + $0x420] sm:$0xff]
      %v1077 = vld [vmem:[%s1 + $0x428] sm:$0xff]
      %v1078 = vld [vmem:[%s1 + $0x430] sm:$0xff]
      %v1079 = vld [vmem:[%s1 + $0x438] sm:$0xff]
      %v1080 = vld [vmem:[%s1 + $0x440] sm:$0xff]
      %v1081 = vld [vmem:[%s1 + $0x448] sm:$0xff]
      %v1082 = vld [vmem:[%s1 + $0x450] sm:$0xff]
      %v1083 = vld [vmem:[%s1 + $0x458] sm:$0xff]
      %v1084 = vld [vmem:[%s1 + $0x460] sm:$0xff]
      %v1085 = vld [vmem:[%s1 + $0x468] sm:$0xff]
      %v1086 = vld [vmem:[%s1 + $0x470] sm:$0xff]
      %v1087 = vld [vmem:[%s1 + $0x478] sm:$0xff]
      %v1088 = vld [vmem:[%s1 + $0x480] sm:$0xff]
      %v1089 = vld [vmem:[%s1 + $0x488] sm:$0xff]
      %v1090 = vld [vmem:[%s1 + $0x490] sm:$0xff]
      %v1091 = vld [vmem:[%s1 + $0x498] sm:$0xff]
      %v1092 = vld [vmem:[%s1 + $0x4a0] sm:$0xff]
      %v1093 = vld [vmem:[%s1 + $0x4a8] sm:$0xff]
      %v1094 = vld [vmem:[%s1 + $0x4b0] sm:$0xff]
      %v1095 = vld [vmem:[%s1 + $0x4b8] sm:$0xff]
      %v1096 = vld [vmem:[%s1 + $0x4c0] sm:$0xff]
      %v1097 = vld [vmem:[%s1 + $0x4c8] sm:$0xff]
      %v1098 = vld [vmem:[%s1 + $0x4d0] sm:$0xff]
      %v1099 = vld [vmem:[%s1 + $0x4d8] sm:$0xff]
      %v1100 = vld [vmem:[%s1 + $0x4e0] sm:$0xff]
      %v1101 = vld [vmem:[%s1 + $0x4e8] sm:$0xff]
      %v1102 = vld [vmem:[%s1 + $0x4f0] sm:$0xff]
      %v1103 = vld [vmem:[%s1 + $0x4f8] sm:$0xff]
      %v1104 = vld [vmem:[%s1 + $0x500] sm:$0xff]
      %v1105 = vld [vmem:[%s1 + $0x508] sm:$0xff]
      %v1106 = vld [vmem:[%s1 + $0x510] sm:$0xff]
      %v1107 = vld [vmem:[%s1 + $0x518] sm:$0xff]
      %v1108 = vld [vmem:[%s1 + $0x520] sm:$0xff]
      %v1109 = vld [vmem:[%s1 + $0x528] sm:$0xff]
      %v1110 = vld [vmem:[%s1 + $0x530] sm:$0xff]
      %v1111 = vld [vmem:[%s1 + $0x538] sm:$0xff]
      %v1112 = vld [vmem:[%s1 + $0x540] sm:$0xff]
      %v1113 = vld [vmem:[%s1 + $0x548] sm:$0xff]
      %v1114 = vld [vmem:[%s1 + $0x550] sm:$0xff]
      %v1115 = vld [vmem:[%s1 + $0x558] sm:$0xff]
      %v1116 = vld [vmem:[%s1 + $0x560] sm:$0xff]
      %v1117 = vld [vmem:[%s1 + $0x568] sm:$0xff]
      %v1118 = vld [vmem:[%s1 + $0x570] sm:$0xff]
      %v1119 = vld [vmem:[%s1 + $0x578] sm:$0xff]
      %v1120 = vld [vmem:[%s1 + $0x580] sm:$0xff]
      %v1121 = vld [vmem:[%s1 + $0x588] sm:$0xff]
      %v1122 = vld [vmem:[%s1 + $0x590] sm:$0xff]
      %v1123 = vld [vmem:[%s1 + $0x598] sm:$0xff]
      %v1124 = vld [vmem:[%s1 + $0x5a0] sm:$0xff]
      %v1125 = vld [vmem:[%s1 + $0x5a8] sm:$0xff]
      %v1126 = vld [vmem:[%s1 + $0x5b0] sm:$0xff]
      %v1127 = vld [vmem:[%s1 + $0x5b8] sm:$0xff]
      %v1128 = vld [vmem:[%s1 + $0x5c0] sm:$0xff]
      %v1129 = vld [vmem:[%s1 + $0x5c8] sm:$0xff]
      %v1130 = vld [vmem:[%s1 + $0x5d0] sm:$0xff]
      %v1131 = vld [vmem:[%s1 + $0x5d8] sm:$0xff]
      %v1132 = vld [vmem:[%s1 + $0x5e0] sm:$0xff]
      %v1133 = vld [vmem:[%s1 + $0x5e8] sm:$0xff]
      %v1134 = vld [vmem:[%s1 + $0x5f0] sm:$0xff]
      %v1135 = vld [vmem:[%s1 + $0x5f8] sm:$0xff]
      %v1136 = vld [vmem:[%s1 + $0x600] sm:$0xff]
      %v1137 = vld [vmem:[%s1 + $0x608] sm:$0xff]
      %v1138 = vld [vmem:[%s1 + $0x610] sm:$0xff]
      %v1139 = vld [vmem:[%s1 + $0x618] sm:$0xff]
      %v1140 = vld [vmem:[%s1 + $0x620] sm:$0xff]
      %v1141 = vld [vmem:[%s1 + $0x628] sm:$0xff]
      %v1142 = vld [vmem:[%s1 + $0x630] sm:$0xff]
      %v1143 = vld [vmem:[%s1 + $0x638] sm:$0xff]
      %v1144 = vld [vmem:[%s1 + $0x640] sm:$0xff]
      %v1145 = vld [vmem:[%s1 + $0x648] sm:$0xff]
      %v1146 = vld [vmem:[%s1 + $0x650] sm:$0xff]
      %v1147 = vld [vmem:[%s1 + $0x658] sm:$0xff]
      %v1148 = vld [vmem:[%s1 + $0x660] sm:$0xff]
      %v1149 = vld [vmem:[%s1 + $0x668] sm:$0xff]
      %v1150 = vld [vmem:[%s1 + $0x670] sm:$0xff]
      %v1151 = vld [vmem:[%s1 + $0x678] sm:$0xff]
      %v1152 = vld [vmem:[%s1 + $0x680] sm:$0xff]
      %v1153 = vld [vmem:[%s1 + $0x688] sm:$0xff]
      %v1154 = vld [vmem:[%s1 + $0x690] sm:$0xff]
      %v1155 = vld [vmem:[%s1 + $0x698] sm:$0xff]
      %v1156 = vld [vmem:[%s1 + $0x6a0] sm:$0xff]
      %v1157 = vld [vmem:[%s1 + $0x6a8] sm:$0xff]
      %v1158 = vld [vmem:[%s1 + $0x6b0] sm:$0xff]
      %v1159 = vld [vmem:[%s1 + $0x6b8] sm:$0xff]
      %v1160 = vld [vmem:[%s1 + $0x6c0] sm:$0xff]
      %v1161 = vld [vmem:[%s1 + $0x6c8] sm:$0xff]
      %v1162 = vld [vmem:[%s1 + $0x6d0] sm:$0xff]
      %v1163 = vld [vmem:[%s1 + $0x6d8] sm:$0xff]
      %v1164 = vld [vmem:[%s1 + $0x6e0] sm:$0xff]
      %v1165 = vld [vmem:[%s1 + $0x6e8] sm:$0xff]
      %v1166 = vld [vmem:[%s1 + $0x6f0] sm:$0xff]
      %v1167 = vld [vmem:[%s1 + $0x6f8] sm:$0xff]
      %v1168 = vld [vmem:[%s1 + $0x700] sm:$0xff]
      %v1169 = vld [vmem:[%s1 + $0x708] sm:$0xff]
      %v1170 = vld [vmem:[%s1 + $0x710] sm:$0xff]
      %v1171 = vld [vmem:[%s1 + $0x718] sm:$0xff]
      %v1172 = vld [vmem:[%s1 + $0x720] sm:$0xff]
      %v1173 = vld [vmem:[%s1 + $0x728] sm:$0xff]
      %v1174 = vld [vmem:[%s1 + $0x730] sm:$0xff]
      %v1175 = vld [vmem:[%s1 + $0x738] sm:$0xff]
      %v1176 = vld [vmem:[%s1 + $0x740] sm:$0xff]
      %v1177 = vld [vmem:[%s1 + $0x748] sm:$0xff]
      %v1178 = vld [vmem:[%s1 + $0x750] sm:$0xff]
      %v1179 = vld [vmem:[%s1 + $0x758] sm:$0xff]
      %v1180 = vld [vmem:[%s1 + $0x760] sm:$0xff]
      %v1181 = vld [vmem:[%s1 + $0x768] sm:$0xff]
      %v1182 = vld [vmem:[%s1 + $0x770] sm:$0xff]
      %v1183 = vld [vmem:[%s1 + $0x778] sm:$0xff]
      %v1184 = vld [vmem:[%s1 + $0x780] sm:$0xff]
      %v1185 = vld [vmem:[%s1 + $0x788] sm:$0xff]
      %v1186 = vld [vmem:[%s1 + $0x790] sm:$0xff]
      %v1187 = vld [vmem:[%s1 + $0x798] sm:$0xff]
      %v1188 = vld [vmem:[%s1 + $0x7a0] sm:$0xff]
      %v1189 = vld [vmem:[%s1 + $0x7a8] sm:$0xff]
      %v1190 = vld [vmem:[%s1 + $0x7b0] sm:$0xff]
      %v1191 = vld [vmem:[%s1 + $0x7b8] sm:$0xff]
      %v1192 = vld [vmem:[%s1 + $0x7c0] sm:$0xff]
      %v1193 = vld [vmem:[%s1 + $0x7c8] sm:$0xff]
      %v1194 = vld [vmem:[%s1 + $0x7d0] sm:$0xff]
      %v1195 = vld [vmem:[%s1 + $0x7d8] sm:$0xff]
      %v1196 = vld [vmem:[%s1 + $0x7e0] sm:$0xff]
      %v1197 = vld [vmem:[%s1 + $0x7e8] sm:$0xff]
      %v1198 = vld [vmem:[%s1 + $0x7f0] sm:$0xff]
      %v1199 = vld [vmem:[%s1 + $0x7f8] sm:$0xff]
      %v1200 = vld [vmem:[%s1 + $0x800] sm:$0xff]
      %v1201 = vld [vmem:[%s1 + $0x808] sm:$0xff]
      %v1202 = vld [vmem:[%s1 + $0x810] sm:$0xff]
      %v1203 = vld [vmem:[%s1 + $0x818] sm:$0xff]
      %v1204 = vld [vmem:[%s1 + $0x820] sm:$0xff]
      %v1205 = vld [vmem:[%s1 + $0x828] sm:$0xff]
      %v1206 = vld [vmem:[%s1 + $0x830] sm:$0xff]
      %v1207 = vld [vmem:[%s1 + $0x838] sm:$0xff]
      %v1208 = vld [vmem:[%s1 + $0x840] sm:$0xff]
      %v1209 = vld [vmem:[%s1 + $0x848] sm:$0xff]
      %v1210 = vld [vmem:[%s1 + $0x850] sm:$0xff]
      %v1211 = vld [vmem:[%s1 + $0x858] sm:$0xff]
      %v1212 = vld [vmem:[%s1 + $0x860] sm:$0xff]
      %v1213 = vld [vmem:[%s1 + $0x868] sm:$0xff]
      %v1214 = vld [vmem:[%s1 + $0x870] sm:$0xff]
      %v1215 = vld [vmem:[%s1 + $0x878] sm:$0xff]
      %v1216 = vld [vmem:[%s1 + $0x880] sm:$0xff]
      %v1217 = vld [vmem:[%s1 + $0x888] sm:$0xff]
      %v1218 = vld [vmem:[%s1 + $0x890] sm:$0xff]
      %v1219 = vld [vmem:[%s1 + $0x898] sm:$0xff]
      %v1220 = vld [vmem:[%s1 + $0x8a0] sm:$0xff]
      %v1221 = vld [vmem:[%s1 + $0x8a8] sm:$0xff]
      %v1222 = vld [vmem:[%s1 + $0x8b0] sm:$0xff]
      %v1223 = vld [vmem:[%s1 + $0x8b8] sm:$0xff]
      %v1224 = vld [vmem:[%s1 + $0x8c0] sm:$0xff]
      %v1225 = vld [vmem:[%s1 + $0x8c8] sm:$0xff]
      %v1226 = vld [vmem:[%s1 + $0x8d0] sm:$0xff]
      %v1227 = vld [vmem:[%s1 + $0x8d8] sm:$0xff]
      %v1228 = vld [vmem:[%s1 + $0x8e0] sm:$0xff]
      %v1229 = vld [vmem:[%s1 + $0x8e8] sm:$0xff]
      %v1230 = vld [vmem:[%s1 + $0x8f0] sm:$0xff]
      %v1231 = vld [vmem:[%s1 + $0x8f8] sm:$0xff]
      %v1232 = vld [vmem:[%s2] sm:$0x1]
      %v1234 = vlaneseq
      %v1235 = vshrl.u32 %v1234, 7
      %v1236 = vsub.s32 0, %v1235
      %v1237 = vrot.slane %v1232, %v1236
      %1239 = vmatprep.subr.mxu0 0.0
      %1240 = vmatpush1.msra.mxu0 %v944
      %1241 = vmatprep.subr.mxu0 0.0
      %1242 = vmatpush1.msra.mxu0 %v945
      %1243 = vmatprep.subr.mxu0 0.0
      %1244 = vmatpush1.msra.mxu0 %v946
      %1245 = vmatprep.subr.mxu0 0.0
      %1246 = vmatpush1.msra.mxu0 %v947
      %1247 = vmatprep.subr.mxu0 0.0
      %1248 = vmatpush1.msra.mxu0 %v948
      %1249 = vmatprep.subr.mxu0 0.0
      %1250 = vmatpush1.msra.mxu0 %v949
      %1251 = vmatprep.subr.mxu0 0.0
      %1252 = vmatpush1.msra.mxu0 %v950
      %1253 = vmatprep.subr.mxu0 0.0
      %1254 = vmatpush1.msra.mxu0 %v951
      %1255 = vmatprep.subr.mxu0 0.0
      %1256 = vmatpush1.msra.mxu0 %v952
      %1257 = vmatprep.subr.mxu0 0.0
      %1258 = vmatpush1.msra.mxu0 %v953
      %1259 = vmatprep.subr.mxu0 0.0
      %1260 = vmatpush1.msra.mxu0 %v954
      %1261 = vmatprep.subr.mxu0 0.0
      %1262 = vmatpush1.msra.mxu0 %v955
      %1263 = vmatprep.subr.mxu0 0.0
      %1264 = vmatpush1.msra.mxu0 %v956
      %1265 = vmatprep.subr.mxu0 0.0
      %1266 = vmatpush1.msra.mxu0 %v957
      %1267 = vmatprep.subr.mxu0 0.0
      %1268 = vmatpush1.msra.mxu0 %v958
      %1269 = vmatprep.subr.mxu0 0.0
      %1270 = vmatpush1.msra.mxu0 %v959
      %1271 = vmatprep.subr.mxu0 0.0
      %1272 = vmatpush1.msra.mxu0 %v960
      %1273 = vmatprep.subr.mxu0 0.0
      %1274 = vmatpush1.msra.mxu0 %v961
      %1275 = vmatprep.subr.mxu0 0.0
      %1276 = vmatpush1.msra.mxu0 %v962
      %1277 = vmatprep.subr.mxu0 0.0
      %1278 = vmatpush1.msra.mxu0 %v963
      %1279 = vmatprep.subr.mxu0 0.0
      %1280 = vmatpush1.msra.mxu0 %v964
      %1281 = vmatprep.subr.mxu0 0.0
      %1282 = vmatpush1.msra.mxu0 %v965
      %1283 = vmatprep.subr.mxu0 0.0
      %1284 = vmatpush1.msra.mxu0 %v966
      %1285 = vmatprep.subr.mxu0 0.0
      %1286 = vmatpush1.msra.mxu0 %v967
      %1287 = vmatprep.subr.mxu0 0.0
      %1288 = vmatpush1.msra.mxu0 %v968
      %1289 = vmatprep.subr.mxu0 0.0
      %1290 = vmatpush1.msra.mxu0 %v969
      %1291 = vmatprep.subr.mxu0 0.0
      %1292 = vmatpush1.msra.mxu0 %v970
      %1293 = vmatprep.subr.mxu0 0.0
      %1294 = vmatpush1.msra.mxu0 %v971
      %1295 = vmatprep.subr.mxu0 0.0
      %1296 = vmatpush1.msra.mxu0 %v972
      %1297 = vmatprep.subr.mxu0 0.0
      %1298 = vmatpush1.msra.mxu0 %v973
      %1299 = vmatprep.subr.mxu0 0.0
      %1300 = vmatpush1.msra.mxu0 %v974
      %1301 = vmatprep.subr.mxu0 0.0
      %1302 = vmatpush1.msra.mxu0 %v975
      %1303 = vmatprep.mubr.f32.mxu0 %v369
      %1304 = vmatmul.mubr.f32.gmra.mrb[0].mxu0 %v368
      %v1305 = vpop.f32.mrb[0].mxu0
      %v1306 = vadd.f32 %v1237, %v1305
      %v1307 = vpop.f32.mrb[0].mxu0
      %1308 = vmatprep.mubr.f32.mxu0 %v387
      %1309 = vmatmul.mubr.f32.gmra.mrb[0].mxu0 %v386
      %v1310 = vpop.f32.mrb[0].mxu0
      %v1311 = vadd.f32 %v1237, %v1310
      %v1312 = vpop.f32.mrb[0].mxu0
      %1313 = vmatprep.mubr.f32.mxu0 %v405
      %1314 = vmatmul.mubr.f32.gmra.mrb[0].mxu0 %v404
      %v1315 = vpop.f32.mrb[0].mxu0
      %v1316 = vadd.f32 %v1237, %v1315
      %v1317 = vpop.f32.mrb[0].mxu0
      %1318 = vmatprep.mubr.f32.mxu0 %v423
      %1319 = vmatmul.mubr.f32.gmra.mrb[0].mxu0 %v422
      %v1320 = vpop.f32.mrb[0].mxu0
      %v1321 = vadd.f32 %v1237, %v1320
      %v1322 = vpop.f32.mrb[0].mxu0
      %1323 = vmatprep.mubr.f32.mxu0 %v441
      %1324 = vmatmul.mubr.f32.gmra.mrb[0].mxu0 %v440
      %v1325 = vpop.f32.mrb[0].mxu0
      %v1326 = vadd.f32 %v1237, %v1325
      %v1327 = vpop.f32.mrb[0].mxu0
      %1328 = vmatprep.mubr.f32.mxu0 %v459
      %1329 = vmatmul.mubr.f32.gmra.mrb[0].mxu0 %v458
      %v1330 = vpop.f32.mrb[0].mxu0
      %v1331 = vadd.f32 %v1237, %v1330
      %v1332 = vpop.f32.mrb[0].mxu0
      %1333 = vmatprep.mubr.f32.mxu0 %v477
      %1334 = vmatmul.mubr.f32.gmra.mrb[0].mxu0 %v476
      %v1335 = vpop.f32.mrb[0].mxu0
      %v1336 = vadd.f32 %v1237, %v1335
      %v1337 = vpop.f32.mrb[0].mxu0
      %1338 = vmatprep.mubr.f32.mxu0 %v495
      %1339 = vmatmul.mubr.f32.gmra.mrb[0].mxu0 %v494
      %v1340 = vpop.f32.mrb[0].mxu0
      %v1341 = vadd.f32 %v1237, %v1340
      %v1342 = vpop.f32.mrb[0].mxu0
      %1343 = vmatprep.mubr.f32.mxu0 %v513
      %1344 = vmatmul.mubr.f32.gmra.mrb[0].mxu0 %v512
      %v1345 = vpop.f32.mrb[0].mxu0
      %v1346 = vadd.f32 %v1237, %v1345
      %v1347 = vpop.f32.mrb[0].mxu0
      %1348 = vmatprep.mubr.f32.mxu0 %v531
      %1349 = vmatmul.mubr.f32.gmra.mrb[0].mxu0 %v530
      %v1350 = vpop.f32.mrb[0].mxu0
      %v1351 = vadd.f32 %v1237, %v1350
      %v1352 = vpop.f32.mrb[0].mxu0
      %1353 = vmatprep.mubr.f32.mxu0 %v549
      %1354 = vmatmul.mubr.f32.gmra.mrb[0].mxu0 %v548
      %v1355 = vpop.f32.mrb[0].mxu0
      %v1356 = vadd.f32 %v1237, %v1355
      %v1357 = vpop.f32.mrb[0].mxu0
      %1358 = vmatprep.mubr.f32.mxu0 %v567
      %1359 = vmatmul.mubr.f32.gmra.mrb[0].mxu0 %v566
      %v1360 = vpop.f32.mrb[0].mxu0
      %v1361 = vadd.f32 %v1237, %v1360
      %v1362 = vpop.f32.mrb[0].mxu0
      %1363 = vmatprep.mubr.f32.mxu0 %v585
      %1364 = vmatmul.mubr.f32.gmra.mrb[0].mxu0 %v584
      %v1365 = vpop.f32.mrb[0].mxu0
      %v1366 = vadd.f32 %v1237, %v1365
      %v1367 = vpop.f32.mrb[0].mxu0
      %1368 = vmatprep.mubr.f32.mxu0 %v603
      %1369 = vmatmul.mubr.f32.gmra.mrb[0].mxu0 %v602
      %v1370 = vpop.f32.mrb[0].mxu0
      %v1371 = vadd.f32 %v1237, %v1370
      %v1372 = vpop.f32.mrb[0].mxu0
      %1373 = vmatprep.mubr.f32.mxu0 %v621
      %1374 = vmatmul.mubr.f32.gmra.mrb[0].mxu0 %v620
      %v1375 = vpop.f32.mrb[0].mxu0
      %v1376 = vadd.f32 %v1237, %v1375
      %v1377 = vpop.f32.mrb[0].mxu0
      %1378 = vmatprep.mubr.f32.mxu0 %v639
      %1379 = vmatmul.mubr.f32.gmra.mrb[0].mxu0 %v638
      %v1380 = vpop.f32.mrb[0].mxu0
      %v1381 = vadd.f32 %v1237, %v1380
      %v1382 = vpop.f32.mrb[0].mxu0
      %1383 = vmatprep.mubr.f32.mxu0 %v657
      %1384 = vmatmul.mubr.f32.gmra.mrb[0].mxu0 %v656
      %v1385 = vpop.f32.mrb[0].mxu0
      %v1386 = vadd.f32 %v1237, %v1385
      %v1387 = vpop.f32.mrb[0].mxu0
      %1388 = vmatprep.mubr.f32.mxu0 %v675
      %1389 = vmatmul.mubr.f32.gmra.mrb[0].mxu0 %v674
      %v1390 = vpop.f32.mrb[0].mxu0
      %v1391 = vadd.f32 %v1237, %v1390
      %v1392 = vpop.f32.mrb[0].mxu0
      %1393 = vmatprep.mubr.f32.mxu0 %v693
      %1394 = vmatmul.mubr.f32.gmra.mrb[0].mxu0 %v692
      %v1395 = vpop.f32.mrb[0].mxu0
      %v1396 = vadd.f32 %v1237, %v1395
      %v1397 = vpop.f32.mrb[0].mxu0
      %1398 = vmatprep.mubr.f32.mxu0 %v711
      %1399 = vmatmul.mubr.f32.gmra.mrb[0].mxu0 %v710
      %v1400 = vpop.f32.mrb[0].mxu0
      %v1401 = vadd.f32 %v1237, %v1400
      %v1402 = vpop.f32.mrb[0].mxu0
      %1403 = vmatprep.mubr.f32.mxu0 %v729
      %1404 = vmatmul.mubr.f32.gmra.mrb[0].mxu0 %v728
      %v1405 = vpop.f32.mrb[0].mxu0
      %v1406 = vadd.f32 %v1237, %v1405
      %v1407 = vpop.f32.mrb[0].mxu0
      %1408 = vmatprep.mubr.f32.mxu0 %v747
      %1409 = vmatmul.mubr.f32.gmra.mrb[0].mxu0 %v746
      %v1410 = vpop.f32.mrb[0].mxu0
      %v1411 = vadd.f32 %v1237, %v1410
      %v1412 = vpop.f32.mrb[0].mxu0
      %1413 = vmatprep.mubr.f32.mxu0 %v765
      %1414 = vmatmul.mubr.f32.gmra.mrb[0].mxu0 %v764
      %v1415 = vpop.f32.mrb[0].mxu0
      %v1416 = vadd.f32 %v1237, %v1415
      %v1417 = vpop.f32.mrb[0].mxu0
      %1418 = vmatprep.mubr.f32.mxu0 %v783
      %1419 = vmatmul.mubr.f32.gmra.mrb[0].mxu0 %v782
      %v1420 = vpop.f32.mrb[0].mxu0
      %v1421 = vadd.f32 %v1237, %v1420
      %v1422 = vpop.f32.mrb[0].mxu0
      %1423 = vmatprep.mubr.f32.mxu0 %v801
      %1424 = vmatmul.mubr.f32.gmra.mrb[0].mxu0 %v800
      %v1425 = vpop.f32.mrb[0].mxu0
      %v1426 = vadd.f32 %v1237, %v1425
      %v1427 = vpop.f32.mrb[0].mxu0
      %1428 = vmatprep.mubr.f32.mxu0 %v819
      %1429 = vmatmul.mubr.f32.gmra.mrb[0].mxu0 %v818
      %v1430 = vpop.f32.mrb[0].mxu0
      %v1431 = vadd.f32 %v1237, %v1430
      %v1432 = vpop.f32.mrb[0].mxu0
      %1433 = vmatprep.mubr.f32.mxu0 %v837
      %1434 = vmatmul.mubr.f32.gmra.mrb[0].mxu0 %v836
      %v1435 = vpop.f32.mrb[0].mxu0
      %v1436 = vadd.f32 %v1237, %v1435
      %v1437 = vpop.f32.mrb[0].mxu0
      %1438 = vmatprep.mubr.f32.mxu0 %v855
      %1439 = vmatmul.mubr.f32.gmra.mrb[0].mxu0 %v854
      %v1440 = vpop.f32.mrb[0].mxu0
      %v1441 = vadd.f32 %v1237, %v1440
      %v1442 = vpop.f32.mrb[0].mxu0
      %1443 = vmatprep.mubr.f32.mxu0 %v873
      %1444 = vmatmul.mubr.f32.gmra.mrb[0].mxu0 %v872
      %v1445 = vpop.f32.mrb[0].mxu0
      %v1446 = vadd.f32 %v1237, %v1445
      %v1447 = vpop.f32.mrb[0].mxu0
      %1448 = vmatprep.mubr.f32.mxu0 %v891
      %1449 = vmatmul.mubr.f32.gmra.mrb[0].mxu0 %v890
      %v1450 = vpop.f32.mrb[0].mxu0
      %v1451 = vadd.f32 %v1237, %v1450
      %v1452 = vpop.f32.mrb[0].mxu0
      %1453 = vmatprep.mubr.f32.mxu0 %v909
      %1454 = vmatmul.mubr.f32.gmra.mrb[0].mxu0 %v908
      %v1455 = vpop.f32.mrb[0].mxu0
      %v1456 = vadd.f32 %v1237, %v1455
      %v1457 = vpop.f32.mrb[0].mxu0
      %1458 = vmatprep.mubr.f32.mxu0 %v927
      %1459 = vmatmul.mubr.f32.gmra.mrb[0].mxu0 %v926
      %v1460 = vpop.f32.mrb[0].mxu0
      %v1461 = vadd.f32 %v1237, %v1460
      %v1462 = vpop.f32.mrb[0].mxu0
      %1463 = vdwg.mxu0
      %1464 = vmatprep.subr.mxu0 0.0
      %1465 = vmatpush1.msra.mxu0 %v976
      %1466 = vmatprep.subr.mxu0 0.0
      %1467 = vmatpush1.msra.mxu0 %v977
      %1468 = vmatprep.subr.mxu0 0.0
      %1469 = vmatpush1.msra.mxu0 %v978
      %1470 = vmatprep.subr.mxu0 0.0
      %1471 = vmatpush1.msra.mxu0 %v979
      %1472 = vmatprep.subr.mxu0 0.0
      %1473 = vmatpush1.msra.mxu0 %v980
      %1474 = vmatprep.subr.mxu0 0.0
      %1475 = vmatpush1.msra.mxu0 %v981
      %1476 = vmatprep.subr.mxu0 0.0
      %1477 = vmatpush1.msra.mxu0 %v982
      %1478 = vmatprep.subr.mxu0 0.0
      %1479 = vmatpush1.msra.mxu0 %v983
      %1480 = vmatprep.subr.mxu0 0.0
      %1481 = vmatpush1.msra.mxu0 %v984
      %1482 = vmatprep.subr.mxu0 0.0
      %1483 = vmatpush1.msra.mxu0 %v985
      %1484 = vmatprep.subr.mxu0 0.0
      %1485 = vmatpush1.msra.mxu0 %v986
      %1486 = vmatprep.subr.mxu0 0.0
      %1487 = vmatpush1.msra.mxu0 %v987
      %1488 = vmatprep.subr.mxu0 0.0
      %1489 = vmatpush1.msra.mxu0 %v988
      %1490 = vmatprep.subr.mxu0 0.0
      %1491 = vmatpush1.msra.mxu0 %v989
      %1492 = vmatprep.subr.mxu0 0.0
      %1493 = vmatpush1.msra.mxu0 %v990
      %1494 = vmatprep.subr.mxu0 0.0
      %1495 = vmatpush1.msra.mxu0 %v991
      %1496 = vmatprep.subr.mxu0 0.0
      %1497 = vmatpush1.msra.mxu0 %v992
      %1498 = vmatprep.subr.mxu0 0.0
      %1499 = vmatpush1.msra.mxu0 %v993
      %1500 = vmatprep.subr.mxu0 0.0
      %1501 = vmatpush1.msra.mxu0 %v994
      %1502 = vmatprep.subr.mxu0 0.0
      %1503 = vmatpush1.msra.mxu0 %v995
      %1504 = vmatprep.subr.mxu0 0.0
      %1505 = vmatpush1.msra.mxu0 %v996
      %1506 = vmatprep.subr.mxu0 0.0
      %1507 = vmatpush1.msra.mxu0 %v997
      %1508 = vmatprep.subr.mxu0 0.0
      %1509 = vmatpush1.msra.mxu0 %v998
      %1510 = vmatprep.subr.mxu0 0.0
      %1511 = vmatpush1.msra.mxu0 %v999
      %1512 = vmatprep.subr.mxu0 0.0
      %1513 = vmatpush1.msra.mxu0 %v1000
      %1514 = vmatprep.subr.mxu0 0.0
      %1515 = vmatpush1.msra.mxu0 %v1001
      %1516 = vmatprep.subr.mxu0 0.0
      %1517 = vmatpush1.msra.mxu0 %v1002
      %1518 = vmatprep.subr.mxu0 0.0
      %1519 = vmatpush1.msra.mxu0 %v1003
      %1520 = vmatprep.subr.mxu0 0.0
      %1521 = vmatpush1.msra.mxu0 %v1004
      %1522 = vmatprep.subr.mxu0 0.0
      %1523 = vmatpush1.msra.mxu0 %v1005
      %1524 = vmatprep.subr.mxu0 0.0
      %1525 = vmatpush1.msra.mxu0 %v1006
      %1526 = vmatprep.subr.mxu0 0.0
      %1527 = vmatpush1.msra.mxu0 %v1007
      %1528 = vmatprep.mubr.f32.mxu0 %v371
      %1529 = vmatmul.mubr.f32.gmra.mrb[0].mxu0 %v370
      %v1530 = vpop.f32.mrb[0].mxu0
      %v1531 = vadd.f32 %v1306, %v1530
      %v1532 = vpop.f32.mrb[0].mxu0
      %1533 = vmatprep.mubr.f32.mxu0 %v389
      %1534 = vmatmul.mubr.f32.gmra.mrb[0].mxu0 %v388
      %v1535 = vpop.f32.mrb[0].mxu0
      %v1536 = vadd.f32 %v1311, %v1535
      %v1537 = vpop.f32.mrb[0].mxu0
      %1538 = vmatprep.mubr.f32.mxu0 %v407
      %1539 = vmatmul.mubr.f32.gmra.mrb[0].mxu0 %v406
      %v1540 = vpop.f32.mrb[0].mxu0
      %v1541 = vadd.f32 %v1316, %v1540
      %v1542 = vpop.f32.mrb[0].mxu0
      %1543 = vmatprep.mubr.f32.mxu0 %v425
      %1544 = vmatmul.mubr.f32.gmra.mrb[0].mxu0 %v424
      %v1545 = vpop.f32.mrb[0].mxu0
      %v1546 = vadd.f32 %v1321, %v1545
      %v1547 = vpop.f32.mrb[0].mxu0
      %1548 = vmatprep.mubr.f32.mxu0 %v443
      %1549 = vmatmul.mubr.f32.gmra.mrb[0].mxu0 %v442
      %v1550 = vpop.f32.mrb[0].mxu0
      %v1551 = vadd.f32 %v1326, %v1550
      %v1552 = vpop.f32.mrb[0].mxu0
      %1553 = vmatprep.mubr.f32.mxu0 %v461
      %1554 = vmatmul.mubr.f32.gmra.mrb[0].mxu0 %v460
      %v1555 = vpop.f32.mrb[0].mxu0
      %v1556 = vadd.f32 %v1331, %v1555
      %v1557 = vpop.f32.mrb[0].mxu0
      %1558 = vmatprep.mubr.f32.mxu0 %v479
      %1559 = vmatmul.mubr.f32.gmra.mrb[0].mxu0 %v478
      %v1560 = vpop.f32.mrb[0].mxu0
      %v1561 = vadd.f32 %v1336, %v1560
      %v1562 = vpop.f32.mrb[0].mxu0
      %1563 = vmatprep.mubr.f32.mxu0 %v497
      %1564 = vmatmul.mubr.f32.gmra.mrb[0].mxu0 %v496
      %v1565 = vpop.f32.mrb[0].mxu0
      %v1566 = vadd.f32 %v1341, %v1565
      %v1567 = vpop.f32.mrb[0].mxu0
      %1568 = vmatprep.mubr.f32.mxu0 %v515
      %1569 = vmatmul.mubr.f32.gmra.mrb[0].mxu0 %v514
      %v1570 = vpop.f32.mrb[0].mxu0
      %v1571 = vadd.f32 %v1346, %v1570
      %v1572 = vpop.f32.mrb[0].mxu0
      %1573 = vmatprep.mubr.f32.mxu0 %v533
      %1574 = vmatmul.mubr.f32.gmra.mrb[0].mxu0 %v532
      %v1575 = vpop.f32.mrb[0].mxu0
      %v1576 = vadd.f32 %v1351, %v1575
      %v1577 = vpop.f32.mrb[0].mxu0
      %1578 = vmatprep.mubr.f32.mxu0 %v551
      %1579 = vmatmul.mubr.f32.gmra.mrb[0].mxu0 %v550
      %v1580 = vpop.f32.mrb[0].mxu0
      %v1581 = vadd.f32 %v1356, %v1580
      %v1582 = vpop.f32.mrb[0].mxu0
      %1583 = vmatprep.mubr.f32.mxu0 %v569
      %1584 = vmatmul.mubr.f32.gmra.mrb[0].mxu0 %v568
      %v1585 = vpop.f32.mrb[0].mxu0
      %v1586 = vadd.f32 %v1361, %v1585
      %v1587 = vpop.f32.mrb[0].mxu0
      %1588 = vmatprep.mubr.f32.mxu0 %v587
      %1589 = vmatmul.mubr.f32.gmra.mrb[0].mxu0 %v586
      %v1590 = vpop.f32.mrb[0].mxu0
      %v1591 = vadd.f32 %v1366, %v1590
      %v1592 = vpop.f32.mrb[0].mxu0
      %1593 = vmatprep.mubr.f32.mxu0 %v605
      %1594 = vmatmul.mubr.f32.gmra.mrb[0].mxu0 %v604
      %v1595 = vpop.f32.mrb[0].mxu0
      %v1596 = vadd.f32 %v1371, %v1595
      %v1597 = vpop.f32.mrb[0].mxu0
      %1598 = vmatprep.mubr.f32.mxu0 %v623
      %1599 = vmatmul.mubr.f32.gmra.mrb[0].mxu0 %v622
      %v1600 = vpop.f32.mrb[0].mxu0
      %v1601 = vadd.f32 %v1376, %v1600
      %v1602 = vpop.f32.mrb[0].mxu0
      %1603 = vmatprep.mubr.f32.mxu0 %v641
      %1604 = vmatmul.mubr.f32.gmra.mrb[0].mxu0 %v640
      %v1605 = vpop.f32.mrb[0].mxu0
      %v1606 = vadd.f32 %v1381, %v1605
      %v1607 = vpop.f32.mrb[0].mxu0
      %1608 = vmatprep.mubr.f32.mxu0 %v659
      %1609 = vmatmul.mubr.f32.gmra.mrb[0].mxu0 %v658
      %v1610 = vpop.f32.mrb[0].mxu0
      %v1611 = vadd.f32 %v1386, %v1610
      %v1612 = vpop.f32.mrb[0].mxu0
      %1613 = vmatprep.mubr.f32.mxu0 %v677
      %1614 = vmatmul.mubr.f32.gmra.mrb[0].mxu0 %v676
      %v1615 = vpop.f32.mrb[0].mxu0
      %v1616 = vadd.f32 %v1391, %v1615
      %v1617 = vpop.f32.mrb[0].mxu0
      %1618 = vmatprep.mubr.f32.mxu0 %v695
      %1619 = vmatmul.mubr.f32.gmra.mrb[0].mxu0 %v694
      %v1620 = vpop.f32.mrb[0].mxu0
      %v1621 = vadd.f32 %v1396, %v1620
      %v1622 = vpop.f32.mrb[0].mxu0
      %1623 = vmatprep.mubr.f32.mxu0 %v713
      %1624 = vmatmul.mubr.f32.gmra.mrb[0].mxu0 %v712
      %v1625 = vpop.f32.mrb[0].mxu0
      %v1626 = vadd.f32 %v1401, %v1625
      %v1627 = vpop.f32.mrb[0].mxu0
      %1628 = vmatprep.mubr.f32.mxu0 %v731
      %1629 = vmatmul.mubr.f32.gmra.mrb[0].mxu0 %v730
      %v1630 = vpop.f32.mrb[0].mxu0
      %v1631 = vadd.f32 %v1406, %v1630
      %v1632 = vpop.f32.mrb[0].mxu0
      %1633 = vmatprep.mubr.f32.mxu0 %v749
      %1634 = vmatmul.mubr.f32.gmra.mrb[0].mxu0 %v748
      %v1635 = vpop.f32.mrb[0].mxu0
      %v1636 = vadd.f32 %v1411, %v1635
      %v1637 = vpop.f32.mrb[0].mxu0
      %1638 = vmatprep.mubr.f32.mxu0 %v767
      %1639 = vmatmul.mubr.f32.gmra.mrb[0].mxu0 %v766
      %v1640 = vpop.f32.mrb[0].mxu0
      %v1641 = vadd.f32 %v1416, %v1640
      %v1642 = vpop.f32.mrb[0].mxu0
      %1643 = vmatprep.mubr.f32.mxu0 %v785
      %1644 = vmatmul.mubr.f32.gmra.mrb[0].mxu0 %v784
      %v1645 = vpop.f32.mrb[0].mxu0
      %v1646 = vadd.f32 %v1421, %v1645
      %v1647 = vpop.f32.mrb[0].mxu0
      %1648 = vmatprep.mubr.f32.mxu0 %v803
      %1649 = vmatmul.mubr.f32.gmra.mrb[0].mxu0 %v802
      %v1650 = vpop.f32.mrb[0].mxu0
      %v1651 = vadd.f32 %v1426, %v1650
      %v1652 = vpop.f32.mrb[0].mxu0
      %1653 = vmatprep.mubr.f32.mxu0 %v821
      %1654 = vmatmul.mubr.f32.gmra.mrb[0].mxu0 %v820
      %v1655 = vpop.f32.mrb[0].mxu0
      %v1656 = vadd.f32 %v1431, %v1655
      %v1657 = vpop.f32.mrb[0].mxu0
      %1658 = vmatprep.mubr.f32.mxu0 %v839
      %1659 = vmatmul.mubr.f32.gmra.mrb[0].mxu0 %v838
      %v1660 = vpop.f32.mrb[0].mxu0
      %v1661 = vadd.f32 %v1436, %v1660
      %v1662 = vpop.f32.mrb[0].mxu0
      %1663 = vmatprep.mubr.f32.mxu0 %v857
      %1664 = vmatmul.mubr.f32.gmra.mrb[0].mxu0 %v856
      %v1665 = vpop.f32.mrb[0].mxu0
      %v1666 = vadd.f32 %v1441, %v1665
      %v1667 = vpop.f32.mrb[0].mxu0
      %1668 = vmatprep.mubr.f32.mxu0 %v875
      %1669 = vmatmul.mubr.f32.gmra.mrb[0].mxu0 %v874
      %v1670 = vpop.f32.mrb[0].mxu0
      %v1671 = vadd.f32 %v1446, %v1670
      %v1672 = vpop.f32.mrb[0].mxu0
      %1673 = vmatprep.mubr.f32.mxu0 %v893
      %1674 = vmatmul.mubr.f32.gmra.mrb[0].mxu0 %v892
      %v1675 = vpop.f32.mrb[0].mxu0
      %v1676 = vadd.f32 %v1451, %v1675
      %v1677 = vpop.f32.mrb[0].mxu0
      %1678 = vmatprep.mubr.f32.mxu0 %v911
      %1679 = vmatmul.mubr.f32.gmra.mrb[0].mxu0 %v910
      %v1680 = vpop.f32.mrb[0].mxu0
      %v1681 = vadd.f32 %v1456, %v1680
      %v1682 = vpop.f32.mrb[0].mxu0
      %1683 = vmatprep.mubr.f32.mxu0 %v929
      %1684 = vmatmul.mubr.f32.gmra.mrb[0].mxu0 %v928
      %v1685 = vpop.f32.mrb[0].mxu0
      %v1686 = vadd.f32 %v1461, %v1685
      %v1687 = vpop.f32.mrb[0].mxu0
      %1688 = vdwg.mxu0
      %1689 = vmatprep.subr.mxu0 0.0
      %1690 = vmatpush1.msra.mxu0 %v1008
      %1691 = vmatprep.subr.mxu0 0.0
      %1692 = vmatpush1.msra.mxu0 %v1009
      %1693 = vmatprep.subr.mxu0 0.0
      %1694 = vmatpush1.msra.mxu0 %v1010
      %1695 = vmatprep.subr.mxu0 0.0
      %1696 = vmatpush1.msra.mxu0 %v1011
      %1697 = vmatprep.subr.mxu0 0.0
      %1698 = vmatpush1.msra.mxu0 %v1012
      %1699 = vmatprep.subr.mxu0 0.0
      %1700 = vmatpush1.msra.mxu0 %v1013
      %1701 = vmatprep.subr.mxu0 0.0
      %1702 = vmatpush1.msra.mxu0 %v1014
      %1703 = vmatprep.subr.mxu0 0.0
      %1704 = vmatpush1.msra.mxu0 %v1015
      %1705 = vmatprep.subr.mxu0 0.0
      %1706 = vmatpush1.msra.mxu0 %v1016
      %1707 = vmatprep.subr.mxu0 0.0
      %1708 = vmatpush1.msra.mxu0 %v1017
      %1709 = vmatprep.subr.mxu0 0.0
      %1710 = vmatpush1.msra.mxu0 %v1018
      %1711 = vmatprep.subr.mxu0 0.0
      %1712 = vmatpush1.msra.mxu0 %v1019
      %1713 = vmatprep.subr.mxu0 0.0
      %1714 = vmatpush1.msra.mxu0 %v1020
      %1715 = vmatprep.subr.mxu0 0.0
      %1716 = vmatpush1.msra.mxu0 %v1021
      %1717 = vmatprep.subr.mxu0 0.0
      %1718 = vmatpush1.msra.mxu0 %v1022
      %1719 = vmatprep.subr.mxu0 0.0
      %1720 = vmatpush1.msra.mxu0 %v1023
      %1721 = vmatprep.subr.mxu0 0.0
      %1722 = vmatpush1.msra.mxu0 %v1024
      %1723 = vmatprep.subr.mxu0 0.0
      %1724 = vmatpush1.msra.mxu0 %v1025
      %1725 = vmatprep.subr.mxu0 0.0
      %1726 = vmatpush1.msra.mxu0 %v1026
      %1727 = vmatprep.subr.mxu0 0.0
      %1728 = vmatpush1.msra.mxu0 %v1027
      %1729 = vmatprep.subr.mxu0 0.0
      %1730 = vmatpush1.msra.mxu0 %v1028
      %1731 = vmatprep.subr.mxu0 0.0
      %1732 = vmatpush1.msra.mxu0 %v1029
      %1733 = vmatprep.subr.mxu0 0.0
      %1734 = vmatpush1.msra.mxu0 %v1030
      %1735 = vmatprep.subr.mxu0 0.0
      %1736 = vmatpush1.msra.mxu0 %v1031
      %1737 = vmatprep.subr.mxu0 0.0
      %1738 = vmatpush1.msra.mxu0 %v1032
      %1739 = vmatprep.subr.mxu0 0.0
      %1740 = vmatpush1.msra.mxu0 %v1033
      %1741 = vmatprep.subr.mxu0 0.0
      %1742 = vmatpush1.msra.mxu0 %v1034
      %1743 = vmatprep.subr.mxu0 0.0
      %1744 = vmatpush1.msra.mxu0 %v1035
      %1745 = vmatprep.subr.mxu0 0.0
      %1746 = vmatpush1.msra.mxu0 %v1036
      %1747 = vmatprep.subr.mxu0 0.0
      %1748 = vmatpush1.msra.mxu0 %v1037
      %1749 = vmatprep.subr.mxu0 0.0
      %1750 = vmatpush1.msra.mxu0 %v1038
      %1751 = vmatprep.subr.mxu0 0.0
      %1752 = vmatpush1.msra.mxu0 %v1039
      %1753 = vmatprep.mubr.f32.mxu0 %v373
      %1754 = vmatmul.mubr.f32.gmra.mrb[0].mxu0 %v372
      %v1755 = vpop.f32.mrb[0].mxu0
      %v1756 = vadd.f32 %v1531, %v1755
      %v1757 = vpop.f32.mrb[0].mxu0
      %1758 = vmatprep.mubr.f32.mxu0 %v391
      %1759 = vmatmul.mubr.f32.gmra.mrb[0].mxu0 %v390
      %v1760 = vpop.f32.mrb[0].mxu0
      %v1761 = vadd.f32 %v1536, %v1760
      %v1762 = vpop.f32.mrb[0].mxu0
      %1763 = vmatprep.mubr.f32.mxu0 %v409
      %1764 = vmatmul.mubr.f32.gmra.mrb[0].mxu0 %v408
      %v1765 = vpop.f32.mrb[0].mxu0
      %v1766 = vadd.f32 %v1541, %v1765
      %v1767 = vpop.f32.mrb[0].mxu0
      %1768 = vmatprep.mubr.f32.mxu0 %v427
      %1769 = vmatmul.mubr.f32.gmra.mrb[0].mxu0 %v426
      %v1770 = vpop.f32.mrb[0].mxu0
      %v1771 = vadd.f32 %v1546, %v1770
      %v1772 = vpop.f32.mrb[0].mxu0
      %1773 = vmatprep.mubr.f32.mxu0 %v445
      %1774 = vmatmul.mubr.f32.gmra.mrb[0].mxu0 %v444
      %v1775 = vpop.f32.mrb[0].mxu0
      %v1776 = vadd.f32 %v1551, %v1775
      %v1777 = vpop.f32.mrb[0].mxu0
      %1778 = vmatprep.mubr.f32.mxu0 %v463
      %1779 = vmatmul.mubr.f32.gmra.mrb[0].mxu0 %v462
      %v1780 = vpop.f32.mrb[0].mxu0
      %v1781 = vadd.f32 %v1556, %v1780
      %v1782 = vpop.f32.mrb[0].mxu0
      %1783 = vmatprep.mubr.f32.mxu0 %v481
      %1784 = vmatmul.mubr.f32.gmra.mrb[0].mxu0 %v480
      %v1785 = vpop.f32.mrb[0].mxu0
      %v1786 = vadd.f32 %v1561, %v1785
      %v1787 = vpop.f32.mrb[0].mxu0
      %1788 = vmatprep.mubr.f32.mxu0 %v499
      %1789 = vmatmul.mubr.f32.gmra.mrb[0].mxu0 %v498
      %v1790 = vpop.f32.mrb[0].mxu0
      %v1791 = vadd.f32 %v1566, %v1790
      %v1792 = vpop.f32.mrb[0].mxu0
      %1793 = vmatprep.mubr.f32.mxu0 %v517
      %1794 = vmatmul.mubr.f32.gmra.mrb[0].mxu0 %v516
      %v1795 = vpop.f32.mrb[0].mxu0
      %v1796 = vadd.f32 %v1571, %v1795
      %v1797 = vpop.f32.mrb[0].mxu0
      %1798 = vmatprep.mubr.f32.mxu0 %v535
      %1799 = vmatmul.mubr.f32.gmra.mrb[0].mxu0 %v534
      %v1800 = vpop.f32.mrb[0].mxu0
      %v1801 = vadd.f32 %v1576, %v1800
      %v1802 = vpop.f32.mrb[0].mxu0
      %1803 = vmatprep.mubr.f32.mxu0 %v553
      %1804 = vmatmul.mubr.f32.gmra.mrb[0].mxu0 %v552
      %v1805 = vpop.f32.mrb[0].mxu0
      %v1806 = vadd.f32 %v1581, %v1805
      %v1807 = vpop.f32.mrb[0].mxu0
      %1808 = vmatprep.mubr.f32.mxu0 %v571
      %1809 = vmatmul.mubr.f32.gmra.mrb[0].mxu0 %v570
      %v1810 = vpop.f32.mrb[0].mxu0
      %v1811 = vadd.f32 %v1586, %v1810
      %v1812 = vpop.f32.mrb[0].mxu0
      %1813 = vmatprep.mubr.f32.mxu0 %v589
      %1814 = vmatmul.mubr.f32.gmra.mrb[0].mxu0 %v588
      %v1815 = vpop.f32.mrb[0].mxu0
      %v1816 = vadd.f32 %v1591, %v1815
      %v1817 = vpop.f32.mrb[0].mxu0
      %1818 = vmatprep.mubr.f32.mxu0 %v607
      %1819 = vmatmul.mubr.f32.gmra.mrb[0].mxu0 %v606
      %v1820 = vpop.f32.mrb[0].mxu0
      %v1821 = vadd.f32 %v1596, %v1820
      %v1822 = vpop.f32.mrb[0].mxu0
      %1823 = vmatprep.mubr.f32.mxu0 %v625
      %1824 = vmatmul.mubr.f32.gmra.mrb[0].mxu0 %v624
      %v1825 = vpop.f32.mrb[0].mxu0
      %v1826 = vadd.f32 %v1601, %v1825
      %v1827 = vpop.f32.mrb[0].mxu0
      %1828 = vmatprep.mubr.f32.mxu0 %v643
      %1829 = vmatmul.mubr.f32.gmra.mrb[0].mxu0 %v642
      %v1830 = vpop.f32.mrb[0].mxu0
      %v1831 = vadd.f32 %v1606, %v1830
      %v1832 = vpop.f32.mrb[0].mxu0
      %1833 = vmatprep.mubr.f32.mxu0 %v661
      %1834 = vmatmul.mubr.f32.gmra.mrb[0].mxu0 %v660
      %v1835 = vpop.f32.mrb[0].mxu0
      %v1836 = vadd.f32 %v1611, %v1835
      %v1837 = vpop.f32.mrb[0].mxu0
      %1838 = vmatprep.mubr.f32.mxu0 %v679
      %1839 = vmatmul.mubr.f32.gmra.mrb[0].mxu0 %v678
      %v1840 = vpop.f32.mrb[0].mxu0
      %v1841 = vadd.f32 %v1616, %v1840
      %v1842 = vpop.f32.mrb[0].mxu0
      %1843 = vmatprep.mubr.f32.mxu0 %v697
      %1844 = vmatmul.mubr.f32.gmra.mrb[0].mxu0 %v696
      %v1845 = vpop.f32.mrb[0].mxu0
      %v1846 = vadd.f32 %v1621, %v1845
      %v1847 = vpop.f32.mrb[0].mxu0
      %1848 = vmatprep.mubr.f32.mxu0 %v715
      %1849 = vmatmul.mubr.f32.gmra.mrb[0].mxu0 %v714
      %v1850 = vpop.f32.mrb[0].mxu0
      %v1851 = vadd.f32 %v1626, %v1850
      %v1852 = vpop.f32.mrb[0].mxu0
      %1853 = vmatprep.mubr.f32.mxu0 %v733
      %1854 = vmatmul.mubr.f32.gmra.mrb[0].mxu0 %v732
      %v1855 = vpop.f32.mrb[0].mxu0
      %v1856 = vadd.f32 %v1631, %v1855
      %v1857 = vpop.f32.mrb[0].mxu0
      %1858 = vmatprep.mubr.f32.mxu0 %v751
      %1859 = vmatmul.mubr.f32.gmra.mrb[0].mxu0 %v750
      %v1860 = vpop.f32.mrb[0].mxu0
      %v1861 = vadd.f32 %v1636, %v1860
      %v1862 = vpop.f32.mrb[0].mxu0
      %1863 = vmatprep.mubr.f32.mxu0 %v769
      %1864 = vmatmul.mubr.f32.gmra.mrb[0].mxu0 %v768
      %v1865 = vpop.f32.mrb[0].mxu0
      %v1866 = vadd.f32 %v1641, %v1865
      %v1867 = vpop.f32.mrb[0].mxu0
      %1868 = vmatprep.mubr.f32.mxu0 %v787
      %1869 = vmatmul.mubr.f32.gmra.mrb[0].mxu0 %v786
      %v1870 = vpop.f32.mrb[0].mxu0
      %v1871 = vadd.f32 %v1646, %v1870
      %v1872 = vpop.f32.mrb[0].mxu0
      %1873 = vmatprep.mubr.f32.mxu0 %v805
      %1874 = vmatmul.mubr.f32.gmra.mrb[0].mxu0 %v804
      %v1875 = vpop.f32.mrb[0].mxu0
      %v1876 = vadd.f32 %v1651, %v1875
      %v1877 = vpop.f32.mrb[0].mxu0
      %1878 = vmatprep.mubr.f32.mxu0 %v823
      %1879 = vmatmul.mubr.f32.gmra.mrb[0].mxu0 %v822
      %v1880 = vpop.f32.mrb[0].mxu0
      %v1881 = vadd.f32 %v1656, %v1880
      %v1882 = vpop.f32.mrb[0].mxu0
      %1883 = vmatprep.mubr.f32.mxu0 %v841
      %1884 = vmatmul.mubr.f32.gmra.mrb[0].mxu0 %v840
      %v1885 = vpop.f32.mrb[0].mxu0
      %v1886 = vadd.f32 %v1661, %v1885
      %v1887 = vpop.f32.mrb[0].mxu0
      %1888 = vmatprep.mubr.f32.mxu0 %v859
      %1889 = vmatmul.mubr.f32.gmra.mrb[0].mxu0 %v858
      %v1890 = vpop.f32.mrb[0].mxu0
      %v1891 = vadd.f32 %v1666, %v1890
      %v1892 = vpop.f32.mrb[0].mxu0
      %1893 = vmatprep.mubr.f32.mxu0 %v877
      %1894 = vmatmul.mubr.f32.gmra.mrb[0].mxu0 %v876
      %v1895 = vpop.f32.mrb[0].mxu0
      %v1896 = vadd.f32 %v1671, %v1895
      %v1897 = vpop.f32.mrb[0].mxu0
      %1898 = vmatprep.mubr.f32.mxu0 %v895
      %1899 = vmatmul.mubr.f32.gmra.mrb[0].mxu0 %v894
      %v1900 = vpop.f32.mrb[0].mxu0
      %v1901 = vadd.f32 %v1676, %v1900
      %v1902 = vpop.f32.mrb[0].mxu0
      %1903 = vmatprep.mubr.f32.mxu0 %v913
      %1904 = vmatmul.mubr.f32.gmra.mrb[0].mxu0 %v912
      %v1905 = vpop.f32.mrb[0].mxu0
      %v1906 = vadd.f32 %v1681, %v1905
      %v1907 = vpop.f32.mrb[0].mxu0
      %1908 = vmatprep.mubr.f32.mxu0 %v931
      %1909 = vmatmul.mubr.f32.gmra.mrb[0].mxu0 %v930
      %v1910 = vpop.f32.mrb[0].mxu0
      %v1911 = vadd.f32 %v1686, %v1910
      %v1912 = vpop.f32.mrb[0].mxu0
      %1913 = vdwg.mxu0
      %1914 = vmatprep.subr.mxu0 0.0
      %1915 = vmatpush1.msra.mxu0 %v1040
      %1916 = vmatprep.subr.mxu0 0.0
      %1917 = vmatpush1.msra.mxu0 %v1041
      %1918 = vmatprep.subr.mxu0 0.0
      %1919 = vmatpush1.msra.mxu0 %v1042
      %1920 = vmatprep.subr.mxu0 0.0
      %1921 = vmatpush1.msra.mxu0 %v1043
      %1922 = vmatprep.subr.mxu0 0.0
      %1923 = vmatpush1.msra.mxu0 %v1044
      %1924 = vmatprep.subr.mxu0 0.0
      %1925 = vmatpush1.msra.mxu0 %v1045
      %1926 = vmatprep.subr.mxu0 0.0
      %1927 = vmatpush1.msra.mxu0 %v1046
      %1928 = vmatprep.subr.mxu0 0.0
      %1929 = vmatpush1.msra.mxu0 %v1047
      %1930 = vmatprep.subr.mxu0 0.0
      %1931 = vmatpush1.msra.mxu0 %v1048
      %1932 = vmatprep.subr.mxu0 0.0
      %1933 = vmatpush1.msra.mxu0 %v1049
      %1934 = vmatprep.subr.mxu0 0.0
      %1935 = vmatpush1.msra.mxu0 %v1050
      %1936 = vmatprep.subr.mxu0 0.0
      %1937 = vmatpush1.msra.mxu0 %v1051
      %1938 = vmatprep.subr.mxu0 0.0
      %1939 = vmatpush1.msra.mxu0 %v1052
      %1940 = vmatprep.subr.mxu0 0.0
      %1941 = vmatpush1.msra.mxu0 %v1053
      %1942 = vmatprep.subr.mxu0 0.0
      %1943 = vmatpush1.msra.mxu0 %v1054
      %1944 = vmatprep.subr.mxu0 0.0
      %1945 = vmatpush1.msra.mxu0 %v1055
      %1946 = vmatprep.subr.mxu0 0.0
      %1947 = vmatpush1.msra.mxu0 %v1056
      %1948 = vmatprep.subr.mxu0 0.0
      %1949 = vmatpush1.msra.mxu0 %v1057
      %1950 = vmatprep.subr.mxu0 0.0
      %1951 = vmatpush1.msra.mxu0 %v1058
      %1952 = vmatprep.subr.mxu0 0.0
      %1953 = vmatpush1.msra.mxu0 %v1059
      %1954 = vmatprep.subr.mxu0 0.0
      %1955 = vmatpush1.msra.mxu0 %v1060
      %1956 = vmatprep.subr.mxu0 0.0
      %1957 = vmatpush1.msra.mxu0 %v1061
      %1958 = vmatprep.subr.mxu0 0.0
      %1959 = vmatpush1.msra.mxu0 %v1062
      %1960 = vmatprep.subr.mxu0 0.0
      %1961 = vmatpush1.msra.mxu0 %v1063
      %1962 = vmatprep.subr.mxu0 0.0
      %1963 = vmatpush1.msra.mxu0 %v1064
      %1964 = vmatprep.subr.mxu0 0.0
      %1965 = vmatpush1.msra.mxu0 %v1065
      %1966 = vmatprep.subr.mxu0 0.0
      %1967 = vmatpush1.msra.mxu0 %v1066
      %1968 = vmatprep.subr.mxu0 0.0
      %1969 = vmatpush1.msra.mxu0 %v1067
      %1970 = vmatprep.subr.mxu0 0.0
      %1971 = vmatpush1.msra.mxu0 %v1068
      %1972 = vmatprep.subr.mxu0 0.0
      %1973 = vmatpush1.msra.mxu0 %v1069
      %1974 = vmatprep.subr.mxu0 0.0
      %1975 = vmatpush1.msra.mxu0 %v1070
      %1976 = vmatprep.subr.mxu0 0.0
      %1977 = vmatpush1.msra.mxu0 %v1071
      %1978 = vmatprep.mubr.f32.mxu0 %v375
      %1979 = vmatmul.mubr.f32.gmra.mrb[0].mxu0 %v374
      %v1980 = vpop.f32.mrb[0].mxu0
      %v1981 = vadd.f32 %v1756, %v1980
      %v1982 = vpop.f32.mrb[0].mxu0
      %1983 = vmatprep.mubr.f32.mxu0 %v393
      %1984 = vmatmul.mubr.f32.gmra.mrb[0].mxu0 %v392
      %v1985 = vpop.f32.mrb[0].mxu0
      %v1986 = vadd.f32 %v1761, %v1985
      %v1987 = vpop.f32.mrb[0].mxu0
      %1988 = vmatprep.mubr.f32.mxu0 %v411
      %1989 = vmatmul.mubr.f32.gmra.mrb[0].mxu0 %v410
      %v1990 = vpop.f32.mrb[0].mxu0
      %v1991 = vadd.f32 %v1766, %v1990
      %v1992 = vpop.f32.mrb[0].mxu0
      %1993 = vmatprep.mubr.f32.mxu0 %v429
      %1994 = vmatmul.mubr.f32.gmra.mrb[0].mxu0 %v428
      %v1995 = vpop.f32.mrb[0].mxu0
      %v1996 = vadd.f32 %v1771, %v1995
      %v1997 = vpop.f32.mrb[0].mxu0
      %1998 = vmatprep.mubr.f32.mxu0 %v447
      %1999 = vmatmul.mubr.f32.gmra.mrb[0].mxu0 %v446
      %v2000 = vpop.f32.mrb[0].mxu0
      %v2001 = vadd.f32 %v1776, %v2000
      %v2002 = vpop.f32.mrb[0].mxu0
      %2003 = vmatprep.mubr.f32.mxu0 %v465
      %2004 = vmatmul.mubr.f32.gmra.mrb[0].mxu0 %v464
      %v2005 = vpop.f32.mrb[0].mxu0
      %v2006 = vadd.f32 %v1781, %v2005
      %v2007 = vpop.f32.mrb[0].mxu0
      %2008 = vmatprep.mubr.f32.mxu0 %v483
      %2009 = vmatmul.mubr.f32.gmra.mrb[0].mxu0 %v482
      %v2010 = vpop.f32.mrb[0].mxu0
      %v2011 = vadd.f32 %v1786, %v2010
      %v2012 = vpop.f32.mrb[0].mxu0
      %2013 = vmatprep.mubr.f32.mxu0 %v501
      %2014 = vmatmul.mubr.f32.gmra.mrb[0].mxu0 %v500
      %v2015 = vpop.f32.mrb[0].mxu0
      %v2016 = vadd.f32 %v1791, %v2015
      %v2017 = vpop.f32.mrb[0].mxu0
      %2018 = vmatprep.mubr.f32.mxu0 %v519
      %2019 = vmatmul.mubr.f32.gmra.mrb[0].mxu0 %v518
      %v2020 = vpop.f32.mrb[0].mxu0
      %v2021 = vadd.f32 %v1796, %v2020
      %v2022 = vpop.f32.mrb[0].mxu0
      %2023 = vmatprep.mubr.f32.mxu0 %v537
      %2024 = vmatmul.mubr.f32.gmra.mrb[0].mxu0 %v536
      %v2025 = vpop.f32.mrb[0].mxu0
      %v2026 = vadd.f32 %v1801, %v2025
      %v2027 = vpop.f32.mrb[0].mxu0
      %2028 = vmatprep.mubr.f32.mxu0 %v555
      %2029 = vmatmul.mubr.f32.gmra.mrb[0].mxu0 %v554
      %v2030 = vpop.f32.mrb[0].mxu0
      %v2031 = vadd.f32 %v1806, %v2030
      %v2032 = vpop.f32.mrb[0].mxu0
      %2033 = vmatprep.mubr.f32.mxu0 %v573
      %2034 = vmatmul.mubr.f32.gmra.mrb[0].mxu0 %v572
      %v2035 = vpop.f32.mrb[0].mxu0
      %v2036 = vadd.f32 %v1811, %v2035
      %v2037 = vpop.f32.mrb[0].mxu0
      %2038 = vmatprep.mubr.f32.mxu0 %v591
      %2039 = vmatmul.mubr.f32.gmra.mrb[0].mxu0 %v590
      %v2040 = vpop.f32.mrb[0].mxu0
      %v2041 = vadd.f32 %v1816, %v2040
      %v2042 = vpop.f32.mrb[0].mxu0
      %2043 = vmatprep.mubr.f32.mxu0 %v609
      %2044 = vmatmul.mubr.f32.gmra.mrb[0].mxu0 %v608
      %v2045 = vpop.f32.mrb[0].mxu0
      %v2046 = vadd.f32 %v1821, %v2045
      %v2047 = vpop.f32.mrb[0].mxu0
      %2048 = vmatprep.mubr.f32.mxu0 %v627
      %2049 = vmatmul.mubr.f32.gmra.mrb[0].mxu0 %v626
      %v2050 = vpop.f32.mrb[0].mxu0
      %v2051 = vadd.f32 %v1826, %v2050
      %v2052 = vpop.f32.mrb[0].mxu0
      %2053 = vmatprep.mubr.f32.mxu0 %v645
      %2054 = vmatmul.mubr.f32.gmra.mrb[0].mxu0 %v644
      %v2055 = vpop.f32.mrb[0].mxu0
      %v2056 = vadd.f32 %v1831, %v2055
      %v2057 = vpop.f32.mrb[0].mxu0
      %2058 = vmatprep.mubr.f32.mxu0 %v663
      %2059 = vmatmul.mubr.f32.gmra.mrb[0].mxu0 %v662
      %v2060 = vpop.f32.mrb[0].mxu0
      %v2061 = vadd.f32 %v1836, %v2060
      %v2062 = vpop.f32.mrb[0].mxu0
      %2063 = vmatprep.mubr.f32.mxu0 %v681
      %2064 = vmatmul.mubr.f32.gmra.mrb[0].mxu0 %v680
      %v2065 = vpop.f32.mrb[0].mxu0
      %v2066 = vadd.f32 %v1841, %v2065
      %v2067 = vpop.f32.mrb[0].mxu0
      %2068 = vmatprep.mubr.f32.mxu0 %v699
      %2069 = vmatmul.mubr.f32.gmra.mrb[0].mxu0 %v698
      %v2070 = vpop.f32.mrb[0].mxu0
      %v2071 = vadd.f32 %v1846, %v2070
      %v2072 = vpop.f32.mrb[0].mxu0
      %2073 = vmatprep.mubr.f32.mxu0 %v717
      %2074 = vmatmul.mubr.f32.gmra.mrb[0].mxu0 %v716
      %v2075 = vpop.f32.mrb[0].mxu0
      %v2076 = vadd.f32 %v1851, %v2075
      %v2077 = vpop.f32.mrb[0].mxu0
      %2078 = vmatprep.mubr.f32.mxu0 %v735
      %2079 = vmatmul.mubr.f32.gmra.mrb[0].mxu0 %v734
      %v2080 = vpop.f32.mrb[0].mxu0
      %v2081 = vadd.f32 %v1856, %v2080
      %v2082 = vpop.f32.mrb[0].mxu0
      %2083 = vmatprep.mubr.f32.mxu0 %v753
      %2084 = vmatmul.mubr.f32.gmra.mrb[0].mxu0 %v752
      %v2085 = vpop.f32.mrb[0].mxu0
      %v2086 = vadd.f32 %v1861, %v2085
      %v2087 = vpop.f32.mrb[0].mxu0
      %2088 = vmatprep.mubr.f32.mxu0 %v771
      %2089 = vmatmul.mubr.f32.gmra.mrb[0].mxu0 %v770
      %v2090 = vpop.f32.mrb[0].mxu0
      %v2091 = vadd.f32 %v1866, %v2090
      %v2092 = vpop.f32.mrb[0].mxu0
      %2093 = vmatprep.mubr.f32.mxu0 %v789
      %2094 = vmatmul.mubr.f32.gmra.mrb[0].mxu0 %v788
      %v2095 = vpop.f32.mrb[0].mxu0
      %v2096 = vadd.f32 %v1871, %v2095
      %v2097 = vpop.f32.mrb[0].mxu0
      %2098 = vmatprep.mubr.f32.mxu0 %v807
      %2099 = vmatmul.mubr.f32.gmra.mrb[0].mxu0 %v806
      %v2100 = vpop.f32.mrb[0].mxu0
      %v2101 = vadd.f32 %v1876, %v2100
      %v2102 = vpop.f32.mrb[0].mxu0
      %2103 = vmatprep.mubr.f32.mxu0 %v825
      %2104 = vmatmul.mubr.f32.gmra.mrb[0].mxu0 %v824
      %v2105 = vpop.f32.mrb[0].mxu0
      %v2106 = vadd.f32 %v1881, %v2105
      %v2107 = vpop.f32.mrb[0].mxu0
      %2108 = vmatprep.mubr.f32.mxu0 %v843
      %2109 = vmatmul.mubr.f32.gmra.mrb[0].mxu0 %v842
      %v2110 = vpop.f32.mrb[0].mxu0
      %v2111 = vadd.f32 %v1886, %v2110
      %v2112 = vpop.f32.mrb[0].mxu0
      %2113 = vmatprep.mubr.f32.mxu0 %v861
      %2114 = vmatmul.mubr.f32.gmra.mrb[0].mxu0 %v860
      %v2115 = vpop.f32.mrb[0].mxu0
      %v2116 = vadd.f32 %v1891, %v2115
      %v2117 = vpop.f32.mrb[0].mxu0
      %2118 = vmatprep.mubr.f32.mxu0 %v879
      %2119 = vmatmul.mubr.f32.gmra.mrb[0].mxu0 %v878
      %v2120 = vpop.f32.mrb[0].mxu0
      %v2121 = vadd.f32 %v1896, %v2120
      %v2122 = vpop.f32.mrb[0].mxu0
      %2123 = vmatprep.mubr.f32.mxu0 %v897
      %2124 = vmatmul.mubr.f32.gmra.mrb[0].mxu0 %v896
      %v2125 = vpop.f32.mrb[0].mxu0
      %v2126 = vadd.f32 %v1901, %v2125
      %v2127 = vpop.f32.mrb[0].mxu0
      %2128 = vmatprep.mubr.f32.mxu0 %v915
      %2129 = vmatmul.mubr.f32.gmra.mrb[0].mxu0 %v914
      %v2130 = vpop.f32.mrb[0].mxu0
      %v2131 = vadd.f32 %v1906, %v2130
      %v2132 = vpop.f32.mrb[0].mxu0
      %2133 = vmatprep.mubr.f32.mxu0 %v933
      %2134 = vmatmul.mubr.f32.gmra.mrb[0].mxu0 %v932
      %v2135 = vpop.f32.mrb[0].mxu0
      %v2136 = vadd.f32 %v1911, %v2135
      %v2137 = vpop.f32.mrb[0].mxu0
      %2138 = vdwg.mxu0
      %2139 = vmatprep.subr.mxu0 0.0
      %2140 = vmatpush1.msra.mxu0 %v1072
      %2141 = vmatprep.subr.mxu0 0.0
      %2142 = vmatpush1.msra.mxu0 %v1073
      %2143 = vmatprep.subr.mxu0 0.0
      %2144 = vmatpush1.msra.mxu0 %v1074
      %2145 = vmatprep.subr.mxu0 0.0
      %2146 = vmatpush1.msra.mxu0 %v1075
      %2147 = vmatprep.subr.mxu0 0.0
      %2148 = vmatpush1.msra.mxu0 %v1076
      %2149 = vmatprep.subr.mxu0 0.0
      %2150 = vmatpush1.msra.mxu0 %v1077
      %2151 = vmatprep.subr.mxu0 0.0
      %2152 = vmatpush1.msra.mxu0 %v1078
      %2153 = vmatprep.subr.mxu0 0.0
      %2154 = vmatpush1.msra.mxu0 %v1079
      %2155 = vmatprep.subr.mxu0 0.0
      %2156 = vmatpush1.msra.mxu0 %v1080
      %2157 = vmatprep.subr.mxu0 0.0
      %2158 = vmatpush1.msra.mxu0 %v1081
      %2159 = vmatprep.subr.mxu0 0.0
      %2160 = vmatpush1.msra.mxu0 %v1082
      %2161 = vmatprep.subr.mxu0 0.0
      %2162 = vmatpush1.msra.mxu0 %v1083
      %2163 = vmatprep.subr.mxu0 0.0
      %2164 = vmatpush1.msra.mxu0 %v1084
      %2165 = vmatprep.subr.mxu0 0.0
      %2166 = vmatpush1.msra.mxu0 %v1085
      %2167 = vmatprep.subr.mxu0 0.0
      %2168 = vmatpush1.msra.mxu0 %v1086
      %2169 = vmatprep.subr.mxu0 0.0
      %2170 = vmatpush1.msra.mxu0 %v1087
      %2171 = vmatprep.subr.mxu0 0.0
      %2172 = vmatpush1.msra.mxu0 %v1088
      %2173 = vmatprep.subr.mxu0 0.0
      %2174 = vmatpush1.msra.mxu0 %v1089
      %2175 = vmatprep.subr.mxu0 0.0
      %2176 = vmatpush1.msra.mxu0 %v1090
      %2177 = vmatprep.subr.mxu0 0.0
      %2178 = vmatpush1.msra.mxu0 %v1091
      %2179 = vmatprep.subr.mxu0 0.0
      %2180 = vmatpush1.msra.mxu0 %v1092
      %2181 = vmatprep.subr.mxu0 0.0
      %2182 = vmatpush1.msra.mxu0 %v1093
      %2183 = vmatprep.subr.mxu0 0.0
      %2184 = vmatpush1.msra.mxu0 %v1094
      %2185 = vmatprep.subr.mxu0 0.0
      %2186 = vmatpush1.msra.mxu0 %v1095
      %2187 = vmatprep.subr.mxu0 0.0
      %2188 = vmatpush1.msra.mxu0 %v1096
      %2189 = vmatprep.subr.mxu0 0.0
      %2190 = vmatpush1.msra.mxu0 %v1097
      %2191 = vmatprep.subr.mxu0 0.0
      %2192 = vmatpush1.msra.mxu0 %v1098
      %2193 = vmatprep.subr.mxu0 0.0
      %2194 = vmatpush1.msra.mxu0 %v1099
      %2195 = vmatprep.subr.mxu0 0.0
      %2196 = vmatpush1.msra.mxu0 %v1100
      %2197 = vmatprep.subr.mxu0 0.0
      %2198 = vmatpush1.msra.mxu0 %v1101
      %2199 = vmatprep.subr.mxu0 0.0
      %2200 = vmatpush1.msra.mxu0 %v1102
      %2201 = vmatprep.subr.mxu0 0.0
      %2202 = vmatpush1.msra.mxu0 %v1103
      %2203 = vmatprep.mubr.f32.mxu0 %v377
      %2204 = vmatmul.mubr.f32.gmra.mrb[0].mxu0 %v376
      %v2205 = vpop.f32.mrb[0].mxu0
      %v2206 = vadd.f32 %v1981, %v2205
      %v2207 = vpop.f32.mrb[0].mxu0
      %2208 = vmatprep.mubr.f32.mxu0 %v395
      %2209 = vmatmul.mubr.f32.gmra.mrb[0].mxu0 %v394
      %v2210 = vpop.f32.mrb[0].mxu0
      %v2211 = vadd.f32 %v1986, %v2210
      %v2212 = vpop.f32.mrb[0].mxu0
      %2213 = vmatprep.mubr.f32.mxu0 %v413
      %2214 = vmatmul.mubr.f32.gmra.mrb[0].mxu0 %v412
      %v2215 = vpop.f32.mrb[0].mxu0
      %v2216 = vadd.f32 %v1991, %v2215
      %v2217 = vpop.f32.mrb[0].mxu0
      %2218 = vmatprep.mubr.f32.mxu0 %v431
      %2219 = vmatmul.mubr.f32.gmra.mrb[0].mxu0 %v430
      %v2220 = vpop.f32.mrb[0].mxu0
      %v2221 = vadd.f32 %v1996, %v2220
      %v2222 = vpop.f32.mrb[0].mxu0
      %2223 = vmatprep.mubr.f32.mxu0 %v449
      %2224 = vmatmul.mubr.f32.gmra.mrb[0].mxu0 %v448
      %v2225 = vpop.f32.mrb[0].mxu0
      %v2226 = vadd.f32 %v2001, %v2225
      %v2227 = vpop.f32.mrb[0].mxu0
      %2228 = vmatprep.mubr.f32.mxu0 %v467
      %2229 = vmatmul.mubr.f32.gmra.mrb[0].mxu0 %v466
      %v2230 = vpop.f32.mrb[0].mxu0
      %v2231 = vadd.f32 %v2006, %v2230
      %v2232 = vpop.f32.mrb[0].mxu0
      %2233 = vmatprep.mubr.f32.mxu0 %v485
      %2234 = vmatmul.mubr.f32.gmra.mrb[0].mxu0 %v484
      %v2235 = vpop.f32.mrb[0].mxu0
      %v2236 = vadd.f32 %v2011, %v2235
      %v2237 = vpop.f32.mrb[0].mxu0
      %2238 = vmatprep.mubr.f32.mxu0 %v503
      %2239 = vmatmul.mubr.f32.gmra.mrb[0].mxu0 %v502
      %v2240 = vpop.f32.mrb[0].mxu0
      %v2241 = vadd.f32 %v2016, %v2240
      %v2242 = vpop.f32.mrb[0].mxu0
      %2243 = vmatprep.mubr.f32.mxu0 %v521
      %2244 = vmatmul.mubr.f32.gmra.mrb[0].mxu0 %v520
      %v2245 = vpop.f32.mrb[0].mxu0
      %v2246 = vadd.f32 %v2021, %v2245
      %v2247 = vpop.f32.mrb[0].mxu0
      %2248 = vmatprep.mubr.f32.mxu0 %v539
      %2249 = vmatmul.mubr.f32.gmra.mrb[0].mxu0 %v538
      %v2250 = vpop.f32.mrb[0].mxu0
      %v2251 = vadd.f32 %v2026, %v2250
      %v2252 = vpop.f32.mrb[0].mxu0
      %2253 = vmatprep.mubr.f32.mxu0 %v557
      %2254 = vmatmul.mubr.f32.gmra.mrb[0].mxu0 %v556
      %v2255 = vpop.f32.mrb[0].mxu0
      %v2256 = vadd.f32 %v2031, %v2255
      %v2257 = vpop.f32.mrb[0].mxu0
      %2258 = vmatprep.mubr.f32.mxu0 %v575
      %2259 = vmatmul.mubr.f32.gmra.mrb[0].mxu0 %v574
      %v2260 = vpop.f32.mrb[0].mxu0
      %v2261 = vadd.f32 %v2036, %v2260
      %v2262 = vpop.f32.mrb[0].mxu0
      %2263 = vmatprep.mubr.f32.mxu0 %v593
      %2264 = vmatmul.mubr.f32.gmra.mrb[0].mxu0 %v592
      %v2265 = vpop.f32.mrb[0].mxu0
      %v2266 = vadd.f32 %v2041, %v2265
      %v2267 = vpop.f32.mrb[0].mxu0
      %2268 = vmatprep.mubr.f32.mxu0 %v611
      %2269 = vmatmul.mubr.f32.gmra.mrb[0].mxu0 %v610
      %v2270 = vpop.f32.mrb[0].mxu0
      %v2271 = vadd.f32 %v2046, %v2270
      %v2272 = vpop.f32.mrb[0].mxu0
      %2273 = vmatprep.mubr.f32.mxu0 %v629
      %2274 = vmatmul.mubr.f32.gmra.mrb[0].mxu0 %v628
      %v2275 = vpop.f32.mrb[0].mxu0
      %v2276 = vadd.f32 %v2051, %v2275
      %v2277 = vpop.f32.mrb[0].mxu0
      %2278 = vmatprep.mubr.f32.mxu0 %v647
      %2279 = vmatmul.mubr.f32.gmra.mrb[0].mxu0 %v646
      %v2280 = vpop.f32.mrb[0].mxu0
      %v2281 = vadd.f32 %v2056, %v2280
      %v2282 = vpop.f32.mrb[0].mxu0
      %2283 = vmatprep.mubr.f32.mxu0 %v665
      %2284 = vmatmul.mubr.f32.gmra.mrb[0].mxu0 %v664
      %v2285 = vpop.f32.mrb[0].mxu0
      %v2286 = vadd.f32 %v2061, %v2285
      %v2287 = vpop.f32.mrb[0].mxu0
      %2288 = vmatprep.mubr.f32.mxu0 %v683
      %2289 = vmatmul.mubr.f32.gmra.mrb[0].mxu0 %v682
      %v2290 = vpop.f32.mrb[0].mxu0
      %v2291 = vadd.f32 %v2066, %v2290
      %v2292 = vpop.f32.mrb[0].mxu0
      %2293 = vmatprep.mubr.f32.mxu0 %v701
      %2294 = vmatmul.mubr.f32.gmra.mrb[0].mxu0 %v700
      %v2295 = vpop.f32.mrb[0].mxu0
      %v2296 = vadd.f32 %v2071, %v2295
      %v2297 = vpop.f32.mrb[0].mxu0
      %2298 = vmatprep.mubr.f32.mxu0 %v719
      %2299 = vmatmul.mubr.f32.gmra.mrb[0].mxu0 %v718
      %v2300 = vpop.f32.mrb[0].mxu0
      %v2301 = vadd.f32 %v2076, %v2300
      %v2302 = vpop.f32.mrb[0].mxu0
      %2303 = vmatprep.mubr.f32.mxu0 %v737
      %2304 = vmatmul.mubr.f32.gmra.mrb[0].mxu0 %v736
      %v2305 = vpop.f32.mrb[0].mxu0
      %v2306 = vadd.f32 %v2081, %v2305
      %v2307 = vpop.f32.mrb[0].mxu0
      %2308 = vmatprep.mubr.f32.mxu0 %v755
      %2309 = vmatmul.mubr.f32.gmra.mrb[0].mxu0 %v754
      %v2310 = vpop.f32.mrb[0].mxu0
      %v2311 = vadd.f32 %v2086, %v2310
      %v2312 = vpop.f32.mrb[0].mxu0
      %2313 = vmatprep.mubr.f32.mxu0 %v773
      %2314 = vmatmul.mubr.f32.gmra.mrb[0].mxu0 %v772
      %v2315 = vpop.f32.mrb[0].mxu0
      %v2316 = vadd.f32 %v2091, %v2315
      %v2317 = vpop.f32.mrb[0].mxu0
      %2318 = vmatprep.mubr.f32.mxu0 %v791
      %2319 = vmatmul.mubr.f32.gmra.mrb[0].mxu0 %v790
      %v2320 = vpop.f32.mrb[0].mxu0
      %v2321 = vadd.f32 %v2096, %v2320
      %v2322 = vpop.f32.mrb[0].mxu0
      %2323 = vmatprep.mubr.f32.mxu0 %v809
      %2324 = vmatmul.mubr.f32.gmra.mrb[0].mxu0 %v808
      %v2325 = vpop.f32.mrb[0].mxu0
      %v2326 = vadd.f32 %v2101, %v2325
      %v2327 = vpop.f32.mrb[0].mxu0
      %2328 = vmatprep.mubr.f32.mxu0 %v827
      %2329 = vmatmul.mubr.f32.gmra.mrb[0].mxu0 %v826
      %v2330 = vpop.f32.mrb[0].mxu0
      %v2331 = vadd.f32 %v2106, %v2330
      %v2332 = vpop.f32.mrb[0].mxu0
      %2333 = vmatprep.mubr.f32.mxu0 %v845
      %2334 = vmatmul.mubr.f32.gmra.mrb[0].mxu0 %v844
      %v2335 = vpop.f32.mrb[0].mxu0
      %v2336 = vadd.f32 %v2111, %v2335
      %v2337 = vpop.f32.mrb[0].mxu0
      %2338 = vmatprep.mubr.f32.mxu0 %v863
      %2339 = vmatmul.mubr.f32.gmra.mrb[0].mxu0 %v862
      %v2340 = vpop.f32.mrb[0].mxu0
      %v2341 = vadd.f32 %v2116, %v2340
      %v2342 = vpop.f32.mrb[0].mxu0
      %2343 = vmatprep.mubr.f32.mxu0 %v881
      %2344 = vmatmul.mubr.f32.gmra.mrb[0].mxu0 %v880
      %v2345 = vpop.f32.mrb[0].mxu0
      %v2346 = vadd.f32 %v2121, %v2345
      %v2347 = vpop.f32.mrb[0].mxu0
      %2348 = vmatprep.mubr.f32.mxu0 %v899
      %2349 = vmatmul.mubr.f32.gmra.mrb[0].mxu0 %v898
      %v2350 = vpop.f32.mrb[0].mxu0
      %v2351 = vadd.f32 %v2126, %v2350
      %v2352 = vpop.f32.mrb[0].mxu0
      %2353 = vmatprep.mubr.f32.mxu0 %v917
      %2354 = vmatmul.mubr.f32.gmra.mrb[0].mxu0 %v916
      %v2355 = vpop.f32.mrb[0].mxu0
      %v2356 = vadd.f32 %v2131, %v2355
      %v2357 = vpop.f32.mrb[0].mxu0
      %2358 = vmatprep.mubr.f32.mxu0 %v935
      %2359 = vmatmul.mubr.f32.gmra.mrb[0].mxu0 %v934
      %v2360 = vpop.f32.mrb[0].mxu0
      %v2361 = vadd.f32 %v2136, %v2360
      %v2362 = vpop.f32.mrb[0].mxu0
      %2363 = vdwg.mxu0
      %2364 = vmatprep.subr.mxu0 0.0
      %2365 = vmatpush1.msra.mxu0 %v1104
      %2366 = vmatprep.subr.mxu0 0.0
      %2367 = vmatpush1.msra.mxu0 %v1105
      %2368 = vmatprep.subr.mxu0 0.0
      %2369 = vmatpush1.msra.mxu0 %v1106
      %2370 = vmatprep.subr.mxu0 0.0
      %2371 = vmatpush1.msra.mxu0 %v1107
      %2372 = vmatprep.subr.mxu0 0.0
      %2373 = vmatpush1.msra.mxu0 %v1108
      %2374 = vmatprep.subr.mxu0 0.0
      %2375 = vmatpush1.msra.mxu0 %v1109
      %2376 = vmatprep.subr.mxu0 0.0
      %2377 = vmatpush1.msra.mxu0 %v1110
      %2378 = vmatprep.subr.mxu0 0.0
      %2379 = vmatpush1.msra.mxu0 %v1111
      %2380 = vmatprep.subr.mxu0 0.0
      %2381 = vmatpush1.msra.mxu0 %v1112
      %2382 = vmatprep.subr.mxu0 0.0
      %2383 = vmatpush1.msra.mxu0 %v1113
      %2384 = vmatprep.subr.mxu0 0.0
      %2385 = vmatpush1.msra.mxu0 %v1114
      %2386 = vmatprep.subr.mxu0 0.0
      %2387 = vmatpush1.msra.mxu0 %v1115
      %2388 = vmatprep.subr.mxu0 0.0
      %2389 = vmatpush1.msra.mxu0 %v1116
      %2390 = vmatprep.subr.mxu0 0.0
      %2391 = vmatpush1.msra.mxu0 %v1117
      %2392 = vmatprep.subr.mxu0 0.0
      %2393 = vmatpush1.msra.mxu0 %v1118
      %2394 = vmatprep.subr.mxu0 0.0
      %2395 = vmatpush1.msra.mxu0 %v1119
      %2396 = vmatprep.subr.mxu0 0.0
      %2397 = vmatpush1.msra.mxu0 %v1120
      %2398 = vmatprep.subr.mxu0 0.0
      %2399 = vmatpush1.msra.mxu0 %v1121
      %2400 = vmatprep.subr.mxu0 0.0
      %2401 = vmatpush1.msra.mxu0 %v1122
      %2402 = vmatprep.subr.mxu0 0.0
      %2403 = vmatpush1.msra.mxu0 %v1123
      %2404 = vmatprep.subr.mxu0 0.0
      %2405 = vmatpush1.msra.mxu0 %v1124
      %2406 = vmatprep.subr.mxu0 0.0
      %2407 = vmatpush1.msra.mxu0 %v1125
      %2408 = vmatprep.subr.mxu0 0.0
      %2409 = vmatpush1.msra.mxu0 %v1126
      %2410 = vmatprep.subr.mxu0 0.0
      %2411 = vmatpush1.msra.mxu0 %v1127
      %2412 = vmatprep.subr.mxu0 0.0
      %2413 = vmatpush1.msra.mxu0 %v1128
      %2414 = vmatprep.subr.mxu0 0.0
      %2415 = vmatpush1.msra.mxu0 %v1129
      %2416 = vmatprep.subr.mxu0 0.0
      %2417 = vmatpush1.msra.mxu0 %v1130
      %2418 = vmatprep.subr.mxu0 0.0
      %2419 = vmatpush1.msra.mxu0 %v1131
      %2420 = vmatprep.subr.mxu0 0.0
      %2421 = vmatpush1.msra.mxu0 %v1132
      %2422 = vmatprep.subr.mxu0 0.0
      %2423 = vmatpush1.msra.mxu0 %v1133
      %2424 = vmatprep.subr.mxu0 0.0
      %2425 = vmatpush1.msra.mxu0 %v1134
      %2426 = vmatprep.subr.mxu0 0.0
      %2427 = vmatpush1.msra.mxu0 %v1135
      %2428 = vmatprep.mubr.f32.mxu0 %v379
      %2429 = vmatmul.mubr.f32.gmra.mrb[0].mxu0 %v378
      %v2430 = vpop.f32.mrb[0].mxu0
      %v2431 = vadd.f32 %v2206, %v2430
      %v2432 = vpop.f32.mrb[0].mxu0
      %2433 = vmatprep.mubr.f32.mxu0 %v397
      %2434 = vmatmul.mubr.f32.gmra.mrb[0].mxu0 %v396
      %v2435 = vpop.f32.mrb[0].mxu0
      %v2436 = vadd.f32 %v2211, %v2435
      %v2437 = vpop.f32.mrb[0].mxu0
      %2438 = vmatprep.mubr.f32.mxu0 %v415
      %2439 = vmatmul.mubr.f32.gmra.mrb[0].mxu0 %v414
      %v2440 = vpop.f32.mrb[0].mxu0
      %v2441 = vadd.f32 %v2216, %v2440
      %v2442 = vpop.f32.mrb[0].mxu0
      %2443 = vmatprep.mubr.f32.mxu0 %v433
      %2444 = vmatmul.mubr.f32.gmra.mrb[0].mxu0 %v432
      %v2445 = vpop.f32.mrb[0].mxu0
      %v2446 = vadd.f32 %v2221, %v2445
      %v2447 = vpop.f32.mrb[0].mxu0
      %2448 = vmatprep.mubr.f32.mxu0 %v451
      %2449 = vmatmul.mubr.f32.gmra.mrb[0].mxu0 %v450
      %v2450 = vpop.f32.mrb[0].mxu0
      %v2451 = vadd.f32 %v2226, %v2450
      %v2452 = vpop.f32.mrb[0].mxu0
      %2453 = vmatprep.mubr.f32.mxu0 %v469
      %2454 = vmatmul.mubr.f32.gmra.mrb[0].mxu0 %v468
      %v2455 = vpop.f32.mrb[0].mxu0
      %v2456 = vadd.f32 %v2231, %v2455
      %v2457 = vpop.f32.mrb[0].mxu0
      %2458 = vmatprep.mubr.f32.mxu0 %v487
      %2459 = vmatmul.mubr.f32.gmra.mrb[0].mxu0 %v486
      %v2460 = vpop.f32.mrb[0].mxu0
      %v2461 = vadd.f32 %v2236, %v2460
      %v2462 = vpop.f32.mrb[0].mxu0
      %2463 = vmatprep.mubr.f32.mxu0 %v505
      %2464 = vmatmul.mubr.f32.gmra.mrb[0].mxu0 %v504
      %v2465 = vpop.f32.mrb[0].mxu0
      %v2466 = vadd.f32 %v2241, %v2465
      %v2467 = vpop.f32.mrb[0].mxu0
      %2468 = vmatprep.mubr.f32.mxu0 %v523
      %2469 = vmatmul.mubr.f32.gmra.mrb[0].mxu0 %v522
      %v2470 = vpop.f32.mrb[0].mxu0
      %v2471 = vadd.f32 %v2246, %v2470
      %v2472 = vpop.f32.mrb[0].mxu0
      %2473 = vmatprep.mubr.f32.mxu0 %v541
      %2474 = vmatmul.mubr.f32.gmra.mrb[0].mxu0 %v540
      %v2475 = vpop.f32.mrb[0].mxu0
      %v2476 = vadd.f32 %v2251, %v2475
      %v2477 = vpop.f32.mrb[0].mxu0
      %2478 = vmatprep.mubr.f32.mxu0 %v559
      %2479 = vmatmul.mubr.f32.gmra.mrb[0].mxu0 %v558
      %v2480 = vpop.f32.mrb[0].mxu0
      %v2481 = vadd.f32 %v2256, %v2480
      %v2482 = vpop.f32.mrb[0].mxu0
      %2483 = vmatprep.mubr.f32.mxu0 %v577
      %2484 = vmatmul.mubr.f32.gmra.mrb[0].mxu0 %v576
      %v2485 = vpop.f32.mrb[0].mxu0
      %v2486 = vadd.f32 %v2261, %v2485
      %v2487 = vpop.f32.mrb[0].mxu0
      %2488 = vmatprep.mubr.f32.mxu0 %v595
      %2489 = vmatmul.mubr.f32.gmra.mrb[0].mxu0 %v594
      %v2490 = vpop.f32.mrb[0].mxu0
      %v2491 = vadd.f32 %v2266, %v2490
      %v2492 = vpop.f32.mrb[0].mxu0
      %2493 = vmatprep.mubr.f32.mxu0 %v613
      %2494 = vmatmul.mubr.f32.gmra.mrb[0].mxu0 %v612
      %v2495 = vpop.f32.mrb[0].mxu0
      %v2496 = vadd.f32 %v2271, %v2495
      %v2497 = vpop.f32.mrb[0].mxu0
      %2498 = vmatprep.mubr.f32.mxu0 %v631
      %2499 = vmatmul.mubr.f32.gmra.mrb[0].mxu0 %v630
      %v2500 = vpop.f32.mrb[0].mxu0
      %v2501 = vadd.f32 %v2276, %v2500
      %v2502 = vpop.f32.mrb[0].mxu0
      %2503 = vmatprep.mubr.f32.mxu0 %v649
      %2504 = vmatmul.mubr.f32.gmra.mrb[0].mxu0 %v648
      %v2505 = vpop.f32.mrb[0].mxu0
      %v2506 = vadd.f32 %v2281, %v2505
      %v2507 = vpop.f32.mrb[0].mxu0
      %2508 = vmatprep.mubr.f32.mxu0 %v667
      %2509 = vmatmul.mubr.f32.gmra.mrb[0].mxu0 %v666
      %v2510 = vpop.f32.mrb[0].mxu0
      %v2511 = vadd.f32 %v2286, %v2510
      %v2512 = vpop.f32.mrb[0].mxu0
      %2513 = vmatprep.mubr.f32.mxu0 %v685
      %2514 = vmatmul.mubr.f32.gmra.mrb[0].mxu0 %v684
      %v2515 = vpop.f32.mrb[0].mxu0
      %v2516 = vadd.f32 %v2291, %v2515
      %v2517 = vpop.f32.mrb[0].mxu0
      %2518 = vmatprep.mubr.f32.mxu0 %v703
      %2519 = vmatmul.mubr.f32.gmra.mrb[0].mxu0 %v702
      %v2520 = vpop.f32.mrb[0].mxu0
      %v2521 = vadd.f32 %v2296, %v2520
      %v2522 = vpop.f32.mrb[0].mxu0
      %2523 = vmatprep.mubr.f32.mxu0 %v721
      %2524 = vmatmul.mubr.f32.gmra.mrb[0].mxu0 %v720
      %v2525 = vpop.f32.mrb[0].mxu0
      %v2526 = vadd.f32 %v2301, %v2525
      %v2527 = vpop.f32.mrb[0].mxu0
      %2528 = vmatprep.mubr.f32.mxu0 %v739
      %2529 = vmatmul.mubr.f32.gmra.mrb[0].mxu0 %v738
      %v2530 = vpop.f32.mrb[0].mxu0
      %v2531 = vadd.f32 %v2306, %v2530
      %v2532 = vpop.f32.mrb[0].mxu0
      %2533 = vmatprep.mubr.f32.mxu0 %v757
      %2534 = vmatmul.mubr.f32.gmra.mrb[0].mxu0 %v756
      %v2535 = vpop.f32.mrb[0].mxu0
      %v2536 = vadd.f32 %v2311, %v2535
      %v2537 = vpop.f32.mrb[0].mxu0
      %2538 = vmatprep.mubr.f32.mxu0 %v775
      %2539 = vmatmul.mubr.f32.gmra.mrb[0].mxu0 %v774
      %v2540 = vpop.f32.mrb[0].mxu0
      %v2541 = vadd.f32 %v2316, %v2540
      %v2542 = vpop.f32.mrb[0].mxu0
      %2543 = vmatprep.mubr.f32.mxu0 %v793
      %2544 = vmatmul.mubr.f32.gmra.mrb[0].mxu0 %v792
      %v2545 = vpop.f32.mrb[0].mxu0
      %v2546 = vadd.f32 %v2321, %v2545
      %v2547 = vpop.f32.mrb[0].mxu0
      %2548 = vmatprep.mubr.f32.mxu0 %v811
      %2549 = vmatmul.mubr.f32.gmra.mrb[0].mxu0 %v810
      %v2550 = vpop.f32.mrb[0].mxu0
      %v2551 = vadd.f32 %v2326, %v2550
      %v2552 = vpop.f32.mrb[0].mxu0
      %2553 = vmatprep.mubr.f32.mxu0 %v829
      %2554 = vmatmul.mubr.f32.gmra.mrb[0].mxu0 %v828
      %v2555 = vpop.f32.mrb[0].mxu0
      %v2556 = vadd.f32 %v2331, %v2555
      %v2557 = vpop.f32.mrb[0].mxu0
      %2558 = vmatprep.mubr.f32.mxu0 %v847
      %2559 = vmatmul.mubr.f32.gmra.mrb[0].mxu0 %v846
      %v2560 = vpop.f32.mrb[0].mxu0
      %v2561 = vadd.f32 %v2336, %v2560
      %v2562 = vpop.f32.mrb[0].mxu0
      %2563 = vmatprep.mubr.f32.mxu0 %v865
      %2564 = vmatmul.mubr.f32.gmra.mrb[0].mxu0 %v864
      %v2565 = vpop.f32.mrb[0].mxu0
      %v2566 = vadd.f32 %v2341, %v2565
      %v2567 = vpop.f32.mrb[0].mxu0
      %2568 = vmatprep.mubr.f32.mxu0 %v883
      %2569 = vmatmul.mubr.f32.gmra.mrb[0].mxu0 %v882
      %v2570 = vpop.f32.mrb[0].mxu0
      %v2571 = vadd.f32 %v2346, %v2570
      %v2572 = vpop.f32.mrb[0].mxu0
      %2573 = vmatprep.mubr.f32.mxu0 %v901
      %2574 = vmatmul.mubr.f32.gmra.mrb[0].mxu0 %v900
      %v2575 = vpop.f32.mrb[0].mxu0
      %v2576 = vadd.f32 %v2351, %v2575
      %v2577 = vpop.f32.mrb[0].mxu0
      %2578 = vmatprep.mubr.f32.mxu0 %v919
      %2579 = vmatmul.mubr.f32.gmra.mrb[0].mxu0 %v918
      %v2580 = vpop.f32.mrb[0].mxu0
      %v2581 = vadd.f32 %v2356, %v2580
      %v2582 = vpop.f32.mrb[0].mxu0
      %2583 = vmatprep.mubr.f32.mxu0 %v937
      %2584 = vmatmul.mubr.f32.gmra.mrb[0].mxu0 %v936
      %v2585 = vpop.f32.mrb[0].mxu0
      %v2586 = vadd.f32 %v2361, %v2585
      %v2587 = vpop.f32.mrb[0].mxu0
      %2588 = vdwg.mxu0
      %2589 = vmatprep.subr.mxu0 0.0
      %2590 = vmatpush1.msra.mxu0 %v1136
      %2591 = vmatprep.subr.mxu0 0.0
      %2592 = vmatpush1.msra.mxu0 %v1137
      %2593 = vmatprep.subr.mxu0 0.0
      %2594 = vmatpush1.msra.mxu0 %v1138
      %2595 = vmatprep.subr.mxu0 0.0
      %2596 = vmatpush1.msra.mxu0 %v1139
      %2597 = vmatprep.subr.mxu0 0.0
      %2598 = vmatpush1.msra.mxu0 %v1140
      %2599 = vmatprep.subr.mxu0 0.0
      %2600 = vmatpush1.msra.mxu0 %v1141
      %2601 = vmatprep.subr.mxu0 0.0
      %2602 = vmatpush1.msra.mxu0 %v1142
      %2603 = vmatprep.subr.mxu0 0.0
      %2604 = vmatpush1.msra.mxu0 %v1143
      %2605 = vmatprep.subr.mxu0 0.0
      %2606 = vmatpush1.msra.mxu0 %v1144
      %2607 = vmatprep.subr.mxu0 0.0
      %2608 = vmatpush1.msra.mxu0 %v1145
      %2609 = vmatprep.subr.mxu0 0.0
      %2610 = vmatpush1.msra.mxu0 %v1146
      %2611 = vmatprep.subr.mxu0 0.0
      %2612 = vmatpush1.msra.mxu0 %v1147
      %2613 = vmatprep.subr.mxu0 0.0
      %2614 = vmatpush1.msra.mxu0 %v1148
      %2615 = vmatprep.subr.mxu0 0.0
      %2616 = vmatpush1.msra.mxu0 %v1149
      %2617 = vmatprep.subr.mxu0 0.0
      %2618 = vmatpush1.msra.mxu0 %v1150
      %2619 = vmatprep.subr.mxu0 0.0
      %2620 = vmatpush1.msra.mxu0 %v1151
      %2621 = vmatprep.subr.mxu0 0.0
      %2622 = vmatpush1.msra.mxu0 %v1152
      %2623 = vmatprep.subr.mxu0 0.0
      %2624 = vmatpush1.msra.mxu0 %v1153
      %2625 = vmatprep.subr.mxu0 0.0
      %2626 = vmatpush1.msra.mxu0 %v1154
      %2627 = vmatprep.subr.mxu0 0.0
      %2628 = vmatpush1.msra.mxu0 %v1155
      %2629 = vmatprep.subr.mxu0 0.0
      %2630 = vmatpush1.msra.mxu0 %v1156
      %2631 = vmatprep.subr.mxu0 0.0
      %2632 = vmatpush1.msra.mxu0 %v1157
      %2633 = vmatprep.subr.mxu0 0.0
      %2634 = vmatpush1.msra.mxu0 %v1158
      %2635 = vmatprep.subr.mxu0 0.0
      %2636 = vmatpush1.msra.mxu0 %v1159
      %2637 = vmatprep.subr.mxu0 0.0
      %2638 = vmatpush1.msra.mxu0 %v1160
      %2639 = vmatprep.subr.mxu0 0.0
      %2640 = vmatpush1.msra.mxu0 %v1161
      %2641 = vmatprep.subr.mxu0 0.0
      %2642 = vmatpush1.msra.mxu0 %v1162
      %2643 = vmatprep.subr.mxu0 0.0
      %2644 = vmatpush1.msra.mxu0 %v1163
      %2645 = vmatprep.subr.mxu0 0.0
      %2646 = vmatpush1.msra.mxu0 %v1164
      %2647 = vmatprep.subr.mxu0 0.0
      %2648 = vmatpush1.msra.mxu0 %v1165
      %2649 = vmatprep.subr.mxu0 0.0
      %2650 = vmatpush1.msra.mxu0 %v1166
      %2651 = vmatprep.subr.mxu0 0.0
      %2652 = vmatpush1.msra.mxu0 %v1167
      %2653 = vmatprep.mubr.f32.mxu0 %v381
      %2654 = vmatmul.mubr.f32.gmra.mrb[0].mxu0 %v380
      %v2655 = vpop.f32.mrb[0].mxu0
      %v2656 = vadd.f32 %v2431, %v2655
      %v2657 = vpop.f32.mrb[0].mxu0
      %2658 = vmatprep.mubr.f32.mxu0 %v399
      %2659 = vmatmul.mubr.f32.gmra.mrb[0].mxu0 %v398
      %v2660 = vpop.f32.mrb[0].mxu0
      %v2661 = vadd.f32 %v2436, %v2660
      %v2662 = vpop.f32.mrb[0].mxu0
      %2663 = vmatprep.mubr.f32.mxu0 %v417
      %2664 = vmatmul.mubr.f32.gmra.mrb[0].mxu0 %v416
      %v2665 = vpop.f32.mrb[0].mxu0
      %v2666 = vadd.f32 %v2441, %v2665
      %v2667 = vpop.f32.mrb[0].mxu0
      %2668 = vmatprep.mubr.f32.mxu0 %v435
      %2669 = vmatmul.mubr.f32.gmra.mrb[0].mxu0 %v434
      %v2670 = vpop.f32.mrb[0].mxu0
      %v2671 = vadd.f32 %v2446, %v2670
      %v2672 = vpop.f32.mrb[0].mxu0
      %2673 = vmatprep.mubr.f32.mxu0 %v453
      %2674 = vmatmul.mubr.f32.gmra.mrb[0].mxu0 %v452
      %v2675 = vpop.f32.mrb[0].mxu0
      %v2676 = vadd.f32 %v2451, %v2675
      %v2677 = vpop.f32.mrb[0].mxu0
      %2678 = vmatprep.mubr.f32.mxu0 %v471
      %2679 = vmatmul.mubr.f32.gmra.mrb[0].mxu0 %v470
      %v2680 = vpop.f32.mrb[0].mxu0
      %v2681 = vadd.f32 %v2456, %v2680
      %v2682 = vpop.f32.mrb[0].mxu0
      %2683 = vmatprep.mubr.f32.mxu0 %v489
      %2684 = vmatmul.mubr.f32.gmra.mrb[0].mxu0 %v488
      %v2685 = vpop.f32.mrb[0].mxu0
      %v2686 = vadd.f32 %v2461, %v2685
      %v2687 = vpop.f32.mrb[0].mxu0
      %2688 = vmatprep.mubr.f32.mxu0 %v507
      %2689 = vmatmul.mubr.f32.gmra.mrb[0].mxu0 %v506
      %v2690 = vpop.f32.mrb[0].mxu0
      %v2691 = vadd.f32 %v2466, %v2690
      %v2692 = vpop.f32.mrb[0].mxu0
      %2693 = vmatprep.mubr.f32.mxu0 %v525
      %2694 = vmatmul.mubr.f32.gmra.mrb[0].mxu0 %v524
      %v2695 = vpop.f32.mrb[0].mxu0
      %v2696 = vadd.f32 %v2471, %v2695
      %v2697 = vpop.f32.mrb[0].mxu0
      %2698 = vmatprep.mubr.f32.mxu0 %v543
      %2699 = vmatmul.mubr.f32.gmra.mrb[0].mxu0 %v542
      %v2700 = vpop.f32.mrb[0].mxu0
      %v2701 = vadd.f32 %v2476, %v2700
      %v2702 = vpop.f32.mrb[0].mxu0
      %2703 = vmatprep.mubr.f32.mxu0 %v561
      %2704 = vmatmul.mubr.f32.gmra.mrb[0].mxu0 %v560
      %v2705 = vpop.f32.mrb[0].mxu0
      %v2706 = vadd.f32 %v2481, %v2705
      %v2707 = vpop.f32.mrb[0].mxu0
      %2708 = vmatprep.mubr.f32.mxu0 %v579
      %2709 = vmatmul.mubr.f32.gmra.mrb[0].mxu0 %v578
      %v2710 = vpop.f32.mrb[0].mxu0
      %v2711 = vadd.f32 %v2486, %v2710
      %v2712 = vpop.f32.mrb[0].mxu0
      %2713 = vmatprep.mubr.f32.mxu0 %v597
      %2714 = vmatmul.mubr.f32.gmra.mrb[0].mxu0 %v596
      %v2715 = vpop.f32.mrb[0].mxu0
      %v2716 = vadd.f32 %v2491, %v2715
      %v2717 = vpop.f32.mrb[0].mxu0
      %2718 = vmatprep.mubr.f32.mxu0 %v615
      %2719 = vmatmul.mubr.f32.gmra.mrb[0].mxu0 %v614
      %v2720 = vpop.f32.mrb[0].mxu0
      %v2721 = vadd.f32 %v2496, %v2720
      %v2722 = vpop.f32.mrb[0].mxu0
      %2723 = vmatprep.mubr.f32.mxu0 %v633
      %2724 = vmatmul.mubr.f32.gmra.mrb[0].mxu0 %v632
      %v2725 = vpop.f32.mrb[0].mxu0
      %v2726 = vadd.f32 %v2501, %v2725
      %v2727 = vpop.f32.mrb[0].mxu0
      %2728 = vmatprep.mubr.f32.mxu0 %v651
      %2729 = vmatmul.mubr.f32.gmra.mrb[0].mxu0 %v650
      %v2730 = vpop.f32.mrb[0].mxu0
      %v2731 = vadd.f32 %v2506, %v2730
      %v2732 = vpop.f32.mrb[0].mxu0
      %2733 = vmatprep.mubr.f32.mxu0 %v669
      %2734 = vmatmul.mubr.f32.gmra.mrb[0].mxu0 %v668
      %v2735 = vpop.f32.mrb[0].mxu0
      %v2736 = vadd.f32 %v2511, %v2735
      %v2737 = vpop.f32.mrb[0].mxu0
      %2738 = vmatprep.mubr.f32.mxu0 %v687
      %2739 = vmatmul.mubr.f32.gmra.mrb[0].mxu0 %v686
      %v2740 = vpop.f32.mrb[0].mxu0
      %v2741 = vadd.f32 %v2516, %v2740
      %v2742 = vpop.f32.mrb[0].mxu0
      %2743 = vmatprep.mubr.f32.mxu0 %v705
      %2744 = vmatmul.mubr.f32.gmra.mrb[0].mxu0 %v704
      %v2745 = vpop.f32.mrb[0].mxu0
      %v2746 = vadd.f32 %v2521, %v2745
      %v2747 = vpop.f32.mrb[0].mxu0
      %2748 = vmatprep.mubr.f32.mxu0 %v723
      %2749 = vmatmul.mubr.f32.gmra.mrb[0].mxu0 %v722
      %v2750 = vpop.f32.mrb[0].mxu0
      %v2751 = vadd.f32 %v2526, %v2750
      %v2752 = vpop.f32.mrb[0].mxu0
      %2753 = vmatprep.mubr.f32.mxu0 %v741
      %2754 = vmatmul.mubr.f32.gmra.mrb[0].mxu0 %v740
      %v2755 = vpop.f32.mrb[0].mxu0
      %v2756 = vadd.f32 %v2531, %v2755
      %v2757 = vpop.f32.mrb[0].mxu0
      %2758 = vmatprep.mubr.f32.mxu0 %v759
      %2759 = vmatmul.mubr.f32.gmra.mrb[0].mxu0 %v758
      %v2760 = vpop.f32.mrb[0].mxu0
      %v2761 = vadd.f32 %v2536, %v2760
      %v2762 = vpop.f32.mrb[0].mxu0
      %2763 = vmatprep.mubr.f32.mxu0 %v777
      %2764 = vmatmul.mubr.f32.gmra.mrb[0].mxu0 %v776
      %v2765 = vpop.f32.mrb[0].mxu0
      %v2766 = vadd.f32 %v2541, %v2765
      %v2767 = vpop.f32.mrb[0].mxu0
      %2768 = vmatprep.mubr.f32.mxu0 %v795
      %2769 = vmatmul.mubr.f32.gmra.mrb[0].mxu0 %v794
      %v2770 = vpop.f32.mrb[0].mxu0
      %v2771 = vadd.f32 %v2546, %v2770
      %v2772 = vpop.f32.mrb[0].mxu0
      %2773 = vmatprep.mubr.f32.mxu0 %v813
      %2774 = vmatmul.mubr.f32.gmra.mrb[0].mxu0 %v812
      %v2775 = vpop.f32.mrb[0].mxu0
      %v2776 = vadd.f32 %v2551, %v2775
      %v2777 = vpop.f32.mrb[0].mxu0
      %2778 = vmatprep.mubr.f32.mxu0 %v831
      %2779 = vmatmul.mubr.f32.gmra.mrb[0].mxu0 %v830
      %v2780 = vpop.f32.mrb[0].mxu0
      %v2781 = vadd.f32 %v2556, %v2780
      %v2782 = vpop.f32.mrb[0].mxu0
      %2783 = vmatprep.mubr.f32.mxu0 %v849
      %2784 = vmatmul.mubr.f32.gmra.mrb[0].mxu0 %v848
      %v2785 = vpop.f32.mrb[0].mxu0
      %v2786 = vadd.f32 %v2561, %v2785
      %v2787 = vpop.f32.mrb[0].mxu0
      %2788 = vmatprep.mubr.f32.mxu0 %v867
      %2789 = vmatmul.mubr.f32.gmra.mrb[0].mxu0 %v866
      %v2790 = vpop.f32.mrb[0].mxu0
      %v2791 = vadd.f32 %v2566, %v2790
      %v2792 = vpop.f32.mrb[0].mxu0
      %2793 = vmatprep.mubr.f32.mxu0 %v885
      %2794 = vmatmul.mubr.f32.gmra.mrb[0].mxu0 %v884
      %v2795 = vpop.f32.mrb[0].mxu0
      %v2796 = vadd.f32 %v2571, %v2795
      %v2797 = vpop.f32.mrb[0].mxu0
      %2798 = vmatprep.mubr.f32.mxu0 %v903
      %2799 = vmatmul.mubr.f32.gmra.mrb[0].mxu0 %v902
      %v2800 = vpop.f32.mrb[0].mxu0
      %v2801 = vadd.f32 %v2576, %v2800
      %v2802 = vpop.f32.mrb[0].mxu0
      %2803 = vmatprep.mubr.f32.mxu0 %v921
      %2804 = vmatmul.mubr.f32.gmra.mrb[0].mxu0 %v920
      %v2805 = vpop.f32.mrb[0].mxu0
      %v2806 = vadd.f32 %v2581, %v2805
      %v2807 = vpop.f32.mrb[0].mxu0
      %2808 = vmatprep.mubr.f32.mxu0 %v939
      %2809 = vmatmul.mubr.f32.gmra.mrb[0].mxu0 %v938
      %v2810 = vpop.f32.mrb[0].mxu0
      %v2811 = vadd.f32 %v2586, %v2810
      %v2812 = vpop.f32.mrb[0].mxu0
      %2813 = vdwg.mxu0
      %2814 = vmatprep.subr.mxu0 0.0
      %2815 = vmatpush1.msra.mxu0 %v1168
      %2816 = vmatprep.subr.mxu0 0.0
      %2817 = vmatpush1.msra.mxu0 %v1169
      %2818 = vmatprep.subr.mxu0 0.0
      %2819 = vmatpush1.msra.mxu0 %v1170
      %2820 = vmatprep.subr.mxu0 0.0
      %2821 = vmatpush1.msra.mxu0 %v1171
      %2822 = vmatprep.subr.mxu0 0.0
      %2823 = vmatpush1.msra.mxu0 %v1172
      %2824 = vmatprep.subr.mxu0 0.0
      %2825 = vmatpush1.msra.mxu0 %v1173
      %2826 = vmatprep.subr.mxu0 0.0
      %2827 = vmatpush1.msra.mxu0 %v1174
      %2828 = vmatprep.subr.mxu0 0.0
      %2829 = vmatpush1.msra.mxu0 %v1175
      %2830 = vmatprep.subr.mxu0 0.0
      %2831 = vmatpush1.msra.mxu0 %v1176
      %2832 = vmatprep.subr.mxu0 0.0
      %2833 = vmatpush1.msra.mxu0 %v1177
      %2834 = vmatprep.subr.mxu0 0.0
      %2835 = vmatpush1.msra.mxu0 %v1178
      %2836 = vmatprep.subr.mxu0 0.0
      %2837 = vmatpush1.msra.mxu0 %v1179
      %2838 = vmatprep.subr.mxu0 0.0
      %2839 = vmatpush1.msra.mxu0 %v1180
      %2840 = vmatprep.subr.mxu0 0.0
      %2841 = vmatpush1.msra.mxu0 %v1181
      %2842 = vmatprep.subr.mxu0 0.0
      %2843 = vmatpush1.msra.mxu0 %v1182
      %2844 = vmatprep.subr.mxu0 0.0
      %2845 = vmatpush1.msra.mxu0 %v1183
      %2846 = vmatprep.subr.mxu0 0.0
      %2847 = vmatpush1.msra.mxu0 %v1184
      %2848 = vmatprep.subr.mxu0 0.0
      %2849 = vmatpush1.msra.mxu0 %v1185
      %2850 = vmatprep.subr.mxu0 0.0
      %2851 = vmatpush1.msra.mxu0 %v1186
      %2852 = vmatprep.subr.mxu0 0.0
      %2853 = vmatpush1.msra.mxu0 %v1187
      %2854 = vmatprep.subr.mxu0 0.0
      %2855 = vmatpush1.msra.mxu0 %v1188
      %2856 = vmatprep.subr.mxu0 0.0
      %2857 = vmatpush1.msra.mxu0 %v1189
      %2858 = vmatprep.subr.mxu0 0.0
      %2859 = vmatpush1.msra.mxu0 %v1190
      %2860 = vmatprep.subr.mxu0 0.0
      %2861 = vmatpush1.msra.mxu0 %v1191
      %2862 = vmatprep.subr.mxu0 0.0
      %2863 = vmatpush1.msra.mxu0 %v1192
      %2864 = vmatprep.subr.mxu0 0.0
      %2865 = vmatpush1.msra.mxu0 %v1193
      %2866 = vmatprep.subr.mxu0 0.0
      %2867 = vmatpush1.msra.mxu0 %v1194
      %2868 = vmatprep.subr.mxu0 0.0
      %2869 = vmatpush1.msra.mxu0 %v1195
      %2870 = vmatprep.subr.mxu0 0.0
      %2871 = vmatpush1.msra.mxu0 %v1196
      %2872 = vmatprep.subr.mxu0 0.0
      %2873 = vmatpush1.msra.mxu0 %v1197
      %2874 = vmatprep.subr.mxu0 0.0
      %2875 = vmatpush1.msra.mxu0 %v1198
      %2876 = vmatprep.subr.mxu0 0.0
      %2877 = vmatpush1.msra.mxu0 %v1199
      %2878 = vmatprep.mubr.f32.mxu0 %v383
      %2879 = vmatmul.mubr.f32.gmra.mrb[0].mxu0 %v382
      %v2880 = vpop.f32.mrb[0].mxu0
      %v2881 = vadd.f32 %v2656, %v2880
      %v2882 = vpop.f32.mrb[0].mxu0
      %2883 = vmatprep.mubr.f32.mxu0 %v401
      %2884 = vmatmul.mubr.f32.gmra.mrb[0].mxu0 %v400
      %v2885 = vpop.f32.mrb[0].mxu0
      %v2886 = vadd.f32 %v2661, %v2885
      %v2887 = vpop.f32.mrb[0].mxu0
      %2888 = vmatprep.mubr.f32.mxu0 %v419
      %2889 = vmatmul.mubr.f32.gmra.mrb[0].mxu0 %v418
      %v2890 = vpop.f32.mrb[0].mxu0
      %v2891 = vadd.f32 %v2666, %v2890
      %v2892 = vpop.f32.mrb[0].mxu0
      %2893 = vmatprep.mubr.f32.mxu0 %v437
      %2894 = vmatmul.mubr.f32.gmra.mrb[0].mxu0 %v436
      %v2895 = vpop.f32.mrb[0].mxu0
      %v2896 = vadd.f32 %v2671, %v2895
      %v2897 = vpop.f32.mrb[0].mxu0
      %2898 = vmatprep.mubr.f32.mxu0 %v455
      %2899 = vmatmul.mubr.f32.gmra.mrb[0].mxu0 %v454
      %v2900 = vpop.f32.mrb[0].mxu0
      %v2901 = vadd.f32 %v2676, %v2900
      %v2902 = vpop.f32.mrb[0].mxu0
      %2903 = vmatprep.mubr.f32.mxu0 %v473
      %2904 = vmatmul.mubr.f32.gmra.mrb[0].mxu0 %v472
      %v2905 = vpop.f32.mrb[0].mxu0
      %v2906 = vadd.f32 %v2681, %v2905
      %v2907 = vpop.f32.mrb[0].mxu0
      %2908 = vmatprep.mubr.f32.mxu0 %v491
      %2909 = vmatmul.mubr.f32.gmra.mrb[0].mxu0 %v490
      %v2910 = vpop.f32.mrb[0].mxu0
      %v2911 = vadd.f32 %v2686, %v2910
      %v2912 = vpop.f32.mrb[0].mxu0
      %2913 = vmatprep.mubr.f32.mxu0 %v509
      %2914 = vmatmul.mubr.f32.gmra.mrb[0].mxu0 %v508
      %v2915 = vpop.f32.mrb[0].mxu0
      %v2916 = vadd.f32 %v2691, %v2915
      %v2917 = vpop.f32.mrb[0].mxu0
      %2918 = vmatprep.mubr.f32.mxu0 %v527
      %2919 = vmatmul.mubr.f32.gmra.mrb[0].mxu0 %v526
      %v2920 = vpop.f32.mrb[0].mxu0
      %v2921 = vadd.f32 %v2696, %v2920
      %v2922 = vpop.f32.mrb[0].mxu0
      %2923 = vmatprep.mubr.f32.mxu0 %v545
      %2924 = vmatmul.mubr.f32.gmra.mrb[0].mxu0 %v544
      %v2925 = vpop.f32.mrb[0].mxu0
      %v2926 = vadd.f32 %v2701, %v2925
      %v2927 = vpop.f32.mrb[0].mxu0
      %2928 = vmatprep.mubr.f32.mxu0 %v563
      %2929 = vmatmul.mubr.f32.gmra.mrb[0].mxu0 %v562
      %v2930 = vpop.f32.mrb[0].mxu0
      %v2931 = vadd.f32 %v2706, %v2930
      %v2932 = vpop.f32.mrb[0].mxu0
      %2933 = vmatprep.mubr.f32.mxu0 %v581
      %2934 = vmatmul.mubr.f32.gmra.mrb[0].mxu0 %v580
      %v2935 = vpop.f32.mrb[0].mxu0
      %v2936 = vadd.f32 %v2711, %v2935
      %v2937 = vpop.f32.mrb[0].mxu0
      %2938 = vmatprep.mubr.f32.mxu0 %v599
      %2939 = vmatmul.mubr.f32.gmra.mrb[0].mxu0 %v598
      %v2940 = vpop.f32.mrb[0].mxu0
      %v2941 = vadd.f32 %v2716, %v2940
      %v2942 = vpop.f32.mrb[0].mxu0
      %2943 = vmatprep.mubr.f32.mxu0 %v617
      %2944 = vmatmul.mubr.f32.gmra.mrb[0].mxu0 %v616
      %v2945 = vpop.f32.mrb[0].mxu0
      %v2946 = vadd.f32 %v2721, %v2945
      %v2947 = vpop.f32.mrb[0].mxu0
      %2948 = vmatprep.mubr.f32.mxu0 %v635
      %2949 = vmatmul.mubr.f32.gmra.mrb[0].mxu0 %v634
      %v2950 = vpop.f32.mrb[0].mxu0
      %v2951 = vadd.f32 %v2726, %v2950
      %v2952 = vpop.f32.mrb[0].mxu0
      %2953 = vmatprep.mubr.f32.mxu0 %v653
      %2954 = vmatmul.mubr.f32.gmra.mrb[0].mxu0 %v652
      %v2955 = vpop.f32.mrb[0].mxu0
      %v2956 = vadd.f32 %v2731, %v2955
      %v2957 = vpop.f32.mrb[0].mxu0
      %2958 = vmatprep.mubr.f32.mxu0 %v671
      %2959 = vmatmul.mubr.f32.gmra.mrb[0].mxu0 %v670
      %v2960 = vpop.f32.mrb[0].mxu0
      %v2961 = vadd.f32 %v2736, %v2960
      %v2962 = vpop.f32.mrb[0].mxu0
      %2963 = vmatprep.mubr.f32.mxu0 %v689
      %2964 = vmatmul.mubr.f32.gmra.mrb[0].mxu0 %v688
      %v2965 = vpop.f32.mrb[0].mxu0
      %v2966 = vadd.f32 %v2741, %v2965
      %v2967 = vpop.f32.mrb[0].mxu0
      %2968 = vmatprep.mubr.f32.mxu0 %v707
      %2969 = vmatmul.mubr.f32.gmra.mrb[0].mxu0 %v706
      %v2970 = vpop.f32.mrb[0].mxu0
      %v2971 = vadd.f32 %v2746, %v2970
      %v2972 = vpop.f32.mrb[0].mxu0
      %2973 = vmatprep.mubr.f32.mxu0 %v725
      %2974 = vmatmul.mubr.f32.gmra.mrb[0].mxu0 %v724
      %v2975 = vpop.f32.mrb[0].mxu0
      %v2976 = vadd.f32 %v2751, %v2975
      %v2977 = vpop.f32.mrb[0].mxu0
      %2978 = vmatprep.mubr.f32.mxu0 %v743
      %2979 = vmatmul.mubr.f32.gmra.mrb[0].mxu0 %v742
      %v2980 = vpop.f32.mrb[0].mxu0
      %v2981 = vadd.f32 %v2756, %v2980
      %v2982 = vpop.f32.mrb[0].mxu0
      %2983 = vmatprep.mubr.f32.mxu0 %v761
      %2984 = vmatmul.mubr.f32.gmra.mrb[0].mxu0 %v760
      %v2985 = vpop.f32.mrb[0].mxu0
      %v2986 = vadd.f32 %v2761, %v2985
      %v2987 = vpop.f32.mrb[0].mxu0
      %2988 = vmatprep.mubr.f32.mxu0 %v779
      %2989 = vmatmul.mubr.f32.gmra.mrb[0].mxu0 %v778
      %v2990 = vpop.f32.mrb[0].mxu0
      %v2991 = vadd.f32 %v2766, %v2990
      %v2992 = vpop.f32.mrb[0].mxu0
      %2993 = vmatprep.mubr.f32.mxu0 %v797
      %2994 = vmatmul.mubr.f32.gmra.mrb[0].mxu0 %v796
      %v2995 = vpop.f32.mrb[0].mxu0
      %v2996 = vadd.f32 %v2771, %v2995
      %v2997 = vpop.f32.mrb[0].mxu0
      %2998 = vmatprep.mubr.f32.mxu0 %v815
      %2999 = vmatmul.mubr.f32.gmra.mrb[0].mxu0 %v814
      %v3000 = vpop.f32.mrb[0].mxu0
      %v3001 = vadd.f32 %v2776, %v3000
      %v3002 = vpop.f32.mrb[0].mxu0
      %3003 = vmatprep.mubr.f32.mxu0 %v833
      %3004 = vmatmul.mubr.f32.gmra.mrb[0].mxu0 %v832
      %v3005 = vpop.f32.mrb[0].mxu0
      %v3006 = vadd.f32 %v2781, %v3005
      %v3007 = vpop.f32.mrb[0].mxu0
      %3008 = vmatprep.mubr.f32.mxu0 %v851
      %3009 = vmatmul.mubr.f32.gmra.mrb[0].mxu0 %v850
      %v3010 = vpop.f32.mrb[0].mxu0
      %v3011 = vadd.f32 %v2786, %v3010
      %v3012 = vpop.f32.mrb[0].mxu0
      %3013 = vmatprep.mubr.f32.mxu0 %v869
      %3014 = vmatmul.mubr.f32.gmra.mrb[0].mxu0 %v868
      %v3015 = vpop.f32.mrb[0].mxu0
      %v3016 = vadd.f32 %v2791, %v3015
      %v3017 = vpop.f32.mrb[0].mxu0
      %3018 = vmatprep.mubr.f32.mxu0 %v887
      %3019 = vmatmul.mubr.f32.gmra.mrb[0].mxu0 %v886
      %v3020 = vpop.f32.mrb[0].mxu0
      %v3021 = vadd.f32 %v2796, %v3020
      %v3022 = vpop.f32.mrb[0].mxu0
      %3023 = vmatprep.mubr.f32.mxu0 %v905
      %3024 = vmatmul.mubr.f32.gmra.mrb[0].mxu0 %v904
      %v3025 = vpop.f32.mrb[0].mxu0
      %v3026 = vadd.f32 %v2801, %v3025
      %v3027 = vpop.f32.mrb[0].mxu0
      %3028 = vmatprep.mubr.f32.mxu0 %v923
      %3029 = vmatmul.mubr.f32.gmra.mrb[0].mxu0 %v922
      %v3030 = vpop.f32.mrb[0].mxu0
      %v3031 = vadd.f32 %v2806, %v3030
      %v3032 = vpop.f32.mrb[0].mxu0
      %3033 = vmatprep.mubr.f32.mxu0 %v941
      %3034 = vmatmul.mubr.f32.gmra.mrb[0].mxu0 %v940
      %v3035 = vpop.f32.mrb[0].mxu0
      %v3036 = vadd.f32 %v2811, %v3035
      %v3037 = vpop.f32.mrb[0].mxu0
      %3038 = vdwg.mxu0
      %3039 = vmatprep.subr.mxu0 0.0
      %3040 = vmatpush1.msra.mxu0 %v1200
      %3041 = vmatprep.subr.mxu0 0.0
      %3042 = vmatpush1.msra.mxu0 %v1201
      %3043 = vmatprep.subr.mxu0 0.0
      %3044 = vmatpush1.msra.mxu0 %v1202
      %3045 = vmatprep.subr.mxu0 0.0
      %3046 = vmatpush1.msra.mxu0 %v1203
      %3047 = vmatprep.subr.mxu0 0.0
      %3048 = vmatpush1.msra.mxu0 %v1204
      %3049 = vmatprep.subr.mxu0 0.0
      %3050 = vmatpush1.msra.mxu0 %v1205
      %3051 = vmatprep.subr.mxu0 0.0
      %3052 = vmatpush1.msra.mxu0 %v1206
      %3053 = vmatprep.subr.mxu0 0.0
      %3054 = vmatpush1.msra.mxu0 %v1207
      %3055 = vmatprep.subr.mxu0 0.0
      %3056 = vmatpush1.msra.mxu0 %v1208
      %3057 = vmatprep.subr.mxu0 0.0
      %3058 = vmatpush1.msra.mxu0 %v1209
      %3059 = vmatprep.subr.mxu0 0.0
      %3060 = vmatpush1.msra.mxu0 %v1210
      %3061 = vmatprep.subr.mxu0 0.0
      %3062 = vmatpush1.msra.mxu0 %v1211
      %3063 = vmatprep.subr.mxu0 0.0
      %3064 = vmatpush1.msra.mxu0 %v1212
      %3065 = vmatprep.subr.mxu0 0.0
      %3066 = vmatpush1.msra.mxu0 %v1213
      %3067 = vmatprep.subr.mxu0 0.0
      %3068 = vmatpush1.msra.mxu0 %v1214
      %3069 = vmatprep.subr.mxu0 0.0
      %3070 = vmatpush1.msra.mxu0 %v1215
      %3071 = vmatprep.subr.mxu0 0.0
      %3072 = vmatpush1.msra.mxu0 %v1216
      %3073 = vmatprep.subr.mxu0 0.0
      %3074 = vmatpush1.msra.mxu0 %v1217
      %3075 = vmatprep.subr.mxu0 0.0
      %3076 = vmatpush1.msra.mxu0 %v1218
      %3077 = vmatprep.subr.mxu0 0.0
      %3078 = vmatpush1.msra.mxu0 %v1219
      %3079 = vmatprep.subr.mxu0 0.0
      %3080 = vmatpush1.msra.mxu0 %v1220
      %3081 = vmatprep.subr.mxu0 0.0
      %3082 = vmatpush1.msra.mxu0 %v1221
      %3083 = vmatprep.subr.mxu0 0.0
      %3084 = vmatpush1.msra.mxu0 %v1222
      %3085 = vmatprep.subr.mxu0 0.0
      %3086 = vmatpush1.msra.mxu0 %v1223
      %3087 = vmatprep.subr.mxu0 0.0
      %3088 = vmatpush1.msra.mxu0 %v1224
      %3089 = vmatprep.subr.mxu0 0.0
      %3090 = vmatpush1.msra.mxu0 %v1225
      %3091 = vmatprep.subr.mxu0 0.0
      %3092 = vmatpush1.msra.mxu0 %v1226
      %3093 = vmatprep.subr.mxu0 0.0
      %3094 = vmatpush1.msra.mxu0 %v1227
      %3095 = vmatprep.subr.mxu0 0.0
      %3096 = vmatpush1.msra.mxu0 %v1228
      %3097 = vmatprep.subr.mxu0 0.0
      %3098 = vmatpush1.msra.mxu0 %v1229
      %3099 = vmatprep.subr.mxu0 0.0
      %3100 = vmatpush1.msra.mxu0 %v1230
      %3101 = vmatprep.subr.mxu0 0.0
      %3102 = vmatpush1.msra.mxu0 %v1231
      %3103 = vmatprep.mubr.f32.mxu0 %v385
      %3104 = vmatmul.mubr.f32.gmra.mrb[0].mxu0 %v384
      %v3105 = vpop.f32.mrb[0].mxu0
      %v3106 = vadd.f32 %v2881, %v3105
      %v3107 = vpop.f32.mrb[0].mxu0
      %3108 = vmatprep.mubr.f32.mxu0 %v403
      %3109 = vmatmul.mubr.f32.gmra.mrb[0].mxu0 %v402
      %v3110 = vpop.f32.mrb[0].mxu0
      %v3111 = vadd.f32 %v2886, %v3110
      %v3112 = vpop.f32.mrb[0].mxu0
      %3113 = vmatprep.mubr.f32.mxu0 %v421
      %3114 = vmatmul.mubr.f32.gmra.mrb[0].mxu0 %v420
      %v3115 = vpop.f32.mrb[0].mxu0
      %v3116 = vadd.f32 %v2891, %v3115
      %v3117 = vpop.f32.mrb[0].mxu0
      %3118 = vmatprep.mubr.f32.mxu0 %v439
      %3119 = vmatmul.mubr.f32.gmra.mrb[0].mxu0 %v438
      %v3120 = vpop.f32.mrb[0].mxu0
      %v3121 = vadd.f32 %v2896, %v3120
      %v3122 = vpop.f32.mrb[0].mxu0
      %3123 = vmatprep.mubr.f32.mxu0 %v457
      %3124 = vmatmul.mubr.f32.gmra.mrb[0].mxu0 %v456
      %v3125 = vpop.f32.mrb[0].mxu0
      %v3126 = vadd.f32 %v2901, %v3125
      %v3127 = vpop.f32.mrb[0].mxu0
      %3128 = vmatprep.mubr.f32.mxu0 %v475
      %3129 = vmatmul.mubr.f32.gmra.mrb[0].mxu0 %v474
      %v3130 = vpop.f32.mrb[0].mxu0
      %v3131 = vadd.f32 %v2906, %v3130
      %v3132 = vpop.f32.mrb[0].mxu0
      %3133 = vmatprep.mubr.f32.mxu0 %v493
      %3134 = vmatmul.mubr.f32.gmra.mrb[0].mxu0 %v492
      %v3135 = vpop.f32.mrb[0].mxu0
      %v3136 = vadd.f32 %v2911, %v3135
      %v3137 = vpop.f32.mrb[0].mxu0
      %3138 = vmatprep.mubr.f32.mxu0 %v511
      %3139 = vmatmul.mubr.f32.gmra.mrb[0].mxu0 %v510
      %v3140 = vpop.f32.mrb[0].mxu0
      %v3141 = vadd.f32 %v2916, %v3140
      %v3142 = vpop.f32.mrb[0].mxu0
      %3143 = vmatprep.mubr.f32.mxu0 %v529
      %3144 = vmatmul.mubr.f32.gmra.mrb[0].mxu0 %v528
      %v3145 = vpop.f32.mrb[0].mxu0
      %v3146 = vadd.f32 %v2921, %v3145
      %v3147 = vpop.f32.mrb[0].mxu0
      %3148 = vmatprep.mubr.f32.mxu0 %v547
      %3149 = vmatmul.mubr.f32.gmra.mrb[0].mxu0 %v546
      %v3150 = vpop.f32.mrb[0].mxu0
      %v3151 = vadd.f32 %v2926, %v3150
      %v3152 = vpop.f32.mrb[0].mxu0
      %3153 = vmatprep.mubr.f32.mxu0 %v565
      %3154 = vmatmul.mubr.f32.gmra.mrb[0].mxu0 %v564
      %v3155 = vpop.f32.mrb[0].mxu0
      %v3156 = vadd.f32 %v2931, %v3155
      %v3157 = vpop.f32.mrb[0].mxu0
      %3158 = vmatprep.mubr.f32.mxu0 %v583
      %3159 = vmatmul.mubr.f32.gmra.mrb[0].mxu0 %v582
      %v3160 = vpop.f32.mrb[0].mxu0
      %v3161 = vadd.f32 %v2936, %v3160
      %v3162 = vpop.f32.mrb[0].mxu0
      %3163 = vmatprep.mubr.f32.mxu0 %v601
      %3164 = vmatmul.mubr.f32.gmra.mrb[0].mxu0 %v600
      %v3165 = vpop.f32.mrb[0].mxu0
      %v3166 = vadd.f32 %v2941, %v3165
      %v3167 = vpop.f32.mrb[0].mxu0
      %3168 = vmatprep.mubr.f32.mxu0 %v619
      %3169 = vmatmul.mubr.f32.gmra.mrb[0].mxu0 %v618
      %v3170 = vpop.f32.mrb[0].mxu0
      %v3171 = vadd.f32 %v2946, %v3170
      %v3172 = vpop.f32.mrb[0].mxu0
      %3173 = vmatprep.mubr.f32.mxu0 %v637
      %3174 = vmatmul.mubr.f32.gmra.mrb[0].mxu0 %v636
      %v3175 = vpop.f32.mrb[0].mxu0
      %v3176 = vadd.f32 %v2951, %v3175
      %v3177 = vpop.f32.mrb[0].mxu0
      %3178 = vmatprep.mubr.f32.mxu0 %v655
      %3179 = vmatmul.mubr.f32.gmra.mrb[0].mxu0 %v654
      %v3180 = vpop.f32.mrb[0].mxu0
      %v3181 = vadd.f32 %v2956, %v3180
      %v3182 = vpop.f32.mrb[0].mxu0
      %3183 = vmatprep.mubr.f32.mxu0 %v673
      %3184 = vmatmul.mubr.f32.gmra.mrb[0].mxu0 %v672
      %v3185 = vpop.f32.mrb[0].mxu0
      %v3186 = vadd.f32 %v2961, %v3185
      %v3187 = vpop.f32.mrb[0].mxu0
      %3188 = vmatprep.mubr.f32.mxu0 %v691
      %3189 = vmatmul.mubr.f32.gmra.mrb[0].mxu0 %v690
      %v3190 = vpop.f32.mrb[0].mxu0
      %v3191 = vadd.f32 %v2966, %v3190
      %v3192 = vpop.f32.mrb[0].mxu0
      %3193 = vmatprep.mubr.f32.mxu0 %v709
      %3194 = vmatmul.mubr.f32.gmra.mrb[0].mxu0 %v708
      %v3195 = vpop.f32.mrb[0].mxu0
      %v3196 = vadd.f32 %v2971, %v3195
      %v3197 = vpop.f32.mrb[0].mxu0
      %3198 = vmatprep.mubr.f32.mxu0 %v727
      %3199 = vmatmul.mubr.f32.gmra.mrb[0].mxu0 %v726
      %v3200 = vpop.f32.mrb[0].mxu0
      %v3201 = vadd.f32 %v2976, %v3200
      %v3202 = vpop.f32.mrb[0].mxu0
      %3203 = vmatprep.mubr.f32.mxu0 %v745
      %3204 = vmatmul.mubr.f32.gmra.mrb[0].mxu0 %v744
      %v3205 = vpop.f32.mrb[0].mxu0
      %v3206 = vadd.f32 %v2981, %v3205
      %v3207 = vpop.f32.mrb[0].mxu0
      %3208 = vmatprep.mubr.f32.mxu0 %v763
      %3209 = vmatmul.mubr.f32.gmra.mrb[0].mxu0 %v762
      %v3210 = vpop.f32.mrb[0].mxu0
      %v3211 = vadd.f32 %v2986, %v3210
      %v3212 = vpop.f32.mrb[0].mxu0
      %3213 = vmatprep.mubr.f32.mxu0 %v781
      %3214 = vmatmul.mubr.f32.gmra.mrb[0].mxu0 %v780
      %v3215 = vpop.f32.mrb[0].mxu0
      %v3216 = vadd.f32 %v2991, %v3215
      %v3217 = vpop.f32.mrb[0].mxu0
      %3218 = vmatprep.mubr.f32.mxu0 %v799
      %3219 = vmatmul.mubr.f32.gmra.mrb[0].mxu0 %v798
      %v3220 = vpop.f32.mrb[0].mxu0
      %v3221 = vadd.f32 %v2996, %v3220
      %v3222 = vpop.f32.mrb[0].mxu0
      %3223 = vmatprep.mubr.f32.mxu0 %v817
      %3224 = vmatmul.mubr.f32.gmra.mrb[0].mxu0 %v816
      %v3225 = vpop.f32.mrb[0].mxu0
      %v3226 = vadd.f32 %v3001, %v3225
      %v3227 = vpop.f32.mrb[0].mxu0
      %3228 = vmatprep.mubr.f32.mxu0 %v835
      %3229 = vmatmul.mubr.f32.gmra.mrb[0].mxu0 %v834
      %v3230 = vpop.f32.mrb[0].mxu0
      %v3231 = vadd.f32 %v3006, %v3230
      %v3232 = vpop.f32.mrb[0].mxu0
      %3233 = vmatprep.mubr.f32.mxu0 %v853
      %3234 = vmatmul.mubr.f32.gmra.mrb[0].mxu0 %v852
      %v3235 = vpop.f32.mrb[0].mxu0
      %v3236 = vadd.f32 %v3011, %v3235
      %v3237 = vpop.f32.mrb[0].mxu0
      %3238 = vmatprep.mubr.f32.mxu0 %v871
      %3239 = vmatmul.mubr.f32.gmra.mrb[0].mxu0 %v870
      %v3240 = vpop.f32.mrb[0].mxu0
      %v3241 = vadd.f32 %v3016, %v3240
      %v3242 = vpop.f32.mrb[0].mxu0
      %3243 = vmatprep.mubr.f32.mxu0 %v889
      %3244 = vmatmul.mubr.f32.gmra.mrb[0].mxu0 %v888
      %v3245 = vpop.f32.mrb[0].mxu0
      %v3246 = vadd.f32 %v3021, %v3245
      %v3247 = vpop.f32.mrb[0].mxu0
      %3248 = vmatprep.mubr.f32.mxu0 %v907
      %3249 = vmatmul.mubr.f32.gmra.mrb[0].mxu0 %v906
      %v3250 = vpop.f32.mrb[0].mxu0
      %v3251 = vadd.f32 %v3026, %v3250
      %v3252 = vpop.f32.mrb[0].mxu0
      %3253 = vmatprep.mubr.f32.mxu0 %v925
      %3254 = vmatmul.mubr.f32.gmra.mrb[0].mxu0 %v924
      %v3255 = vpop.f32.mrb[0].mxu0
      %v3256 = vadd.f32 %v3031, %v3255
      %v3257 = vpop.f32.mrb[0].mxu0
      %3258 = vmatprep.mubr.f32.mxu0 %v943
      %3259 = vmatmul.mubr.f32.gmra.mrb[0].mxu0 %v942
      %v3260 = vpop.f32.mrb[0].mxu0
      %v3261 = vadd.f32 %v3036, %v3260
      %v3262 = vpop.f32.mrb[0].mxu0
      %3263 = vdwg.mxu0
      %v3264 = vmax.f32 %v3106, 0.0
      %v3265 = vmax.f32 %v3111, 0.0
      %v3266 = vmax.f32 %v3116, 0.0
      %v3267 = vmax.f32 %v3121, 0.0
      %v3268 = vmax.f32 %v3126, 0.0
      %v3269 = vmax.f32 %v3131, 0.0
      %v3270 = vmax.f32 %v3136, 0.0
      %v3271 = vmax.f32 %v3141, 0.0
      %v3272 = vmax.f32 %v3146, 0.0
      %v3273 = vmax.f32 %v3151, 0.0
      %v3274 = vmax.f32 %v3156, 0.0
      %v3275 = vmax.f32 %v3161, 0.0
      %v3276 = vmax.f32 %v3166, 0.0
      %v3277 = vmax.f32 %v3171, 0.0
      %v3278 = vmax.f32 %v3176, 0.0
      %v3279 = vmax.f32 %v3181, 0.0
      %v3280 = vmax.f32 %v3186, 0.0
      %v3281 = vmax.f32 %v3191, 0.0
      %v3282 = vmax.f32 %v3196, 0.0
      %v3283 = vmax.f32 %v3201, 0.0
      %v3284 = vmax.f32 %v3206, 0.0
      %v3285 = vmax.f32 %v3211, 0.0
      %v3286 = vmax.f32 %v3216, 0.0
      %v3287 = vmax.f32 %v3221, 0.0
      %v3288 = vmax.f32 %v3226, 0.0
      %v3289 = vmax.f32 %v3231, 0.0
      %v3290 = vmax.f32 %v3236, 0.0
      %v3291 = vmax.f32 %v3241, 0.0
      %v3292 = vmax.f32 %v3246, 0.0
      %v3293 = vmax.f32 %v3251, 0.0
      %v3294 = vmax.f32 %v3256, 0.0
      %v3295 = vmax.f32 %v3261, 0.0
      %v3296 = vld [vmem:[%s3] sm:$0xff]
      %v3297 = vld [vmem:[%s3 + $0x8] sm:$0xff]
      %v3298 = vld [vmem:[%s3 + $0x10] sm:$0xff]
      %v3299 = vld [vmem:[%s3 + $0x18] sm:$0xff]
      %v3300 = vld [vmem:[%s3 + $0x20] sm:$0xff]
      %v3301 = vld [vmem:[%s3 + $0x28] sm:$0xff]
      %v3302 = vld [vmem:[%s3 + $0x30] sm:$0xff]
      %v3303 = vld [vmem:[%s3 + $0x38] sm:$0xff]
      %v3304 = vld [vmem:[%s3 + $0x40] sm:$0xff]
      %v3305 = vld [vmem:[%s3 + $0x48] sm:$0xff]
      %v3306 = vld [vmem:[%s3 + $0x50] sm:$0xff]
      %v3307 = vld [vmem:[%s3 + $0x58] sm:$0xff]
      %v3308 = vld [vmem:[%s3 + $0x60] sm:$0xff]
      %v3309 = vld [vmem:[%s3 + $0x68] sm:$0xff]
      %v3310 = vld [vmem:[%s3 + $0x70] sm:$0xff]
      %v3311 = vld [vmem:[%s3 + $0x78] sm:$0xff]
      %v3312 = vld [vmem:[%s4] sm:$0x1]
      %v3314 = vlaneseq
      %v3315 = vshrl.u32 %v3314, 7
      %v3316 = vsub.s32 0, %v3315
      %v3317 = vrot.slane %v3312, %v3316
      %3319 = vmatprep.subr.mxu0 0.0
      %3320 = vmatpush1.msra.mxu0 %v3296
      %3321 = vmatprep.subr.mxu0 0.0
      %3322 = vmatpush1.msra.mxu0 %v3297
      %3323 = vmatprep.subr.mxu0 0.0
      %3324 = vmatpush1.msra.mxu0 %v3298
      %3325 = vmatprep.subr.mxu0 0.0
      %3326 = vmatpush1.msra.mxu0 %v3299
      %3327 = vmatprep.subr.mxu0 0.0
      %3328 = vmatpush1.msra.mxu0 %v3300
      %3329 = vmatprep.subr.mxu0 0.0
      %3330 = vmatpush1.msra.mxu0 %v3301
      %3331 = vmatprep.subr.mxu0 0.0
      %3332 = vmatpush1.msra.mxu0 %v3302
      %3333 = vmatprep.subr.mxu0 0.0
      %3334 = vmatpush1.msra.mxu0 %v3303
      %3335 = vmatprep.subr.mxu0 0.0
      %3336 = vmatpush1.msra.mxu0 %v3304
      %3337 = vmatprep.subr.mxu0 0.0
      %3338 = vmatpush1.msra.mxu0 %v3305
      %3339 = vmatprep.subr.mxu0 0.0
      %3340 = vmatpush1.msra.mxu0 %v3306
      %3341 = vmatprep.subr.mxu0 0.0
      %3342 = vmatpush1.msra.mxu0 %v3307
      %3343 = vmatprep.subr.mxu0 0.0
      %3344 = vmatpush1.msra.mxu0 %v3308
      %3345 = vmatprep.subr.mxu0 0.0
      %3346 = vmatpush1.msra.mxu0 %v3309
      %3347 = vmatprep.subr.mxu0 0.0
      %3348 = vmatpush1.msra.mxu0 %v3310
      %3349 = vmatprep.subr.mxu0 0.0
      %3350 = vmatpush1.msra.mxu0 %v3311
      %3351 = vmatprep.subr.mxu0 0.0
      %3352 = vmatpush1.msra.mxu0 0.0
      %3353 = vmatprep.subr.mxu0 0.0
      %3354 = vmatpush1.msra.mxu0 0.0
      %3355 = vmatprep.subr.mxu0 0.0
      %3356 = vmatpush1.msra.mxu0 0.0
      %3357 = vmatprep.subr.mxu0 0.0
      %3358 = vmatpush1.msra.mxu0 0.0
      %3359 = vmatprep.subr.mxu0 0.0
      %3360 = vmatpush1.msra.mxu0 0.0
      %3361 = vmatprep.subr.mxu0 0.0
      %3362 = vmatpush1.msra.mxu0 0.0
      %3363 = vmatprep.subr.mxu0 0.0
      %3364 = vmatpush1.msra.mxu0 0.0
      %3365 = vmatprep.subr.mxu0 0.0
      %3366 = vmatpush1.msra.mxu0 0.0
      %3367 = vmatprep.subr.mxu0 0.0
      %3368 = vmatpush1.msra.mxu0 0.0
      %3369 = vmatprep.subr.mxu0 0.0
      %3370 = vmatpush1.msra.mxu0 0.0
      %3371 = vmatprep.subr.mxu0 0.0
      %3372 = vmatpush1.msra.mxu0 0.0
      %3373 = vmatprep.subr.mxu0 0.0
      %3374 = vmatpush1.msra.mxu0 0.0
      %3375 = vmatprep.subr.mxu0 0.0
      %3376 = vmatpush1.msra.mxu0 0.0
      %3377 = vmatprep.subr.mxu0 0.0
      %3378 = vmatpush1.msra.mxu0 0.0
      %3379 = vmatprep.subr.mxu0 0.0
      %3380 = vmatpush1.msra.mxu0 0.0
      %3381 = vmatprep.subr.mxu0 0.0
      %3382 = vmatpush1.msra.mxu0 0.0
      %3383 = vmatprep.mubr.f32.mxu0 0.0
      %3384 = vmatmul.mubr.f32.gmra.mrb[0].mxu0 %v3264
      %v3385 = vpop.f32.mrb[0].mxu0
      %v3386 = vadd.f32 %v3317, %v3385
      %v3387 = vpop.f32.mrb[0].mxu0
      %3388 = vmatprep.mubr.f32.mxu0 0.0
      %3389 = vmatmul.mubr.f32.gmra.mrb[0].mxu0 %v3265
      %v3390 = vpop.f32.mrb[0].mxu0
      %v3391 = vadd.f32 %v3317, %v3390
      %v3392 = vpop.f32.mrb[0].mxu0
      %3393 = vmatprep.mubr.f32.mxu0 0.0
      %3394 = vmatmul.mubr.f32.gmra.mrb[0].mxu0 %v3266
      %v3395 = vpop.f32.mrb[0].mxu0
      %v3396 = vadd.f32 %v3317, %v3395
      %v3397 = vpop.f32.mrb[0].mxu0
      %3398 = vmatprep.mubr.f32.mxu0 0.0
      %3399 = vmatmul.mubr.f32.gmra.mrb[0].mxu0 %v3267
      %v3400 = vpop.f32.mrb[0].mxu0
      %v3401 = vadd.f32 %v3317, %v3400
      %v3402 = vpop.f32.mrb[0].mxu0
      %3403 = vmatprep.mubr.f32.mxu0 0.0
      %3404 = vmatmul.mubr.f32.gmra.mrb[0].mxu0 %v3268
      %v3405 = vpop.f32.mrb[0].mxu0
      %v3406 = vadd.f32 %v3317, %v3405
      %v3407 = vpop.f32.mrb[0].mxu0
      %3408 = vmatprep.mubr.f32.mxu0 0.0
      %3409 = vmatmul.mubr.f32.gmra.mrb[0].mxu0 %v3269
      %v3410 = vpop.f32.mrb[0].mxu0
      %v3411 = vadd.f32 %v3317, %v3410
      %v3412 = vpop.f32.mrb[0].mxu0
      %3413 = vmatprep.mubr.f32.mxu0 0.0
      %3414 = vmatmul.mubr.f32.gmra.mrb[0].mxu0 %v3270
      %v3415 = vpop.f32.mrb[0].mxu0
      %v3416 = vadd.f32 %v3317, %v3415
      %v3417 = vpop.f32.mrb[0].mxu0
      %3418 = vmatprep.mubr.f32.mxu0 0.0
      %3419 = vmatmul.mubr.f32.gmra.mrb[0].mxu0 %v3271
      %v3420 = vpop.f32.mrb[0].mxu0
      %v3421 = vadd.f32 %v3317, %v3420
      %v3422 = vpop.f32.mrb[0].mxu0
      %3423 = vmatprep.mubr.f32.mxu0 0.0
      %3424 = vmatmul.mubr.f32.gmra.mrb[0].mxu0 %v3272
      %v3425 = vpop.f32.mrb[0].mxu0
      %v3426 = vadd.f32 %v3317, %v3425
      %v3427 = vpop.f32.mrb[0].mxu0
      %3428 = vmatprep.mubr.f32.mxu0 0.0
      %3429 = vmatmul.mubr.f32.gmra.mrb[0].mxu0 %v3273
      %v3430 = vpop.f32.mrb[0].mxu0
      %v3431 = vadd.f32 %v3317, %v3430
      %v3432 = vpop.f32.mrb[0].mxu0
      %3433 = vmatprep.mubr.f32.mxu0 0.0
      %3434 = vmatmul.mubr.f32.gmra.mrb[0].mxu0 %v3274
      %v3435 = vpop.f32.mrb[0].mxu0
      %v3436 = vadd.f32 %v3317, %v3435
      %v3437 = vpop.f32.mrb[0].mxu0
      %3438 = vmatprep.mubr.f32.mxu0 0.0
      %3439 = vmatmul.mubr.f32.gmra.mrb[0].mxu0 %v3275
      %v3440 = vpop.f32.mrb[0].mxu0
      %v3441 = vadd.f32 %v3317, %v3440
      %v3442 = vpop.f32.mrb[0].mxu0
      %3443 = vmatprep.mubr.f32.mxu0 0.0
      %3444 = vmatmul.mubr.f32.gmra.mrb[0].mxu0 %v3276
      %v3445 = vpop.f32.mrb[0].mxu0
      %v3446 = vadd.f32 %v3317, %v3445
      %v3447 = vpop.f32.mrb[0].mxu0
      %3448 = vmatprep.mubr.f32.mxu0 0.0
      %3449 = vmatmul.mubr.f32.gmra.mrb[0].mxu0 %v3277
      %v3450 = vpop.f32.mrb[0].mxu0
      %v3451 = vadd.f32 %v3317, %v3450
      %v3452 = vpop.f32.mrb[0].mxu0
      %3453 = vmatprep.mubr.f32.mxu0 0.0
      %3454 = vmatmul.mubr.f32.gmra.mrb[0].mxu0 %v3278
      %v3455 = vpop.f32.mrb[0].mxu0
      %v3456 = vadd.f32 %v3317, %v3455
      %v3457 = vpop.f32.mrb[0].mxu0
      %3458 = vmatprep.mubr.f32.mxu0 0.0
      %3459 = vmatmul.mubr.f32.gmra.mrb[0].mxu0 %v3279
      %v3460 = vpop.f32.mrb[0].mxu0
      %v3461 = vadd.f32 %v3317, %v3460
      %v3462 = vpop.f32.mrb[0].mxu0
      %3463 = vmatprep.mubr.f32.mxu0 0.0
      %3464 = vmatmul.mubr.f32.gmra.mrb[0].mxu0 %v3280
      %v3465 = vpop.f32.mrb[0].mxu0
      %v3466 = vadd.f32 %v3317, %v3465
      %v3467 = vpop.f32.mrb[0].mxu0
      %3468 = vmatprep.mubr.f32.mxu0 0.0
      %3469 = vmatmul.mubr.f32.gmra.mrb[0].mxu0 %v3281
      %v3470 = vpop.f32.mrb[0].mxu0
      %v3471 = vadd.f32 %v3317, %v3470
      %v3472 = vpop.f32.mrb[0].mxu0
      %3473 = vmatprep.mubr.f32.mxu0 0.0
      %3474 = vmatmul.mubr.f32.gmra.mrb[0].mxu0 %v3282
      %v3475 = vpop.f32.mrb[0].mxu0
      %v3476 = vadd.f32 %v3317, %v3475
      %v3477 = vpop.f32.mrb[0].mxu0
      %3478 = vmatprep.mubr.f32.mxu0 0.0
      %3479 = vmatmul.mubr.f32.gmra.mrb[0].mxu0 %v3283
      %v3480 = vpop.f32.mrb[0].mxu0
      %v3481 = vadd.f32 %v3317, %v3480
      %v3482 = vpop.f32.mrb[0].mxu0
      %3483 = vmatprep.mubr.f32.mxu0 0.0
      %3484 = vmatmul.mubr.f32.gmra.mrb[0].mxu0 %v3284
      %v3485 = vpop.f32.mrb[0].mxu0
      %v3486 = vadd.f32 %v3317, %v3485
      %v3487 = vpop.f32.mrb[0].mxu0
      %3488 = vmatprep.mubr.f32.mxu0 0.0
      %3489 = vmatmul.mubr.f32.gmra.mrb[0].mxu0 %v3285
      %v3490 = vpop.f32.mrb[0].mxu0
      %v3491 = vadd.f32 %v3317, %v3490
      %v3492 = vpop.f32.mrb[0].mxu0
      %3493 = vmatprep.mubr.f32.mxu0 0.0
      %3494 = vmatmul.mubr.f32.gmra.mrb[0].mxu0 %v3286
      %v3495 = vpop.f32.mrb[0].mxu0
      %v3496 = vadd.f32 %v3317, %v3495
      %v3497 = vpop.f32.mrb[0].mxu0
      %3498 = vmatprep.mubr.f32.mxu0 0.0
      %3499 = vmatmul.mubr.f32.gmra.mrb[0].mxu0 %v3287
      %v3500 = vpop.f32.mrb[0].mxu0
      %v3501 = vadd.f32 %v3317, %v3500
      %v3502 = vpop.f32.mrb[0].mxu0
      %3503 = vmatprep.mubr.f32.mxu0 0.0
      %3504 = vmatmul.mubr.f32.gmra.mrb[0].mxu0 %v3288
      %v3505 = vpop.f32.mrb[0].mxu0
      %v3506 = vadd.f32 %v3317, %v3505
      %v3507 = vpop.f32.mrb[0].mxu0
      %3508 = vmatprep.mubr.f32.mxu0 0.0
      %3509 = vmatmul.mubr.f32.gmra.mrb[0].mxu0 %v3289
      %v3510 = vpop.f32.mrb[0].mxu0
      %v3511 = vadd.f32 %v3317, %v3510
      %v3512 = vpop.f32.mrb[0].mxu0
      %3513 = vmatprep.mubr.f32.mxu0 0.0
      %3514 = vmatmul.mubr.f32.gmra.mrb[0].mxu0 %v3290
      %v3515 = vpop.f32.mrb[0].mxu0
      %v3516 = vadd.f32 %v3317, %v3515
      %v3517 = vpop.f32.mrb[0].mxu0
      %3518 = vmatprep.mubr.f32.mxu0 0.0
      %3519 = vmatmul.mubr.f32.gmra.mrb[0].mxu0 %v3291
      %v3520 = vpop.f32.mrb[0].mxu0
      %v3521 = vadd.f32 %v3317, %v3520
      %v3522 = vpop.f32.mrb[0].mxu0
      %3523 = vmatprep.mubr.f32.mxu0 0.0
      %3524 = vmatmul.mubr.f32.gmra.mrb[0].mxu0 %v3292
      %v3525 = vpop.f32.mrb[0].mxu0
      %v3526 = vadd.f32 %v3317, %v3525
      %v3527 = vpop.f32.mrb[0].mxu0
      %3528 = vmatprep.mubr.f32.mxu0 0.0
      %3529 = vmatmul.mubr.f32.gmra.mrb[0].mxu0 %v3293
      %v3530 = vpop.f32.mrb[0].mxu0
      %v3531 = vadd.f32 %v3317, %v3530
      %v3532 = vpop.f32.mrb[0].mxu0
      %3533 = vmatprep.mubr.f32.mxu0 0.0
      %3534 = vmatmul.mubr.f32.gmra.mrb[0].mxu0 %v3294
      %v3535 = vpop.f32.mrb[0].mxu0
      %v3536 = vadd.f32 %v3317, %v3535
      %v3537 = vpop.f32.mrb[0].mxu0
      %3538 = vmatprep.mubr.f32.mxu0 0.0
      %3539 = vmatmul.mubr.f32.gmra.mrb[0].mxu0 %v3295
      %v3540 = vpop.f32.mrb[0].mxu0
      %v3541 = vadd.f32 %v3317, %v3540
      %v3542 = vpop.f32.mrb[0].mxu0
      %3543 = vdwg.mxu0
      %v3544 = vld [vmem:[%s5] sm:$0xff]
      %v3545 = vld [vmem:[%s5 + $0x8] sm:$0xff]
      %v3546 = vld [vmem:[%s5 + $0x10] sm:$0xff]
      %v3547 = vld [vmem:[%s5 + $0x18] sm:$0xff]
      %v3548 = vld [vmem:[%s5 + $0x20] sm:$0xff]
      %v3549 = vld [vmem:[%s5 + $0x28] sm:$0xff]
      %v3550 = vld [vmem:[%s5 + $0x30] sm:$0xff]
      %v3551 = vld [vmem:[%s5 + $0x38] sm:$0xff]
      %v3552 = vld [vmem:[%s5 + $0x40] sm:$0xff]
      %v3553 = vld [vmem:[%s5 + $0x48] sm:$0xff]
      %v3554 = vld [vmem:[%s5 + $0x50] sm:$0xff]
      %v3555 = vld [vmem:[%s5 + $0x58] sm:$0xff]
      %v3556 = vld [vmem:[%s5 + $0x60] sm:$0xff]
      %v3557 = vld [vmem:[%s5 + $0x68] sm:$0xff]
      %v3558 = vld [vmem:[%s5 + $0x70] sm:$0xff]
      %v3559 = vld [vmem:[%s5 + $0x78] sm:$0xff]
      %v3560 = vld [vmem:[%s6] sm:$0x1]
      %v3562 = vlaneseq
      %v3563 = vshrl.u32 %v3562, 7
      %v3564 = vsub.s32 0, %v3563
      %v3565 = vrot.slane %v3560, %v3564
      %3567 = vmatprep.subr.mxu0 0.0
      %3568 = vmatpush1.msra.mxu0 %v3544
      %3569 = vmatprep.subr.mxu0 0.0
      %3570 = vmatpush1.msra.mxu0 %v3545
      %3571 = vmatprep.subr.mxu0 0.0
      %3572 = vmatpush1.msra.mxu0 %v3546
      %3573 = vmatprep.subr.mxu0 0.0
      %3574 = vmatpush1.msra.mxu0 %v3547
      %3575 = vmatprep.subr.mxu0 0.0
      %3576 = vmatpush1.msra.mxu0 %v3548
      %3577 = vmatprep.subr.mxu0 0.0
      %3578 = vmatpush1.msra.mxu0 %v3549
      %3579 = vmatprep.subr.mxu0 0.0
      %3580 = vmatpush1.msra.mxu0 %v3550
      %3581 = vmatprep.subr.mxu0 0.0
      %3582 = vmatpush1.msra.mxu0 %v3551
      %3583 = vmatprep.subr.mxu0 0.0
      %3584 = vmatpush1.msra.mxu0 %v3552
      %3585 = vmatprep.subr.mxu0 0.0
      %3586 = vmatpush1.msra.mxu0 %v3553
      %3587 = vmatprep.subr.mxu0 0.0
      %3588 = vmatpush1.msra.mxu0 %v3554
      %3589 = vmatprep.subr.mxu0 0.0
      %3590 = vmatpush1.msra.mxu0 %v3555
      %3591 = vmatprep.subr.mxu0 0.0
      %3592 = vmatpush1.msra.mxu0 %v3556
      %3593 = vmatprep.subr.mxu0 0.0
      %3594 = vmatpush1.msra.mxu0 %v3557
      %3595 = vmatprep.subr.mxu0 0.0
      %3596 = vmatpush1.msra.mxu0 %v3558
      %3597 = vmatprep.subr.mxu0 0.0
      %3598 = vmatpush1.msra.mxu0 %v3559
      %3599 = vmatprep.subr.mxu0 0.0
      %3600 = vmatpush1.msra.mxu0 0.0
      %3601 = vmatprep.subr.mxu0 0.0
      %3602 = vmatpush1.msra.mxu0 0.0
      %3603 = vmatprep.subr.mxu0 0.0
      %3604 = vmatpush1.msra.mxu0 0.0
      %3605 = vmatprep.subr.mxu0 0.0
      %3606 = vmatpush1.msra.mxu0 0.0
      %3607 = vmatprep.subr.mxu0 0.0
      %3608 = vmatpush1.msra.mxu0 0.0
      %3609 = vmatprep.subr.mxu0 0.0
      %3610 = vmatpush1.msra.mxu0 0.0
      %3611 = vmatprep.subr.mxu0 0.0
      %3612 = vmatpush1.msra.mxu0 0.0
      %3613 = vmatprep.subr.mxu0 0.0
      %3614 = vmatpush1.msra.mxu0 0.0
      %3615 = vmatprep.subr.mxu0 0.0
      %3616 = vmatpush1.msra.mxu0 0.0
      %3617 = vmatprep.subr.mxu0 0.0
      %3618 = vmatpush1.msra.mxu0 0.0
      %3619 = vmatprep.subr.mxu0 0.0
      %3620 = vmatpush1.msra.mxu0 0.0
      %3621 = vmatprep.subr.mxu0 0.0
      %3622 = vmatpush1.msra.mxu0 0.0
      %3623 = vmatprep.subr.mxu0 0.0
      %3624 = vmatpush1.msra.mxu0 0.0
      %3625 = vmatprep.subr.mxu0 0.0
      %3626 = vmatpush1.msra.mxu0 0.0
      %3627 = vmatprep.subr.mxu0 0.0
      %3628 = vmatpush1.msra.mxu0 0.0
      %3629 = vmatprep.subr.mxu0 0.0
      %3630 = vmatpush1.msra.mxu0 0.0
      %3631 = vmatprep.mubr.f32.mxu0 0.0
      %3632 = vmatmul.mubr.f32.gmra.mrb[0].mxu0 %v3264
      %v3633 = vpop.f32.mrb[0].mxu0
      %v3634 = vadd.f32 %v3565, %v3633
      %v3635 = vpop.f32.mrb[0].mxu0
      %3636 = vmatprep.mubr.f32.mxu0 0.0
      %3637 = vmatmul.mubr.f32.gmra.mrb[0].mxu0 %v3265
      %v3638 = vpop.f32.mrb[0].mxu0
      %v3639 = vadd.f32 %v3565, %v3638
      %v3640 = vpop.f32.mrb[0].mxu0
      %3641 = vmatprep.mubr.f32.mxu0 0.0
      %3642 = vmatmul.mubr.f32.gmra.mrb[0].mxu0 %v3266
      %v3643 = vpop.f32.mrb[0].mxu0
      %v3644 = vadd.f32 %v3565, %v3643
      %v3645 = vpop.f32.mrb[0].mxu0
      %3646 = vmatprep.mubr.f32.mxu0 0.0
      %3647 = vmatmul.mubr.f32.gmra.mrb[0].mxu0 %v3267
      %v3648 = vpop.f32.mrb[0].mxu0
      %v3649 = vadd.f32 %v3565, %v3648
      %v3650 = vpop.f32.mrb[0].mxu0
      %3651 = vmatprep.mubr.f32.mxu0 0.0
      %3652 = vmatmul.mubr.f32.gmra.mrb[0].mxu0 %v3268
      %v3653 = vpop.f32.mrb[0].mxu0
      %v3654 = vadd.f32 %v3565, %v3653
      %v3655 = vpop.f32.mrb[0].mxu0
      %3656 = vmatprep.mubr.f32.mxu0 0.0
      %3657 = vmatmul.mubr.f32.gmra.mrb[0].mxu0 %v3269
      %v3658 = vpop.f32.mrb[0].mxu0
      %v3659 = vadd.f32 %v3565, %v3658
      %v3660 = vpop.f32.mrb[0].mxu0
      %3661 = vmatprep.mubr.f32.mxu0 0.0
      %3662 = vmatmul.mubr.f32.gmra.mrb[0].mxu0 %v3270
      %v3663 = vpop.f32.mrb[0].mxu0
      %v3664 = vadd.f32 %v3565, %v3663
      %v3665 = vpop.f32.mrb[0].mxu0
      %3666 = vmatprep.mubr.f32.mxu0 0.0
      %3667 = vmatmul.mubr.f32.gmra.mrb[0].mxu0 %v3271
      %v3668 = vpop.f32.mrb[0].mxu0
      %v3669 = vadd.f32 %v3565, %v3668
      %v3670 = vpop.f32.mrb[0].mxu0
      %3671 = vmatprep.mubr.f32.mxu0 0.0
      %3672 = vmatmul.mubr.f32.gmra.mrb[0].mxu0 %v3272
      %v3673 = vpop.f32.mrb[0].mxu0
      %v3674 = vadd.f32 %v3565, %v3673
      %v3675 = vpop.f32.mrb[0].mxu0
      %3676 = vmatprep.mubr.f32.mxu0 0.0
      %3677 = vmatmul.mubr.f32.gmra.mrb[0].mxu0 %v3273
      %v3678 = vpop.f32.mrb[0].mxu0
      %v3679 = vadd.f32 %v3565, %v3678
      %v3680 = vpop.f32.mrb[0].mxu0
      %3681 = vmatprep.mubr.f32.mxu0 0.0
      %3682 = vmatmul.mubr.f32.gmra.mrb[0].mxu0 %v3274
      %v3683 = vpop.f32.mrb[0].mxu0
      %v3684 = vadd.f32 %v3565, %v3683
      %v3685 = vpop.f32.mrb[0].mxu0
      %3686 = vmatprep.mubr.f32.mxu0 0.0
      %3687 = vmatmul.mubr.f32.gmra.mrb[0].mxu0 %v3275
      %v3688 = vpop.f32.mrb[0].mxu0
      %v3689 = vadd.f32 %v3565, %v3688
      %v3690 = vpop.f32.mrb[0].mxu0
      %3691 = vmatprep.mubr.f32.mxu0 0.0
      %3692 = vmatmul.mubr.f32.gmra.mrb[0].mxu0 %v3276
      %v3693 = vpop.f32.mrb[0].mxu0
      %v3694 = vadd.f32 %v3565, %v3693
      %v3695 = vpop.f32.mrb[0].mxu0
      %3696 = vmatprep.mubr.f32.mxu0 0.0
      %3697 = vmatmul.mubr.f32.gmra.mrb[0].mxu0 %v3277
      %v3698 = vpop.f32.mrb[0].mxu0
      %v3699 = vadd.f32 %v3565, %v3698
      %v3700 = vpop.f32.mrb[0].mxu0
      %3701 = vmatprep.mubr.f32.mxu0 0.0
      %3702 = vmatmul.mubr.f32.gmra.mrb[0].mxu0 %v3278
      %v3703 = vpop.f32.mrb[0].mxu0
      %v3704 = vadd.f32 %v3565, %v3703
      %v3705 = vpop.f32.mrb[0].mxu0
      %3706 = vmatprep.mubr.f32.mxu0 0.0
      %3707 = vmatmul.mubr.f32.gmra.mrb[0].mxu0 %v3279
      %v3708 = vpop.f32.mrb[0].mxu0
      %v3709 = vadd.f32 %v3565, %v3708
      %v3710 = vpop.f32.mrb[0].mxu0
      %3711 = vmatprep.mubr.f32.mxu0 0.0
      %3712 = vmatmul.mubr.f32.gmra.mrb[0].mxu0 %v3280
      %v3713 = vpop.f32.mrb[0].mxu0
      %v3714 = vadd.f32 %v3565, %v3713
      %v3715 = vpop.f32.mrb[0].mxu0
      %3716 = vmatprep.mubr.f32.mxu0 0.0
      %3717 = vmatmul.mubr.f32.gmra.mrb[0].mxu0 %v3281
      %v3718 = vpop.f32.mrb[0].mxu0
      %v3719 = vadd.f32 %v3565, %v3718
      %v3720 = vpop.f32.mrb[0].mxu0
      %3721 = vmatprep.mubr.f32.mxu0 0.0
      %3722 = vmatmul.mubr.f32.gmra.mrb[0].mxu0 %v3282
      %v3723 = vpop.f32.mrb[0].mxu0
      %v3724 = vadd.f32 %v3565, %v3723
      %v3725 = vpop.f32.mrb[0].mxu0
      %3726 = vmatprep.mubr.f32.mxu0 0.0
      %3727 = vmatmul.mubr.f32.gmra.mrb[0].mxu0 %v3283
      %v3728 = vpop.f32.mrb[0].mxu0
      %v3729 = vadd.f32 %v3565, %v3728
      %v3730 = vpop.f32.mrb[0].mxu0
      %3731 = vmatprep.mubr.f32.mxu0 0.0
      %3732 = vmatmul.mubr.f32.gmra.mrb[0].mxu0 %v3284
      %v3733 = vpop.f32.mrb[0].mxu0
      %v3734 = vadd.f32 %v3565, %v3733
      %v3735 = vpop.f32.mrb[0].mxu0
      %3736 = vmatprep.mubr.f32.mxu0 0.0
      %3737 = vmatmul.mubr.f32.gmra.mrb[0].mxu0 %v3285
      %v3738 = vpop.f32.mrb[0].mxu0
      %v3739 = vadd.f32 %v3565, %v3738
      %v3740 = vpop.f32.mrb[0].mxu0
      %3741 = vmatprep.mubr.f32.mxu0 0.0
      %3742 = vmatmul.mubr.f32.gmra.mrb[0].mxu0 %v3286
      %v3743 = vpop.f32.mrb[0].mxu0
      %v3744 = vadd.f32 %v3565, %v3743
      %v3745 = vpop.f32.mrb[0].mxu0
      %3746 = vmatprep.mubr.f32.mxu0 0.0
      %3747 = vmatmul.mubr.f32.gmra.mrb[0].mxu0 %v3287
      %v3748 = vpop.f32.mrb[0].mxu0
      %v3749 = vadd.f32 %v3565, %v3748
      %v3750 = vpop.f32.mrb[0].mxu0
      %3751 = vmatprep.mubr.f32.mxu0 0.0
      %3752 = vmatmul.mubr.f32.gmra.mrb[0].mxu0 %v3288
      %v3753 = vpop.f32.mrb[0].mxu0
      %v3754 = vadd.f32 %v3565, %v3753
      %v3755 = vpop.f32.mrb[0].mxu0
      %3756 = vmatprep.mubr.f32.mxu0 0.0
      %3757 = vmatmul.mubr.f32.gmra.mrb[0].mxu0 %v3289
      %v3758 = vpop.f32.mrb[0].mxu0
      %v3759 = vadd.f32 %v3565, %v3758
      %v3760 = vpop.f32.mrb[0].mxu0
      %3761 = vmatprep.mubr.f32.mxu0 0.0
      %3762 = vmatmul.mubr.f32.gmra.mrb[0].mxu0 %v3290
      %v3763 = vpop.f32.mrb[0].mxu0
      %v3764 = vadd.f32 %v3565, %v3763
      %v3765 = vpop.f32.mrb[0].mxu0
      %3766 = vmatprep.mubr.f32.mxu0 0.0
      %3767 = vmatmul.mubr.f32.gmra.mrb[0].mxu0 %v3291
      %v3768 = vpop.f32.mrb[0].mxu0
      %v3769 = vadd.f32 %v3565, %v3768
      %v3770 = vpop.f32.mrb[0].mxu0
      %3771 = vmatprep.mubr.f32.mxu0 0.0
      %3772 = vmatmul.mubr.f32.gmra.mrb[0].mxu0 %v3292
      %v3773 = vpop.f32.mrb[0].mxu0
      %v3774 = vadd.f32 %v3565, %v3773
      %v3775 = vpop.f32.mrb[0].mxu0
      %3776 = vmatprep.mubr.f32.mxu0 0.0
      %3777 = vmatmul.mubr.f32.gmra.mrb[0].mxu0 %v3293
      %v3778 = vpop.f32.mrb[0].mxu0
      %v3779 = vadd.f32 %v3565, %v3778
      %v3780 = vpop.f32.mrb[0].mxu0
      %3781 = vmatprep.mubr.f32.mxu0 0.0
      %3782 = vmatmul.mubr.f32.gmra.mrb[0].mxu0 %v3294
      %v3783 = vpop.f32.mrb[0].mxu0
      %v3784 = vadd.f32 %v3565, %v3783
      %v3785 = vpop.f32.mrb[0].mxu0
      %3786 = vmatprep.mubr.f32.mxu0 0.0
      %3787 = vmatmul.mubr.f32.gmra.mrb[0].mxu0 %v3295
      %v3788 = vpop.f32.mrb[0].mxu0
      %v3789 = vadd.f32 %v3565, %v3788
      %v3790 = vpop.f32.mrb[0].mxu0
      %3791 = vdwg.mxu0
      %v3792 = vld [vmem:[%s7] sm:$0xff]
      %v3793 = vld [vmem:[%s7 + $0x8] sm:$0xff]
      %v3794 = vld [vmem:[%s7 + $0x10] sm:$0xff]
      %v3795 = vld [vmem:[%s7 + $0x18] sm:$0xff]
      %v3796 = vld [vmem:[%s7 + $0x20] sm:$0xff]
      %v3797 = vld [vmem:[%s7 + $0x28] sm:$0xff]
      %v3798 = vld [vmem:[%s7 + $0x30] sm:$0xff]
      %v3799 = vld [vmem:[%s7 + $0x38] sm:$0xff]
      %v3800 = vld [vmem:[%s7 + $0x40] sm:$0xff]
      %v3801 = vld [vmem:[%s7 + $0x48] sm:$0xff]
      %v3802 = vld [vmem:[%s7 + $0x50] sm:$0xff]
      %v3803 = vld [vmem:[%s7 + $0x58] sm:$0xff]
      %v3804 = vld [vmem:[%s7 + $0x60] sm:$0xff]
      %v3805 = vld [vmem:[%s7 + $0x68] sm:$0xff]
      %v3806 = vld [vmem:[%s7 + $0x70] sm:$0xff]
      %v3807 = vld [vmem:[%s7 + $0x78] sm:$0xff]
      %v3808 = vld [vmem:[%s8] sm:$0x1]
      %v3810 = vlaneseq
      %v3811 = vshrl.u32 %v3810, 7
      %v3812 = vsub.s32 0, %v3811
      %v3813 = vrot.slane %v3808, %v3812
      %3815 = vmatprep.subr.mxu0 0.0
      %3816 = vmatpush1.msra.mxu0 %v3792
      %3817 = vmatprep.subr.mxu0 0.0
      %3818 = vmatpush1.msra.mxu0 %v3793
      %3819 = vmatprep.subr.mxu0 0.0
      %3820 = vmatpush1.msra.mxu0 %v3794
      %3821 = vmatprep.subr.mxu0 0.0
      %3822 = vmatpush1.msra.mxu0 %v3795
      %3823 = vmatprep.subr.mxu0 0.0
      %3824 = vmatpush1.msra.mxu0 %v3796
      %3825 = vmatprep.subr.mxu0 0.0
      %3826 = vmatpush1.msra.mxu0 %v3797
      %3827 = vmatprep.subr.mxu0 0.0
      %3828 = vmatpush1.msra.mxu0 %v3798
      %3829 = vmatprep.subr.mxu0 0.0
      %3830 = vmatpush1.msra.mxu0 %v3799
      %3831 = vmatprep.subr.mxu0 0.0
      %3832 = vmatpush1.msra.mxu0 %v3800
      %3833 = vmatprep.subr.mxu0 0.0
      %3834 = vmatpush1.msra.mxu0 %v3801
      %3835 = vmatprep.subr.mxu0 0.0
      %3836 = vmatpush1.msra.mxu0 %v3802
      %3837 = vmatprep.subr.mxu0 0.0
      %3838 = vmatpush1.msra.mxu0 %v3803
      %3839 = vmatprep.subr.mxu0 0.0
      %3840 = vmatpush1.msra.mxu0 %v3804
      %3841 = vmatprep.subr.mxu0 0.0
      %3842 = vmatpush1.msra.mxu0 %v3805
      %3843 = vmatprep.subr.mxu0 0.0
      %3844 = vmatpush1.msra.mxu0 %v3806
      %3845 = vmatprep.subr.mxu0 0.0
      %3846 = vmatpush1.msra.mxu0 %v3807
      %3847 = vmatprep.subr.mxu0 0.0
      %3848 = vmatpush1.msra.mxu0 0.0
      %3849 = vmatprep.subr.mxu0 0.0
      %3850 = vmatpush1.msra.mxu0 0.0
      %3851 = vmatprep.subr.mxu0 0.0
      %3852 = vmatpush1.msra.mxu0 0.0
      %3853 = vmatprep.subr.mxu0 0.0
      %3854 = vmatpush1.msra.mxu0 0.0
      %3855 = vmatprep.subr.mxu0 0.0
      %3856 = vmatpush1.msra.mxu0 0.0
      %3857 = vmatprep.subr.mxu0 0.0
      %3858 = vmatpush1.msra.mxu0 0.0
      %3859 = vmatprep.subr.mxu0 0.0
      %3860 = vmatpush1.msra.mxu0 0.0
      %3861 = vmatprep.subr.mxu0 0.0
      %3862 = vmatpush1.msra.mxu0 0.0
      %3863 = vmatprep.subr.mxu0 0.0
      %3864 = vmatpush1.msra.mxu0 0.0
      %3865 = vmatprep.subr.mxu0 0.0
      %3866 = vmatpush1.msra.mxu0 0.0
      %3867 = vmatprep.subr.mxu0 0.0
      %3868 = vmatpush1.msra.mxu0 0.0
      %3869 = vmatprep.subr.mxu0 0.0
      %3870 = vmatpush1.msra.mxu0 0.0
      %3871 = vmatprep.subr.mxu0 0.0
      %3872 = vmatpush1.msra.mxu0 0.0
      %3873 = vmatprep.subr.mxu0 0.0
      %3874 = vmatpush1.msra.mxu0 0.0
      %3875 = vmatprep.subr.mxu0 0.0
      %3876 = vmatpush1.msra.mxu0 0.0
      %3877 = vmatprep.subr.mxu0 0.0
      %3878 = vmatpush1.msra.mxu0 0.0
      %3879 = vmatprep.mubr.f32.mxu0 0.0
      %3880 = vmatmul.mubr.f32.gmra.mrb[0].mxu0 %v3264
      %v3881 = vpop.f32.mrb[0].mxu0
      %v3882 = vadd.f32 %v3813, %v3881
      %v3883 = vpop.f32.mrb[0].mxu0
      %3884 = vmatprep.mubr.f32.mxu0 0.0
      %3885 = vmatmul.mubr.f32.gmra.mrb[0].mxu0 %v3265
      %v3886 = vpop.f32.mrb[0].mxu0
      %v3887 = vadd.f32 %v3813, %v3886
      %v3888 = vpop.f32.mrb[0].mxu0
      %3889 = vmatprep.mubr.f32.mxu0 0.0
      %3890 = vmatmul.mubr.f32.gmra.mrb[0].mxu0 %v3266
      %v3891 = vpop.f32.mrb[0].mxu0
      %v3892 = vadd.f32 %v3813, %v3891
      %v3893 = vpop.f32.mrb[0].mxu0
      %3894 = vmatprep.mubr.f32.mxu0 0.0
      %3895 = vmatmul.mubr.f32.gmra.mrb[0].mxu0 %v3267
      %v3896 = vpop.f32.mrb[0].mxu0
      %v3897 = vadd.f32 %v3813, %v3896
      %v3898 = vpop.f32.mrb[0].mxu0
      %3899 = vmatprep.mubr.f32.mxu0 0.0
      %3900 = vmatmul.mubr.f32.gmra.mrb[0].mxu0 %v3268
      %v3901 = vpop.f32.mrb[0].mxu0
      %v3902 = vadd.f32 %v3813, %v3901
      %v3903 = vpop.f32.mrb[0].mxu0
      %3904 = vmatprep.mubr.f32.mxu0 0.0
      %3905 = vmatmul.mubr.f32.gmra.mrb[0].mxu0 %v3269
      %v3906 = vpop.f32.mrb[0].mxu0
      %v3907 = vadd.f32 %v3813, %v3906
      %v3908 = vpop.f32.mrb[0].mxu0
      %3909 = vmatprep.mubr.f32.mxu0 0.0
      %3910 = vmatmul.mubr.f32.gmra.mrb[0].mxu0 %v3270
      %v3911 = vpop.f32.mrb[0].mxu0
      %v3912 = vadd.f32 %v3813, %v3911
      %v3913 = vpop.f32.mrb[0].mxu0
      %3914 = vmatprep.mubr.f32.mxu0 0.0
      %3915 = vmatmul.mubr.f32.gmra.mrb[0].mxu0 %v3271
      %v3916 = vpop.f32.mrb[0].mxu0
      %v3917 = vadd.f32 %v3813, %v3916
      %v3918 = vpop.f32.mrb[0].mxu0
      %3919 = vmatprep.mubr.f32.mxu0 0.0
      %3920 = vmatmul.mubr.f32.gmra.mrb[0].mxu0 %v3272
      %v3921 = vpop.f32.mrb[0].mxu0
      %v3922 = vadd.f32 %v3813, %v3921
      %v3923 = vpop.f32.mrb[0].mxu0
      %3924 = vmatprep.mubr.f32.mxu0 0.0
      %3925 = vmatmul.mubr.f32.gmra.mrb[0].mxu0 %v3273
      %v3926 = vpop.f32.mrb[0].mxu0
      %v3927 = vadd.f32 %v3813, %v3926
      %v3928 = vpop.f32.mrb[0].mxu0
      %3929 = vmatprep.mubr.f32.mxu0 0.0
      %3930 = vmatmul.mubr.f32.gmra.mrb[0].mxu0 %v3274
      %v3931 = vpop.f32.mrb[0].mxu0
      %v3932 = vadd.f32 %v3813, %v3931
      %v3933 = vpop.f32.mrb[0].mxu0
      %3934 = vmatprep.mubr.f32.mxu0 0.0
      %3935 = vmatmul.mubr.f32.gmra.mrb[0].mxu0 %v3275
      %v3936 = vpop.f32.mrb[0].mxu0
      %v3937 = vadd.f32 %v3813, %v3936
      %v3938 = vpop.f32.mrb[0].mxu0
      %3939 = vmatprep.mubr.f32.mxu0 0.0
      %3940 = vmatmul.mubr.f32.gmra.mrb[0].mxu0 %v3276
      %v3941 = vpop.f32.mrb[0].mxu0
      %v3942 = vadd.f32 %v3813, %v3941
      %v3943 = vpop.f32.mrb[0].mxu0
      %3944 = vmatprep.mubr.f32.mxu0 0.0
      %3945 = vmatmul.mubr.f32.gmra.mrb[0].mxu0 %v3277
      %v3946 = vpop.f32.mrb[0].mxu0
      %v3947 = vadd.f32 %v3813, %v3946
      %v3948 = vpop.f32.mrb[0].mxu0
      %3949 = vmatprep.mubr.f32.mxu0 0.0
      %3950 = vmatmul.mubr.f32.gmra.mrb[0].mxu0 %v3278
      %v3951 = vpop.f32.mrb[0].mxu0
      %v3952 = vadd.f32 %v3813, %v3951
      %v3953 = vpop.f32.mrb[0].mxu0
      %3954 = vmatprep.mubr.f32.mxu0 0.0
      %3955 = vmatmul.mubr.f32.gmra.mrb[0].mxu0 %v3279
      %v3956 = vpop.f32.mrb[0].mxu0
      %v3957 = vadd.f32 %v3813, %v3956
      %v3958 = vpop.f32.mrb[0].mxu0
      %3959 = vmatprep.mubr.f32.mxu0 0.0
      %3960 = vmatmul.mubr.f32.gmra.mrb[0].mxu0 %v3280
      %v3961 = vpop.f32.mrb[0].mxu0
      %v3962 = vadd.f32 %v3813, %v3961
      %v3963 = vpop.f32.mrb[0].mxu0
      %3964 = vmatprep.mubr.f32.mxu0 0.0
      %3965 = vmatmul.mubr.f32.gmra.mrb[0].mxu0 %v3281
      %v3966 = vpop.f32.mrb[0].mxu0
      %v3967 = vadd.f32 %v3813, %v3966
      %v3968 = vpop.f32.mrb[0].mxu0
      %3969 = vmatprep.mubr.f32.mxu0 0.0
      %3970 = vmatmul.mubr.f32.gmra.mrb[0].mxu0 %v3282
      %v3971 = vpop.f32.mrb[0].mxu0
      %v3972 = vadd.f32 %v3813, %v3971
      %v3973 = vpop.f32.mrb[0].mxu0
      %3974 = vmatprep.mubr.f32.mxu0 0.0
      %3975 = vmatmul.mubr.f32.gmra.mrb[0].mxu0 %v3283
      %v3976 = vpop.f32.mrb[0].mxu0
      %v3977 = vadd.f32 %v3813, %v3976
      %v3978 = vpop.f32.mrb[0].mxu0
      %3979 = vmatprep.mubr.f32.mxu0 0.0
      %3980 = vmatmul.mubr.f32.gmra.mrb[0].mxu0 %v3284
      %v3981 = vpop.f32.mrb[0].mxu0
      %v3982 = vadd.f32 %v3813, %v3981
      %v3983 = vpop.f32.mrb[0].mxu0
      %3984 = vmatprep.mubr.f32.mxu0 0.0
      %3985 = vmatmul.mubr.f32.gmra.mrb[0].mxu0 %v3285
      %v3986 = vpop.f32.mrb[0].mxu0
      %v3987 = vadd.f32 %v3813, %v3986
      %v3988 = vpop.f32.mrb[0].mxu0
      %3989 = vmatprep.mubr.f32.mxu0 0.0
      %3990 = vmatmul.mubr.f32.gmra.mrb[0].mxu0 %v3286
      %v3991 = vpop.f32.mrb[0].mxu0
      %v3992 = vadd.f32 %v3813, %v3991
      %v3993 = vpop.f32.mrb[0].mxu0
      %3994 = vmatprep.mubr.f32.mxu0 0.0
      %3995 = vmatmul.mubr.f32.gmra.mrb[0].mxu0 %v3287
      %v3996 = vpop.f32.mrb[0].mxu0
      %v3997 = vadd.f32 %v3813, %v3996
      %v3998 = vpop.f32.mrb[0].mxu0
      %3999 = vmatprep.mubr.f32.mxu0 0.0
      %4000 = vmatmul.mubr.f32.gmra.mrb[0].mxu0 %v3288
      %v4001 = vpop.f32.mrb[0].mxu0
      %v4002 = vadd.f32 %v3813, %v4001
      %v4003 = vpop.f32.mrb[0].mxu0
      %4004 = vmatprep.mubr.f32.mxu0 0.0
      %4005 = vmatmul.mubr.f32.gmra.mrb[0].mxu0 %v3289
      %v4006 = vpop.f32.mrb[0].mxu0
      %v4007 = vadd.f32 %v3813, %v4006
      %v4008 = vpop.f32.mrb[0].mxu0
      %4009 = vmatprep.mubr.f32.mxu0 0.0
      %4010 = vmatmul.mubr.f32.gmra.mrb[0].mxu0 %v3290
      %v4011 = vpop.f32.mrb[0].mxu0
      %v4012 = vadd.f32 %v3813, %v4011
      %v4013 = vpop.f32.mrb[0].mxu0
      %4014 = vmatprep.mubr.f32.mxu0 0.0
      %4015 = vmatmul.mubr.f32.gmra.mrb[0].mxu0 %v3291
      %v4016 = vpop.f32.mrb[0].mxu0
      %v4017 = vadd.f32 %v3813, %v4016
      %v4018 = vpop.f32.mrb[0].mxu0
      %4019 = vmatprep.mubr.f32.mxu0 0.0
      %4020 = vmatmul.mubr.f32.gmra.mrb[0].mxu0 %v3292
      %v4021 = vpop.f32.mrb[0].mxu0
      %v4022 = vadd.f32 %v3813, %v4021
      %v4023 = vpop.f32.mrb[0].mxu0
      %4024 = vmatprep.mubr.f32.mxu0 0.0
      %4025 = vmatmul.mubr.f32.gmra.mrb[0].mxu0 %v3293
      %v4026 = vpop.f32.mrb[0].mxu0
      %v4027 = vadd.f32 %v3813, %v4026
      %v4028 = vpop.f32.mrb[0].mxu0
      %4029 = vmatprep.mubr.f32.mxu0 0.0
      %4030 = vmatmul.mubr.f32.gmra.mrb[0].mxu0 %v3294
      %v4031 = vpop.f32.mrb[0].mxu0
      %v4032 = vadd.f32 %v3813, %v4031
      %v4033 = vpop.f32.mrb[0].mxu0
      %4034 = vmatprep.mubr.f32.mxu0 0.0
      %4035 = vmatmul.mubr.f32.gmra.mrb[0].mxu0 %v3295
      %v4036 = vpop.f32.mrb[0].mxu0
      %v4037 = vadd.f32 %v3813, %v4036
      %v4038 = vpop.f32.mrb[0].mxu0
      %4039 = vdwg.mxu0
      %4040 = vmatprep.subr.mxu0 0.0
      %4041 = vmatpush1.xpose.msra.mxu0 %v3634
      %4042 = vmatprep.subr.mxu0 0.0
      %4043 = vmatpush1.xpose.msra.mxu0 %v3639
      %4044 = vmatprep.subr.mxu0 0.0
      %4045 = vmatpush1.xpose.msra.mxu0 %v3644
      %4046 = vmatprep.subr.mxu0 0.0
      %4047 = vmatpush1.xpose.msra.mxu0 %v3649
      %4048 = vmatprep.subr.mxu0 0.0
      %4049 = vmatpush1.xpose.msra.mxu0 %v3654
      %4050 = vmatprep.subr.mxu0 0.0
      %4051 = vmatpush1.xpose.msra.mxu0 %v3659
      %4052 = vmatprep.subr.mxu0 0.0
      %4053 = vmatpush1.xpose.msra.mxu0 %v3664
      %4054 = vmatprep.subr.mxu0 0.0
      %4055 = vmatpush1.xpose.msra.mxu0 %v3669
      %4056 = vmatprep.subr.mxu0 0.0
      %4057 = vmatpush1.xpose.msra.mxu0 %v3674
      %4058 = vmatprep.subr.mxu0 0.0
      %4059 = vmatpush1.xpose.msra.mxu0 %v3679
      %4060 = vmatprep.subr.mxu0 0.0
      %4061 = vmatpush1.xpose.msra.mxu0 %v3684
      %4062 = vmatprep.subr.mxu0 0.0
      %4063 = vmatpush1.xpose.msra.mxu0 %v3689
      %4064 = vmatprep.subr.mxu0 0.0
      %4065 = vmatpush1.xpose.msra.mxu0 %v3694
      %4066 = vmatprep.subr.mxu0 0.0
      %4067 = vmatpush1.xpose.msra.mxu0 %v3699
      %4068 = vmatprep.subr.mxu0 0.0
      %4069 = vmatpush1.xpose.msra.mxu0 %v3704
      %4070 = vmatprep.subr.mxu0 0.0
      %4071 = vmatpush1.xpose.msra.mxu0 %v3709
      %4072 = vmatprep.subr.mxu0 0.0
      %4073 = vmatpush1.xpose.msra.mxu0 %v3714
      %4074 = vmatprep.subr.mxu0 0.0
      %4075 = vmatpush1.xpose.msra.mxu0 %v3719
      %4076 = vmatprep.subr.mxu0 0.0
      %4077 = vmatpush1.xpose.msra.mxu0 %v3724
      %4078 = vmatprep.subr.mxu0 0.0
      %4079 = vmatpush1.xpose.msra.mxu0 %v3729
      %4080 = vmatprep.subr.mxu0 0.0
      %4081 = vmatpush1.xpose.msra.mxu0 %v3734
      %4082 = vmatprep.subr.mxu0 0.0
      %4083 = vmatpush1.xpose.msra.mxu0 %v3739
      %4084 = vmatprep.subr.mxu0 0.0
      %4085 = vmatpush1.xpose.msra.mxu0 %v3744
      %4086 = vmatprep.subr.mxu0 0.0
      %4087 = vmatpush1.xpose.msra.mxu0 %v3749
      %4088 = vmatprep.subr.mxu0 0.0
      %4089 = vmatpush1.xpose.msra.mxu0 %v3754
      %4090 = vmatprep.subr.mxu0 0.0
      %4091 = vmatpush1.xpose.msra.mxu0 %v3759
      %4092 = vmatprep.subr.mxu0 0.0
      %4093 = vmatpush1.xpose.msra.mxu0 %v3764
      %4094 = vmatprep.subr.mxu0 0.0
      %4095 = vmatpush1.xpose.msra.mxu0 %v3769
      %4096 = vmatprep.subr.mxu0 0.0
      %4097 = vmatpush1.xpose.msra.mxu0 %v3774
      %4098 = vmatprep.subr.mxu0 0.0
      %4099 = vmatpush1.xpose.msra.mxu0 %v3779
      %4100 = vmatprep.subr.mxu0 0.0
      %4101 = vmatpush1.xpose.msra.mxu0 %v3784
      %4102 = vmatprep.subr.mxu0 0.0
      %4103 = vmatpush1.xpose.msra.mxu0 %v3789
      %4104 = vmatprep.mubr.f32.mxu0 0.0
      %4105 = vmatmul.mubr.f32.gmra.mrb[0].mxu0 %v3386
      %v4106 = vpop.f32.mrb[0].mxu0
      %v4107 = vadd.f32 0.0, %v4106
      %v4108 = vpop.f32.mrb[0].mxu0
      %v4109 = vadd.f32 0.0, %v4108
      %4110 = vmatprep.mubr.f32.mxu0 0.0
      %4111 = vmatmul.mubr.f32.gmra.mrb[0].mxu0 %v3391
      %v4112 = vpop.f32.mrb[0].mxu0
      %v4113 = vadd.f32 0.0, %v4112
      %v4114 = vpop.f32.mrb[0].mxu0
      %v4115 = vadd.f32 0.0, %v4114
      %4116 = vmatprep.mubr.f32.mxu0 0.0
      %4117 = vmatmul.mubr.f32.gmra.mrb[0].mxu0 %v3396
      %v4118 = vpop.f32.mrb[0].mxu0
      %v4119 = vadd.f32 0.0, %v4118
      %v4120 = vpop.f32.mrb[0].mxu0
      %v4121 = vadd.f32 0.0, %v4120
      %4122 = vmatprep.mubr.f32.mxu0 0.0
      %4123 = vmatmul.mubr.f32.gmra.mrb[0].mxu0 %v3401
      %v4124 = vpop.f32.mrb[0].mxu0
      %v4125 = vadd.f32 0.0, %v4124
      %v4126 = vpop.f32.mrb[0].mxu0
      %v4127 = vadd.f32 0.0, %v4126
      %4128 = vmatprep.mubr.f32.mxu0 0.0
      %4129 = vmatmul.mubr.f32.gmra.mrb[0].mxu0 %v3406
      %v4130 = vpop.f32.mrb[0].mxu0
      %v4131 = vadd.f32 0.0, %v4130
      %v4132 = vpop.f32.mrb[0].mxu0
      %v4133 = vadd.f32 0.0, %v4132
      %4134 = vmatprep.mubr.f32.mxu0 0.0
      %4135 = vmatmul.mubr.f32.gmra.mrb[0].mxu0 %v3411
      %v4136 = vpop.f32.mrb[0].mxu0
      %v4137 = vadd.f32 0.0, %v4136
      %v4138 = vpop.f32.mrb[0].mxu0
      %v4139 = vadd.f32 0.0, %v4138
      %4140 = vmatprep.mubr.f32.mxu0 0.0
      %4141 = vmatmul.mubr.f32.gmra.mrb[0].mxu0 %v3416
      %v4142 = vpop.f32.mrb[0].mxu0
      %v4143 = vadd.f32 0.0, %v4142
      %v4144 = vpop.f32.mrb[0].mxu0
      %v4145 = vadd.f32 0.0, %v4144
      %4146 = vmatprep.mubr.f32.mxu0 0.0
      %4147 = vmatmul.mubr.f32.gmra.mrb[0].mxu0 %v3421
      %v4148 = vpop.f32.mrb[0].mxu0
      %v4149 = vadd.f32 0.0, %v4148
      %v4150 = vpop.f32.mrb[0].mxu0
      %v4151 = vadd.f32 0.0, %v4150
      %4152 = vmatprep.mubr.f32.mxu0 0.0
      %4153 = vmatmul.mubr.f32.gmra.mrb[0].mxu0 %v3426
      %v4154 = vpop.f32.mrb[0].mxu0
      %v4155 = vadd.f32 0.0, %v4154
      %v4156 = vpop.f32.mrb[0].mxu0
      %v4157 = vadd.f32 0.0, %v4156
      %4158 = vmatprep.mubr.f32.mxu0 0.0
      %4159 = vmatmul.mubr.f32.gmra.mrb[0].mxu0 %v3431
      %v4160 = vpop.f32.mrb[0].mxu0
      %v4161 = vadd.f32 0.0, %v4160
      %v4162 = vpop.f32.mrb[0].mxu0
      %v4163 = vadd.f32 0.0, %v4162
      %4164 = vmatprep.mubr.f32.mxu0 0.0
      %4165 = vmatmul.mubr.f32.gmra.mrb[0].mxu0 %v3436
      %v4166 = vpop.f32.mrb[0].mxu0
      %v4167 = vadd.f32 0.0, %v4166
      %v4168 = vpop.f32.mrb[0].mxu0
      %v4169 = vadd.f32 0.0, %v4168
      %4170 = vmatprep.mubr.f32.mxu0 0.0
      %4171 = vmatmul.mubr.f32.gmra.mrb[0].mxu0 %v3441
      %v4172 = vpop.f32.mrb[0].mxu0
      %v4173 = vadd.f32 0.0, %v4172
      %v4174 = vpop.f32.mrb[0].mxu0
      %v4175 = vadd.f32 0.0, %v4174
      %4176 = vmatprep.mubr.f32.mxu0 0.0
      %4177 = vmatmul.mubr.f32.gmra.mrb[0].mxu0 %v3446
      %v4178 = vpop.f32.mrb[0].mxu0
      %v4179 = vadd.f32 0.0, %v4178
      %v4180 = vpop.f32.mrb[0].mxu0
      %v4181 = vadd.f32 0.0, %v4180
      %4182 = vmatprep.mubr.f32.mxu0 0.0
      %4183 = vmatmul.mubr.f32.gmra.mrb[0].mxu0 %v3451
      %v4184 = vpop.f32.mrb[0].mxu0
      %v4185 = vadd.f32 0.0, %v4184
      %v4186 = vpop.f32.mrb[0].mxu0
      %v4187 = vadd.f32 0.0, %v4186
      %4188 = vmatprep.mubr.f32.mxu0 0.0
      %4189 = vmatmul.mubr.f32.gmra.mrb[0].mxu0 %v3456
      %v4190 = vpop.f32.mrb[0].mxu0
      %v4191 = vadd.f32 0.0, %v4190
      %v4192 = vpop.f32.mrb[0].mxu0
      %v4193 = vadd.f32 0.0, %v4192
      %4194 = vmatprep.mubr.f32.mxu0 0.0
      %4195 = vmatmul.mubr.f32.gmra.mrb[0].mxu0 %v3461
      %v4196 = vpop.f32.mrb[0].mxu0
      %v4197 = vadd.f32 0.0, %v4196
      %v4198 = vpop.f32.mrb[0].mxu0
      %v4199 = vadd.f32 0.0, %v4198
      %4200 = vmatprep.mubr.f32.mxu0 0.0
      %4201 = vmatmul.mubr.f32.gmra.mrb[0].mxu0 %v3466
      %v4202 = vpop.f32.mrb[0].mxu0
      %v4203 = vadd.f32 0.0, %v4202
      %v4204 = vpop.f32.mrb[0].mxu0
      %v4205 = vadd.f32 0.0, %v4204
      %4206 = vmatprep.mubr.f32.mxu0 0.0
      %4207 = vmatmul.mubr.f32.gmra.mrb[0].mxu0 %v3471
      %v4208 = vpop.f32.mrb[0].mxu0
      %v4209 = vadd.f32 0.0, %v4208
      %v4210 = vpop.f32.mrb[0].mxu0
      %v4211 = vadd.f32 0.0, %v4210
      %4212 = vmatprep.mubr.f32.mxu0 0.0
      %4213 = vmatmul.mubr.f32.gmra.mrb[0].mxu0 %v3476
      %v4214 = vpop.f32.mrb[0].mxu0
      %v4215 = vadd.f32 0.0, %v4214
      %v4216 = vpop.f32.mrb[0].mxu0
      %v4217 = vadd.f32 0.0, %v4216
      %4218 = vmatprep.mubr.f32.mxu0 0.0
      %4219 = vmatmul.mubr.f32.gmra.mrb[0].mxu0 %v3481
      %v4220 = vpop.f32.mrb[0].mxu0
      %v4221 = vadd.f32 0.0, %v4220
      %v4222 = vpop.f32.mrb[0].mxu0
      %v4223 = vadd.f32 0.0, %v4222
      %4224 = vmatprep.mubr.f32.mxu0 0.0
      %4225 = vmatmul.mubr.f32.gmra.mrb[0].mxu0 %v3486
      %v4226 = vpop.f32.mrb[0].mxu0
      %v4227 = vadd.f32 0.0, %v4226
      %v4228 = vpop.f32.mrb[0].mxu0
      %v4229 = vadd.f32 0.0, %v4228
      %4230 = vmatprep.mubr.f32.mxu0 0.0
      %4231 = vmatmul.mubr.f32.gmra.mrb[0].mxu0 %v3491
      %v4232 = vpop.f32.mrb[0].mxu0
      %v4233 = vadd.f32 0.0, %v4232
      %v4234 = vpop.f32.mrb[0].mxu0
      %v4235 = vadd.f32 0.0, %v4234
      %4236 = vmatprep.mubr.f32.mxu0 0.0
      %4237 = vmatmul.mubr.f32.gmra.mrb[0].mxu0 %v3496
      %v4238 = vpop.f32.mrb[0].mxu0
      %v4239 = vadd.f32 0.0, %v4238
      %v4240 = vpop.f32.mrb[0].mxu0
      %v4241 = vadd.f32 0.0, %v4240
      %4242 = vmatprep.mubr.f32.mxu0 0.0
      %4243 = vmatmul.mubr.f32.gmra.mrb[0].mxu0 %v3501
      %v4244 = vpop.f32.mrb[0].mxu0
      %v4245 = vadd.f32 0.0, %v4244
      %v4246 = vpop.f32.mrb[0].mxu0
      %v4247 = vadd.f32 0.0, %v4246
      %4248 = vmatprep.mubr.f32.mxu0 0.0
      %4249 = vmatmul.mubr.f32.gmra.mrb[0].mxu0 %v3506
      %v4250 = vpop.f32.mrb[0].mxu0
      %v4251 = vadd.f32 0.0, %v4250
      %v4252 = vpop.f32.mrb[0].mxu0
      %v4253 = vadd.f32 0.0, %v4252
      %4254 = vmatprep.mubr.f32.mxu0 0.0
      %4255 = vmatmul.mubr.f32.gmra.mrb[0].mxu0 %v3511
      %v4256 = vpop.f32.mrb[0].mxu0
      %v4257 = vadd.f32 0.0, %v4256
      %v4258 = vpop.f32.mrb[0].mxu0
      %v4259 = vadd.f32 0.0, %v4258
      %4260 = vmatprep.mubr.f32.mxu0 0.0
      %4261 = vmatmul.mubr.f32.gmra.mrb[0].mxu0 %v3516
      %v4262 = vpop.f32.mrb[0].mxu0
      %v4263 = vadd.f32 0.0, %v4262
      %v4264 = vpop.f32.mrb[0].mxu0
      %v4265 = vadd.f32 0.0, %v4264
      %4266 = vmatprep.mubr.f32.mxu0 0.0
      %4267 = vmatmul.mubr.f32.gmra.mrb[0].mxu0 %v3521
      %v4268 = vpop.f32.mrb[0].mxu0
      %v4269 = vadd.f32 0.0, %v4268
      %v4270 = vpop.f32.mrb[0].mxu0
      %v4271 = vadd.f32 0.0, %v4270
      %4272 = vmatprep.mubr.f32.mxu0 0.0
      %4273 = vmatmul.mubr.f32.gmra.mrb[0].mxu0 %v3526
      %v4274 = vpop.f32.mrb[0].mxu0
      %v4275 = vadd.f32 0.0, %v4274
      %v4276 = vpop.f32.mrb[0].mxu0
      %v4277 = vadd.f32 0.0, %v4276
      %4278 = vmatprep.mubr.f32.mxu0 0.0
      %4279 = vmatmul.mubr.f32.gmra.mrb[0].mxu0 %v3531
      %v4280 = vpop.f32.mrb[0].mxu0
      %v4281 = vadd.f32 0.0, %v4280
      %v4282 = vpop.f32.mrb[0].mxu0
      %v4283 = vadd.f32 0.0, %v4282
      %4284 = vmatprep.mubr.f32.mxu0 0.0
      %4285 = vmatmul.mubr.f32.gmra.mrb[0].mxu0 %v3536
      %v4286 = vpop.f32.mrb[0].mxu0
      %v4287 = vadd.f32 0.0, %v4286
      %v4288 = vpop.f32.mrb[0].mxu0
      %v4289 = vadd.f32 0.0, %v4288
      %4290 = vmatprep.mubr.f32.mxu0 0.0
      %4291 = vmatmul.mubr.f32.gmra.mrb[0].mxu0 %v3541
      %v4292 = vpop.f32.mrb[0].mxu0
      %v4293 = vadd.f32 0.0, %v4292
      %v4294 = vpop.f32.mrb[0].mxu0
      %v4295 = vadd.f32 0.0, %v4294
      %4296 = vdwg.mxu0
      %v4297 = vmax.f32 %v4107, %v4109
      %4298 = vmax.xlane.f32.xlu0 %v4297
      %v4299 = vpop.xlane.xlu0 %4298
      %v4300 = vmax.f32 %v4113, %v4115
      %4301 = vmax.xlane.f32.xlu0 %v4300
      %v4302 = vpop.xlane.xlu0 %4301
      %v4303 = vmax.f32 %v4119, %v4121
      %4304 = vmax.xlane.f32.xlu0 %v4303
      %v4305 = vpop.xlane.xlu0 %4304
      %v4306 = vmax.f32 %v4125, %v4127
      %4307 = vmax.xlane.f32.xlu0 %v4306
      %v4308 = vpop.xlane.xlu0 %4307
      %v4309 = vmax.f32 %v4131, %v4133
      %4310 = vmax.xlane.f32.xlu0 %v4309
      %v4311 = vpop.xlane.xlu0 %4310
      %v4312 = vmax.f32 %v4137, %v4139
      %4313 = vmax.xlane.f32.xlu0 %v4312
      %v4314 = vpop.xlane.xlu0 %4313
      %v4315 = vmax.f32 %v4143, %v4145
      %4316 = vmax.xlane.f32.xlu0 %v4315
      %v4317 = vpop.xlane.xlu0 %4316
      %v4318 = vmax.f32 %v4149, %v4151
      %4319 = vmax.xlane.f32.xlu0 %v4318
      %v4320 = vpop.xlane.xlu0 %4319
      %v4321 = vmax.f32 %v4155, %v4157
      %4322 = vmax.xlane.f32.xlu0 %v4321
      %v4323 = vpop.xlane.xlu0 %4322
      %v4324 = vmax.f32 %v4161, %v4163
      %4325 = vmax.xlane.f32.xlu0 %v4324
      %v4326 = vpop.xlane.xlu0 %4325
      %v4327 = vmax.f32 %v4167, %v4169
      %4328 = vmax.xlane.f32.xlu0 %v4327
      %v4329 = vpop.xlane.xlu0 %4328
      %v4330 = vmax.f32 %v4173, %v4175
      %4331 = vmax.xlane.f32.xlu0 %v4330
      %v4332 = vpop.xlane.xlu0 %4331
      %v4333 = vmax.f32 %v4179, %v4181
      %4334 = vmax.xlane.f32.xlu0 %v4333
      %v4335 = vpop.xlane.xlu0 %4334
      %v4336 = vmax.f32 %v4185, %v4187
      %4337 = vmax.xlane.f32.xlu0 %v4336
      %v4338 = vpop.xlane.xlu0 %4337
      %v4339 = vmax.f32 %v4191, %v4193
      %4340 = vmax.xlane.f32.xlu0 %v4339
      %v4341 = vpop.xlane.xlu0 %4340
      %v4342 = vmax.f32 %v4197, %v4199
      %4343 = vmax.xlane.f32.xlu0 %v4342
      %v4344 = vpop.xlane.xlu0 %4343
      %v4345 = vmax.f32 %v4203, %v4205
      %4346 = vmax.xlane.f32.xlu0 %v4345
      %v4347 = vpop.xlane.xlu0 %4346
      %v4348 = vmax.f32 %v4209, %v4211
      %4349 = vmax.xlane.f32.xlu0 %v4348
      %v4350 = vpop.xlane.xlu0 %4349
      %v4351 = vmax.f32 %v4215, %v4217
      %4352 = vmax.xlane.f32.xlu0 %v4351
      %v4353 = vpop.xlane.xlu0 %4352
      %v4354 = vmax.f32 %v4221, %v4223
      %4355 = vmax.xlane.f32.xlu0 %v4354
      %v4356 = vpop.xlane.xlu0 %4355
      %v4357 = vmax.f32 %v4227, %v4229
      %4358 = vmax.xlane.f32.xlu0 %v4357
      %v4359 = vpop.xlane.xlu0 %4358
      %v4360 = vmax.f32 %v4233, %v4235
      %4361 = vmax.xlane.f32.xlu0 %v4360
      %v4362 = vpop.xlane.xlu0 %4361
      %v4363 = vmax.f32 %v4239, %v4241
      %4364 = vmax.xlane.f32.xlu0 %v4363
      %v4365 = vpop.xlane.xlu0 %4364
      %v4366 = vmax.f32 %v4245, %v4247
      %4367 = vmax.xlane.f32.xlu0 %v4366
      %v4368 = vpop.xlane.xlu0 %4367
      %v4369 = vmax.f32 %v4251, %v4253
      %4370 = vmax.xlane.f32.xlu0 %v4369
      %v4371 = vpop.xlane.xlu0 %4370
      %v4372 = vmax.f32 %v4257, %v4259
      %4373 = vmax.xlane.f32.xlu0 %v4372
      %v4374 = vpop.xlane.xlu0 %4373
      %v4375 = vmax.f32 %v4263, %v4265
      %4376 = vmax.xlane.f32.xlu0 %v4375
      %v4377 = vpop.xlane.xlu0 %4376
      %v4378 = vmax.f32 %v4269, %v4271
      %4379 = vmax.xlane.f32.xlu0 %v4378
      %v4380 = vpop.xlane.xlu0 %4379
      %v4381 = vmax.f32 %v4275, %v4277
      %4382 = vmax.xlane.f32.xlu0 %v4381
      %v4383 = vpop.xlane.xlu0 %4382
      %v4384 = vmax.f32 %v4281, %v4283
      %4385 = vmax.xlane.f32.xlu0 %v4384
      %v4386 = vpop.xlane.xlu0 %4385
      %v4387 = vmax.f32 %v4287, %v4289
      %4388 = vmax.xlane.f32.xlu0 %v4387
      %v4389 = vpop.xlane.xlu0 %4388
      %v4390 = vmax.f32 %v4293, %v4295
      %4391 = vmax.xlane.f32.xlu0 %v4390
      %v4392 = vpop.xlane.xlu0 %4391
      %v4393 = vsub.f32 %v4107, %v4299
      %v4394 = vsub.f32 %v4109, %v4299
      %v4395 = vsub.f32 %v4113, %v4302
      %v4396 = vsub.f32 %v4115, %v4302
      %v4397 = vsub.f32 %v4119, %v4305
      %v4398 = vsub.f32 %v4121, %v4305
      %v4399 = vsub.f32 %v4125, %v4308
      %v4400 = vsub.f32 %v4127, %v4308
      %v4401 = vsub.f32 %v4131, %v4311
      %v4402 = vsub.f32 %v4133, %v4311
      %v4403 = vsub.f32 %v4137, %v4314
      %v4404 = vsub.f32 %v4139, %v4314
      %v4405 = vsub.f32 %v4143, %v4317
      %v4406 = vsub.f32 %v4145, %v4317
      %v4407 = vsub.f32 %v4149, %v4320
      %v4408 = vsub.f32 %v4151, %v4320
      %v4409 = vsub.f32 %v4155, %v4323
      %v4410 = vsub.f32 %v4157, %v4323
      %v4411 = vsub.f32 %v4161, %v4326
      %v4412 = vsub.f32 %v4163, %v4326
      %v4413 = vsub.f32 %v4167, %v4329
      %v4414 = vsub.f32 %v4169, %v4329
      %v4415 = vsub.f32 %v4173, %v4332
      %v4416 = vsub.f32 %v4175, %v4332
      %v4417 = vsub.f32 %v4179, %v4335
      %v4418 = vsub.f32 %v4181, %v4335
      %v4419 = vsub.f32 %v4185, %v4338
      %v4420 = vsub.f32 %v4187, %v4338
      %v4421 = vsub.f32 %v4191, %v4341
      %v4422 = vsub.f32 %v4193, %v4341
      %v4423 = vsub.f32 %v4197, %v4344
      %v4424 = vsub.f32 %v4199, %v4344
      %v4425 = vsub.f32 %v4203, %v4347
      %v4426 = vsub.f32 %v4205, %v4347
      %v4427 = vsub.f32 %v4209, %v4350
      %v4428 = vsub.f32 %v4211, %v4350
      %v4429 = vsub.f32 %v4215, %v4353
      %v4430 = vsub.f32 %v4217, %v4353
      %v4431 = vsub.f32 %v4221, %v4356
      %v4432 = vsub.f32 %v4223, %v4356
      %v4433 = vsub.f32 %v4227, %v4359
      %v4434 = vsub.f32 %v4229, %v4359
      %v4435 = vsub.f32 %v4233, %v4362
      %v4436 = vsub.f32 %v4235, %v4362
      %v4437 = vsub.f32 %v4239, %v4365
      %v4438 = vsub.f32 %v4241, %v4365
      %v4439 = vsub.f32 %v4245, %v4368
      %v4440 = vsub.f32 %v4247, %v4368
      %v4441 = vsub.f32 %v4251, %v4371
      %v4442 = vsub.f32 %v4253, %v4371
      %v4443 = vsub.f32 %v4257, %v4374
      %v4444 = vsub.f32 %v4259, %v4374
      %v4445 = vsub.f32 %v4263, %v4377
      %v4446 = vsub.f32 %v4265, %v4377
      %v4447 = vsub.f32 %v4269, %v4380
      %v4448 = vsub.f32 %v4271, %v4380
      %v4449 = vsub.f32 %v4275, %v4383
      %v4450 = vsub.f32 %v4277, %v4383
      %v4451 = vsub.f32 %v4281, %v4386
      %v4452 = vsub.f32 %v4283, %v4386
      %v4453 = vsub.f32 %v4287, %v4389
      %v4454 = vsub.f32 %v4289, %v4389
      %v4455 = vsub.f32 %v4293, %v4392
      %v4456 = vsub.f32 %v4295, %v4392
      %v4457 = vmul.f32 %v4393, 1.442695
      %v4458 = vpow.pop %v4457
      %v4459 = vmul.f32 %v4394, 1.442695
      %v4460 = vpow.pop %v4459
      %v4461 = vmul.f32 %v4395, 1.442695
      %v4462 = vpow.pop %v4461
      %v4463 = vmul.f32 %v4396, 1.442695
      %v4464 = vpow.pop %v4463
      %v4465 = vmul.f32 %v4397, 1.442695
      %v4466 = vpow.pop %v4465
      %v4467 = vmul.f32 %v4398, 1.442695
      %v4468 = vpow.pop %v4467
      %v4469 = vmul.f32 %v4399, 1.442695
      %v4470 = vpow.pop %v4469
      %v4471 = vmul.f32 %v4400, 1.442695
      %v4472 = vpow.pop %v4471
      %v4473 = vmul.f32 %v4401, 1.442695
      %v4474 = vpow.pop %v4473
      %v4475 = vmul.f32 %v4402, 1.442695
      %v4476 = vpow.pop %v4475
      %v4477 = vmul.f32 %v4403, 1.442695
      %v4478 = vpow.pop %v4477
      %v4479 = vmul.f32 %v4404, 1.442695
      %v4480 = vpow.pop %v4479
      %v4481 = vmul.f32 %v4405, 1.442695
      %v4482 = vpow.pop %v4481
      %v4483 = vmul.f32 %v4406, 1.442695
      %v4484 = vpow.pop %v4483
      %v4485 = vmul.f32 %v4407, 1.442695
      %v4486 = vpow.pop %v4485
      %v4487 = vmul.f32 %v4408, 1.442695
      %v4488 = vpow.pop %v4487
      %v4489 = vmul.f32 %v4409, 1.442695
      %v4490 = vpow.pop %v4489
      %v4491 = vmul.f32 %v4410, 1.442695
      %v4492 = vpow.pop %v4491
      %v4493 = vmul.f32 %v4411, 1.442695
      %v4494 = vpow.pop %v4493
      %v4495 = vmul.f32 %v4412, 1.442695
      %v4496 = vpow.pop %v4495
      %v4497 = vmul.f32 %v4413, 1.442695
      %v4498 = vpow.pop %v4497
      %v4499 = vmul.f32 %v4414, 1.442695
      %v4500 = vpow.pop %v4499
      %v4501 = vmul.f32 %v4415, 1.442695
      %v4502 = vpow.pop %v4501
      %v4503 = vmul.f32 %v4416, 1.442695
      %v4504 = vpow.pop %v4503
      %v4505 = vmul.f32 %v4417, 1.442695
      %v4506 = vpow.pop %v4505
      %v4507 = vmul.f32 %v4418, 1.442695
      %v4508 = vpow.pop %v4507
      %v4509 = vmul.f32 %v4419, 1.442695
      %v4510 = vpow.pop %v4509
      %v4511 = vmul.f32 %v4420, 1.442695
      %v4512 = vpow.pop %v4511
      %v4513 = vmul.f32 %v4421, 1.442695
      %v4514 = vpow.pop %v4513
      %v4515 = vmul.f32 %v4422, 1.442695
      %v4516 = vpow.pop %v4515
      %v4517 = vmul.f32 %v4423, 1.442695
      %v4518 = vpow.pop %v4517
      %v4519 = vmul.f32 %v4424, 1.442695
      %v4520 = vpow.pop %v4519
      %v4521 = vmul.f32 %v4425, 1.442695
      %v4522 = vpow.pop %v4521
      %v4523 = vmul.f32 %v4426, 1.442695
      %v4524 = vpow.pop %v4523
      %v4525 = vmul.f32 %v4427, 1.442695
      %v4526 = vpow.pop %v4525
      %v4527 = vmul.f32 %v4428, 1.442695
      %v4528 = vpow.pop %v4527
      %v4529 = vmul.f32 %v4429, 1.442695
      %v4530 = vpow.pop %v4529
      %v4531 = vmul.f32 %v4430, 1.442695
      %v4532 = vpow.pop %v4531
      %v4533 = vmul.f32 %v4431, 1.442695
      %v4534 = vpow.pop %v4533
      %v4535 = vmul.f32 %v4432, 1.442695
      %v4536 = vpow.pop %v4535
      %v4537 = vmul.f32 %v4433, 1.442695
      %v4538 = vpow.pop %v4537
      %v4539 = vmul.f32 %v4434, 1.442695
      %v4540 = vpow.pop %v4539
      %v4541 = vmul.f32 %v4435, 1.442695
      %v4542 = vpow.pop %v4541
      %v4543 = vmul.f32 %v4436, 1.442695
      %v4544 = vpow.pop %v4543
      %v4545 = vmul.f32 %v4437, 1.442695
      %v4546 = vpow.pop %v4545
      %v4547 = vmul.f32 %v4438, 1.442695
      %v4548 = vpow.pop %v4547
      %v4549 = vmul.f32 %v4439, 1.442695
      %v4550 = vpow.pop %v4549
      %v4551 = vmul.f32 %v4440, 1.442695
      %v4552 = vpow.pop %v4551
      %v4553 = vmul.f32 %v4441, 1.442695
      %v4554 = vpow.pop %v4553
      %v4555 = vmul.f32 %v4442, 1.442695
      %v4556 = vpow.pop %v4555
      %v4557 = vmul.f32 %v4443, 1.442695
      %v4558 = vpow.pop %v4557
      %v4559 = vmul.f32 %v4444, 1.442695
      %v4560 = vpow.pop %v4559
      %v4561 = vmul.f32 %v4445, 1.442695
      %v4562 = vpow.pop %v4561
      %v4563 = vmul.f32 %v4446, 1.442695
      %v4564 = vpow.pop %v4563
      %v4565 = vmul.f32 %v4447, 1.442695
      %v4566 = vpow.pop %v4565
      %v4567 = vmul.f32 %v4448, 1.442695
      %v4568 = vpow.pop %v4567
      %v4569 = vmul.f32 %v4449, 1.442695
      %v4570 = vpow.pop %v4569
      %v4571 = vmul.f32 %v4450, 1.442695
      %v4572 = vpow.pop %v4571
      %v4573 = vmul.f32 %v4451, 1.442695
      %v4574 = vpow.pop %v4573
      %v4575 = vmul.f32 %v4452, 1.442695
      %v4576 = vpow.pop %v4575
      %v4577 = vmul.f32 %v4453, 1.442695
      %v4578 = vpow.pop %v4577
      %v4579 = vmul.f32 %v4454, 1.442695
      %v4580 = vpow.pop %v4579
      %v4581 = vmul.f32 %v4455, 1.442695
      %v4582 = vpow.pop %v4581
      %v4583 = vmul.f32 %v4456, 1.442695
      %v4584 = vpow.pop %v4583
      %v4585 = vadd.f32 %v4458, %v4460
      %4586 = vadd.xlane.f32.xlu0 %v4585
      %v4587 = vpop.xlane.xlu0 %4586
      %v4588 = vadd.f32 %v4462, %v4464
      %4589 = vadd.xlane.f32.xlu0 %v4588
      %v4590 = vpop.xlane.xlu0 %4589
      %v4591 = vadd.f32 %v4466, %v4468
      %4592 = vadd.xlane.f32.xlu0 %v4591
      %v4593 = vpop.xlane.xlu0 %4592
      %v4594 = vadd.f32 %v4470, %v4472
      %4595 = vadd.xlane.f32.xlu0 %v4594
      %v4596 = vpop.xlane.xlu0 %4595
      %v4597 = vadd.f32 %v4474, %v4476
      %4598 = vadd.xlane.f32.xlu0 %v4597
      %v4599 = vpop.xlane.xlu0 %4598
      %v4600 = vadd.f32 %v4478, %v4480
      %4601 = vadd.xlane.f32.xlu0 %v4600
      %v4602 = vpop.xlane.xlu0 %4601
      %v4603 = vadd.f32 %v4482, %v4484
      %4604 = vadd.xlane.f32.xlu0 %v4603
      %v4605 = vpop.xlane.xlu0 %4604
      %v4606 = vadd.f32 %v4486, %v4488
      %4607 = vadd.xlane.f32.xlu0 %v4606
      %v4608 = vpop.xlane.xlu0 %4607
      %v4609 = vadd.f32 %v4490, %v4492
      %4610 = vadd.xlane.f32.xlu0 %v4609
      %v4611 = vpop.xlane.xlu0 %4610
      %v4612 = vadd.f32 %v4494, %v4496
      %4613 = vadd.xlane.f32.xlu0 %v4612
      %v4614 = vpop.xlane.xlu0 %4613
      %v4615 = vadd.f32 %v4498, %v4500
      %4616 = vadd.xlane.f32.xlu0 %v4615
      %v4617 = vpop.xlane.xlu0 %4616
      %v4618 = vadd.f32 %v4502, %v4504
      %4619 = vadd.xlane.f32.xlu0 %v4618
      %v4620 = vpop.xlane.xlu0 %4619
      %v4621 = vadd.f32 %v4506, %v4508
      %4622 = vadd.xlane.f32.xlu0 %v4621
      %v4623 = vpop.xlane.xlu0 %4622
      %v4624 = vadd.f32 %v4510, %v4512
      %4625 = vadd.xlane.f32.xlu0 %v4624
      %v4626 = vpop.xlane.xlu0 %4625
      %v4627 = vadd.f32 %v4514, %v4516
      %4628 = vadd.xlane.f32.xlu0 %v4627
      %v4629 = vpop.xlane.xlu0 %4628
      %v4630 = vadd.f32 %v4518, %v4520
      %4631 = vadd.xlane.f32.xlu0 %v4630
      %v4632 = vpop.xlane.xlu0 %4631
      %v4633 = vadd.f32 %v4522, %v4524
      %4634 = vadd.xlane.f32.xlu0 %v4633
      %v4635 = vpop.xlane.xlu0 %4634
      %v4636 = vadd.f32 %v4526, %v4528
      %4637 = vadd.xlane.f32.xlu0 %v4636
      %v4638 = vpop.xlane.xlu0 %4637
      %v4639 = vadd.f32 %v4530, %v4532
      %4640 = vadd.xlane.f32.xlu0 %v4639
      %v4641 = vpop.xlane.xlu0 %4640
      %v4642 = vadd.f32 %v4534, %v4536
      %4643 = vadd.xlane.f32.xlu0 %v4642
      %v4644 = vpop.xlane.xlu0 %4643
      %v4645 = vadd.f32 %v4538, %v4540
      %4646 = vadd.xlane.f32.xlu0 %v4645
      %v4647 = vpop.xlane.xlu0 %4646
      %v4648 = vadd.f32 %v4542, %v4544
      %4649 = vadd.xlane.f32.xlu0 %v4648
      %v4650 = vpop.xlane.xlu0 %4649
      %v4651 = vadd.f32 %v4546, %v4548
      %4652 = vadd.xlane.f32.xlu0 %v4651
      %v4653 = vpop.xlane.xlu0 %4652
      %v4654 = vadd.f32 %v4550, %v4552
      %4655 = vadd.xlane.f32.xlu0 %v4654
      %v4656 = vpop.xlane.xlu0 %4655
      %v4657 = vadd.f32 %v4554, %v4556
      %4658 = vadd.xlane.f32.xlu0 %v4657
      %v4659 = vpop.xlane.xlu0 %4658
      %v4660 = vadd.f32 %v4558, %v4560
      %4661 = vadd.xlane.f32.xlu0 %v4660
      %v4662 = vpop.xlane.xlu0 %4661
      %v4663 = vadd.f32 %v4562, %v4564
      %4664 = vadd.xlane.f32.xlu0 %v4663
      %v4665 = vpop.xlane.xlu0 %4664
      %v4666 = vadd.f32 %v4566, %v4568
      %4667 = vadd.xlane.f32.xlu0 %v4666
      %v4668 = vpop.xlane.xlu0 %4667
      %v4669 = vadd.f32 %v4570, %v4572
      %4670 = vadd.xlane.f32.xlu0 %v4669
      %v4671 = vpop.xlane.xlu0 %4670
      %v4672 = vadd.f32 %v4574, %v4576
      %4673 = vadd.xlane.f32.xlu0 %v4672
      %v4674 = vpop.xlane.xlu0 %4673
      %v4675 = vadd.f32 %v4578, %v4580
      %4676 = vadd.xlane.f32.xlu0 %v4675
      %v4677 = vpop.xlane.xlu0 %4676
      %v4678 = vadd.f32 %v4582, %v4584
      %4679 = vadd.xlane.f32.xlu0 %v4678
      %v4680 = vpop.xlane.xlu0 %4679
      %v4681 = vrcp.pop %v4587
      %v4682 = vmul.f32 %v4458, %v4681
      %v4683 = vmul.f32 %v4460, %v4681
      %v4684 = vrcp.pop %v4590
      %v4685 = vmul.f32 %v4462, %v4684
      %v4686 = vmul.f32 %v4464, %v4684
      %v4687 = vrcp.pop %v4593
      %v4688 = vmul.f32 %v4466, %v4687
      %v4689 = vmul.f32 %v4468, %v4687
      %v4690 = vrcp.pop %v4596
      %v4691 = vmul.f32 %v4470, %v4690
      %v4692 = vmul.f32 %v4472, %v4690
      %v4693 = vrcp.pop %v4599
      %v4694 = vmul.f32 %v4474, %v4693
      %v4695 = vmul.f32 %v4476, %v4693
      %v4696 = vrcp.pop %v4602
      %v4697 = vmul.f32 %v4478, %v4696
      %v4698 = vmul.f32 %v4480, %v4696
      %v4699 = vrcp.pop %v4605
      %v4700 = vmul.f32 %v4482, %v4699
      %v4701 = vmul.f32 %v4484, %v4699
      %v4702 = vrcp.pop %v4608
      %v4703 = vmul.f32 %v4486, %v4702
      %v4704 = vmul.f32 %v4488, %v4702
      %v4705 = vrcp.pop %v4611
      %v4706 = vmul.f32 %v4490, %v4705
      %v4707 = vmul.f32 %v4492, %v4705
      %v4708 = vrcp.pop %v4614
      %v4709 = vmul.f32 %v4494, %v4708
      %v4710 = vmul.f32 %v4496, %v4708
      %v4711 = vrcp.pop %v4617
      %v4712 = vmul.f32 %v4498, %v4711
      %v4713 = vmul.f32 %v4500, %v4711
      %v4714 = vrcp.pop %v4620
      %v4715 = vmul.f32 %v4502, %v4714
      %v4716 = vmul.f32 %v4504, %v4714
      %v4717 = vrcp.pop %v4623
      %v4718 = vmul.f32 %v4506, %v4717
      %v4719 = vmul.f32 %v4508, %v4717
      %v4720 = vrcp.pop %v4626
      %v4721 = vmul.f32 %v4510, %v4720
      %v4722 = vmul.f32 %v4512, %v4720
      %v4723 = vrcp.pop %v4629
      %v4724 = vmul.f32 %v4514, %v4723
      %v4725 = vmul.f32 %v4516, %v4723
      %v4726 = vrcp.pop %v4632
      %v4727 = vmul.f32 %v4518, %v4726
      %v4728 = vmul.f32 %v4520, %v4726
      %v4729 = vrcp.pop %v4635
      %v4730 = vmul.f32 %v4522, %v4729
      %v4731 = vmul.f32 %v4524, %v4729
      %v4732 = vrcp.pop %v4638
      %v4733 = vmul.f32 %v4526, %v4732
      %v4734 = vmul.f32 %v4528, %v4732
      %v4735 = vrcp.pop %v4641
      %v4736 = vmul.f32 %v4530, %v4735
      %v4737 = vmul.f32 %v4532, %v4735
      %v4738 = vrcp.pop %v4644
      %v4739 = vmul.f32 %v4534, %v4738
      %v4740 = vmul.f32 %v4536, %v4738
      %v4741 = vrcp.pop %v4647
      %v4742 = vmul.f32 %v4538, %v4741
      %v4743 = vmul.f32 %v4540, %v4741
      %v4744 = vrcp.pop %v4650
      %v4745 = vmul.f32 %v4542, %v4744
      %v4746 = vmul.f32 %v4544, %v4744
      %v4747 = vrcp.pop %v4653
      %v4748 = vmul.f32 %v4546, %v4747
      %v4749 = vmul.f32 %v4548, %v4747
      %v4750 = vrcp.pop %v4656
      %v4751 = vmul.f32 %v4550, %v4750
      %v4752 = vmul.f32 %v4552, %v4750
      %v4753 = vrcp.pop %v4659
      %v4754 = vmul.f32 %v4554, %v4753
      %v4755 = vmul.f32 %v4556, %v4753
      %v4756 = vrcp.pop %v4662
      %v4757 = vmul.f32 %v4558, %v4756
      %v4758 = vmul.f32 %v4560, %v4756
      %v4759 = vrcp.pop %v4665
      %v4760 = vmul.f32 %v4562, %v4759
      %v4761 = vmul.f32 %v4564, %v4759
      %v4762 = vrcp.pop %v4668
      %v4763 = vmul.f32 %v4566, %v4762
      %v4764 = vmul.f32 %v4568, %v4762
      %v4765 = vrcp.pop %v4671
      %v4766 = vmul.f32 %v4570, %v4765
      %v4767 = vmul.f32 %v4572, %v4765
      %v4768 = vrcp.pop %v4674
      %v4769 = vmul.f32 %v4574, %v4768
      %v4770 = vmul.f32 %v4576, %v4768
      %v4771 = vrcp.pop %v4677
      %v4772 = vmul.f32 %v4578, %v4771
      %v4773 = vmul.f32 %v4580, %v4771
      %v4774 = vrcp.pop %v4680
      %v4775 = vmul.f32 %v4582, %v4774
      %v4776 = vmul.f32 %v4584, %v4774
      %4777 = vmatprep.subr.mxu0 0.0
      %4778 = vmatpush1.msra.mxu0 %v3882
      %4779 = vmatprep.subr.mxu0 0.0
      %4780 = vmatpush1.msra.mxu0 %v3887
      %4781 = vmatprep.subr.mxu0 0.0
      %4782 = vmatpush1.msra.mxu0 %v3892
      %4783 = vmatprep.subr.mxu0 0.0
      %4784 = vmatpush1.msra.mxu0 %v3897
      %4785 = vmatprep.subr.mxu0 0.0
      %4786 = vmatpush1.msra.mxu0 %v3902
      %4787 = vmatprep.subr.mxu0 0.0
      %4788 = vmatpush1.msra.mxu0 %v3907
      %4789 = vmatprep.subr.mxu0 0.0
      %4790 = vmatpush1.msra.mxu0 %v3912
      %4791 = vmatprep.subr.mxu0 0.0
      %4792 = vmatpush1.msra.mxu0 %v3917
      %4793 = vmatprep.subr.mxu0 0.0
      %4794 = vmatpush1.msra.mxu0 %v3922
      %4795 = vmatprep.subr.mxu0 0.0
      %4796 = vmatpush1.msra.mxu0 %v3927
      %4797 = vmatprep.subr.mxu0 0.0
      %4798 = vmatpush1.msra.mxu0 %v3932
      %4799 = vmatprep.subr.mxu0 0.0
      %4800 = vmatpush1.msra.mxu0 %v3937
      %4801 = vmatprep.subr.mxu0 0.0
      %4802 = vmatpush1.msra.mxu0 %v3942
      %4803 = vmatprep.subr.mxu0 0.0
      %4804 = vmatpush1.msra.mxu0 %v3947
      %4805 = vmatprep.subr.mxu0 0.0
      %4806 = vmatpush1.msra.mxu0 %v3952
      %4807 = vmatprep.subr.mxu0 0.0
      %4808 = vmatpush1.msra.mxu0 %v3957
      %4809 = vmatprep.subr.mxu0 0.0
      %4810 = vmatpush1.msra.mxu0 %v3962
      %4811 = vmatprep.subr.mxu0 0.0
      %4812 = vmatpush1.msra.mxu0 %v3967
      %4813 = vmatprep.subr.mxu0 0.0
      %4814 = vmatpush1.msra.mxu0 %v3972
      %4815 = vmatprep.subr.mxu0 0.0
      %4816 = vmatpush1.msra.mxu0 %v3977
      %4817 = vmatprep.subr.mxu0 0.0
      %4818 = vmatpush1.msra.mxu0 %v3982
      %4819 = vmatprep.subr.mxu0 0.0
      %4820 = vmatpush1.msra.mxu0 %v3987
      %4821 = vmatprep.subr.mxu0 0.0
      %4822 = vmatpush1.msra.mxu0 %v3992
      %4823 = vmatprep.subr.mxu0 0.0
      %4824 = vmatpush1.msra.mxu0 %v3997
      %4825 = vmatprep.subr.mxu0 0.0
      %4826 = vmatpush1.msra.mxu0 %v4002
      %4827 = vmatprep.subr.mxu0 0.0
      %4828 = vmatpush1.msra.mxu0 %v4007
      %4829 = vmatprep.subr.mxu0 0.0
      %4830 = vmatpush1.msra.mxu0 %v4012
      %4831 = vmatprep.subr.mxu0 0.0
      %4832 = vmatpush1.msra.mxu0 %v4017
      %4833 = vmatprep.subr.mxu0 0.0
      %4834 = vmatpush1.msra.mxu0 %v4022
      %4835 = vmatprep.subr.mxu0 0.0
      %4836 = vmatpush1.msra.mxu0 %v4027
      %4837 = vmatprep.subr.mxu0 0.0
      %4838 = vmatpush1.msra.mxu0 %v4032
      %4839 = vmatprep.subr.mxu0 0.0
      %4840 = vmatpush1.msra.mxu0 %v4037
      %4841 = vmatprep.mubr.f32.mxu0 %v4683
      %4842 = vmatmul.mubr.f32.gmra.mrb[0].mxu0 %v4682
      %v4843 = vpop.f32.mrb[0].mxu0
      %v4844 = vadd.f32 0.0, %v4843
      %v4845 = vpop.f32.mrb[0].mxu0
      %4846 = vmatprep.mubr.f32.mxu0 %v4686
      %4847 = vmatmul.mubr.f32.gmra.mrb[0].mxu0 %v4685
      %v4848 = vpop.f32.mrb[0].mxu0
      %v4849 = vadd.f32 0.0, %v4848
      %v4850 = vpop.f32.mrb[0].mxu0
      %4851 = vmatprep.mubr.f32.mxu0 %v4689
      %4852 = vmatmul.mubr.f32.gmra.mrb[0].mxu0 %v4688
      %v4853 = vpop.f32.mrb[0].mxu0
      %v4854 = vadd.f32 0.0, %v4853
      %v4855 = vpop.f32.mrb[0].mxu0
      %4856 = vmatprep.mubr.f32.mxu0 %v4692
      %4857 = vmatmul.mubr.f32.gmra.mrb[0].mxu0 %v4691
      %v4858 = vpop.f32.mrb[0].mxu0
      %v4859 = vadd.f32 0.0, %v4858
      %v4860 = vpop.f32.mrb[0].mxu0
      %4861 = vmatprep.mubr.f32.mxu0 %v4695
      %4862 = vmatmul.mubr.f32.gmra.mrb[0].mxu0 %v4694
      %v4863 = vpop.f32.mrb[0].mxu0
      %v4864 = vadd.f32 0.0, %v4863
      %v4865 = vpop.f32.mrb[0].mxu0
      %4866 = vmatprep.mubr.f32.mxu0 %v4698
      %4867 = vmatmul.mubr.f32.gmra.mrb[0].mxu0 %v4697
      %v4868 = vpop.f32.mrb[0].mxu0
      %v4869 = vadd.f32 0.0, %v4868
      %v4870 = vpop.f32.mrb[0].mxu0
      %4871 = vmatprep.mubr.f32.mxu0 %v4701
      %4872 = vmatmul.mubr.f32.gmra.mrb[0].mxu0 %v4700
      %v4873 = vpop.f32.mrb[0].mxu0
      %v4874 = vadd.f32 0.0, %v4873
      %v4875 = vpop.f32.mrb[0].mxu0
      %4876 = vmatprep.mubr.f32.mxu0 %v4704
      %4877 = vmatmul.mubr.f32.gmra.mrb[0].mxu0 %v4703
      %v4878 = vpop.f32.mrb[0].mxu0
      %v4879 = vadd.f32 0.0, %v4878
      %v4880 = vpop.f32.mrb[0].mxu0
      %4881 = vmatprep.mubr.f32.mxu0 %v4707
      %4882 = vmatmul.mubr.f32.gmra.mrb[0].mxu0 %v4706
      %v4883 = vpop.f32.mrb[0].mxu0
      %v4884 = vadd.f32 0.0, %v4883
      %v4885 = vpop.f32.mrb[0].mxu0
      %4886 = vmatprep.mubr.f32.mxu0 %v4710
      %4887 = vmatmul.mubr.f32.gmra.mrb[0].mxu0 %v4709
      %v4888 = vpop.f32.mrb[0].mxu0
      %v4889 = vadd.f32 0.0, %v4888
      %v4890 = vpop.f32.mrb[0].mxu0
      %4891 = vmatprep.mubr.f32.mxu0 %v4713
      %4892 = vmatmul.mubr.f32.gmra.mrb[0].mxu0 %v4712
      %v4893 = vpop.f32.mrb[0].mxu0
      %v4894 = vadd.f32 0.0, %v4893
      %v4895 = vpop.f32.mrb[0].mxu0
      %4896 = vmatprep.mubr.f32.mxu0 %v4716
      %4897 = vmatmul.mubr.f32.gmra.mrb[0].mxu0 %v4715
      %v4898 = vpop.f32.mrb[0].mxu0
      %v4899 = vadd.f32 0.0, %v4898
      %v4900 = vpop.f32.mrb[0].mxu0
      %4901 = vmatprep.mubr.f32.mxu0 %v4719
      %4902 = vmatmul.mubr.f32.gmra.mrb[0].mxu0 %v4718
      %v4903 = vpop.f32.mrb[0].mxu0
      %v4904 = vadd.f32 0.0, %v4903
      %v4905 = vpop.f32.mrb[0].mxu0
      %4906 = vmatprep.mubr.f32.mxu0 %v4722
      %4907 = vmatmul.mubr.f32.gmra.mrb[0].mxu0 %v4721
      %v4908 = vpop.f32.mrb[0].mxu0
      %v4909 = vadd.f32 0.0, %v4908
      %v4910 = vpop.f32.mrb[0].mxu0
      %4911 = vmatprep.mubr.f32.mxu0 %v4725
      %4912 = vmatmul.mubr.f32.gmra.mrb[0].mxu0 %v4724
      %v4913 = vpop.f32.mrb[0].mxu0
      %v4914 = vadd.f32 0.0, %v4913
      %v4915 = vpop.f32.mrb[0].mxu0
      %4916 = vmatprep.mubr.f32.mxu0 %v4728
      %4917 = vmatmul.mubr.f32.gmra.mrb[0].mxu0 %v4727
      %v4918 = vpop.f32.mrb[0].mxu0
      %v4919 = vadd.f32 0.0, %v4918
      %v4920 = vpop.f32.mrb[0].mxu0
      %4921 = vmatprep.mubr.f32.mxu0 %v4731
      %4922 = vmatmul.mubr.f32.gmra.mrb[0].mxu0 %v4730
      %v4923 = vpop.f32.mrb[0].mxu0
      %v4924 = vadd.f32 0.0, %v4923
      %v4925 = vpop.f32.mrb[0].mxu0
      %4926 = vmatprep.mubr.f32.mxu0 %v4734
      %4927 = vmatmul.mubr.f32.gmra.mrb[0].mxu0 %v4733
      %v4928 = vpop.f32.mrb[0].mxu0
      %v4929 = vadd.f32 0.0, %v4928
      %v4930 = vpop.f32.mrb[0].mxu0
      %4931 = vmatprep.mubr.f32.mxu0 %v4737
      %4932 = vmatmul.mubr.f32.gmra.mrb[0].mxu0 %v4736
      %v4933 = vpop.f32.mrb[0].mxu0
      %v4934 = vadd.f32 0.0, %v4933
      %v4935 = vpop.f32.mrb[0].mxu0
      %4936 = vmatprep.mubr.f32.mxu0 %v4740
      %4937 = vmatmul.mubr.f32.gmra.mrb[0].mxu0 %v4739
      %v4938 = vpop.f32.mrb[0].mxu0
      %v4939 = vadd.f32 0.0, %v4938
      %v4940 = vpop.f32.mrb[0].mxu0
      %4941 = vmatprep.mubr.f32.mxu0 %v4743
      %4942 = vmatmul.mubr.f32.gmra.mrb[0].mxu0 %v4742
      %v4943 = vpop.f32.mrb[0].mxu0
      %v4944 = vadd.f32 0.0, %v4943
      %v4945 = vpop.f32.mrb[0].mxu0
      %4946 = vmatprep.mubr.f32.mxu0 %v4746
      %4947 = vmatmul.mubr.f32.gmra.mrb[0].mxu0 %v4745
      %v4948 = vpop.f32.mrb[0].mxu0
      %v4949 = vadd.f32 0.0, %v4948
      %v4950 = vpop.f32.mrb[0].mxu0
      %4951 = vmatprep.mubr.f32.mxu0 %v4749
      %4952 = vmatmul.mubr.f32.gmra.mrb[0].mxu0 %v4748
      %v4953 = vpop.f32.mrb[0].mxu0
      %v4954 = vadd.f32 0.0, %v4953
      %v4955 = vpop.f32.mrb[0].mxu0
      %4956 = vmatprep.mubr.f32.mxu0 %v4752
      %4957 = vmatmul.mubr.f32.gmra.mrb[0].mxu0 %v4751
      %v4958 = vpop.f32.mrb[0].mxu0
      %v4959 = vadd.f32 0.0, %v4958
      %v4960 = vpop.f32.mrb[0].mxu0
      %4961 = vmatprep.mubr.f32.mxu0 %v4755
      %4962 = vmatmul.mubr.f32.gmra.mrb[0].mxu0 %v4754
      %v4963 = vpop.f32.mrb[0].mxu0
      %v4964 = vadd.f32 0.0, %v4963
      %v4965 = vpop.f32.mrb[0].mxu0
      %4966 = vmatprep.mubr.f32.mxu0 %v4758
      %4967 = vmatmul.mubr.f32.gmra.mrb[0].mxu0 %v4757
      %v4968 = vpop.f32.mrb[0].mxu0
      %v4969 = vadd.f32 0.0, %v4968
      %v4970 = vpop.f32.mrb[0].mxu0
      %4971 = vmatprep.mubr.f32.mxu0 %v4761
      %4972 = vmatmul.mubr.f32.gmra.mrb[0].mxu0 %v4760
      %v4973 = vpop.f32.mrb[0].mxu0
      %v4974 = vadd.f32 0.0, %v4973
      %v4975 = vpop.f32.mrb[0].mxu0
      %4976 = vmatprep.mubr.f32.mxu0 %v4764
      %4977 = vmatmul.mubr.f32.gmra.mrb[0].mxu0 %v4763
      %v4978 = vpop.f32.mrb[0].mxu0
      %v4979 = vadd.f32 0.0, %v4978
      %v4980 = vpop.f32.mrb[0].mxu0
      %4981 = vmatprep.mubr.f32.mxu0 %v4767
      %4982 = vmatmul.mubr.f32.gmra.mrb[0].mxu0 %v4766
      %v4983 = vpop.f32.mrb[0].mxu0
      %v4984 = vadd.f32 0.0, %v4983
      %v4985 = vpop.f32.mrb[0].mxu0
      %4986 = vmatprep.mubr.f32.mxu0 %v4770
      %4987 = vmatmul.mubr.f32.gmra.mrb[0].mxu0 %v4769
      %v4988 = vpop.f32.mrb[0].mxu0
      %v4989 = vadd.f32 0.0, %v4988
      %v4990 = vpop.f32.mrb[0].mxu0
      %4991 = vmatprep.mubr.f32.mxu0 %v4773
      %4992 = vmatmul.mubr.f32.gmra.mrb[0].mxu0 %v4772
      %v4993 = vpop.f32.mrb[0].mxu0
      %v4994 = vadd.f32 0.0, %v4993
      %v4995 = vpop.f32.mrb[0].mxu0
      %4996 = vmatprep.mubr.f32.mxu0 %v4776
      %4997 = vmatmul.mubr.f32.gmra.mrb[0].mxu0 %v4775
      %v4998 = vpop.f32.mrb[0].mxu0
      %v4999 = vadd.f32 0.0, %v4998
      %v5000 = vpop.f32.mrb[0].mxu0
      %5001 = vdwg.mxu0
      %v5002 = vld [vmem:[#allocation2] sm:$0x1]
      %v5004 = vlaneseq
      %v5005 = vshrl.u32 %v5004, 7
      %v5006 = vsub.s32 0, %v5005
      %v5007 = vrot.slane %v5002, %v5006
      %5008 = vset.pattern.permute.xlu0 0
      %5009 = vperm.xlu0 %5008, %v5007
      %v5010 = vpop.permute.xlu0 %5009
      %v5012 = vmul.f32 %v5010, %v4844
      %v5013 = vmul.f32 %v5010, %v4849
      %v5014 = vmul.f32 %v5010, %v4854
      %v5015 = vmul.f32 %v5010, %v4859
      %v5016 = vmul.f32 %v5010, %v4864
      %v5017 = vmul.f32 %v5010, %v4869
      %v5018 = vmul.f32 %v5010, %v4874
      %v5019 = vmul.f32 %v5010, %v4879
      %v5020 = vmul.f32 %v5010, %v4884
      %v5021 = vmul.f32 %v5010, %v4889
      %v5022 = vmul.f32 %v5010, %v4894
      %v5023 = vmul.f32 %v5010, %v4899
      %v5024 = vmul.f32 %v5010, %v4904
      %v5025 = vmul.f32 %v5010, %v4909
      %v5026 = vmul.f32 %v5010, %v4914
      %v5027 = vmul.f32 %v5010, %v4919
      %v5028 = vmul.f32 %v5010, %v4924
      %v5029 = vmul.f32 %v5010, %v4929
      %v5030 = vmul.f32 %v5010, %v4934
      %v5031 = vmul.f32 %v5010, %v4939
      %v5032 = vmul.f32 %v5010, %v4944
      %v5033 = vmul.f32 %v5010, %v4949
      %v5034 = vmul.f32 %v5010, %v4954
      %v5035 = vmul.f32 %v5010, %v4959
      %v5036 = vmul.f32 %v5010, %v4964
      %v5037 = vmul.f32 %v5010, %v4969
      %v5038 = vmul.f32 %v5010, %v4974
      %v5039 = vmul.f32 %v5010, %v4979
      %v5040 = vmul.f32 %v5010, %v4984
      %v5041 = vmul.f32 %v5010, %v4989
      %v5042 = vmul.f32 %v5010, %v4994
      %v5043 = vmul.f32 %v5010, %v4999
      %v5044 = vadd.f32 %v5012, %v3264
      %v5045 = vadd.f32 %v5013, %v3265
      %v5046 = vadd.f32 %v5014, %v3266
      %v5047 = vadd.f32 %v5015, %v3267
      %v5048 = vadd.f32 %v5016, %v3268
      %v5049 = vadd.f32 %v5017, %v3269
      %v5050 = vadd.f32 %v5018, %v3270
      %v5051 = vadd.f32 %v5019, %v3271
      %v5052 = vadd.f32 %v5020, %v3272
      %v5053 = vadd.f32 %v5021, %v3273
      %v5054 = vadd.f32 %v5022, %v3274
      %v5055 = vadd.f32 %v5023, %v3275
      %v5056 = vadd.f32 %v5024, %v3276
      %v5057 = vadd.f32 %v5025, %v3277
      %v5058 = vadd.f32 %v5026, %v3278
      %v5059 = vadd.f32 %v5027, %v3279
      %v5060 = vadd.f32 %v5028, %v3280
      %v5061 = vadd.f32 %v5029, %v3281
      %v5062 = vadd.f32 %v5030, %v3282
      %v5063 = vadd.f32 %v5031, %v3283
      %v5064 = vadd.f32 %v5032, %v3284
      %v5065 = vadd.f32 %v5033, %v3285
      %v5066 = vadd.f32 %v5034, %v3286
      %v5067 = vadd.f32 %v5035, %v3287
      %v5068 = vadd.f32 %v5036, %v3288
      %v5069 = vadd.f32 %v5037, %v3289
      %v5070 = vadd.f32 %v5038, %v3290
      %v5071 = vadd.f32 %v5039, %v3291
      %v5072 = vadd.f32 %v5040, %v3292
      %v5073 = vadd.f32 %v5041, %v3293
      %v5074 = vadd.f32 %v5042, %v3294
      %v5075 = vadd.f32 %v5043, %v3295
      %5076 = vst [vmem:[%s366] sm:$0xff] %v5044
      %5077 = vst [vmem:[%s366 + $0x8] sm:$0xff] %v5045
      %5078 = vst [vmem:[%s366 + $0x10] sm:$0xff] %v5046
      %5079 = vst [vmem:[%s366 + $0x18] sm:$0xff] %v5047
      %5080 = vst [vmem:[%s366 + $0x20] sm:$0xff] %v5048
      %5081 = vst [vmem:[%s366 + $0x28] sm:$0xff] %v5049
      %5082 = vst [vmem:[%s366 + $0x30] sm:$0xff] %v5050
      %5083 = vst [vmem:[%s366 + $0x38] sm:$0xff] %v5051
      %5084 = vst [vmem:[%s366 + $0x40] sm:$0xff] %v5052
      %5085 = vst [vmem:[%s366 + $0x48] sm:$0xff] %v5053
      %5086 = vst [vmem:[%s366 + $0x50] sm:$0xff] %v5054
      %5087 = vst [vmem:[%s366 + $0x58] sm:$0xff] %v5055
      %5088 = vst [vmem:[%s366 + $0x60] sm:$0xff] %v5056
      %5089 = vst [vmem:[%s366 + $0x68] sm:$0xff] %v5057
      %5090 = vst [vmem:[%s366 + $0x70] sm:$0xff] %v5058
      %5091 = vst [vmem:[%s366 + $0x78] sm:$0xff] %v5059
      %5092 = vst [vmem:[%s366 + $0x80] sm:$0xff] %v5060
      %5093 = vst [vmem:[%s366 + $0x88] sm:$0xff] %v5061
      %5094 = vst [vmem:[%s366 + $0x90] sm:$0xff] %v5062
      %5095 = vst [vmem:[%s366 + $0x98] sm:$0xff] %v5063
      %5096 = vst [vmem:[%s366 + $0xa0] sm:$0xff] %v5064
      %5097 = vst [vmem:[%s366 + $0xa8] sm:$0xff] %v5065
      %5098 = vst [vmem:[%s366 + $0xb0] sm:$0xff] %v5066
      %5099 = vst [vmem:[%s366 + $0xb8] sm:$0xff] %v5067
      %5100 = vst [vmem:[%s366 + $0xc0] sm:$0xff] %v5068
      %5101 = vst [vmem:[%s366 + $0xc8] sm:$0xff] %v5069
      %5102 = vst [vmem:[%s366 + $0xd0] sm:$0xff] %v5070
      %5103 = vst [vmem:[%s366 + $0xd8] sm:$0xff] %v5071
      %5104 = vst [vmem:[%s366 + $0xe0] sm:$0xff] %v5072
      %5105 = vst [vmem:[%s366 + $0xe8] sm:$0xff] %v5073
      %5106 = vst [vmem:[%s366 + $0xf0] sm:$0xff] %v5074
      %5107 = vst [vmem:[%s366 + $0xf8] sm:$0xff] %v5075
      %s5108 = smul.u32 32, %s23
      %p5109 = scmp.lt.s32.totalorder %s5108, 63
      %s5110 = scalar_select %p5109, %s5108, 63
      %s5111 = smul.addr %s5110, 8
      %s5112 = scalar_lea.vmem %s10, %s5111
      // Predicated region
      $region61: #{apm_forward_pallas.6} parent=59 // pred_check
        %p5113 = pneg %p256
      $region62: #{apm_forward_pallas.6} parent=59 // pred_check_branch
        %5115 = sbr.rel (%p5113) target = $region64
      $region63: #{apm_forward_pallas.6} parent=59 // pred_region
        %s5116 = smul.u32 32, %s23
      $region64: #{apm_forward_pallas.6} parent=59 // pred_fallthru
        _
    $region60: #{apm_forward_pallas.6} parent=5 // pred_fallthru
      _
    %p5117 = scmp.le.s32.totalorder 2, %s18
    // Predicated region
    $region65: #{apm_forward_pallas.6} parent=5 // pred_check
      %p5118 = pneg %p5117
    $region66: #{apm_forward_pallas.6} parent=5 // pred_check_branch
      %5120 = sbr.rel (%p5118) target = $region68
    $region67: #{apm_forward_pallas.6} parent=5 // pred_region
      %s5121 = ssub.s32 %s18, 2
      // Predicated region
      $region69: #{apm_forward_pallas.6} parent=67 // pred_check
        %p5122 = pneg %p262
      $region70: #{apm_forward_pallas.6} parent=67 // pred_check_branch
        %5124 = sbr.rel (%p5122) target = $region72
      $region71: #{apm_forward_pallas.6} parent=67 // pred_region
        %s5125 = smul.u32 32, %s24
        %p5126 = scmp.lt.s32.totalorder %s5125, 63
        %s5127 = scalar_select %p5126, %s5125, 63
        %s5128 = smul.addr %s5127, 8
        %s5129 = scalar_lea.vmem %s10, %s5128
      $region72: #{apm_forward_pallas.6} parent=67 // pred_fallthru
        _
    $region68: #{apm_forward_pallas.6} parent=5 // pred_fallthru
      _
  $region6: #{apm_forward_pallas.6} parent=0 // loop_footer
    %s22 = sadd.s32 1, %s18
  $region7: #{apm_forward_pallas.6} parent=0 // loop_footer_branch
    %17 = sbr.rel target = $region3
  $region8: #{apm_forward_pallas.6} parent=0 // loop_exit
    _

</llo_original>
